<compile_context>
chip_gen: v5e
topology: v5e:2x2
jax: 0.10.0
libtpu: 0.0.40
codegen_flags: <defaults>
</compile_context>

<pallas_src>
import functools

import jax
import jax.numpy as jnp
from jax.experimental import pallas as pl
from jax.experimental.pallas import tpu as pltpu

_LANE = 128
_SUBLANE = 8
_B_ALIGN = 16                           # batch padding (bf16 sublane packing)
_MATMUL_DTYPE = jnp.bfloat16            # MXU operand dtype (f32 accumulation)
_ACT_DTYPE = jnp.bfloat16               # activation storage across kernels


def _round_up(x, m):
    return ((x + m - 1) // m) * m


def _vmem_limit_bytes():
    """~100 MiB on 128 MiB parts (v5e/v6e), ~56 MiB on 64 MiB parts (v7x)."""
    cap = None
    try:
        cap = int(pltpu.get_tpu_info().vmem_capacity_bytes)
    except Exception:
        cap = None
    if not cap or cap < (32 << 20):
        cap = 64 << 20
    return int(min(cap - (8 << 20), 100 << 20))


def _pad_gate_cols(w, nhid, nhid_p):
    """Pad the trailing 4*nhid gate axis per-gate (i,f,g,o) to 4*nhid_p with zeros."""
    lead = w.shape[:-1]
    w4 = w.reshape(lead + (4, nhid))
    w4 = jnp.pad(w4, [(0, 0)] * len(lead) + [(0, 0), (0, nhid_p - nhid)])
    return w4.reshape(lead + (4 * nhid_p,))


# ----------------------------------------------------------------------------
# Tiled GEMM + bias kernel (decoder).  Grid = (rows/tm, cols/tn); K is a
# single block.  tm is sized so the (large) weight streams from HBM once.
# ----------------------------------------------------------------------------
def _matmul_bias_kernel(x_ref, w_ref, b_ref, o_ref):
    w = w_ref[...]
    o_ref[...] = (jnp.dot(x_ref[...].astype(w.dtype), w,
                          preferred_element_type=jnp.float32) + b_ref[...])


def run_matmul_bias(x, w, b, *, vmem_limit):
    """x: (M, K) bf16/f32, w: (K, N) bf16, b: (1, N) f32 -> (M, N) f32.
    K and N must be multiples of 128 (caller pads)."""
    M, K = x.shape
    N = w.shape[1]
    assert K % _LANE == 0 and N % _LANE == 0

    # Lane-dense output tile; N is a multiple of 128 so this terminates >= 128.
    tn = min(N, 2048)
    while N % tn != 0:
        tn -= _LANE

    x_bytes = jnp.dtype(x.dtype).itemsize
    budget = vmem_limit - (4 << 20)
    bytes_fixed = 2 * K * tn * 2 + 2 * tn * 4          # w (x2 buf) + bias
    per_row = 2 * K * x_bytes + 2 * tn * 4             # x row (x2) + out row (x2)
    tm_cap = max(_SUBLANE, (budget - bytes_fixed) // max(per_row, 1))
    tm_cap = max(_SUBLANE, (tm_cap // _SUBLANE) * _SUBLANE)
    tm = max(_SUBLANE, min(_round_up(M, _SUBLANE), tm_cap, 4096))

    M_p = _round_up(M, tm)
    if M_p != M:
        x = jnp.pad(x, ((0, M_p - M), (0, 0)))

    out = pl.pallas_call(
        _matmul_bias_kernel,
        out_shape=jax.ShapeDtypeStruct((M_p, N), jnp.float32),
        grid_spec=pltpu.PrefetchScalarGridSpec(
            num_scalar_prefetch=0,
            grid=(M_p // tm, N // tn),
            in_specs=[
                pl.BlockSpec((tm, K), lambda i, j: (i, 0)),
                pl.BlockSpec((K, tn), lambda i, j: (0, j)),
                pl.BlockSpec((1, tn), lambda i, j: (0, j)),
            ],
            out_specs=pl.BlockSpec((tm, tn), lambda i, j: (i, j)),
        ),
        compiler_params=pltpu.CompilerParams(
            dimension_semantics=("parallel", "parallel"),
            vmem_limit_bytes=vmem_limit),
    )(x, w, b)
    return out[:M] if M_p != M else out


# ----------------------------------------------------------------------------
# Fused LSTM layer kernel: per grid step (batch-block bi, time-block ti)
#   1) gx = x_block(T*bb, in_p) @ W_ih + b          (one MXU GEMM, into scratch)
#   2) serial T-step recurrence using resident W_hh; h/c carry in VMEM scratch
# hN/cN written only on the last time block of each batch block.
# ----------------------------------------------------------------------------
def _lstm_rec_kernel(x_ref, h0_ref, c0_ref, wih_ref, whh_ref, b_ref,
                     out_ref, hN_ref, cN_ref,
                     h_sc, c_sc, gx_sc, *, nhid, T, S_real, unroll):
    ti = pl.program_id(1)

    @pl.when(ti == 0)
    def _():
        h_sc[...] = h0_ref[...]
        c_sc[...] = c0_ref[...]

    w_ih = wih_ref[...]                       # resident (bf16), single-buffered
    w_hh = whh_ref[...]                       # resident (bf16), single-buffered
    bias = b_ref[...]

    # Hoisted input projection for this T-block (T*bb rows -> MXU-friendly LHS).
    Tb, bb, in_p = x_ref.shape
    x2d = x_ref[...].reshape(Tb * bb, in_p)
    gx_sc[...] = (jnp.dot(x2d, w_ih, preferred_element_type=jnp.float32)
                  + bias).reshape(Tb, bb, 4 * nhid)

    def step(t, carry):
        h, c = carry
        gates = gx_sc[t] + jnp.dot(h.astype(w_hh.dtype), w_hh,
                                   preferred_element_type=jnp.float32)
        # gate order i, f, g, o (matches PyTorch nn.LSTM); slices 128-aligned.
        i_g = jax.nn.sigmoid(gates[:, 0 * nhid:1 * nhid])
        f_g = jax.nn.sigmoid(gates[:, 1 * nhid:2 * nhid])
        g_g = jnp.tanh(gates[:, 2 * nhid:3 * nhid])
        o_g = jax.nn.sigmoid(gates[:, 3 * nhid:4 * nhid])
        c_new = f_g * c + i_g * g_g
        h_new = o_g * jnp.tanh(c_new)
        out_ref[t] = h_new.astype(out_ref.dtype)      # lane-dense bf16 store
        # Mask padded timesteps (S padded up to a multiple of T).
        valid = (ti * T + t) < S_real
        h = jnp.where(valid, h_new, h)
        c = jnp.where(valid, c_new, c)
        return (h, c)

    hT, cT = jax.lax.fori_loop(0, T, step, (h_sc[...], c_sc[...]), unroll=unroll)
    h_sc[...] = hT
    c_sc[...] = cT

    @pl.when(ti == pl.num_programs(1) - 1)            # write final h/c once
    def _():
        hN_ref[...] = hT
        cN_ref[...] = cT


def run_lstm_layer(x, h0, c0, w_ih, w_hh, b, *, nhid_p, vmem_limit):
    """x: (S, B_p, in_p) bf16; h0/c0: (B_p, nhid_p) f32;
    w_ih: (in_p, 4*nhid_p) bf16; w_hh: (nhid_p, 4*nhid_p) bf16; b: (1, 4*nhid_p) f32.
    Returns (out (S, B_p, nhid_p) bf16, hN (B_p, nhid_p) f32, cN f32)."""
    S, B_p, in_p = x.shape
    G = 4 * nhid_p

    # Batch-block axis (engages v7x megacore when B_p is large enough).
    n_bb = 2 if (B_p % (2 * _B_ALIGN) == 0) else 1
    bb = B_p // n_bb

    # VMEM-derived T: biggest legal time block for this generation.
    budget = vmem_limit - (4 << 20)
    fixed = (in_p * G * 2 + nhid_p * G * 2 + _SUBLANE * G * 4   # W_ih, W_hh, bias
             + 2 * 2 * bb * nhid_p * 4                          # h0, c0 (x2 buf)
             + 2 * 2 * bb * nhid_p * 4                          # hN, cN outs (x2)
             + 2 * bb * nhid_p * 4)                             # h/c scratch
    per_T = (2 * bb * in_p * 2 +        # x block (x2 buf, bf16)
             2 * bb * nhid_p * 2 +      # out block (x2 buf, bf16)
             bb * G * 4)                # gx scratch (f32)
    T = int(max(1, min(S, 64, (budget - fixed) // max(per_T, 1))))

    S_p = _round_up(S, T)
    if S_p != S:
        x = jnp.pad(x, ((0, S_p - S), (0, 0), (0, 0)))
    n_tb = S_p // T

    # Cap unroll: full unroll only when the per-step gate tensor is small.
    gate_bytes = bb * G * 4
    unroll = True if gate_bytes <= 64 * 1024 else min(T, 2)

    kernel = functools.partial(_lstm_rec_kernel, nhid=nhid_p, T=T, S_real=S,
                               unroll=unroll)
    out_shapes = (
        jax.ShapeDtypeStruct((S_p, B_p, nhid_p), _ACT_DTYPE),
        jax.ShapeDtypeStruct((B_p, nhid_p), jnp.float32),
        jax.ShapeDtypeStruct((B_p, nhid_p), jnp.float32),
    )

    def call(single_buffer_weights):
        pm = ({"pipeline_mode": pl.Buffered(1)} if single_buffer_weights else {})
        grid_spec = pltpu.PrefetchScalarGridSpec(
            num_scalar_prefetch=0,
            grid=(n_bb, n_tb),
            in_specs=[
                pl.BlockSpec((T, bb, in_p), lambda bi, ti: (ti, bi, 0)),
                pl.BlockSpec((bb, nhid_p), lambda bi, ti: (bi, 0)),
                pl.BlockSpec((bb, nhid_p), lambda bi, ti: (bi, 0)),
                pl.BlockSpec((in_p, G), lambda bi, ti: (0, 0), **pm),
                pl.BlockSpec((nhid_p, G), lambda bi, ti: (0, 0), **pm),
                pl.BlockSpec((1, G), lambda bi, ti: (0, 0), **pm),
            ],
            out_specs=[
                pl.BlockSpec((T, bb, nhid_p), lambda bi, ti: (ti, bi, 0)),
                pl.BlockSpec((bb, nhid_p), lambda bi, ti: (bi, 0)),
                pl.BlockSpec((bb, nhid_p), lambda bi, ti: (bi, 0)),
            ],
            scratch_shapes=[
                pltpu.VMEM((bb, nhid_p), jnp.float32),      # h carry
                pltpu.VMEM((bb, nhid_p), jnp.float32),      # c carry
                pltpu.VMEM((T, bb, G), jnp.float32),        # gx block
            ],
        )
        return pl.pallas_call(
            kernel,
            out_shape=out_shapes,
            grid_spec=grid_spec,
            compiler_params=pltpu.CompilerParams(
                dimension_semantics=("parallel", "arbitrary"),
                vmem_limit_bytes=vmem_limit),
        )(x, h0, c0, w_ih, w_hh, b)

    try:
        out, hN, cN = call(True)          # single-buffer resident weights
    except Exception:
        out, hN, cN = call(False)         # fallback: default double buffering

    return (out[:S] if S_p != S else out), hN, cN


# ----------------------------------------------------------------------------
# Parameter init (PyTorch-equivalent distributions), padded for TPU layout.
# ----------------------------------------------------------------------------
def init_params(key, ntoken, ninp, nhid, nlayers, matmul_dtype=_MATMUL_DTYPE):
    ninp_p = _round_up(ninp, _LANE)
    nhid_p = _round_up(nhid, _LANE)
    ntoken_p = _round_up(ntoken, _LANE)
    keys = jax.random.split(key, 2 + 4 * nlayers)
    initrange = 0.1

    emb = jax.random.uniform(keys[0], (ntoken, ninp), jnp.float32,
                             -initrange, initrange)
    dec_w = jax.random.uniform(keys[1], (nhid, ntoken), jnp.float32,
                               -initrange, initrange)  # stored pre-transposed

    params = {
        "dims": dict(ntoken=ntoken, ninp=ninp, nhid=nhid, nlayers=nlayers,
                     ninp_p=ninp_p, nhid_p=nhid_p, ntoken_p=ntoken_p),
        "emb": jnp.pad(emb, ((0, 0), (0, ninp_p - ninp))),
        "dec_w": jnp.pad(dec_w, ((0, nhid_p - nhid),
                                 (0, ntoken_p - ntoken))).astype(matmul_dtype),
        "dec_b": jnp.zeros((1, ntoken_p), jnp.float32),
        "lstm": [],
    }

    stdv = 1.0 / (nhid ** 0.5)
    for l in range(nlayers):
        in_feat = ninp if l == 0 else nhid
        in_p = ninp_p if l == 0 else nhid_p
        k = keys[2 + 4 * l: 2 + 4 * (l + 1)]
        # PyTorch stores (4*nhid, in_feat); we keep transposed (in_feat, 4*nhid).
        w_ih = jax.random.uniform(k[0], (in_feat, 4 * nhid), jnp.float32, -stdv, stdv)
        w_hh = jax.random.uniform(k[1], (nhid, 4 * nhid), jnp.float32, -stdv, stdv)
        b_ih = jax.random.uniform(k[2], (1, 4 * nhid), jnp.float32, -stdv, stdv)
        b_hh = jax.random.uniform(k[3], (1, 4 * nhid), jnp.float32, -stdv, stdv)

        w_ih_p = jnp.pad(_pad_gate_cols(w_ih, nhid, nhid_p),
                         ((0, in_p - in_feat), (0, 0)))
        w_hh_p = jnp.pad(_pad_gate_cols(w_hh, nhid, nhid_p),
                         ((0, nhid_p - nhid), (0, 0)))
        b_p = _pad_gate_cols(b_ih + b_hh, nhid, nhid_p)
        params["lstm"].append((w_ih_p.astype(matmul_dtype),
                               w_hh_p.astype(matmul_dtype),
                               b_p))
    return params


def init_hidden(nlayers, bsz, nhid):
    return (jnp.zeros((nlayers, bsz, nhid), jnp.float32),
            jnp.zeros((nlayers, bsz, nhid), jnp.float32))


# ----------------------------------------------------------------------------
# Full RNNModel forward (LSTM variant).
# ----------------------------------------------------------------------------
def rnn_model_forward(params, tokens, hidden):
    d = params["dims"]
    nhid, nhid_p = d["nhid"], d["nhid_p"]
    ntoken, ntoken_p = d["ntoken"], d["ntoken_p"]
    S, B = tokens.shape
    B_p = _round_up(max(B, _B_ALIGN), _B_ALIGN)
    vmem_limit = _vmem_limit_bytes()

    # Encoder (embedding gather) -- glue, plain JAX. Dropout -> identity (eval).
    emb = jnp.take(params["emb"], tokens, axis=0)            # (S, B, ninp_p) f32
    x = jnp.pad(emb, ((0, 0), (0, B_p - B), (0, 0))).astype(_ACT_DTYPE)

    h0s, c0s = hidden                                        # (nlayers, B, nhid)
    pad_hc = ((0, 0), (0, B_p - B), (0, nhid_p - nhid))
    h0s = jnp.pad(h0s, pad_hc).astype(jnp.float32)
    c0s = jnp.pad(c0s, pad_hc).astype(jnp.float32)

    h_finals, c_finals = [], []
    for l in range(d["nlayers"]):
        w_ih, w_hh, b = params["lstm"][l]
        x, hN, cN = run_lstm_layer(x, h0s[l], c0s[l], w_ih, w_hh, b,
                                   nhid_p=nhid_p, vmem_limit=vmem_limit)
        h_finals.append(hN)
        c_finals.append(cN)
        # inter-layer dropout -> identity (eval mode)

    # Output dropout -> identity (eval mode). Decoder: tiled GEMM (W streamed once).
    dec = run_matmul_bias(x.reshape(S * B_p, nhid_p),
                          params["dec_w"], params["dec_b"],
                          vmem_limit=vmem_limit)              # (S*B_p, ntoken_p) f32
    decoded = dec.reshape(S, B_p, ntoken_p)[:, :B, :ntoken].reshape(S * B, ntoken)

    h_out = jnp.stack(h_finals, axis=0)[:, :B, :nhid]
    c_out = jnp.stack(c_finals, axis=0)[:, :B, :nhid]
    return decoded, (h_out, c_out)


if __name__ == "__main__":
    ntoken, ninp, nhid, nlayers = 50, 32, 32, 2
    seq_len, batch = 8, 2

    key = jax.random.PRNGKey(0)
    k_param, k_tok = jax.random.split(key)
    params = init_params(k_param, ntoken, ninp, nhid, nlayers)

    tokens = jax.random.randint(k_tok, (seq_len, batch), 0, ntoken, dtype=jnp.int32)
    hidden = init_hidden(nlayers, batch, nhid)

    decoded, (h_out, c_out) = rnn_model_forward(params, tokens, hidden)
    jax.block_until_ready((decoded, h_out, c_out))

    assert decoded.shape == (seq_len * batch, ntoken)
    assert h_out.shape == (nlayers, batch, nhid)
    assert c_out.shape == (nlayers, batch, nhid)
    assert bool(jnp.all(jnp.isfinite(decoded)))
    print("KERNEL_OK")
</pallas_src>

<mosaic_0001>
module attributes {stable_mosaic.version = 11 : i64} {
  func.func @_lstm_rec_kernel(%arg0: i32, %arg1: i32, %arg2: memref<8x16x128xbf16, #tpu.memory_space<vmem>>, %arg3: memref<16x128xf32, #tpu.memory_space<vmem>>, %arg4: memref<16x128xf32, #tpu.memory_space<vmem>>, %arg5: memref<128x512xbf16, #tpu.memory_space<vmem>>, %arg6: memref<128x512xbf16, #tpu.memory_space<vmem>>, %arg7: memref<1x512xf32, #tpu.memory_space<vmem>>, %arg8: memref<8x16x128xbf16, #tpu.memory_space<vmem>>, %arg9: memref<16x128xf32, #tpu.memory_space<vmem>>, %arg10: memref<16x128xf32, #tpu.memory_space<vmem>>, %arg11: memref<16x128xf32, #tpu.memory_space<vmem>>, %arg12: memref<16x128xf32, #tpu.memory_space<vmem>>, %arg13: memref<8x16x512xf32, #tpu.memory_space<vmem>>) attributes {dimension_semantics = [#tpu.dimension_semantics<parallel>, #tpu.dimension_semantics<arbitrary>], iteration_bounds = array<i64: 1, 1>, scalar_prefetch = 0 : i64, scratch_operands = 3 : i64, tpu.core_type = #tpu.core_type<tc>, window_params = [{transform_indices = @transform_0, window_bounds = array<i64: 8, 16, 128>}, {transform_indices = @transform_1, window_bounds = array<i64: 16, 128>}, {transform_indices = @transform_2, window_bounds = array<i64: 16, 128>}, {pipeline_mode = #tpu.pipeline_mode<synchronous>, transform_indices = @transform_3, window_bounds = array<i64: 128, 512>}, {pipeline_mode = #tpu.pipeline_mode<synchronous>, transform_indices = @transform_4, window_bounds = array<i64: 128, 512>}, {pipeline_mode = #tpu.pipeline_mode<synchronous>, transform_indices = @transform_5, window_bounds = array<i64: 1, 512>}, {transform_indices = @transform_6, window_bounds = array<i64: 8, 16, 128>}, {transform_indices = @transform_7, window_bounds = array<i64: 16, 128>}, {transform_indices = @transform_8, window_bounds = array<i64: 16, 128>}]} {
    %c0_i32 = arith.constant 0 : i32
    %0 = arith.cmpi eq, %arg1, %c0_i32 : i32
    %1 = arith.extui %0 : i1 to i32
    %c0_i32_0 = arith.constant 0 : i32
    %2 = arith.cmpi ne, %1, %c0_i32_0 : i32
    scf.if %2 {
      %c0_103 = arith.constant 0 : index
      %c0_104 = arith.constant 0 : index
      %348 = vector.load %arg3[%c0_103, %c0_104] : memref<16x128xf32, #tpu.memory_space<vmem>>, vector<16x128xf32>
      %c0_105 = arith.constant 0 : index
      %c0_106 = arith.constant 0 : index
      %349 = vector.load %arg11[%c0_105, %c0_106] : memref<16x128xf32, #tpu.memory_space<vmem>>, vector<16x128xf32>
      tpu.vector_store %arg11[%c0_105, %c0_106], %348 {strides = array<i32>} : memref<16x128xf32, #tpu.memory_space<vmem>>, vector<16x128xf32>,
      %c0_107 = arith.constant 0 : index
      %c0_108 = arith.constant 0 : index
      %350 = vector.load %arg4[%c0_107, %c0_108] : memref<16x128xf32, #tpu.memory_space<vmem>>, vector<16x128xf32>
      %c0_109 = arith.constant 0 : index
      %c0_110 = arith.constant 0 : index
      %351 = vector.load %arg12[%c0_109, %c0_110] : memref<16x128xf32, #tpu.memory_space<vmem>>, vector<16x128xf32>
      tpu.vector_store %arg12[%c0_109, %c0_110], %350 {strides = array<i32>} : memref<16x128xf32, #tpu.memory_space<vmem>>, vector<16x128xf32>,
    } else {
    }
    %c0 = arith.constant 0 : index
    %c0_1 = arith.constant 0 : index
    %3 = vector.load %arg5[%c0, %c0_1] : memref<128x512xbf16, #tpu.memory_space<vmem>>, vector<128x512xbf16>
    %c0_2 = arith.constant 0 : index
    %c0_3 = arith.constant 0 : index
    %4 = vector.load %arg6[%c0_2, %c0_3] : memref<128x512xbf16, #tpu.memory_space<vmem>>, vector<128x512xbf16>
    %c0_4 = arith.constant 0 : index
    %c0_5 = arith.constant 0 : index
    %5 = vector.load %arg7[%c0_4, %c0_5] : memref<1x512xf32, #tpu.memory_space<vmem>>, vector<1x512xf32>
    %c0_6 = arith.constant 0 : index
    %c0_7 = arith.constant 0 : index
    %c0_8 = arith.constant 0 : index
    %6 = vector.load %arg2[%c0_6, %c0_7, %c0_8] : memref<8x16x128xbf16, #tpu.memory_space<vmem>>, vector<8x16x128xbf16>
    %7 = vector.shape_cast %6 : vector<8x16x128xbf16> to vector<128x128xbf16>
    %cst = arith.constant dense<0.000000e+00> : vector<128x512xf32>
    %8 = tpu.matmul %7, %3, %cst {dimension_numbers = #tpu.dot_dimension_numbers<[1], [0], [0], [1], [0, 0, 1, 1], [], []>} : vector<128x128xbf16>, vector<128x512xbf16>, vector<128x512xf32> -> vector<128x512xf32>
    %9 = vector.broadcast %5 : vector<1x512xf32> to vector<128x512xf32>
    %10 = arith.addf %8, %9 : vector<128x512xf32>
    %11 = vector.shape_cast %10 : vector<128x512xf32> to vector<8x16x512xf32>
    %c0_9 = arith.constant 0 : index
    %c0_10 = arith.constant 0 : index
    %c0_11 = arith.constant 0 : index
    %12 = vector.load %arg13[%c0_9, %c0_10, %c0_11] : memref<8x16x512xf32, #tpu.memory_space<vmem>>, vector<8x16x512xf32>
    tpu.vector_store %arg13[%c0_9, %c0_10, %c0_11], %11 {strides = array<i32>} : memref<8x16x512xf32, #tpu.memory_space<vmem>>, vector<8x16x512xf32>,
    %c0_12 = arith.constant 0 : index
    %c0_13 = arith.constant 0 : index
    %13 = vector.load %arg11[%c0_12, %c0_13] : memref<16x128xf32, #tpu.memory_space<vmem>>, vector<16x128xf32>
    %c0_14 = arith.constant 0 : index
    %c0_15 = arith.constant 0 : index
    %14 = vector.load %arg12[%c0_14, %c0_15] : memref<16x128xf32, #tpu.memory_space<vmem>>, vector<16x128xf32>
    %c0_i32_16 = arith.constant 0 : i32
    %15 = arith.index_cast %c0_i32_16 : i32 to index
    %c0_17 = arith.constant 0 : index
    %c0_18 = arith.constant 0 : index
    %16 = vector.load %arg13[%15, %c0_17, %c0_18] : memref<8x16x512xf32, #tpu.memory_space<vmem>>, vector<1x16x512xf32>
    %17 = vector.shape_cast %16 : vector<1x16x512xf32> to vector<16x512xf32>
    %18 = arith.truncf %13 : vector<16x128xf32> to vector<16x128xbf16>
    %cst_19 = arith.constant dense<0.000000e+00> : vector<16x512xf32>
    %19 = tpu.matmul %18, %4, %cst_19 {dimension_numbers = #tpu.dot_dimension_numbers<[1], [0], [0], [1], [0, 0, 1, 1], [], []>} : vector<16x128xbf16>, vector<128x512xbf16>, vector<16x512xf32> -> vector<16x512xf32>
    %20 = arith.addf %17, %19 : vector<16x512xf32>
    %21 = vector.extract_strided_slice %20 {offsets = [0, 0], sizes = [16, 128], strides = [1, 1]} : vector<16x512xf32> to vector<16x128xf32>
    %22 = arith.negf %21 : vector<16x128xf32>
    %23 = math.exp %22 : vector<16x128xf32>
    %cst_20 = arith.constant 1.000000e+00 : f32
    %24 = vector.broadcast %cst_20 : f32 to vector<16x128xf32>
    %25 = arith.addf %24, %23 : vector<16x128xf32>
    %26 = arith.divf %24, %25 : vector<16x128xf32>
    %27 = vector.extract_strided_slice %20 {offsets = [0, 128], sizes = [16, 128], strides = [1, 1]} : vector<16x512xf32> to vector<16x128xf32>
    %28 = arith.negf %27 : vector<16x128xf32>
    %29 = math.exp %28 : vector<16x128xf32>
    %cst_21 = arith.constant 1.000000e+00 : f32
    %30 = vector.broadcast %cst_21 : f32 to vector<16x128xf32>
    %31 = arith.addf %30, %29 : vector<16x128xf32>
    %32 = arith.divf %30, %31 : vector<16x128xf32>
    %33 = vector.extract_strided_slice %20 {offsets = [0, 256], sizes = [16, 128], strides = [1, 1]} : vector<16x512xf32> to vector<16x128xf32>
    %34 = math.tanh %33 : vector<16x128xf32>
    %35 = vector.extract_strided_slice %20 {offsets = [0, 384], sizes = [16, 128], strides = [1, 1]} : vector<16x512xf32> to vector<16x128xf32>
    %36 = arith.negf %35 : vector<16x128xf32>
    %37 = math.exp %36 : vector<16x128xf32>
    %cst_22 = arith.constant 1.000000e+00 : f32
    %38 = vector.broadcast %cst_22 : f32 to vector<16x128xf32>
    %39 = arith.addf %38, %37 : vector<16x128xf32>
    %40 = arith.divf %38, %39 : vector<16x128xf32>
    %41 = arith.mulf %32, %14 : vector<16x128xf32>
    %42 = arith.mulf %26, %34 : vector<16x128xf32>
    %43 = arith.addf %41, %42 : vector<16x128xf32>
    %44 = math.tanh %43 : vector<16x128xf32>
    %45 = arith.mulf %40, %44 : vector<16x128xf32>
    %46 = arith.truncf %45 : vector<16x128xf32> to vector<16x128xbf16>
    %47 = arith.index_cast %c0_i32_16 : i32 to index
    %c0_23 = arith.constant 0 : index
    %c0_24 = arith.constant 0 : index
    %48 = vector.load %arg8[%47, %c0_23, %c0_24] : memref<8x16x128xbf16, #tpu.memory_space<vmem>>, vector<1x16x128xbf16>
    %49 = vector.shape_cast %48 : vector<1x16x128xbf16> to vector<16x128xbf16>
    %50 = vector.shape_cast %46 : vector<16x128xbf16> to vector<1x16x128xbf16>
    tpu.vector_store %arg8[%47, %c0_23, %c0_24], %50 {strides = array<i32>} : memref<8x16x128xbf16, #tpu.memory_space<vmem>>, vector<1x16x128xbf16>,
    %c8_i32 = arith.constant 8 : i32
    %51 = arith.muli %arg1, %c8_i32 : i32
    %52 = arith.addi %51, %c0_i32_16 : i32
    %c8_i32_25 = arith.constant 8 : i32
    %53 = arith.cmpi slt, %52, %c8_i32_25 : i32
    %54 = arith.select %53, %45, %13 : vector<16x128xf32>
    %55 = arith.select %53, %43, %14 : vector<16x128xf32>
    %c1_i32 = arith.constant 1 : i32
    %56 = arith.index_cast %c1_i32 : i32 to index
    %c0_26 = arith.constant 0 : index
    %c0_27 = arith.constant 0 : index
    %57 = vector.load %arg13[%56, %c0_26, %c0_27] : memref<8x16x512xf32, #tpu.memory_space<vmem>>, vector<1x16x512xf32>
    %58 = vector.shape_cast %57 : vector<1x16x512xf32> to vector<16x512xf32>
    %59 = arith.truncf %54 : vector<16x128xf32> to vector<16x128xbf16>
    %cst_28 = arith.constant dense<0.000000e+00> : vector<16x512xf32>
    %60 = tpu.matmul %59, %4, %cst_28 {dimension_numbers = #tpu.dot_dimension_numbers<[1], [0], [0], [1], [0, 0, 1, 1], [], []>} : vector<16x128xbf16>, vector<128x512xbf16>, vector<16x512xf32> -> vector<16x512xf32>
    %61 = arith.addf %58, %60 : vector<16x512xf32>
    %62 = vector.extract_strided_slice %61 {offsets = [0, 0], sizes = [16, 128], strides = [1, 1]} : vector<16x512xf32> to vector<16x128xf32>
    %63 = arith.negf %62 : vector<16x128xf32>
    %64 = math.exp %63 : vector<16x128xf32>
    %cst_29 = arith.constant 1.000000e+00 : f32
    %65 = vector.broadcast %cst_29 : f32 to vector<16x128xf32>
    %66 = arith.addf %65, %64 : vector<16x128xf32>
    %67 = arith.divf %65, %66 : vector<16x128xf32>
    %68 = vector.extract_strided_slice %61 {offsets = [0, 128], sizes = [16, 128], strides = [1, 1]} : vector<16x512xf32> to vector<16x128xf32>
    %69 = arith.negf %68 : vector<16x128xf32>
    %70 = math.exp %69 : vector<16x128xf32>
    %cst_30 = arith.constant 1.000000e+00 : f32
    %71 = vector.broadcast %cst_30 : f32 to vector<16x128xf32>
    %72 = arith.addf %71, %70 : vector<16x128xf32>
    %73 = arith.divf %71, %72 : vector<16x128xf32>
    %74 = vector.extract_strided_slice %61 {offsets = [0, 256], sizes = [16, 128], strides = [1, 1]} : vector<16x512xf32> to vector<16x128xf32>
    %75 = math.tanh %74 : vector<16x128xf32>
    %76 = vector.extract_strided_slice %61 {offsets = [0, 384], sizes = [16, 128], strides = [1, 1]} : vector<16x512xf32> to vector<16x128xf32>
    %77 = arith.negf %76 : vector<16x128xf32>
    %78 = math.exp %77 : vector<16x128xf32>
    %cst_31 = arith.constant 1.000000e+00 : f32
    %79 = vector.broadcast %cst_31 : f32 to vector<16x128xf32>
    %80 = arith.addf %79, %78 : vector<16x128xf32>
    %81 = arith.divf %79, %80 : vector<16x128xf32>
    %82 = arith.mulf %73, %55 : vector<16x128xf32>
    %83 = arith.mulf %67, %75 : vector<16x128xf32>
    %84 = arith.addf %82, %83 : vector<16x128xf32>
    %85 = math.tanh %84 : vector<16x128xf32>
    %86 = arith.mulf %81, %85 : vector<16x128xf32>
    %87 = arith.truncf %86 : vector<16x128xf32> to vector<16x128xbf16>
    %88 = arith.index_cast %c1_i32 : i32 to index
    %c0_32 = arith.constant 0 : index
    %c0_33 = arith.constant 0 : index
    %89 = vector.load %arg8[%88, %c0_32, %c0_33] : memref<8x16x128xbf16, #tpu.memory_space<vmem>>, vector<1x16x128xbf16>
    %90 = vector.shape_cast %89 : vector<1x16x128xbf16> to vector<16x128xbf16>
    %91 = vector.shape_cast %87 : vector<16x128xbf16> to vector<1x16x128xbf16>
    tpu.vector_store %arg8[%88, %c0_32, %c0_33], %91 {strides = array<i32>} : memref<8x16x128xbf16, #tpu.memory_space<vmem>>, vector<1x16x128xbf16>,
    %c8_i32_34 = arith.constant 8 : i32
    %92 = arith.muli %arg1, %c8_i32_34 : i32
    %93 = arith.addi %92, %c1_i32 : i32
    %c8_i32_35 = arith.constant 8 : i32
    %94 = arith.cmpi slt, %93, %c8_i32_35 : i32
    %95 = arith.select %94, %86, %54 : vector<16x128xf32>
    %96 = arith.select %94, %84, %55 : vector<16x128xf32>
    %c2_i32 = arith.constant 2 : i32
    %97 = arith.index_cast %c2_i32 : i32 to index
    %c0_36 = arith.constant 0 : index
    %c0_37 = arith.constant 0 : index
    %98 = vector.load %arg13[%97, %c0_36, %c0_37] : memref<8x16x512xf32, #tpu.memory_space<vmem>>, vector<1x16x512xf32>
    %99 = vector.shape_cast %98 : vector<1x16x512xf32> to vector<16x512xf32>
    %100 = arith.truncf %95 : vector<16x128xf32> to vector<16x128xbf16>
    %cst_38 = arith.constant dense<0.000000e+00> : vector<16x512xf32>
    %101 = tpu.matmul %100, %4, %cst_38 {dimension_numbers = #tpu.dot_dimension_numbers<[1], [0], [0], [1], [0, 0, 1, 1], [], []>} : vector<16x128xbf16>, vector<128x512xbf16>, vector<16x512xf32> -> vector<16x512xf32>
    %102 = arith.addf %99, %101 : vector<16x512xf32>
    %103 = vector.extract_strided_slice %102 {offsets = [0, 0], sizes = [16, 128], strides = [1, 1]} : vector<16x512xf32> to vector<16x128xf32>
    %104 = arith.negf %103 : vector<16x128xf32>
    %105 = math.exp %104 : vector<16x128xf32>
    %cst_39 = arith.constant 1.000000e+00 : f32
    %106 = vector.broadcast %cst_39 : f32 to vector<16x128xf32>
    %107 = arith.addf %106, %105 : vector<16x128xf32>
    %108 = arith.divf %106, %107 : vector<16x128xf32>
    %109 = vector.extract_strided_slice %102 {offsets = [0, 128], sizes = [16, 128], strides = [1, 1]} : vector<16x512xf32> to vector<16x128xf32>
    %110 = arith.negf %109 : vector<16x128xf32>
    %111 = math.exp %110 : vector<16x128xf32>
    %cst_40 = arith.constant 1.000000e+00 : f32
    %112 = vector.broadcast %cst_40 : f32 to vector<16x128xf32>
    %113 = arith.addf %112, %111 : vector<16x128xf32>
    %114 = arith.divf %112, %113 : vector<16x128xf32>
    %115 = vector.extract_strided_slice %102 {offsets = [0, 256], sizes = [16, 128], strides = [1, 1]} : vector<16x512xf32> to vector<16x128xf32>
    %116 = math.tanh %115 : vector<16x128xf32>
    %117 = vector.extract_strided_slice %102 {offsets = [0, 384], sizes = [16, 128], strides = [1, 1]} : vector<16x512xf32> to vector<16x128xf32>
    %118 = arith.negf %117 : vector<16x128xf32>
    %119 = math.exp %118 : vector<16x128xf32>
    %cst_41 = arith.constant 1.000000e+00 : f32
    %120 = vector.broadcast %cst_41 : f32 to vector<16x128xf32>
    %121 = arith.addf %120, %119 : vector<16x128xf32>
    %122 = arith.divf %120, %121 : vector<16x128xf32>
    %123 = arith.mulf %114, %96 : vector<16x128xf32>
    %124 = arith.mulf %108, %116 : vector<16x128xf32>
    %125 = arith.addf %123, %124 : vector<16x128xf32>
    %126 = math.tanh %125 : vector<16x128xf32>
    %127 = arith.mulf %122, %126 : vector<16x128xf32>
    %128 = arith.truncf %127 : vector<16x128xf32> to vector<16x128xbf16>
    %129 = arith.index_cast %c2_i32 : i32 to index
    %c0_42 = arith.constant 0 : index
    %c0_43 = arith.constant 0 : index
    %130 = vector.load %arg8[%129, %c0_42, %c0_43] : memref<8x16x128xbf16, #tpu.memory_space<vmem>>, vector<1x16x128xbf16>
    %131 = vector.shape_cast %130 : vector<1x16x128xbf16> to vector<16x128xbf16>
    %132 = vector.shape_cast %128 : vector<16x128xbf16> to vector<1x16x128xbf16>
    tpu.vector_store %arg8[%129, %c0_42, %c0_43], %132 {strides = array<i32>} : memref<8x16x128xbf16, #tpu.memory_space<vmem>>, vector<1x16x128xbf16>,
    %c8_i32_44 = arith.constant 8 : i32
    %133 = arith.muli %arg1, %c8_i32_44 : i32
    %134 = arith.addi %133, %c2_i32 : i32
    %c8_i32_45 = arith.constant 8 : i32
    %135 = arith.cmpi slt, %134, %c8_i32_45 : i32
    %136 = arith.select %135, %127, %95 : vector<16x128xf32>
    %137 = arith.select %135, %125, %96 : vector<16x128xf32>
    %c3_i32 = arith.constant 3 : i32
    %138 = arith.index_cast %c3_i32 : i32 to index
    %c0_46 = arith.constant 0 : index
    %c0_47 = arith.constant 0 : index
    %139 = vector.load %arg13[%138, %c0_46, %c0_47] : memref<8x16x512xf32, #tpu.memory_space<vmem>>, vector<1x16x512xf32>
    %140 = vector.shape_cast %139 : vector<1x16x512xf32> to vector<16x512xf32>
    %141 = arith.truncf %136 : vector<16x128xf32> to vector<16x128xbf16>
    %cst_48 = arith.constant dense<0.000000e+00> : vector<16x512xf32>
    %142 = tpu.matmul %141, %4, %cst_48 {dimension_numbers = #tpu.dot_dimension_numbers<[1], [0], [0], [1], [0, 0, 1, 1], [], []>} : vector<16x128xbf16>, vector<128x512xbf16>, vector<16x512xf32> -> vector<16x512xf32>
    %143 = arith.addf %140, %142 : vector<16x512xf32>
    %144 = vector.extract_strided_slice %143 {offsets = [0, 0], sizes = [16, 128], strides = [1, 1]} : vector<16x512xf32> to vector<16x128xf32>
    %145 = arith.negf %144 : vector<16x128xf32>
    %146 = math.exp %145 : vector<16x128xf32>
    %cst_49 = arith.constant 1.000000e+00 : f32
    %147 = vector.broadcast %cst_49 : f32 to vector<16x128xf32>
    %148 = arith.addf %147, %146 : vector<16x128xf32>
    %149 = arith.divf %147, %148 : vector<16x128xf32>
    %150 = vector.extract_strided_slice %143 {offsets = [0, 128], sizes = [16, 128], strides = [1, 1]} : vector<16x512xf32> to vector<16x128xf32>
    %151 = arith.negf %150 : vector<16x128xf32>
    %152 = math.exp %151 : vector<16x128xf32>
    %cst_50 = arith.constant 1.000000e+00 : f32
    %153 = vector.broadcast %cst_50 : f32 to vector<16x128xf32>
    %154 = arith.addf %153, %152 : vector<16x128xf32>
    %155 = arith.divf %153, %154 : vector<16x128xf32>
    %156 = vector.extract_strided_slice %143 {offsets = [0, 256], sizes = [16, 128], strides = [1, 1]} : vector<16x512xf32> to vector<16x128xf32>
    %157 = math.tanh %156 : vector<16x128xf32>
    %158 = vector.extract_strided_slice %143 {offsets = [0, 384], sizes = [16, 128], strides = [1, 1]} : vector<16x512xf32> to vector<16x128xf32>
    %159 = arith.negf %158 : vector<16x128xf32>
    %160 = math.exp %159 : vector<16x128xf32>
    %cst_51 = arith.constant 1.000000e+00 : f32
    %161 = vector.broadcast %cst_51 : f32 to vector<16x128xf32>
    %162 = arith.addf %161, %160 : vector<16x128xf32>
    %163 = arith.divf %161, %162 : vector<16x128xf32>
    %164 = arith.mulf %155, %137 : vector<16x128xf32>
    %165 = arith.mulf %149, %157 : vector<16x128xf32>
    %166 = arith.addf %164, %165 : vector<16x128xf32>
    %167 = math.tanh %166 : vector<16x128xf32>
    %168 = arith.mulf %163, %167 : vector<16x128xf32>
    %169 = arith.truncf %168 : vector<16x128xf32> to vector<16x128xbf16>
    %170 = arith.index_cast %c3_i32 : i32 to index
    %c0_52 = arith.constant 0 : index
    %c0_53 = arith.constant 0 : index
    %171 = vector.load %arg8[%170, %c0_52, %c0_53] : memref<8x16x128xbf16, #tpu.memory_space<vmem>>, vector<1x16x128xbf16>
    %172 = vector.shape_cast %171 : vector<1x16x128xbf16> to vector<16x128xbf16>
    %173 = vector.shape_cast %169 : vector<16x128xbf16> to vector<1x16x128xbf16>
    tpu.vector_store %arg8[%170, %c0_52, %c0_53], %173 {strides = array<i32>} : memref<8x16x128xbf16, #tpu.memory_space<vmem>>, vector<1x16x128xbf16>,
    %c8_i32_54 = arith.constant 8 : i32
    %174 = arith.muli %arg1, %c8_i32_54 : i32
    %175 = arith.addi %174, %c3_i32 : i32
    %c8_i32_55 = arith.constant 8 : i32
    %176 = arith.cmpi slt, %175, %c8_i32_55 : i32
    %177 = arith.select %176, %168, %136 : vector<16x128xf32>
    %178 = arith.select %176, %166, %137 : vector<16x128xf32>
    %c4_i32 = arith.constant 4 : i32
    %179 = arith.index_cast %c4_i32 : i32 to index
    %c0_56 = arith.constant 0 : index
    %c0_57 = arith.constant 0 : index
    %180 = vector.load %arg13[%179, %c0_56, %c0_57] : memref<8x16x512xf32, #tpu.memory_space<vmem>>, vector<1x16x512xf32>
    %181 = vector.shape_cast %180 : vector<1x16x512xf32> to vector<16x512xf32>
    %182 = arith.truncf %177 : vector<16x128xf32> to vector<16x128xbf16>
    %cst_58 = arith.constant dense<0.000000e+00> : vector<16x512xf32>
    %183 = tpu.matmul %182, %4, %cst_58 {dimension_numbers = #tpu.dot_dimension_numbers<[1], [0], [0], [1], [0, 0, 1, 1], [], []>} : vector<16x128xbf16>, vector<128x512xbf16>, vector<16x512xf32> -> vector<16x512xf32>
    %184 = arith.addf %181, %183 : vector<16x512xf32>
    %185 = vector.extract_strided_slice %184 {offsets = [0, 0], sizes = [16, 128], strides = [1, 1]} : vector<16x512xf32> to vector<16x128xf32>
    %186 = arith.negf %185 : vector<16x128xf32>
    %187 = math.exp %186 : vector<16x128xf32>
    %cst_59 = arith.constant 1.000000e+00 : f32
    %188 = vector.broadcast %cst_59 : f32 to vector<16x128xf32>
    %189 = arith.addf %188, %187 : vector<16x128xf32>
    %190 = arith.divf %188, %189 : vector<16x128xf32>
    %191 = vector.extract_strided_slice %184 {offsets = [0, 128], sizes = [16, 128], strides = [1, 1]} : vector<16x512xf32> to vector<16x128xf32>
    %192 = arith.negf %191 : vector<16x128xf32>
    %193 = math.exp %192 : vector<16x128xf32>
    %cst_60 = arith.constant 1.000000e+00 : f32
    %194 = vector.broadcast %cst_60 : f32 to vector<16x128xf32>
    %195 = arith.addf %194, %193 : vector<16x128xf32>
    %196 = arith.divf %194, %195 : vector<16x128xf32>
    %197 = vector.extract_strided_slice %184 {offsets = [0, 256], sizes = [16, 128], strides = [1, 1]} : vector<16x512xf32> to vector<16x128xf32>
    %198 = math.tanh %197 : vector<16x128xf32>
    %199 = vector.extract_strided_slice %184 {offsets = [0, 384], sizes = [16, 128], strides = [1, 1]} : vector<16x512xf32> to vector<16x128xf32>
    %200 = arith.negf %199 : vector<16x128xf32>
    %201 = math.exp %200 : vector<16x128xf32>
    %cst_61 = arith.constant 1.000000e+00 : f32
    %202 = vector.broadcast %cst_61 : f32 to vector<16x128xf32>
    %203 = arith.addf %202, %201 : vector<16x128xf32>
    %204 = arith.divf %202, %203 : vector<16x128xf32>
    %205 = arith.mulf %196, %178 : vector<16x128xf32>
    %206 = arith.mulf %190, %198 : vector<16x128xf32>
    %207 = arith.addf %205, %206 : vector<16x128xf32>
    %208 = math.tanh %207 : vector<16x128xf32>
    %209 = arith.mulf %204, %208 : vector<16x128xf32>
    %210 = arith.truncf %209 : vector<16x128xf32> to vector<16x128xbf16>
    %211 = arith.index_cast %c4_i32 : i32 to index
    %c0_62 = arith.constant 0 : index
    %c0_63 = arith.constant 0 : index
    %212 = vector.load %arg8[%211, %c0_62, %c0_63] : memref<8x16x128xbf16, #tpu.memory_space<vmem>>, vector<1x16x128xbf16>
    %213 = vector.shape_cast %212 : vector<1x16x128xbf16> to vector<16x128xbf16>
    %214 = vector.shape_cast %210 : vector<16x128xbf16> to vector<1x16x128xbf16>
    tpu.vector_store %arg8[%211, %c0_62, %c0_63], %214 {strides = array<i32>} : memref<8x16x128xbf16, #tpu.memory_space<vmem>>, vector<1x16x128xbf16>,
    %c8_i32_64 = arith.constant 8 : i32
    %215 = arith.muli %arg1, %c8_i32_64 : i32
    %216 = arith.addi %215, %c4_i32 : i32
    %c8_i32_65 = arith.constant 8 : i32
    %217 = arith.cmpi slt, %216, %c8_i32_65 : i32
    %218 = arith.select %217, %209, %177 : vector<16x128xf32>
    %219 = arith.select %217, %207, %178 : vector<16x128xf32>
    %c5_i32 = arith.constant 5 : i32
    %220 = arith.index_cast %c5_i32 : i32 to index
    %c0_66 = arith.constant 0 : index
    %c0_67 = arith.constant 0 : index
    %221 = vector.load %arg13[%220, %c0_66, %c0_67] : memref<8x16x512xf32, #tpu.memory_space<vmem>>, vector<1x16x512xf32>
    %222 = vector.shape_cast %221 : vector<1x16x512xf32> to vector<16x512xf32>
    %223 = arith.truncf %218 : vector<16x128xf32> to vector<16x128xbf16>
    %cst_68 = arith.constant dense<0.000000e+00> : vector<16x512xf32>
    %224 = tpu.matmul %223, %4, %cst_68 {dimension_numbers = #tpu.dot_dimension_numbers<[1], [0], [0], [1], [0, 0, 1, 1], [], []>} : vector<16x128xbf16>, vector<128x512xbf16>, vector<16x512xf32> -> vector<16x512xf32>
    %225 = arith.addf %222, %224 : vector<16x512xf32>
    %226 = vector.extract_strided_slice %225 {offsets = [0, 0], sizes = [16, 128], strides = [1, 1]} : vector<16x512xf32> to vector<16x128xf32>
    %227 = arith.negf %226 : vector<16x128xf32>
    %228 = math.exp %227 : vector<16x128xf32>
    %cst_69 = arith.constant 1.000000e+00 : f32
    %229 = vector.broadcast %cst_69 : f32 to vector<16x128xf32>
    %230 = arith.addf %229, %228 : vector<16x128xf32>
    %231 = arith.divf %229, %230 : vector<16x128xf32>
    %232 = vector.extract_strided_slice %225 {offsets = [0, 128], sizes = [16, 128], strides = [1, 1]} : vector<16x512xf32> to vector<16x128xf32>
    %233 = arith.negf %232 : vector<16x128xf32>
    %234 = math.exp %233 : vector<16x128xf32>
    %cst_70 = arith.constant 1.000000e+00 : f32
    %235 = vector.broadcast %cst_70 : f32 to vector<16x128xf32>
    %236 = arith.addf %235, %234 : vector<16x128xf32>
    %237 = arith.divf %235, %236 : vector<16x128xf32>
    %238 = vector.extract_strided_slice %225 {offsets = [0, 256], sizes = [16, 128], strides = [1, 1]} : vector<16x512xf32> to vector<16x128xf32>
    %239 = math.tanh %238 : vector<16x128xf32>
    %240 = vector.extract_strided_slice %225 {offsets = [0, 384], sizes = [16, 128], strides = [1, 1]} : vector<16x512xf32> to vector<16x128xf32>
    %241 = arith.negf %240 : vector<16x128xf32>
    %242 = math.exp %241 : vector<16x128xf32>
    %cst_71 = arith.constant 1.000000e+00 : f32
    %243 = vector.broadcast %cst_71 : f32 to vector<16x128xf32>
    %244 = arith.addf %243, %242 : vector<16x128xf32>
    %245 = arith.divf %243, %244 : vector<16x128xf32>
    %246 = arith.mulf %237, %219 : vector<16x128xf32>
    %247 = arith.mulf %231, %239 : vector<16x128xf32>
    %248 = arith.addf %246, %247 : vector<16x128xf32>
    %249 = math.tanh %248 : vector<16x128xf32>
    %250 = arith.mulf %245, %249 : vector<16x128xf32>
    %251 = arith.truncf %250 : vector<16x128xf32> to vector<16x128xbf16>
    %252 = arith.index_cast %c5_i32 : i32 to index
    %c0_72 = arith.constant 0 : index
    %c0_73 = arith.constant 0 : index
    %253 = vector.load %arg8[%252, %c0_72, %c0_73] : memref<8x16x128xbf16, #tpu.memory_space<vmem>>, vector<1x16x128xbf16>
    %254 = vector.shape_cast %253 : vector<1x16x128xbf16> to vector<16x128xbf16>
    %255 = vector.shape_cast %251 : vector<16x128xbf16> to vector<1x16x128xbf16>
    tpu.vector_store %arg8[%252, %c0_72, %c0_73], %255 {strides = array<i32>} : memref<8x16x128xbf16, #tpu.memory_space<vmem>>, vector<1x16x128xbf16>,
    %c8_i32_74 = arith.constant 8 : i32
    %256 = arith.muli %arg1, %c8_i32_74 : i32
    %257 = arith.addi %256, %c5_i32 : i32
    %c8_i32_75 = arith.constant 8 : i32
    %258 = arith.cmpi slt, %257, %c8_i32_75 : i32
    %259 = arith.select %258, %250, %218 : vector<16x128xf32>
    %260 = arith.select %258, %248, %219 : vector<16x128xf32>
    %c6_i32 = arith.constant 6 : i32
    %261 = arith.index_cast %c6_i32 : i32 to index
    %c0_76 = arith.constant 0 : index
    %c0_77 = arith.constant 0 : index
    %262 = vector.load %arg13[%261, %c0_76, %c0_77] : memref<8x16x512xf32, #tpu.memory_space<vmem>>, vector<1x16x512xf32>
    %263 = vector.shape_cast %262 : vector<1x16x512xf32> to vector<16x512xf32>
    %264 = arith.truncf %259 : vector<16x128xf32> to vector<16x128xbf16>
    %cst_78 = arith.constant dense<0.000000e+00> : vector<16x512xf32>
    %265 = tpu.matmul %264, %4, %cst_78 {dimension_numbers = #tpu.dot_dimension_numbers<[1], [0], [0], [1], [0, 0, 1, 1], [], []>} : vector<16x128xbf16>, vector<128x512xbf16>, vector<16x512xf32> -> vector<16x512xf32>
    %266 = arith.addf %263, %265 : vector<16x512xf32>
    %267 = vector.extract_strided_slice %266 {offsets = [0, 0], sizes = [16, 128], strides = [1, 1]} : vector<16x512xf32> to vector<16x128xf32>
    %268 = arith.negf %267 : vector<16x128xf32>
    %269 = math.exp %268 : vector<16x128xf32>
    %cst_79 = arith.constant 1.000000e+00 : f32
    %270 = vector.broadcast %cst_79 : f32 to vector<16x128xf32>
    %271 = arith.addf %270, %269 : vector<16x128xf32>
    %272 = arith.divf %270, %271 : vector<16x128xf32>
    %273 = vector.extract_strided_slice %266 {offsets = [0, 128], sizes = [16, 128], strides = [1, 1]} : vector<16x512xf32> to vector<16x128xf32>
    %274 = arith.negf %273 : vector<16x128xf32>
    %275 = math.exp %274 : vector<16x128xf32>
    %cst_80 = arith.constant 1.000000e+00 : f32
    %276 = vector.broadcast %cst_80 : f32 to vector<16x128xf32>
    %277 = arith.addf %276, %275 : vector<16x128xf32>
    %278 = arith.divf %276, %277 : vector<16x128xf32>
    %279 = vector.extract_strided_slice %266 {offsets = [0, 256], sizes = [16, 128], strides = [1, 1]} : vector<16x512xf32> to vector<16x128xf32>
    %280 = math.tanh %279 : vector<16x128xf32>
    %281 = vector.extract_strided_slice %266 {offsets = [0, 384], sizes = [16, 128], strides = [1, 1]} : vector<16x512xf32> to vector<16x128xf32>
    %282 = arith.negf %281 : vector<16x128xf32>
    %283 = math.exp %282 : vector<16x128xf32>
    %cst_81 = arith.constant 1.000000e+00 : f32
    %284 = vector.broadcast %cst_81 : f32 to vector<16x128xf32>
    %285 = arith.addf %284, %283 : vector<16x128xf32>
    %286 = arith.divf %284, %285 : vector<16x128xf32>
    %287 = arith.mulf %278, %260 : vector<16x128xf32>
    %288 = arith.mulf %272, %280 : vector<16x128xf32>
    %289 = arith.addf %287, %288 : vector<16x128xf32>
    %290 = math.tanh %289 : vector<16x128xf32>
    %291 = arith.mulf %286, %290 : vector<16x128xf32>
    %292 = arith.truncf %291 : vector<16x128xf32> to vector<16x128xbf16>
    %293 = arith.index_cast %c6_i32 : i32 to index
    %c0_82 = arith.constant 0 : index
    %c0_83 = arith.constant 0 : index
    %294 = vector.load %arg8[%293, %c0_82, %c0_83] : memref<8x16x128xbf16, #tpu.memory_space<vmem>>, vector<1x16x128xbf16>
    %295 = vector.shape_cast %294 : vector<1x16x128xbf16> to vector<16x128xbf16>
    %296 = vector.shape_cast %292 : vector<16x128xbf16> to vector<1x16x128xbf16>
    tpu.vector_store %arg8[%293, %c0_82, %c0_83], %296 {strides = array<i32>} : memref<8x16x128xbf16, #tpu.memory_space<vmem>>, vector<1x16x128xbf16>,
    %c8_i32_84 = arith.constant 8 : i32
    %297 = arith.muli %arg1, %c8_i32_84 : i32
    %298 = arith.addi %297, %c6_i32 : i32
    %c8_i32_85 = arith.constant 8 : i32
    %299 = arith.cmpi slt, %298, %c8_i32_85 : i32
    %300 = arith.select %299, %291, %259 : vector<16x128xf32>
    %301 = arith.select %299, %289, %260 : vector<16x128xf32>
    %c7_i32 = arith.constant 7 : i32
    %302 = arith.index_cast %c7_i32 : i32 to index
    %c0_86 = arith.constant 0 : index
    %c0_87 = arith.constant 0 : index
    %303 = vector.load %arg13[%302, %c0_86, %c0_87] : memref<8x16x512xf32, #tpu.memory_space<vmem>>, vector<1x16x512xf32>
    %304 = vector.shape_cast %303 : vector<1x16x512xf32> to vector<16x512xf32>
    %305 = arith.truncf %300 : vector<16x128xf32> to vector<16x128xbf16>
    %cst_88 = arith.constant dense<0.000000e+00> : vector<16x512xf32>
    %306 = tpu.matmul %305, %4, %cst_88 {dimension_numbers = #tpu.dot_dimension_numbers<[1], [0], [0], [1], [0, 0, 1, 1], [], []>} : vector<16x128xbf16>, vector<128x512xbf16>, vector<16x512xf32> -> vector<16x512xf32>
    %307 = arith.addf %304, %306 : vector<16x512xf32>
    %308 = vector.extract_strided_slice %307 {offsets = [0, 0], sizes = [16, 128], strides = [1, 1]} : vector<16x512xf32> to vector<16x128xf32>
    %309 = arith.negf %308 : vector<16x128xf32>
    %310 = math.exp %309 : vector<16x128xf32>
    %cst_89 = arith.constant 1.000000e+00 : f32
    %311 = vector.broadcast %cst_89 : f32 to vector<16x128xf32>
    %312 = arith.addf %311, %310 : vector<16x128xf32>
    %313 = arith.divf %311, %312 : vector<16x128xf32>
    %314 = vector.extract_strided_slice %307 {offsets = [0, 128], sizes = [16, 128], strides = [1, 1]} : vector<16x512xf32> to vector<16x128xf32>
    %315 = arith.negf %314 : vector<16x128xf32>
    %316 = math.exp %315 : vector<16x128xf32>
    %cst_90 = arith.constant 1.000000e+00 : f32
    %317 = vector.broadcast %cst_90 : f32 to vector<16x128xf32>
    %318 = arith.addf %317, %316 : vector<16x128xf32>
    %319 = arith.divf %317, %318 : vector<16x128xf32>
    %320 = vector.extract_strided_slice %307 {offsets = [0, 256], sizes = [16, 128], strides = [1, 1]} : vector<16x512xf32> to vector<16x128xf32>
    %321 = math.tanh %320 : vector<16x128xf32>
    %322 = vector.extract_strided_slice %307 {offsets = [0, 384], sizes = [16, 128], strides = [1, 1]} : vector<16x512xf32> to vector<16x128xf32>
    %323 = arith.negf %322 : vector<16x128xf32>
    %324 = math.exp %323 : vector<16x128xf32>
    %cst_91 = arith.constant 1.000000e+00 : f32
    %325 = vector.broadcast %cst_91 : f32 to vector<16x128xf32>
    %326 = arith.addf %325, %324 : vector<16x128xf32>
    %327 = arith.divf %325, %326 : vector<16x128xf32>
    %328 = arith.mulf %319, %301 : vector<16x128xf32>
    %329 = arith.mulf %313, %321 : vector<16x128xf32>
    %330 = arith.addf %328, %329 : vector<16x128xf32>
    %331 = math.tanh %330 : vector<16x128xf32>
    %332 = arith.mulf %327, %331 : vector<16x128xf32>
    %333 = arith.truncf %332 : vector<16x128xf32> to vector<16x128xbf16>
    %334 = arith.index_cast %c7_i32 : i32 to index
    %c0_92 = arith.constant 0 : index
    %c0_93 = arith.constant 0 : index
    %335 = vector.load %arg8[%334, %c0_92, %c0_93] : memref<8x16x128xbf16, #tpu.memory_space<vmem>>, vector<1x16x128xbf16>
    %336 = vector.shape_cast %335 : vector<1x16x128xbf16> to vector<16x128xbf16>
    %337 = vector.shape_cast %333 : vector<16x128xbf16> to vector<1x16x128xbf16>
    tpu.vector_store %arg8[%334, %c0_92, %c0_93], %337 {strides = array<i32>} : memref<8x16x128xbf16, #tpu.memory_space<vmem>>, vector<1x16x128xbf16>,
    %c8_i32_94 = arith.constant 8 : i32
    %338 = arith.muli %arg1, %c8_i32_94 : i32
    %339 = arith.addi %338, %c7_i32 : i32
    %c8_i32_95 = arith.constant 8 : i32
    %340 = arith.cmpi slt, %339, %c8_i32_95 : i32
    %341 = arith.select %340, %332, %300 : vector<16x128xf32>
    %342 = arith.select %340, %330, %301 : vector<16x128xf32>
    %c8_i32_96 = arith.constant 8 : i32
    %c0_97 = arith.constant 0 : index
    %c0_98 = arith.constant 0 : index
    %343 = vector.load %arg11[%c0_97, %c0_98] : memref<16x128xf32, #tpu.memory_space<vmem>>, vector<16x128xf32>
    tpu.vector_store %arg11[%c0_97, %c0_98], %341 {strides = array<i32>} : memref<16x128xf32, #tpu.memory_space<vmem>>, vector<16x128xf32>,
    %c0_99 = arith.constant 0 : index
    %c0_100 = arith.constant 0 : index
    %344 = vector.load %arg12[%c0_99, %c0_100] : memref<16x128xf32, #tpu.memory_space<vmem>>, vector<16x128xf32>
    tpu.vector_store %arg12[%c0_99, %c0_100], %342 {strides = array<i32>} : memref<16x128xf32, #tpu.memory_space<vmem>>, vector<16x128xf32>,
    %c0_i32_101 = arith.constant 0 : i32
    %345 = arith.cmpi eq, %arg1, %c0_i32_101 : i32
    %346 = arith.extui %345 : i1 to i32
    %c0_i32_102 = arith.constant 0 : i32
    %347 = arith.cmpi ne, %346, %c0_i32_102 : i32
    scf.if %347 {
      %c0_103 = arith.constant 0 : index
      %c0_104 = arith.constant 0 : index
      %348 = vector.load %arg9[%c0_103, %c0_104] : memref<16x128xf32, #tpu.memory_space<vmem>>, vector<16x128xf32>
      tpu.vector_store %arg9[%c0_103, %c0_104], %341 {strides = array<i32>} : memref<16x128xf32, #tpu.memory_space<vmem>>, vector<16x128xf32>,
      %c0_105 = arith.constant 0 : index
      %c0_106 = arith.constant 0 : index
      %349 = vector.load %arg10[%c0_105, %c0_106] : memref<16x128xf32, #tpu.memory_space<vmem>>, vector<16x128xf32>
      tpu.vector_store %arg10[%c0_105, %c0_106], %342 {strides = array<i32>} : memref<16x128xf32, #tpu.memory_space<vmem>>, vector<16x128xf32>,
    } else {
    }
    return
  }
  func.func @transform_0(%arg0: i32, %arg1: i32) -> (i32, i32, i32) {
    %c0_i32 = arith.constant 0 : i32
    %c0_i32_0 = arith.constant 0 : i32
    return %arg1, %arg0, %c0_i32 : i32, i32, i32
  }
  func.func @transform_1(%arg0: i32, %arg1: i32) -> (i32, i32) {
    %c0_i32 = arith.constant 0 : i32
    %c0_i32_0 = arith.constant 0 : i32
    return %arg0, %c0_i32 : i32, i32
  }
  func.func @transform_2(%arg0: i32, %arg1: i32) -> (i32, i32) {
    %c0_i32 = arith.constant 0 : i32
    %c0_i32_0 = arith.constant 0 : i32
    return %arg0, %c0_i32 : i32, i32
  }
  func.func @transform_3(%arg0: i32, %arg1: i32) -> (i32, i32) {
    %c0_i32 = arith.constant 0 : i32
    %c0_i32_0 = arith.constant 0 : i32
    %c0_i32_1 = arith.constant 0 : i32
    return %c0_i32, %c0_i32_0 : i32, i32
  }
  func.func @transform_4(%arg0: i32, %arg1: i32) -> (i32, i32) {
    %c0_i32 = arith.constant 0 : i32
    %c0_i32_0 = arith.constant 0 : i32
    %c0_i32_1 = arith.constant 0 : i32
    return %c0_i32, %c0_i32_0 : i32, i32
  }
  func.func @transform_5(%arg0: i32, %arg1: i32) -> (i32, i32) {
    %c0_i32 = arith.constant 0 : i32
    %c0_i32_0 = arith.constant 0 : i32
    %c0_i32_1 = arith.constant 0 : i32
    return %c0_i32, %c0_i32_0 : i32, i32
  }
  func.func @transform_6(%arg0: i32, %arg1: i32) -> (i32, i32, i32) {
    %c0_i32 = arith.constant 0 : i32
    %c0_i32_0 = arith.constant 0 : i32
    return %arg1, %arg0, %c0_i32 : i32, i32, i32
  }
  func.func @transform_7(%arg0: i32, %arg1: i32) -> (i32, i32) {
    %c0_i32 = arith.constant 0 : i32
    %c0_i32_0 = arith.constant 0 : i32
    return %arg0, %c0_i32 : i32, i32
  }
  func.func @transform_8(%arg0: i32, %arg1: i32) -> (i32, i32) {
    %c0_i32 = arith.constant 0 : i32
    %c0_i32_0 = arith.constant 0 : i32
    return %arg0, %c0_i32 : i32, i32
  }
}

module attributes {stable_mosaic.version = 11 : i64} {
  func.func @_lstm_rec_kernel(%arg0: i32, %arg1: i32, %arg2: memref<8x16x128xbf16, #tpu.memory_space<vmem>>, %arg3: memref<16x128xf32, #tpu.memory_space<vmem>>, %arg4: memref<16x128xf32, #tpu.memory_space<vmem>>, %arg5: memref<128x512xbf16, #tpu.memory_space<vmem>>, %arg6: memref<128x512xbf16, #tpu.memory_space<vmem>>, %arg7: memref<1x512xf32, #tpu.memory_space<vmem>>, %arg8: memref<8x16x128xbf16, #tpu.memory_space<vmem>>, %arg9: memref<16x128xf32, #tpu.memory_space<vmem>>, %arg10: memref<16x128xf32, #tpu.memory_space<vmem>>, %arg11: memref<16x128xf32, #tpu.memory_space<vmem>>, %arg12: memref<16x128xf32, #tpu.memory_space<vmem>>, %arg13: memref<8x16x512xf32, #tpu.memory_space<vmem>>) attributes {dimension_semantics = [#tpu.dimension_semantics<parallel>, #tpu.dimension_semantics<arbitrary>], iteration_bounds = array<i64: 1, 1>, scalar_prefetch = 0 : i64, scratch_operands = 3 : i64, tpu.core_type = #tpu.core_type<tc>, window_params = [{transform_indices = @transform_0, window_bounds = array<i64: 8, 16, 128>}, {transform_indices = @transform_1, window_bounds = array<i64: 16, 128>}, {transform_indices = @transform_2, window_bounds = array<i64: 16, 128>}, {pipeline_mode = #tpu.pipeline_mode<synchronous>, transform_indices = @transform_3, window_bounds = array<i64: 128, 512>}, {pipeline_mode = #tpu.pipeline_mode<synchronous>, transform_indices = @transform_4, window_bounds = array<i64: 128, 512>}, {pipeline_mode = #tpu.pipeline_mode<synchronous>, transform_indices = @transform_5, window_bounds = array<i64: 1, 512>}, {transform_indices = @transform_6, window_bounds = array<i64: 8, 16, 128>}, {transform_indices = @transform_7, window_bounds = array<i64: 16, 128>}, {transform_indices = @transform_8, window_bounds = array<i64: 16, 128>}]} {
    %c0_i32 = arith.constant 0 : i32
    %0 = arith.cmpi eq, %arg1, %c0_i32 : i32
    %1 = arith.extui %0 : i1 to i32
    %c0_i32_0 = arith.constant 0 : i32
    %2 = arith.cmpi ne, %1, %c0_i32_0 : i32
    scf.if %2 {
      %c0_103 = arith.constant 0 : index
      %c0_104 = arith.constant 0 : index
      %348 = vector.load %arg3[%c0_103, %c0_104] : memref<16x128xf32, #tpu.memory_space<vmem>>, vector<16x128xf32>
      %c0_105 = arith.constant 0 : index
      %c0_106 = arith.constant 0 : index
      %349 = vector.load %arg11[%c0_105, %c0_106] : memref<16x128xf32, #tpu.memory_space<vmem>>, vector<16x128xf32>
      tpu.vector_store %arg11[%c0_105, %c0_106], %348 {strides = array<i32>} : memref<16x128xf32, #tpu.memory_space<vmem>>, vector<16x128xf32>,
      %c0_107 = arith.constant 0 : index
      %c0_108 = arith.constant 0 : index
      %350 = vector.load %arg4[%c0_107, %c0_108] : memref<16x128xf32, #tpu.memory_space<vmem>>, vector<16x128xf32>
      %c0_109 = arith.constant 0 : index
      %c0_110 = arith.constant 0 : index
      %351 = vector.load %arg12[%c0_109, %c0_110] : memref<16x128xf32, #tpu.memory_space<vmem>>, vector<16x128xf32>
      tpu.vector_store %arg12[%c0_109, %c0_110], %350 {strides = array<i32>} : memref<16x128xf32, #tpu.memory_space<vmem>>, vector<16x128xf32>,
    } else {
    }
    %c0 = arith.constant 0 : index
    %c0_1 = arith.constant 0 : index
    %3 = vector.load %arg5[%c0, %c0_1] : memref<128x512xbf16, #tpu.memory_space<vmem>>, vector<128x512xbf16>
    %c0_2 = arith.constant 0 : index
    %c0_3 = arith.constant 0 : index
    %4 = vector.load %arg6[%c0_2, %c0_3] : memref<128x512xbf16, #tpu.memory_space<vmem>>, vector<128x512xbf16>
    %c0_4 = arith.constant 0 : index
    %c0_5 = arith.constant 0 : index
    %5 = vector.load %arg7[%c0_4, %c0_5] : memref<1x512xf32, #tpu.memory_space<vmem>>, vector<1x512xf32>
    %c0_6 = arith.constant 0 : index
    %c0_7 = arith.constant 0 : index
    %c0_8 = arith.constant 0 : index
    %6 = vector.load %arg2[%c0_6, %c0_7, %c0_8] : memref<8x16x128xbf16, #tpu.memory_space<vmem>>, vector<8x16x128xbf16>
    %7 = vector.shape_cast %6 : vector<8x16x128xbf16> to vector<128x128xbf16>
    %cst = arith.constant dense<0.000000e+00> : vector<128x512xf32>
    %8 = tpu.matmul %7, %3, %cst {dimension_numbers = #tpu.dot_dimension_numbers<[1], [0], [0], [1], [0, 0, 1, 1], [], []>} : vector<128x128xbf16>, vector<128x512xbf16>, vector<128x512xf32> -> vector<128x512xf32>
    %9 = vector.broadcast %5 : vector<1x512xf32> to vector<128x512xf32>
    %10 = arith.addf %8, %9 : vector<128x512xf32>
    %11 = vector.shape_cast %10 : vector<128x512xf32> to vector<8x16x512xf32>
    %c0_9 = arith.constant 0 : index
    %c0_10 = arith.constant 0 : index
    %c0_11 = arith.constant 0 : index
    %12 = vector.load %arg13[%c0_9, %c0_10, %c0_11] : memref<8x16x512xf32, #tpu.memory_space<vmem>>, vector<8x16x512xf32>
    tpu.vector_store %arg13[%c0_9, %c0_10, %c0_11], %11 {strides = array<i32>} : memref<8x16x512xf32, #tpu.memory_space<vmem>>, vector<8x16x512xf32>,
    %c0_12 = arith.constant 0 : index
    %c0_13 = arith.constant 0 : index
    %13 = vector.load %arg11[%c0_12, %c0_13] : memref<16x128xf32, #tpu.memory_space<vmem>>, vector<16x128xf32>
    %c0_14 = arith.constant 0 : index
    %c0_15 = arith.constant 0 : index
    %14 = vector.load %arg12[%c0_14, %c0_15] : memref<16x128xf32, #tpu.memory_space<vmem>>, vector<16x128xf32>
    %c0_i32_16 = arith.constant 0 : i32
    %15 = arith.index_cast %c0_i32_16 : i32 to index
    %c0_17 = arith.constant 0 : index
    %c0_18 = arith.constant 0 : index
    %16 = vector.load %arg13[%15, %c0_17, %c0_18] : memref<8x16x512xf32, #tpu.memory_space<vmem>>, vector<1x16x512xf32>
    %17 = vector.shape_cast %16 : vector<1x16x512xf32> to vector<16x512xf32>
    %18 = arith.truncf %13 : vector<16x128xf32> to vector<16x128xbf16>
    %cst_19 = arith.constant dense<0.000000e+00> : vector<16x512xf32>
    %19 = tpu.matmul %18, %4, %cst_19 {dimension_numbers = #tpu.dot_dimension_numbers<[1], [0], [0], [1], [0, 0, 1, 1], [], []>} : vector<16x128xbf16>, vector<128x512xbf16>, vector<16x512xf32> -> vector<16x512xf32>
    %20 = arith.addf %17, %19 : vector<16x512xf32>
    %21 = vector.extract_strided_slice %20 {offsets = [0, 0], sizes = [16, 128], strides = [1, 1]} : vector<16x512xf32> to vector<16x128xf32>
    %22 = arith.negf %21 : vector<16x128xf32>
    %23 = math.exp %22 : vector<16x128xf32>
    %cst_20 = arith.constant 1.000000e+00 : f32
    %24 = vector.broadcast %cst_20 : f32 to vector<16x128xf32>
    %25 = arith.addf %24, %23 : vector<16x128xf32>
    %26 = arith.divf %24, %25 : vector<16x128xf32>
    %27 = vector.extract_strided_slice %20 {offsets = [0, 128], sizes = [16, 128], strides = [1, 1]} : vector<16x512xf32> to vector<16x128xf32>
    %28 = arith.negf %27 : vector<16x128xf32>
    %29 = math.exp %28 : vector<16x128xf32>
    %cst_21 = arith.constant 1.000000e+00 : f32
    %30 = vector.broadcast %cst_21 : f32 to vector<16x128xf32>
    %31 = arith.addf %30, %29 : vector<16x128xf32>
    %32 = arith.divf %30, %31 : vector<16x128xf32>
    %33 = vector.extract_strided_slice %20 {offsets = [0, 256], sizes = [16, 128], strides = [1, 1]} : vector<16x512xf32> to vector<16x128xf32>
    %34 = math.tanh %33 : vector<16x128xf32>
    %35 = vector.extract_strided_slice %20 {offsets = [0, 384], sizes = [16, 128], strides = [1, 1]} : vector<16x512xf32> to vector<16x128xf32>
    %36 = arith.negf %35 : vector<16x128xf32>
    %37 = math.exp %36 : vector<16x128xf32>
    %cst_22 = arith.constant 1.000000e+00 : f32
    %38 = vector.broadcast %cst_22 : f32 to vector<16x128xf32>
    %39 = arith.addf %38, %37 : vector<16x128xf32>
    %40 = arith.divf %38, %39 : vector<16x128xf32>
    %41 = arith.mulf %32, %14 : vector<16x128xf32>
    %42 = arith.mulf %26, %34 : vector<16x128xf32>
    %43 = arith.addf %41, %42 : vector<16x128xf32>
    %44 = math.tanh %43 : vector<16x128xf32>
    %45 = arith.mulf %40, %44 : vector<16x128xf32>
    %46 = arith.truncf %45 : vector<16x128xf32> to vector<16x128xbf16>
    %47 = arith.index_cast %c0_i32_16 : i32 to index
    %c0_23 = arith.constant 0 : index
    %c0_24 = arith.constant 0 : index
    %48 = vector.load %arg8[%47, %c0_23, %c0_24] : memref<8x16x128xbf16, #tpu.memory_space<vmem>>, vector<1x16x128xbf16>
    %49 = vector.shape_cast %48 : vector<1x16x128xbf16> to vector<16x128xbf16>
    %50 = vector.shape_cast %46 : vector<16x128xbf16> to vector<1x16x128xbf16>
    tpu.vector_store %arg8[%47, %c0_23, %c0_24], %50 {strides = array<i32>} : memref<8x16x128xbf16, #tpu.memory_space<vmem>>, vector<1x16x128xbf16>,
    %c8_i32 = arith.constant 8 : i32
    %51 = arith.muli %arg1, %c8_i32 : i32
    %52 = arith.addi %51, %c0_i32_16 : i32
    %c8_i32_25 = arith.constant 8 : i32
    %53 = arith.cmpi slt, %52, %c8_i32_25 : i32
    %54 = arith.select %53, %45, %13 : vector<16x128xf32>
    %55 = arith.select %53, %43, %14 : vector<16x128xf32>
    %c1_i32 = arith.constant 1 : i32
    %56 = arith.index_cast %c1_i32 : i32 to index
    %c0_26 = arith.constant 0 : index
    %c0_27 = arith.constant 0 : index
    %57 = vector.load %arg13[%56, %c0_26, %c0_27] : memref<8x16x512xf32, #tpu.memory_space<vmem>>, vector<1x16x512xf32>
    %58 = vector.shape_cast %57 : vector<1x16x512xf32> to vector<16x512xf32>
    %59 = arith.truncf %54 : vector<16x128xf32> to vector<16x128xbf16>
    %cst_28 = arith.constant dense<0.000000e+00> : vector<16x512xf32>
    %60 = tpu.matmul %59, %4, %cst_28 {dimension_numbers = #tpu.dot_dimension_numbers<[1], [0], [0], [1], [0, 0, 1, 1], [], []>} : vector<16x128xbf16>, vector<128x512xbf16>, vector<16x512xf32> -> vector<16x512xf32>
    %61 = arith.addf %58, %60 : vector<16x512xf32>
    %62 = vector.extract_strided_slice %61 {offsets = [0, 0], sizes = [16, 128], strides = [1, 1]} : vector<16x512xf32> to vector<16x128xf32>
    %63 = arith.negf %62 : vector<16x128xf32>
    %64 = math.exp %63 : vector<16x128xf32>
    %cst_29 = arith.constant 1.000000e+00 : f32
    %65 = vector.broadcast %cst_29 : f32 to vector<16x128xf32>
    %66 = arith.addf %65, %64 : vector<16x128xf32>
    %67 = arith.divf %65, %66 : vector<16x128xf32>
    %68 = vector.extract_strided_slice %61 {offsets = [0, 128], sizes = [16, 128], strides = [1, 1]} : vector<16x512xf32> to vector<16x128xf32>
    %69 = arith.negf %68 : vector<16x128xf32>
    %70 = math.exp %69 : vector<16x128xf32>
    %cst_30 = arith.constant 1.000000e+00 : f32
    %71 = vector.broadcast %cst_30 : f32 to vector<16x128xf32>
    %72 = arith.addf %71, %70 : vector<16x128xf32>
    %73 = arith.divf %71, %72 : vector<16x128xf32>
    %74 = vector.extract_strided_slice %61 {offsets = [0, 256], sizes = [16, 128], strides = [1, 1]} : vector<16x512xf32> to vector<16x128xf32>
    %75 = math.tanh %74 : vector<16x128xf32>
    %76 = vector.extract_strided_slice %61 {offsets = [0, 384], sizes = [16, 128], strides = [1, 1]} : vector<16x512xf32> to vector<16x128xf32>
    %77 = arith.negf %76 : vector<16x128xf32>
    %78 = math.exp %77 : vector<16x128xf32>
    %cst_31 = arith.constant 1.000000e+00 : f32
    %79 = vector.broadcast %cst_31 : f32 to vector<16x128xf32>
    %80 = arith.addf %79, %78 : vector<16x128xf32>
    %81 = arith.divf %79, %80 : vector<16x128xf32>
    %82 = arith.mulf %73, %55 : vector<16x128xf32>
    %83 = arith.mulf %67, %75 : vector<16x128xf32>
    %84 = arith.addf %82, %83 : vector<16x128xf32>
    %85 = math.tanh %84 : vector<16x128xf32>
    %86 = arith.mulf %81, %85 : vector<16x128xf32>
    %87 = arith.truncf %86 : vector<16x128xf32> to vector<16x128xbf16>
    %88 = arith.index_cast %c1_i32 : i32 to index
    %c0_32 = arith.constant 0 : index
    %c0_33 = arith.constant 0 : index
    %89 = vector.load %arg8[%88, %c0_32, %c0_33] : memref<8x16x128xbf16, #tpu.memory_space<vmem>>, vector<1x16x128xbf16>
    %90 = vector.shape_cast %89 : vector<1x16x128xbf16> to vector<16x128xbf16>
    %91 = vector.shape_cast %87 : vector<16x128xbf16> to vector<1x16x128xbf16>
    tpu.vector_store %arg8[%88, %c0_32, %c0_33], %91 {strides = array<i32>} : memref<8x16x128xbf16, #tpu.memory_space<vmem>>, vector<1x16x128xbf16>,
    %c8_i32_34 = arith.constant 8 : i32
    %92 = arith.muli %arg1, %c8_i32_34 : i32
    %93 = arith.addi %92, %c1_i32 : i32
    %c8_i32_35 = arith.constant 8 : i32
    %94 = arith.cmpi slt, %93, %c8_i32_35 : i32
    %95 = arith.select %94, %86, %54 : vector<16x128xf32>
    %96 = arith.select %94, %84, %55 : vector<16x128xf32>
    %c2_i32 = arith.constant 2 : i32
    %97 = arith.index_cast %c2_i32 : i32 to index
    %c0_36 = arith.constant 0 : index
    %c0_37 = arith.constant 0 : index
    %98 = vector.load %arg13[%97, %c0_36, %c0_37] : memref<8x16x512xf32, #tpu.memory_space<vmem>>, vector<1x16x512xf32>
    %99 = vector.shape_cast %98 : vector<1x16x512xf32> to vector<16x512xf32>
    %100 = arith.truncf %95 : vector<16x128xf32> to vector<16x128xbf16>
    %cst_38 = arith.constant dense<0.000000e+00> : vector<16x512xf32>
    %101 = tpu.matmul %100, %4, %cst_38 {dimension_numbers = #tpu.dot_dimension_numbers<[1], [0], [0], [1], [0, 0, 1, 1], [], []>} : vector<16x128xbf16>, vector<128x512xbf16>, vector<16x512xf32> -> vector<16x512xf32>
    %102 = arith.addf %99, %101 : vector<16x512xf32>
    %103 = vector.extract_strided_slice %102 {offsets = [0, 0], sizes = [16, 128], strides = [1, 1]} : vector<16x512xf32> to vector<16x128xf32>
    %104 = arith.negf %103 : vector<16x128xf32>
    %105 = math.exp %104 : vector<16x128xf32>
    %cst_39 = arith.constant 1.000000e+00 : f32
    %106 = vector.broadcast %cst_39 : f32 to vector<16x128xf32>
    %107 = arith.addf %106, %105 : vector<16x128xf32>
    %108 = arith.divf %106, %107 : vector<16x128xf32>
    %109 = vector.extract_strided_slice %102 {offsets = [0, 128], sizes = [16, 128], strides = [1, 1]} : vector<16x512xf32> to vector<16x128xf32>
    %110 = arith.negf %109 : vector<16x128xf32>
    %111 = math.exp %110 : vector<16x128xf32>
    %cst_40 = arith.constant 1.000000e+00 : f32
    %112 = vector.broadcast %cst_40 : f32 to vector<16x128xf32>
    %113 = arith.addf %112, %111 : vector<16x128xf32>
    %114 = arith.divf %112, %113 : vector<16x128xf32>
    %115 = vector.extract_strided_slice %102 {offsets = [0, 256], sizes = [16, 128], strides = [1, 1]} : vector<16x512xf32> to vector<16x128xf32>
    %116 = math.tanh %115 : vector<16x128xf32>
    %117 = vector.extract_strided_slice %102 {offsets = [0, 384], sizes = [16, 128], strides = [1, 1]} : vector<16x512xf32> to vector<16x128xf32>
    %118 = arith.negf %117 : vector<16x128xf32>
    %119 = math.exp %118 : vector<16x128xf32>
    %cst_41 = arith.constant 1.000000e+00 : f32
    %120 = vector.broadcast %cst_41 : f32 to vector<16x128xf32>
    %121 = arith.addf %120, %119 : vector<16x128xf32>
    %122 = arith.divf %120, %121 : vector<16x128xf32>
    %123 = arith.mulf %114, %96 : vector<16x128xf32>
    %124 = arith.mulf %108, %116 : vector<16x128xf32>
    %125 = arith.addf %123, %124 : vector<16x128xf32>
    %126 = math.tanh %125 : vector<16x128xf32>
    %127 = arith.mulf %122, %126 : vector<16x128xf32>
    %128 = arith.truncf %127 : vector<16x128xf32> to vector<16x128xbf16>
    %129 = arith.index_cast %c2_i32 : i32 to index
    %c0_42 = arith.constant 0 : index
    %c0_43 = arith.constant 0 : index
    %130 = vector.load %arg8[%129, %c0_42, %c0_43] : memref<8x16x128xbf16, #tpu.memory_space<vmem>>, vector<1x16x128xbf16>
    %131 = vector.shape_cast %130 : vector<1x16x128xbf16> to vector<16x128xbf16>
    %132 = vector.shape_cast %128 : vector<16x128xbf16> to vector<1x16x128xbf16>
    tpu.vector_store %arg8[%129, %c0_42, %c0_43], %132 {strides = array<i32>} : memref<8x16x128xbf16, #tpu.memory_space<vmem>>, vector<1x16x128xbf16>,
    %c8_i32_44 = arith.constant 8 : i32
    %133 = arith.muli %arg1, %c8_i32_44 : i32
    %134 = arith.addi %133, %c2_i32 : i32
    %c8_i32_45 = arith.constant 8 : i32
    %135 = arith.cmpi slt, %134, %c8_i32_45 : i32
    %136 = arith.select %135, %127, %95 : vector<16x128xf32>
    %137 = arith.select %135, %125, %96 : vector<16x128xf32>
    %c3_i32 = arith.constant 3 : i32
    %138 = arith.index_cast %c3_i32 : i32 to index
    %c0_46 = arith.constant 0 : index
    %c0_47 = arith.constant 0 : index
    %139 = vector.load %arg13[%138, %c0_46, %c0_47] : memref<8x16x512xf32, #tpu.memory_space<vmem>>, vector<1x16x512xf32>
    %140 = vector.shape_cast %139 : vector<1x16x512xf32> to vector<16x512xf32>
    %141 = arith.truncf %136 : vector<16x128xf32> to vector<16x128xbf16>
    %cst_48 = arith.constant dense<0.000000e+00> : vector<16x512xf32>
    %142 = tpu.matmul %141, %4, %cst_48 {dimension_numbers = #tpu.dot_dimension_numbers<[1], [0], [0], [1], [0, 0, 1, 1], [], []>} : vector<16x128xbf16>, vector<128x512xbf16>, vector<16x512xf32> -> vector<16x512xf32>
    %143 = arith.addf %140, %142 : vector<16x512xf32>
    %144 = vector.extract_strided_slice %143 {offsets = [0, 0], sizes = [16, 128], strides = [1, 1]} : vector<16x512xf32> to vector<16x128xf32>
    %145 = arith.negf %144 : vector<16x128xf32>
    %146 = math.exp %145 : vector<16x128xf32>
    %cst_49 = arith.constant 1.000000e+00 : f32
    %147 = vector.broadcast %cst_49 : f32 to vector<16x128xf32>
    %148 = arith.addf %147, %146 : vector<16x128xf32>
    %149 = arith.divf %147, %148 : vector<16x128xf32>
    %150 = vector.extract_strided_slice %143 {offsets = [0, 128], sizes = [16, 128], strides = [1, 1]} : vector<16x512xf32> to vector<16x128xf32>
    %151 = arith.negf %150 : vector<16x128xf32>
    %152 = math.exp %151 : vector<16x128xf32>
    %cst_50 = arith.constant 1.000000e+00 : f32
    %153 = vector.broadcast %cst_50 : f32 to vector<16x128xf32>
    %154 = arith.addf %153, %152 : vector<16x128xf32>
    %155 = arith.divf %153, %154 : vector<16x128xf32>
    %156 = vector.extract_strided_slice %143 {offsets = [0, 256], sizes = [16, 128], strides = [1, 1]} : vector<16x512xf32> to vector<16x128xf32>
    %157 = math.tanh %156 : vector<16x128xf32>
    %158 = vector.extract_strided_slice %143 {offsets = [0, 384], sizes = [16, 128], strides = [1, 1]} : vector<16x512xf32> to vector<16x128xf32>
    %159 = arith.negf %158 : vector<16x128xf32>
    %160 = math.exp %159 : vector<16x128xf32>
    %cst_51 = arith.constant 1.000000e+00 : f32
    %161 = vector.broadcast %cst_51 : f32 to vector<16x128xf32>
    %162 = arith.addf %161, %160 : vector<16x128xf32>
    %163 = arith.divf %161, %162 : vector<16x128xf32>
    %164 = arith.mulf %155, %137 : vector<16x128xf32>
    %165 = arith.mulf %149, %157 : vector<16x128xf32>
    %166 = arith.addf %164, %165 : vector<16x128xf32>
    %167 = math.tanh %166 : vector<16x128xf32>
    %168 = arith.mulf %163, %167 : vector<16x128xf32>
    %169 = arith.truncf %168 : vector<16x128xf32> to vector<16x128xbf16>
    %170 = arith.index_cast %c3_i32 : i32 to index
    %c0_52 = arith.constant 0 : index
    %c0_53 = arith.constant 0 : index
    %171 = vector.load %arg8[%170, %c0_52, %c0_53] : memref<8x16x128xbf16, #tpu.memory_space<vmem>>, vector<1x16x128xbf16>
    %172 = vector.shape_cast %171 : vector<1x16x128xbf16> to vector<16x128xbf16>
    %173 = vector.shape_cast %169 : vector<16x128xbf16> to vector<1x16x128xbf16>
    tpu.vector_store %arg8[%170, %c0_52, %c0_53], %173 {strides = array<i32>} : memref<8x16x128xbf16, #tpu.memory_space<vmem>>, vector<1x16x128xbf16>,
    %c8_i32_54 = arith.constant 8 : i32
    %174 = arith.muli %arg1, %c8_i32_54 : i32
    %175 = arith.addi %174, %c3_i32 : i32
    %c8_i32_55 = arith.constant 8 : i32
    %176 = arith.cmpi slt, %175, %c8_i32_55 : i32
    %177 = arith.select %176, %168, %136 : vector<16x128xf32>
    %178 = arith.select %176, %166, %137 : vector<16x128xf32>
    %c4_i32 = arith.constant 4 : i32
    %179 = arith.index_cast %c4_i32 : i32 to index
    %c0_56 = arith.constant 0 : index
    %c0_57 = arith.constant 0 : index
    %180 = vector.load %arg13[%179, %c0_56, %c0_57] : memref<8x16x512xf32, #tpu.memory_space<vmem>>, vector<1x16x512xf32>
    %181 = vector.shape_cast %180 : vector<1x16x512xf32> to vector<16x512xf32>
    %182 = arith.truncf %177 : vector<16x128xf32> to vector<16x128xbf16>
    %cst_58 = arith.constant dense<0.000000e+00> : vector<16x512xf32>
    %183 = tpu.matmul %182, %4, %cst_58 {dimension_numbers = #tpu.dot_dimension_numbers<[1], [0], [0], [1], [0, 0, 1, 1], [], []>} : vector<16x128xbf16>, vector<128x512xbf16>, vector<16x512xf32> -> vector<16x512xf32>
    %184 = arith.addf %181, %183 : vector<16x512xf32>
    %185 = vector.extract_strided_slice %184 {offsets = [0, 0], sizes = [16, 128], strides = [1, 1]} : vector<16x512xf32> to vector<16x128xf32>
    %186 = arith.negf %185 : vector<16x128xf32>
    %187 = math.exp %186 : vector<16x128xf32>
    %cst_59 = arith.constant 1.000000e+00 : f32
    %188 = vector.broadcast %cst_59 : f32 to vector<16x128xf32>
    %189 = arith.addf %188, %187 : vector<16x128xf32>
    %190 = arith.divf %188, %189 : vector<16x128xf32>
    %191 = vector.extract_strided_slice %184 {offsets = [0, 128], sizes = [16, 128], strides = [1, 1]} : vector<16x512xf32> to vector<16x128xf32>
    %192 = arith.negf %191 : vector<16x128xf32>
    %193 = math.exp %192 : vector<16x128xf32>
    %cst_60 = arith.constant 1.000000e+00 : f32
    %194 = vector.broadcast %cst_60 : f32 to vector<16x128xf32>
    %195 = arith.addf %194, %193 : vector<16x128xf32>
    %196 = arith.divf %194, %195 : vector<16x128xf32>
    %197 = vector.extract_strided_slice %184 {offsets = [0, 256], sizes = [16, 128], strides = [1, 1]} : vector<16x512xf32> to vector<16x128xf32>
    %198 = math.tanh %197 : vector<16x128xf32>
    %199 = vector.extract_strided_slice %184 {offsets = [0, 384], sizes = [16, 128], strides = [1, 1]} : vector<16x512xf32> to vector<16x128xf32>
    %200 = arith.negf %199 : vector<16x128xf32>
    %201 = math.exp %200 : vector<16x128xf32>
    %cst_61 = arith.constant 1.000000e+00 : f32
    %202 = vector.broadcast %cst_61 : f32 to vector<16x128xf32>
    %203 = arith.addf %202, %201 : vector<16x128xf32>
    %204 = arith.divf %202, %203 : vector<16x128xf32>
    %205 = arith.mulf %196, %178 : vector<16x128xf32>
    %206 = arith.mulf %190, %198 : vector<16x128xf32>
    %207 = arith.addf %205, %206 : vector<16x128xf32>
    %208 = math.tanh %207 : vector<16x128xf32>
    %209 = arith.mulf %204, %208 : vector<16x128xf32>
    %210 = arith.truncf %209 : vector<16x128xf32> to vector<16x128xbf16>
    %211 = arith.index_cast %c4_i32 : i32 to index
    %c0_62 = arith.constant 0 : index
    %c0_63 = arith.constant 0 : index
    %212 = vector.load %arg8[%211, %c0_62, %c0_63] : memref<8x16x128xbf16, #tpu.memory_space<vmem>>, vector<1x16x128xbf16>
    %213 = vector.shape_cast %212 : vector<1x16x128xbf16> to vector<16x128xbf16>
    %214 = vector.shape_cast %210 : vector<16x128xbf16> to vector<1x16x128xbf16>
    tpu.vector_store %arg8[%211, %c0_62, %c0_63], %214 {strides = array<i32>} : memref<8x16x128xbf16, #tpu.memory_space<vmem>>, vector<1x16x128xbf16>,
    %c8_i32_64 = arith.constant 8 : i32
    %215 = arith.muli %arg1, %c8_i32_64 : i32
    %216 = arith.addi %215, %c4_i32 : i32
    %c8_i32_65 = arith.constant 8 : i32
    %217 = arith.cmpi slt, %216, %c8_i32_65 : i32
    %218 = arith.select %217, %209, %177 : vector<16x128xf32>
    %219 = arith.select %217, %207, %178 : vector<16x128xf32>
    %c5_i32 = arith.constant 5 : i32
    %220 = arith.index_cast %c5_i32 : i32 to index
    %c0_66 = arith.constant 0 : index
    %c0_67 = arith.constant 0 : index
    %221 = vector.load %arg13[%220, %c0_66, %c0_67] : memref<8x16x512xf32, #tpu.memory_space<vmem>>, vector<1x16x512xf32>
    %222 = vector.shape_cast %221 : vector<1x16x512xf32> to vector<16x512xf32>
    %223 = arith.truncf %218 : vector<16x128xf32> to vector<16x128xbf16>
    %cst_68 = arith.constant dense<0.000000e+00> : vector<16x512xf32>
    %224 = tpu.matmul %223, %4, %cst_68 {dimension_numbers = #tpu.dot_dimension_numbers<[1], [0], [0], [1], [0, 0, 1, 1], [], []>} : vector<16x128xbf16>, vector<128x512xbf16>, vector<16x512xf32> -> vector<16x512xf32>
    %225 = arith.addf %222, %224 : vector<16x512xf32>
    %226 = vector.extract_strided_slice %225 {offsets = [0, 0], sizes = [16, 128], strides = [1, 1]} : vector<16x512xf32> to vector<16x128xf32>
    %227 = arith.negf %226 : vector<16x128xf32>
    %228 = math.exp %227 : vector<16x128xf32>
    %cst_69 = arith.constant 1.000000e+00 : f32
    %229 = vector.broadcast %cst_69 : f32 to vector<16x128xf32>
    %230 = arith.addf %229, %228 : vector<16x128xf32>
    %231 = arith.divf %229, %230 : vector<16x128xf32>
    %232 = vector.extract_strided_slice %225 {offsets = [0, 128], sizes = [16, 128], strides = [1, 1]} : vector<16x512xf32> to vector<16x128xf32>
    %233 = arith.negf %232 : vector<16x128xf32>
    %234 = math.exp %233 : vector<16x128xf32>
    %cst_70 = arith.constant 1.000000e+00 : f32
    %235 = vector.broadcast %cst_70 : f32 to vector<16x128xf32>
    %236 = arith.addf %235, %234 : vector<16x128xf32>
    %237 = arith.divf %235, %236 : vector<16x128xf32>
    %238 = vector.extract_strided_slice %225 {offsets = [0, 256], sizes = [16, 128], strides = [1, 1]} : vector<16x512xf32> to vector<16x128xf32>
    %239 = math.tanh %238 : vector<16x128xf32>
    %240 = vector.extract_strided_slice %225 {offsets = [0, 384], sizes = [16, 128], strides = [1, 1]} : vector<16x512xf32> to vector<16x128xf32>
    %241 = arith.negf %240 : vector<16x128xf32>
    %242 = math.exp %241 : vector<16x128xf32>
    %cst_71 = arith.constant 1.000000e+00 : f32
    %243 = vector.broadcast %cst_71 : f32 to vector<16x128xf32>
    %244 = arith.addf %243, %242 : vector<16x128xf32>
    %245 = arith.divf %243, %244 : vector<16x128xf32>
    %246 = arith.mulf %237, %219 : vector<16x128xf32>
    %247 = arith.mulf %231, %239 : vector<16x128xf32>
    %248 = arith.addf %246, %247 : vector<16x128xf32>
    %249 = math.tanh %248 : vector<16x128xf32>
    %250 = arith.mulf %245, %249 : vector<16x128xf32>
    %251 = arith.truncf %250 : vector<16x128xf32> to vector<16x128xbf16>
    %252 = arith.index_cast %c5_i32 : i32 to index
    %c0_72 = arith.constant 0 : index
    %c0_73 = arith.constant 0 : index
    %253 = vector.load %arg8[%252, %c0_72, %c0_73] : memref<8x16x128xbf16, #tpu.memory_space<vmem>>, vector<1x16x128xbf16>
    %254 = vector.shape_cast %253 : vector<1x16x128xbf16> to vector<16x128xbf16>
    %255 = vector.shape_cast %251 : vector<16x128xbf16> to vector<1x16x128xbf16>
    tpu.vector_store %arg8[%252, %c0_72, %c0_73], %255 {strides = array<i32>} : memref<8x16x128xbf16, #tpu.memory_space<vmem>>, vector<1x16x128xbf16>,
    %c8_i32_74 = arith.constant 8 : i32
    %256 = arith.muli %arg1, %c8_i32_74 : i32
    %257 = arith.addi %256, %c5_i32 : i32
    %c8_i32_75 = arith.constant 8 : i32
    %258 = arith.cmpi slt, %257, %c8_i32_75 : i32
    %259 = arith.select %258, %250, %218 : vector<16x128xf32>
    %260 = arith.select %258, %248, %219 : vector<16x128xf32>
    %c6_i32 = arith.constant 6 : i32
    %261 = arith.index_cast %c6_i32 : i32 to index
    %c0_76 = arith.constant 0 : index
    %c0_77 = arith.constant 0 : index
    %262 = vector.load %arg13[%261, %c0_76, %c0_77] : memref<8x16x512xf32, #tpu.memory_space<vmem>>, vector<1x16x512xf32>
    %263 = vector.shape_cast %262 : vector<1x16x512xf32> to vector<16x512xf32>
    %264 = arith.truncf %259 : vector<16x128xf32> to vector<16x128xbf16>
    %cst_78 = arith.constant dense<0.000000e+00> : vector<16x512xf32>
    %265 = tpu.matmul %264, %4, %cst_78 {dimension_numbers = #tpu.dot_dimension_numbers<[1], [0], [0], [1], [0, 0, 1, 1], [], []>} : vector<16x128xbf16>, vector<128x512xbf16>, vector<16x512xf32> -> vector<16x512xf32>
    %266 = arith.addf %263, %265 : vector<16x512xf32>
    %267 = vector.extract_strided_slice %266 {offsets = [0, 0], sizes = [16, 128], strides = [1, 1]} : vector<16x512xf32> to vector<16x128xf32>
    %268 = arith.negf %267 : vector<16x128xf32>
    %269 = math.exp %268 : vector<16x128xf32>
    %cst_79 = arith.constant 1.000000e+00 : f32
    %270 = vector.broadcast %cst_79 : f32 to vector<16x128xf32>
    %271 = arith.addf %270, %269 : vector<16x128xf32>
    %272 = arith.divf %270, %271 : vector<16x128xf32>
    %273 = vector.extract_strided_slice %266 {offsets = [0, 128], sizes = [16, 128], strides = [1, 1]} : vector<16x512xf32> to vector<16x128xf32>
    %274 = arith.negf %273 : vector<16x128xf32>
    %275 = math.exp %274 : vector<16x128xf32>
    %cst_80 = arith.constant 1.000000e+00 : f32
    %276 = vector.broadcast %cst_80 : f32 to vector<16x128xf32>
    %277 = arith.addf %276, %275 : vector<16x128xf32>
    %278 = arith.divf %276, %277 : vector<16x128xf32>
    %279 = vector.extract_strided_slice %266 {offsets = [0, 256], sizes = [16, 128], strides = [1, 1]} : vector<16x512xf32> to vector<16x128xf32>
    %280 = math.tanh %279 : vector<16x128xf32>
    %281 = vector.extract_strided_slice %266 {offsets = [0, 384], sizes = [16, 128], strides = [1, 1]} : vector<16x512xf32> to vector<16x128xf32>
    %282 = arith.negf %281 : vector<16x128xf32>
    %283 = math.exp %282 : vector<16x128xf32>
    %cst_81 = arith.constant 1.000000e+00 : f32
    %284 = vector.broadcast %cst_81 : f32 to vector<16x128xf32>
    %285 = arith.addf %284, %283 : vector<16x128xf32>
    %286 = arith.divf %284, %285 : vector<16x128xf32>
    %287 = arith.mulf %278, %260 : vector<16x128xf32>
    %288 = arith.mulf %272, %280 : vector<16x128xf32>
    %289 = arith.addf %287, %288 : vector<16x128xf32>
    %290 = math.tanh %289 : vector<16x128xf32>
    %291 = arith.mulf %286, %290 : vector<16x128xf32>
    %292 = arith.truncf %291 : vector<16x128xf32> to vector<16x128xbf16>
    %293 = arith.index_cast %c6_i32 : i32 to index
    %c0_82 = arith.constant 0 : index
    %c0_83 = arith.constant 0 : index
    %294 = vector.load %arg8[%293, %c0_82, %c0_83] : memref<8x16x128xbf16, #tpu.memory_space<vmem>>, vector<1x16x128xbf16>
    %295 = vector.shape_cast %294 : vector<1x16x128xbf16> to vector<16x128xbf16>
    %296 = vector.shape_cast %292 : vector<16x128xbf16> to vector<1x16x128xbf16>
    tpu.vector_store %arg8[%293, %c0_82, %c0_83], %296 {strides = array<i32>} : memref<8x16x128xbf16, #tpu.memory_space<vmem>>, vector<1x16x128xbf16>,
    %c8_i32_84 = arith.constant 8 : i32
    %297 = arith.muli %arg1, %c8_i32_84 : i32
    %298 = arith.addi %297, %c6_i32 : i32
    %c8_i32_85 = arith.constant 8 : i32
    %299 = arith.cmpi slt, %298, %c8_i32_85 : i32
    %300 = arith.select %299, %291, %259 : vector<16x128xf32>
    %301 = arith.select %299, %289, %260 : vector<16x128xf32>
    %c7_i32 = arith.constant 7 : i32
    %302 = arith.index_cast %c7_i32 : i32 to index
    %c0_86 = arith.constant 0 : index
    %c0_87 = arith.constant 0 : index
    %303 = vector.load %arg13[%302, %c0_86, %c0_87] : memref<8x16x512xf32, #tpu.memory_space<vmem>>, vector<1x16x512xf32>
    %304 = vector.shape_cast %303 : vector<1x16x512xf32> to vector<16x512xf32>
    %305 = arith.truncf %300 : vector<16x128xf32> to vector<16x128xbf16>
    %cst_88 = arith.constant dense<0.000000e+00> : vector<16x512xf32>
    %306 = tpu.matmul %305, %4, %cst_88 {dimension_numbers = #tpu.dot_dimension_numbers<[1], [0], [0], [1], [0, 0, 1, 1], [], []>} : vector<16x128xbf16>, vector<128x512xbf16>, vector<16x512xf32> -> vector<16x512xf32>
    %307 = arith.addf %304, %306 : vector<16x512xf32>
    %308 = vector.extract_strided_slice %307 {offsets = [0, 0], sizes = [16, 128], strides = [1, 1]} : vector<16x512xf32> to vector<16x128xf32>
    %309 = arith.negf %308 : vector<16x128xf32>
    %310 = math.exp %309 : vector<16x128xf32>
    %cst_89 = arith.constant 1.000000e+00 : f32
    %311 = vector.broadcast %cst_89 : f32 to vector<16x128xf32>
    %312 = arith.addf %311, %310 : vector<16x128xf32>
    %313 = arith.divf %311, %312 : vector<16x128xf32>
    %314 = vector.extract_strided_slice %307 {offsets = [0, 128], sizes = [16, 128], strides = [1, 1]} : vector<16x512xf32> to vector<16x128xf32>
    %315 = arith.negf %314 : vector<16x128xf32>
    %316 = math.exp %315 : vector<16x128xf32>
    %cst_90 = arith.constant 1.000000e+00 : f32
    %317 = vector.broadcast %cst_90 : f32 to vector<16x128xf32>
    %318 = arith.addf %317, %316 : vector<16x128xf32>
    %319 = arith.divf %317, %318 : vector<16x128xf32>
    %320 = vector.extract_strided_slice %307 {offsets = [0, 256], sizes = [16, 128], strides = [1, 1]} : vector<16x512xf32> to vector<16x128xf32>
    %321 = math.tanh %320 : vector<16x128xf32>
    %322 = vector.extract_strided_slice %307 {offsets = [0, 384], sizes = [16, 128], strides = [1, 1]} : vector<16x512xf32> to vector<16x128xf32>
    %323 = arith.negf %322 : vector<16x128xf32>
    %324 = math.exp %323 : vector<16x128xf32>
    %cst_91 = arith.constant 1.000000e+00 : f32
    %325 = vector.broadcast %cst_91 : f32 to vector<16x128xf32>
    %326 = arith.addf %325, %324 : vector<16x128xf32>
    %327 = arith.divf %325, %326 : vector<16x128xf32>
    %328 = arith.mulf %319, %301 : vector<16x128xf32>
    %329 = arith.mulf %313, %321 : vector<16x128xf32>
    %330 = arith.addf %328, %329 : vector<16x128xf32>
    %331 = math.tanh %330 : vector<16x128xf32>
    %332 = arith.mulf %327, %331 : vector<16x128xf32>
    %333 = arith.truncf %332 : vector<16x128xf32> to vector<16x128xbf16>
    %334 = arith.index_cast %c7_i32 : i32 to index
    %c0_92 = arith.constant 0 : index
    %c0_93 = arith.constant 0 : index
    %335 = vector.load %arg8[%334, %c0_92, %c0_93] : memref<8x16x128xbf16, #tpu.memory_space<vmem>>, vector<1x16x128xbf16>
    %336 = vector.shape_cast %335 : vector<1x16x128xbf16> to vector<16x128xbf16>
    %337 = vector.shape_cast %333 : vector<16x128xbf16> to vector<1x16x128xbf16>
    tpu.vector_store %arg8[%334, %c0_92, %c0_93], %337 {strides = array<i32>} : memref<8x16x128xbf16, #tpu.memory_space<vmem>>, vector<1x16x128xbf16>,
    %c8_i32_94 = arith.constant 8 : i32
    %338 = arith.muli %arg1, %c8_i32_94 : i32
    %339 = arith.addi %338, %c7_i32 : i32
    %c8_i32_95 = arith.constant 8 : i32
    %340 = arith.cmpi slt, %339, %c8_i32_95 : i32
    %341 = arith.select %340, %332, %300 : vector<16x128xf32>
    %342 = arith.select %340, %330, %301 : vector<16x128xf32>
    %c8_i32_96 = arith.constant 8 : i32
    %c0_97 = arith.constant 0 : index
    %c0_98 = arith.constant 0 : index
    %343 = vector.load %arg11[%c0_97, %c0_98] : memref<16x128xf32, #tpu.memory_space<vmem>>, vector<16x128xf32>
    tpu.vector_store %arg11[%c0_97, %c0_98], %341 {strides = array<i32>} : memref<16x128xf32, #tpu.memory_space<vmem>>, vector<16x128xf32>,
    %c0_99 = arith.constant 0 : index
    %c0_100 = arith.constant 0 : index
    %344 = vector.load %arg12[%c0_99, %c0_100] : memref<16x128xf32, #tpu.memory_space<vmem>>, vector<16x128xf32>
    tpu.vector_store %arg12[%c0_99, %c0_100], %342 {strides = array<i32>} : memref<16x128xf32, #tpu.memory_space<vmem>>, vector<16x128xf32>,
    %c0_i32_101 = arith.constant 0 : i32
    %345 = arith.cmpi eq, %arg1, %c0_i32_101 : i32
    %346 = arith.extui %345 : i1 to i32
    %c0_i32_102 = arith.constant 0 : i32
    %347 = arith.cmpi ne, %346, %c0_i32_102 : i32
    scf.if %347 {
      %c0_103 = arith.constant 0 : index
      %c0_104 = arith.constant 0 : index
      %348 = vector.load %arg9[%c0_103, %c0_104] : memref<16x128xf32, #tpu.memory_space<vmem>>, vector<16x128xf32>
      tpu.vector_store %arg9[%c0_103, %c0_104], %341 {strides = array<i32>} : memref<16x128xf32, #tpu.memory_space<vmem>>, vector<16x128xf32>,
      %c0_105 = arith.constant 0 : index
      %c0_106 = arith.constant 0 : index
      %349 = vector.load %arg10[%c0_105, %c0_106] : memref<16x128xf32, #tpu.memory_space<vmem>>, vector<16x128xf32>
      tpu.vector_store %arg10[%c0_105, %c0_106], %342 {strides = array<i32>} : memref<16x128xf32, #tpu.memory_space<vmem>>, vector<16x128xf32>,
    } else {
    }
    return
  }
  func.func @transform_0(%arg0: i32, %arg1: i32) -> (i32, i32, i32) {
    %c0_i32 = arith.constant 0 : i32
    %c0_i32_0 = arith.constant 0 : i32
    return %arg1, %arg0, %c0_i32 : i32, i32, i32
  }
  func.func @transform_1(%arg0: i32, %arg1: i32) -> (i32, i32) {
    %c0_i32 = arith.constant 0 : i32
    %c0_i32_0 = arith.constant 0 : i32
    return %arg0, %c0_i32 : i32, i32
  }
  func.func @transform_2(%arg0: i32, %arg1: i32) -> (i32, i32) {
    %c0_i32 = arith.constant 0 : i32
    %c0_i32_0 = arith.constant 0 : i32
    return %arg0, %c0_i32 : i32, i32
  }
  func.func @transform_3(%arg0: i32, %arg1: i32) -> (i32, i32) {
    %c0_i32 = arith.constant 0 : i32
    %c0_i32_0 = arith.constant 0 : i32
    %c0_i32_1 = arith.constant 0 : i32
    return %c0_i32, %c0_i32_0 : i32, i32
  }
  func.func @transform_4(%arg0: i32, %arg1: i32) -> (i32, i32) {
    %c0_i32 = arith.constant 0 : i32
    %c0_i32_0 = arith.constant 0 : i32
    %c0_i32_1 = arith.constant 0 : i32
    return %c0_i32, %c0_i32_0 : i32, i32
  }
  func.func @transform_5(%arg0: i32, %arg1: i32) -> (i32, i32) {
    %c0_i32 = arith.constant 0 : i32
    %c0_i32_0 = arith.constant 0 : i32
    %c0_i32_1 = arith.constant 0 : i32
    return %c0_i32, %c0_i32_0 : i32, i32
  }
  func.func @transform_6(%arg0: i32, %arg1: i32) -> (i32, i32, i32) {
    %c0_i32 = arith.constant 0 : i32
    %c0_i32_0 = arith.constant 0 : i32
    return %arg1, %arg0, %c0_i32 : i32, i32, i32
  }
  func.func @transform_7(%arg0: i32, %arg1: i32) -> (i32, i32) {
    %c0_i32 = arith.constant 0 : i32
    %c0_i32_0 = arith.constant 0 : i32
    return %arg0, %c0_i32 : i32, i32
  }
  func.func @transform_8(%arg0: i32, %arg1: i32) -> (i32, i32) {
    %c0_i32 = arith.constant 0 : i32
    %c0_i32_0 = arith.constant 0 : i32
    return %arg0, %c0_i32 : i32, i32
  }
}

</mosaic_0001>

<llo_original>
// kernel: tpu_custom_call.1
$region0: #{tpu_custom_call.1}
  #allocation0 [shape = 'u32[]', space=smem, size = 0x4, offset = 0x4, fixed_abs, tag = 'smem constant byte address 0x4 - core index']
  #allocation1 [shape = 'u32[72,128]{1,0:T(1,128)}', space=vmem, size = 0x9000, scoped, tag = 'internal scratch']
  #allocation2 [shape = 'f32[16,128]{1,0:T(8,128)}', space=vmem, size = 0x2000, scoped, tag = 'scratch operand']
  #allocation3 [shape = 'f32[16,128]{1,0:T(8,128)}', space=vmem, size = 0x2000, scoped, tag = 'scratch operand']
  #allocation4 [shape = 'f32[8,16,512]{2,1,0:T(8,128)}', space=vmem, size = 0x40000, scoped, tag = 'scratch operand']
  %s0 = inlined_call_operand.hbm [shape: bf16[8,16,128], index: 0, kind: input, shape index: {}]
  %s1 = inlined_call_operand.hbm [shape: f32[16,128], index: 1, kind: input, shape index: {}]
  %s2 = inlined_call_operand.hbm [shape: f32[16,128], index: 2, kind: input, shape index: {}]
  %s3 = inlined_call_operand.hbm [shape: bf16[128,512], index: 3, kind: input, shape index: {}]
  %s4 = inlined_call_operand.hbm [shape: bf16[128,512], index: 4, kind: input, shape index: {}]
  %s5 = inlined_call_operand.vmem [shape: f32[1,512], index: 5, kind: input, shape index: {}]
  %s6 = inlined_call_operand.hbm [shape: bf16[8,16,128], index: 6, kind: output, shape index: {0}]
  %s7 = inlined_call_operand.hbm [shape: f32[16,128], index: 7, kind: output, shape index: {1}]
  %s8 = inlined_call_operand.hbm [shape: f32[16,128], index: 8, kind: output, shape index: {2}]
  %9 = xla_tuple %s6, %s7, %s8
  %s10 = sld [smem:[#allocation0]]
  $region78: #{tpu_custom_call.1} parent=0
    _
  %s12 = ssub.s32 1, %s10
  %s13 = scalar_select 0, %s12, %s10
  $region1: #{tpu_custom_call.1} parent=0
    #allocation5 [shape = 'u8[32768]{0}', space=vmem, size = 0x8000, scoped, tag = 'input window, operand 0, single buffered']
    #allocation6 [shape = 's32[1]{0}', space=sflag, size = 0x4, scoped, tag = 'scoped memory for tpu_custom_call.1']
    #allocation7 [shape = 's32[1]{0}', space=sflag, size = 0x4, scoped, tag = 'scoped memory for tpu_custom_call.1']
    #allocation8 [shape = 'u8[8192]{0}', space=vmem, size = 0x2000, scoped, tag = 'input window, operand 1, single buffered']
    #allocation9 [shape = 's32[1]{0}', space=sflag, size = 0x4, scoped, tag = 'scoped memory for tpu_custom_call.1']
    #allocation10 [shape = 'u8[8192]{0}', space=vmem, size = 0x2000, scoped, tag = 'input window, operand 2, single buffered']
    #allocation11 [shape = 'u8[131072]{0}', space=vmem, size = 0x20000, scoped, tag = 'input window, operand 3, single buffered']
    #allocation12 [shape = 's32[1]{0}', space=sflag, size = 0x4, scoped, tag = 'scoped memory for tpu_custom_call.1']
    #allocation13 [shape = 'u8[131072]{0}', space=vmem, size = 0x20000, scoped, tag = 'input window, operand 4, single buffered']
    #allocation14 [shape = 'u8[32768]{0}', space=vmem, size = 0x8000, scoped, tag = 'output window, operand 0, single buffered']
    #allocation15 [shape = 'u8[8192]{0}', space=vmem, size = 0x2000, scoped, tag = 'output window, operand 1, single buffered']
    #allocation16 [shape = 's32[1]{0}', space=sflag, size = 0x4, scoped, tag = 'scoped memory for tpu_custom_call.1']
    #allocation17 [shape = 'u8[8192]{0}', space=vmem, size = 0x2000, scoped, tag = 'output window, operand 2, single buffered']
    %14 = vsyncpa [#allocation6], 0
    %15 = vsyncpa [#allocation9], 0
    %16 = vsyncpa [#allocation12], 0
    %17 = vsyncpa [#allocation7], 0
    %18 = vsyncpa [#allocation16], 0
    // Predicated region
    $region2: #{tpu_custom_call.1} parent=1 // pred_check
      _
    $region3: #{tpu_custom_call.1} parent=1 // pred_check_branch
      %20 = sbr.rel (0) target = $region5
    $region4: #{tpu_custom_call.1} parent=1 // pred_region
      %22 = vsyncadd [#allocation6], 0
      %s23 = sshll.u32 %s0, 4
      %s24 = int_to_ptr.hbm [resolvable:$true] %s23
      %s25 = sshll.u32 [#allocation5], 4
      %s26 = int_to_ptr.vmem [resolvable:$true] %s25
      %31 = dma.hbm_to_vmem [thread:$0]  %s24, 1024, %s26, [#allocation6], 64, 64, 4
    $region5: #{tpu_custom_call.1} parent=1 // pred_fallthru
      _
    // Predicated region
    $region6: #{tpu_custom_call.1} parent=1 // pred_check
      _
    $region7: #{tpu_custom_call.1} parent=1 // pred_check_branch
      %33 = sbr.rel (0) target = $region9
    $region8: #{tpu_custom_call.1} parent=1 // pred_region
      %35 = vsyncadd [#allocation9], 0
      %s36 = sshll.u32 %s1, 4
      %s37 = int_to_ptr.hbm [resolvable:$true] %s36
      %s38 = sshll.u32 [#allocation8], 4
      %s39 = int_to_ptr.vmem [resolvable:$true] %s38
      %44 = dma.hbm_to_vmem [thread:$0]  %s37, 256, %s39, [#allocation9], 128, 128, 8
    $region9: #{tpu_custom_call.1} parent=1 // pred_fallthru
      _
    // Predicated region
    $region10: #{tpu_custom_call.1} parent=1 // pred_check
      _
    $region11: #{tpu_custom_call.1} parent=1 // pred_check_branch
      %46 = sbr.rel (0) target = $region13
    $region12: #{tpu_custom_call.1} parent=1 // pred_region
      %48 = vsyncadd [#allocation9], 0
      %s49 = sshll.u32 %s2, 4
      %s50 = int_to_ptr.hbm [resolvable:$true] %s49
      %s51 = sshll.u32 [#allocation10], 4
      %s52 = int_to_ptr.vmem [resolvable:$true] %s51
      %57 = dma.hbm_to_vmem [thread:$0]  %s50, 256, %s52, [#allocation9], 128, 128, 8
    $region13: #{tpu_custom_call.1} parent=1 // pred_fallthru
      _
    // Predicated region
    $region14: #{tpu_custom_call.1} parent=1 // pred_check
      _
    $region15: #{tpu_custom_call.1} parent=1 // pred_check_branch
      %59 = sbr.rel (0) target = $region17
    $region16: #{tpu_custom_call.1} parent=1 // pred_region
      %61 = vsyncadd [#allocation12], 0
      %s62 = sshll.u32 %s3, 4
      %s63 = int_to_ptr.hbm [resolvable:$true] %s62
      %s64 = sshll.u32 [#allocation11], 4
      %s65 = int_to_ptr.vmem [resolvable:$true] %s64
      %70 = dma.hbm_to_vmem [thread:$0]  %s63, 4096, %s65, [#allocation12], 256, 256, 16
    $region17: #{tpu_custom_call.1} parent=1 // pred_fallthru
      _
    // Predicated region
    $region18: #{tpu_custom_call.1} parent=1 // pred_check
      _
    $region19: #{tpu_custom_call.1} parent=1 // pred_check_branch
      %72 = sbr.rel (0) target = $region21
    $region20: #{tpu_custom_call.1} parent=1 // pred_region
      %74 = vsyncadd [#allocation12], 0
      %s75 = sshll.u32 %s4, 4
      %s76 = int_to_ptr.hbm [resolvable:$true] %s75
      %s77 = sshll.u32 [#allocation13], 4
      %s78 = int_to_ptr.vmem [resolvable:$true] %s77
      %83 = dma.hbm_to_vmem [thread:$0]  %s76, 4096, %s78, [#allocation12], 256, 256, 16
    $region21: #{tpu_custom_call.1} parent=1 // pred_fallthru
      _
    // Predicated region
    $region22: #{tpu_custom_call.1} parent=1 // pred_check
      _
    $region23: #{tpu_custom_call.1} parent=1 // pred_check_branch
      %85 = sbr.rel (0) target = $region25
    $region24: #{tpu_custom_call.1} parent=1 // pred_region
      _
    $region25: #{tpu_custom_call.1} parent=1 // pred_fallthru
      _
    // Predicated region
    $region26: #{tpu_custom_call.1} parent=1 // pred_check
      _
    $region27: #{tpu_custom_call.1} parent=1 // pred_check_branch
      %87 = sbr.rel (0) target = $region29
    $region28: #{tpu_custom_call.1} parent=1 // pred_region
      %89 = dma.done [#allocation6], 1024
    $region29: #{tpu_custom_call.1} parent=1 // pred_fallthru
      _
    // Predicated region
    $region30: #{tpu_custom_call.1} parent=1 // pred_check
      _
    $region31: #{tpu_custom_call.1} parent=1 // pred_check_branch
      %91 = sbr.rel (0) target = $region33
    $region32: #{tpu_custom_call.1} parent=1 // pred_region
      %93 = dma.done [#allocation9], 256
    $region33: #{tpu_custom_call.1} parent=1 // pred_fallthru
      _
    // Predicated region
    $region34: #{tpu_custom_call.1} parent=1 // pred_check
      _
    $region35: #{tpu_custom_call.1} parent=1 // pred_check_branch
      %95 = sbr.rel (0) target = $region37
    $region36: #{tpu_custom_call.1} parent=1 // pred_region
      %97 = dma.done [#allocation9], 256
    $region37: #{tpu_custom_call.1} parent=1 // pred_fallthru
      _
    // Predicated region
    $region38: #{tpu_custom_call.1} parent=1 // pred_check
      _
    $region39: #{tpu_custom_call.1} parent=1 // pred_check_branch
      %99 = sbr.rel (0) target = $region41
    $region40: #{tpu_custom_call.1} parent=1 // pred_region
      %101 = dma.done [#allocation12], 4096
    $region41: #{tpu_custom_call.1} parent=1 // pred_fallthru
      _
    // Predicated region
    $region42: #{tpu_custom_call.1} parent=1 // pred_check
      _
    $region43: #{tpu_custom_call.1} parent=1 // pred_check_branch
      %103 = sbr.rel (0) target = $region45
    $region44: #{tpu_custom_call.1} parent=1 // pred_region
      %105 = dma.done [#allocation12], 4096
    $region45: #{tpu_custom_call.1} parent=1 // pred_fallthru
      _
    %p106 = scmp.eq.s32.totalorder 0, 0
    // Predicated region
    $region46: #{tpu_custom_call.1} parent=1 // pred_check
      %p107 = pneg %p106
    $region47: #{tpu_custom_call.1} parent=1 // pred_check_branch
      %109 = sbr.rel (%p107) target = $region49
    $region48: #{tpu_custom_call.1} parent=1 // pred_region
      %v110 = vld [vmem:[#allocation8] sm:$0xff]
      %v111 = vld [vmem:[#allocation8 + $0x8] sm:$0xff]
      %112 = vst [vmem:[#allocation2] sm:$0xff] %v110
      %113 = vst [vmem:[#allocation2 + $0x8] sm:$0xff] %v111
      %v114 = vld [vmem:[#allocation10] sm:$0xff]
      %v115 = vld [vmem:[#allocation10 + $0x8] sm:$0xff]
      %116 = vst [vmem:[#allocation3] sm:$0xff] %v114
      %117 = vst [vmem:[#allocation3 + $0x8] sm:$0xff] %v115
    $region49: #{tpu_custom_call.1} parent=1 // pred_fallthru
      _
    %v118 = vld [vmem:[#allocation11] sm:$0xff]
    %v119 = vld [vmem:[#allocation11 + $0x8] sm:$0xff]
    %v120 = vld [vmem:[#allocation11 + $0x10] sm:$0xff]
    %v121 = vld [vmem:[#allocation11 + $0x18] sm:$0xff]
    %v122 = vld [vmem:[#allocation11 + $0x20] sm:$0xff]
    %v123 = vld [vmem:[#allocation11 + $0x28] sm:$0xff]
    %v124 = vld [vmem:[#allocation11 + $0x30] sm:$0xff]
    %v125 = vld [vmem:[#allocation11 + $0x38] sm:$0xff]
    %v126 = vld [vmem:[#allocation11 + $0x40] sm:$0xff]
    %v127 = vld [vmem:[#allocation11 + $0x48] sm:$0xff]
    %v128 = vld [vmem:[#allocation11 + $0x50] sm:$0xff]
    %v129 = vld [vmem:[#allocation11 + $0x58] sm:$0xff]
    %v130 = vld [vmem:[#allocation11 + $0x60] sm:$0xff]
    %v131 = vld [vmem:[#allocation11 + $0x68] sm:$0xff]
    %v132 = vld [vmem:[#allocation11 + $0x70] sm:$0xff]
    %v133 = vld [vmem:[#allocation11 + $0x78] sm:$0xff]
    %v134 = vld [vmem:[#allocation11 + $0x80] sm:$0xff]
    %v135 = vld [vmem:[#allocation11 + $0x88] sm:$0xff]
    %v136 = vld [vmem:[#allocation11 + $0x90] sm:$0xff]
    %v137 = vld [vmem:[#allocation11 + $0x98] sm:$0xff]
    %v138 = vld [vmem:[#allocation11 + $0xa0] sm:$0xff]
    %v139 = vld [vmem:[#allocation11 + $0xa8] sm:$0xff]
    %v140 = vld [vmem:[#allocation11 + $0xb0] sm:$0xff]
    %v141 = vld [vmem:[#allocation11 + $0xb8] sm:$0xff]
    %v142 = vld [vmem:[#allocation11 + $0xc0] sm:$0xff]
    %v143 = vld [vmem:[#allocation11 + $0xc8] sm:$0xff]
    %v144 = vld [vmem:[#allocation11 + $0xd0] sm:$0xff]
    %v145 = vld [vmem:[#allocation11 + $0xd8] sm:$0xff]
    %v146 = vld [vmem:[#allocation11 + $0xe0] sm:$0xff]
    %v147 = vld [vmem:[#allocation11 + $0xe8] sm:$0xff]
    %v148 = vld [vmem:[#allocation11 + $0xf0] sm:$0xff]
    %v149 = vld [vmem:[#allocation11 + $0xf8] sm:$0xff]
    %v150 = vld [vmem:[#allocation13] sm:$0xff]
    %v151 = vld [vmem:[#allocation13 + $0x8] sm:$0xff]
    %v152 = vld [vmem:[#allocation13 + $0x10] sm:$0xff]
    %v153 = vld [vmem:[#allocation13 + $0x18] sm:$0xff]
    %v154 = vld [vmem:[#allocation13 + $0x20] sm:$0xff]
    %v155 = vld [vmem:[#allocation13 + $0x28] sm:$0xff]
    %v156 = vld [vmem:[#allocation13 + $0x30] sm:$0xff]
    %v157 = vld [vmem:[#allocation13 + $0x38] sm:$0xff]
    %v158 = vld [vmem:[#allocation13 + $0x40] sm:$0xff]
    %v159 = vld [vmem:[#allocation13 + $0x48] sm:$0xff]
    %v160 = vld [vmem:[#allocation13 + $0x50] sm:$0xff]
    %v161 = vld [vmem:[#allocation13 + $0x58] sm:$0xff]
    %v162 = vld [vmem:[#allocation13 + $0x60] sm:$0xff]
    %v163 = vld [vmem:[#allocation13 + $0x68] sm:$0xff]
    %v164 = vld [vmem:[#allocation13 + $0x70] sm:$0xff]
    %v165 = vld [vmem:[#allocation13 + $0x78] sm:$0xff]
    %v166 = vld [vmem:[#allocation13 + $0x80] sm:$0xff]
    %v167 = vld [vmem:[#allocation13 + $0x88] sm:$0xff]
    %v168 = vld [vmem:[#allocation13 + $0x90] sm:$0xff]
    %v169 = vld [vmem:[#allocation13 + $0x98] sm:$0xff]
    %v170 = vld [vmem:[#allocation13 + $0xa0] sm:$0xff]
    %v171 = vld [vmem:[#allocation13 + $0xa8] sm:$0xff]
    %v172 = vld [vmem:[#allocation13 + $0xb0] sm:$0xff]
    %v173 = vld [vmem:[#allocation13 + $0xb8] sm:$0xff]
    %v174 = vld [vmem:[#allocation13 + $0xc0] sm:$0xff]
    %v175 = vld [vmem:[#allocation13 + $0xc8] sm:$0xff]
    %v176 = vld [vmem:[#allocation13 + $0xd0] sm:$0xff]
    %v177 = vld [vmem:[#allocation13 + $0xd8] sm:$0xff]
    %v178 = vld [vmem:[#allocation13 + $0xe0] sm:$0xff]
    %v179 = vld [vmem:[#allocation13 + $0xe8] sm:$0xff]
    %v180 = vld [vmem:[#allocation13 + $0xf0] sm:$0xff]
    %v181 = vld [vmem:[#allocation13 + $0xf8] sm:$0xff]
    %v182 = vld [vmem:[%s5] sm:$0xf]
    %v183 = vld [vmem:[#allocation5] sm:$0xf]
    %v184 = vld [vmem:[#allocation5 + $0x4] sm:$0xf]
    %v185 = vld [vmem:[#allocation5 + $0x8] sm:$0xf]
    %v186 = vld [vmem:[#allocation5 + $0xc] sm:$0xf]
    %v187 = vld [vmem:[#allocation5 + $0x10] sm:$0xf]
    %v188 = vld [vmem:[#allocation5 + $0x14] sm:$0xf]
    %v189 = vld [vmem:[#allocation5 + $0x18] sm:$0xf]
    %v190 = vld [vmem:[#allocation5 + $0x1c] sm:$0xf]
    %v191 = vld [vmem:[#allocation5 + $0x20] sm:$0xf]
    %v192 = vld [vmem:[#allocation5 + $0x24] sm:$0xf]
    %v193 = vld [vmem:[#allocation5 + $0x28] sm:$0xf]
    %v194 = vld [vmem:[#allocation5 + $0x2c] sm:$0xf]
    %v195 = vld [vmem:[#allocation5 + $0x30] sm:$0xf]
    %v196 = vld [vmem:[#allocation5 + $0x34] sm:$0xf]
    %v197 = vld [vmem:[#allocation5 + $0x38] sm:$0xf]
    %v198 = vld [vmem:[#allocation5 + $0x3c] sm:$0xf]
    %v200 = vperm.slane %v182, 0
    %v201 = vperm.slane %v182, 1
    %v202 = vperm.slane %v182, 2
    %v203 = vperm.slane %v182, 3
    %v224 = vunpack.c.l.b16 %v183
    %v225 = vunpack.c.l.b16 %v184
    %v226 = vunpack.c.l.b16 %v185
    %v227 = vunpack.c.l.b16 %v186
    %v228 = vunpack.c.l.b16 %v187
    %v229 = vunpack.c.l.b16 %v188
    %v230 = vunpack.c.l.b16 %v189
    %v231 = vunpack.c.l.b16 %v190
    %v232 = vunpack.c.l.b16 %v191
    %v233 = vunpack.c.l.b16 %v192
    %v234 = vunpack.c.l.b16 %v193
    %v235 = vunpack.c.l.b16 %v194
    %v236 = vunpack.c.l.b16 %v195
    %v237 = vunpack.c.l.b16 %v196
    %v238 = vunpack.c.l.b16 %v197
    %v239 = vunpack.c.l.b16 %v198
    %v240 = vpack.c.b16 %v225, %v224
    %v241 = vpack.c.b16 %v227, %v226
    %v242 = vpack.c.b16 %v229, %v228
    %v243 = vpack.c.b16 %v231, %v230
    %v244 = vpack.c.b16 %v233, %v232
    %v245 = vpack.c.b16 %v235, %v234
    %v246 = vpack.c.b16 %v237, %v236
    %v247 = vpack.c.b16 %v239, %v238
    %v288 = vunpack.c.l.b16 %v118
    %v289 = vunpack.c.h.b16 %v118
    %v290 = vunpack.c.l.b16 %v119
    %v291 = vunpack.c.h.b16 %v119
    %v292 = vunpack.c.l.b16 %v120
    %v293 = vunpack.c.h.b16 %v120
    %v294 = vunpack.c.l.b16 %v121
    %v295 = vunpack.c.h.b16 %v121
    %v296 = vunpack.c.l.b16 %v122
    %v297 = vunpack.c.h.b16 %v122
    %v298 = vunpack.c.l.b16 %v123
    %v299 = vunpack.c.h.b16 %v123
    %v300 = vunpack.c.l.b16 %v124
    %v301 = vunpack.c.h.b16 %v124
    %v302 = vunpack.c.l.b16 %v125
    %v303 = vunpack.c.h.b16 %v125
    %v304 = vunpack.c.l.b16 %v126
    %v305 = vunpack.c.h.b16 %v126
    %v306 = vunpack.c.l.b16 %v127
    %v307 = vunpack.c.h.b16 %v127
    %v308 = vunpack.c.l.b16 %v128
    %v309 = vunpack.c.h.b16 %v128
    %v310 = vunpack.c.l.b16 %v129
    %v311 = vunpack.c.h.b16 %v129
    %v312 = vunpack.c.l.b16 %v130
    %v313 = vunpack.c.h.b16 %v130
    %v314 = vunpack.c.l.b16 %v131
    %v315 = vunpack.c.h.b16 %v131
    %v316 = vunpack.c.l.b16 %v132
    %v317 = vunpack.c.h.b16 %v132
    %v318 = vunpack.c.l.b16 %v133
    %v319 = vunpack.c.h.b16 %v133
    %v320 = vunpack.c.l.b16 %v134
    %v321 = vunpack.c.h.b16 %v134
    %v322 = vunpack.c.l.b16 %v135
    %v323 = vunpack.c.h.b16 %v135
    %v324 = vunpack.c.l.b16 %v136
    %v325 = vunpack.c.h.b16 %v136
    %v326 = vunpack.c.l.b16 %v137
    %v327 = vunpack.c.h.b16 %v137
    %v328 = vunpack.c.l.b16 %v138
    %v329 = vunpack.c.h.b16 %v138
    %v330 = vunpack.c.l.b16 %v139
    %v331 = vunpack.c.h.b16 %v139
    %v332 = vunpack.c.l.b16 %v140
    %v333 = vunpack.c.h.b16 %v140
    %v334 = vunpack.c.l.b16 %v141
    %v335 = vunpack.c.h.b16 %v141
    %v336 = vunpack.c.l.b16 %v142
    %v337 = vunpack.c.h.b16 %v142
    %v338 = vunpack.c.l.b16 %v143
    %v339 = vunpack.c.h.b16 %v143
    %v340 = vunpack.c.l.b16 %v144
    %v341 = vunpack.c.h.b16 %v144
    %v342 = vunpack.c.l.b16 %v145
    %v343 = vunpack.c.h.b16 %v145
    %v344 = vunpack.c.l.b16 %v146
    %v345 = vunpack.c.h.b16 %v146
    %v346 = vunpack.c.l.b16 %v147
    %v347 = vunpack.c.h.b16 %v147
    %v348 = vunpack.c.l.b16 %v148
    %v349 = vunpack.c.h.b16 %v148
    %v350 = vunpack.c.l.b16 %v149
    %v351 = vunpack.c.h.b16 %v149
    %v352 = vpack.c.b16 %v292, %v288
    %v353 = vpack.c.b16 %v293, %v289
    %v354 = vpack.c.b16 %v294, %v290
    %v355 = vpack.c.b16 %v295, %v291
    %v356 = vpack.c.b16 %v300, %v296
    %v357 = vpack.c.b16 %v301, %v297
    %v358 = vpack.c.b16 %v302, %v298
    %v359 = vpack.c.b16 %v303, %v299
    %v360 = vpack.c.b16 %v308, %v304
    %v361 = vpack.c.b16 %v309, %v305
    %v362 = vpack.c.b16 %v310, %v306
    %v363 = vpack.c.b16 %v311, %v307
    %v364 = vpack.c.b16 %v316, %v312
    %v365 = vpack.c.b16 %v317, %v313
    %v366 = vpack.c.b16 %v318, %v314
    %v367 = vpack.c.b16 %v319, %v315
    %v368 = vpack.c.b16 %v324, %v320
    %v369 = vpack.c.b16 %v325, %v321
    %v370 = vpack.c.b16 %v326, %v322
    %v371 = vpack.c.b16 %v327, %v323
    %v372 = vpack.c.b16 %v332, %v328
    %v373 = vpack.c.b16 %v333, %v329
    %v374 = vpack.c.b16 %v334, %v330
    %v375 = vpack.c.b16 %v335, %v331
    %v376 = vpack.c.b16 %v340, %v336
    %v377 = vpack.c.b16 %v341, %v337
    %v378 = vpack.c.b16 %v342, %v338
    %v379 = vpack.c.b16 %v343, %v339
    %v380 = vpack.c.b16 %v348, %v344
    %v381 = vpack.c.b16 %v349, %v345
    %v382 = vpack.c.b16 %v350, %v346
    %v383 = vpack.c.b16 %v351, %v347
    %416 = vmatpush.bf16.msra.mxu0 %v380
    %417 = vmatpush.bf16.msra.mxu0 %v376
    %418 = vmatpush.bf16.msra.mxu0 %v372
    %419 = vmatpush.bf16.msra.mxu0 %v368
    %420 = vmatpush.bf16.msra.mxu0 %v364
    %421 = vmatpush.bf16.msra.mxu0 %v360
    %422 = vmatpush.bf16.msra.mxu0 %v356
    %423 = vmatpush.bf16.msra.mxu0 %v352
    %424 = vmatmul.bf16.gmra.mxu0 %v240
    %v425 = vpop.f32.mrf.mxu0
    %v426 = vadd.f32 %v200, %v425
    %v427 = vpop.f32.mrf.mxu0
    %v428 = vadd.f32 %v200, %v427
    %429 = vmatmul.bf16.gmra.mxu0 %v241
    %v430 = vpop.f32.mrf.mxu0
    %v431 = vadd.f32 %v200, %v430
    %v432 = vpop.f32.mrf.mxu0
    %v433 = vadd.f32 %v200, %v432
    %434 = vmatmul.bf16.gmra.mxu0 %v242
    %v435 = vpop.f32.mrf.mxu0
    %v436 = vadd.f32 %v200, %v435
    %v437 = vpop.f32.mrf.mxu0
    %v438 = vadd.f32 %v200, %v437
    %439 = vmatmul.bf16.gmra.mxu0 %v243
    %v440 = vpop.f32.mrf.mxu0
    %v441 = vadd.f32 %v200, %v440
    %v442 = vpop.f32.mrf.mxu0
    %v443 = vadd.f32 %v200, %v442
    %444 = vmatmul.bf16.gmra.mxu0 %v244
    %v445 = vpop.f32.mrf.mxu0
    %v446 = vadd.f32 %v200, %v445
    %v447 = vpop.f32.mrf.mxu0
    %v448 = vadd.f32 %v200, %v447
    %449 = vmatmul.bf16.gmra.mxu0 %v245
    %v450 = vpop.f32.mrf.mxu0
    %v451 = vadd.f32 %v200, %v450
    %v452 = vpop.f32.mrf.mxu0
    %v453 = vadd.f32 %v200, %v452
    %454 = vmatmul.bf16.gmra.mxu0 %v246
    %v455 = vpop.f32.mrf.mxu0
    %v456 = vadd.f32 %v200, %v455
    %v457 = vpop.f32.mrf.mxu0
    %v458 = vadd.f32 %v200, %v457
    %459 = vmatmul.bf16.gmra.mxu0 %v247
    %v460 = vpop.f32.mrf.mxu0
    %v461 = vadd.f32 %v200, %v460
    %v462 = vpop.f32.mrf.mxu0
    %v463 = vadd.f32 %v200, %v462
    %464 = vdwg.mxu0
    %465 = vmatpush.bf16.msra.mxu0 %v381
    %466 = vmatpush.bf16.msra.mxu0 %v377
    %467 = vmatpush.bf16.msra.mxu0 %v373
    %468 = vmatpush.bf16.msra.mxu0 %v369
    %469 = vmatpush.bf16.msra.mxu0 %v365
    %470 = vmatpush.bf16.msra.mxu0 %v361
    %471 = vmatpush.bf16.msra.mxu0 %v357
    %472 = vmatpush.bf16.msra.mxu0 %v353
    %473 = vmatmul.bf16.gmra.mxu0 %v240
    %v474 = vpop.f32.mrf.mxu0
    %v475 = vadd.f32 %v201, %v474
    %v476 = vpop.f32.mrf.mxu0
    %v477 = vadd.f32 %v201, %v476
    %478 = vmatmul.bf16.gmra.mxu0 %v241
    %v479 = vpop.f32.mrf.mxu0
    %v480 = vadd.f32 %v201, %v479
    %v481 = vpop.f32.mrf.mxu0
    %v482 = vadd.f32 %v201, %v481
    %483 = vmatmul.bf16.gmra.mxu0 %v242
    %v484 = vpop.f32.mrf.mxu0
    %v485 = vadd.f32 %v201, %v484
    %v486 = vpop.f32.mrf.mxu0
    %v487 = vadd.f32 %v201, %v486
    %488 = vmatmul.bf16.gmra.mxu0 %v243
    %v489 = vpop.f32.mrf.mxu0
    %v490 = vadd.f32 %v201, %v489
    %v491 = vpop.f32.mrf.mxu0
    %v492 = vadd.f32 %v201, %v491
    %493 = vmatmul.bf16.gmra.mxu0 %v244
    %v494 = vpop.f32.mrf.mxu0
    %v495 = vadd.f32 %v201, %v494
    %v496 = vpop.f32.mrf.mxu0
    %v497 = vadd.f32 %v201, %v496
    %498 = vmatmul.bf16.gmra.mxu0 %v245
    %v499 = vpop.f32.mrf.mxu0
    %v500 = vadd.f32 %v201, %v499
    %v501 = vpop.f32.mrf.mxu0
    %v502 = vadd.f32 %v201, %v501
    %503 = vmatmul.bf16.gmra.mxu0 %v246
    %v504 = vpop.f32.mrf.mxu0
    %v505 = vadd.f32 %v201, %v504
    %v506 = vpop.f32.mrf.mxu0
    %v507 = vadd.f32 %v201, %v506
    %508 = vmatmul.bf16.gmra.mxu0 %v247
    %v509 = vpop.f32.mrf.mxu0
    %v510 = vadd.f32 %v201, %v509
    %v511 = vpop.f32.mrf.mxu0
    %v512 = vadd.f32 %v201, %v511
    %513 = vdwg.mxu0
    %514 = vmatpush.bf16.msra.mxu0 %v382
    %515 = vmatpush.bf16.msra.mxu0 %v378
    %516 = vmatpush.bf16.msra.mxu0 %v374
    %517 = vmatpush.bf16.msra.mxu0 %v370
    %518 = vmatpush.bf16.msra.mxu0 %v366
    %519 = vmatpush.bf16.msra.mxu0 %v362
    %520 = vmatpush.bf16.msra.mxu0 %v358
    %521 = vmatpush.bf16.msra.mxu0 %v354
    %522 = vmatmul.bf16.gmra.mxu0 %v240
    %v523 = vpop.f32.mrf.mxu0
    %v524 = vadd.f32 %v202, %v523
    %v525 = vpop.f32.mrf.mxu0
    %v526 = vadd.f32 %v202, %v525
    %527 = vmatmul.bf16.gmra.mxu0 %v241
    %v528 = vpop.f32.mrf.mxu0
    %v529 = vadd.f32 %v202, %v528
    %v530 = vpop.f32.mrf.mxu0
    %v531 = vadd.f32 %v202, %v530
    %532 = vmatmul.bf16.gmra.mxu0 %v242
    %v533 = vpop.f32.mrf.mxu0
    %v534 = vadd.f32 %v202, %v533
    %v535 = vpop.f32.mrf.mxu0
    %v536 = vadd.f32 %v202, %v535
    %537 = vmatmul.bf16.gmra.mxu0 %v243
    %v538 = vpop.f32.mrf.mxu0
    %v539 = vadd.f32 %v202, %v538
    %v540 = vpop.f32.mrf.mxu0
    %v541 = vadd.f32 %v202, %v540
    %542 = vmatmul.bf16.gmra.mxu0 %v244
    %v543 = vpop.f32.mrf.mxu0
    %v544 = vadd.f32 %v202, %v543
    %v545 = vpop.f32.mrf.mxu0
    %v546 = vadd.f32 %v202, %v545
    %547 = vmatmul.bf16.gmra.mxu0 %v245
    %v548 = vpop.f32.mrf.mxu0
    %v549 = vadd.f32 %v202, %v548
    %v550 = vpop.f32.mrf.mxu0
    %v551 = vadd.f32 %v202, %v550
    %552 = vmatmul.bf16.gmra.mxu0 %v246
    %v553 = vpop.f32.mrf.mxu0
    %v554 = vadd.f32 %v202, %v553
    %v555 = vpop.f32.mrf.mxu0
    %v556 = vadd.f32 %v202, %v555
    %557 = vmatmul.bf16.gmra.mxu0 %v247
    %v558 = vpop.f32.mrf.mxu0
    %v559 = vadd.f32 %v202, %v558
    %v560 = vpop.f32.mrf.mxu0
    %v561 = vadd.f32 %v202, %v560
    %562 = vdwg.mxu0
    %563 = vmatpush.bf16.msra.mxu0 %v383
    %564 = vmatpush.bf16.msra.mxu0 %v379
    %565 = vmatpush.bf16.msra.mxu0 %v375
    %566 = vmatpush.bf16.msra.mxu0 %v371
    %567 = vmatpush.bf16.msra.mxu0 %v367
    %568 = vmatpush.bf16.msra.mxu0 %v363
    %569 = vmatpush.bf16.msra.mxu0 %v359
    %570 = vmatpush.bf16.msra.mxu0 %v355
    %571 = vmatmul.bf16.gmra.mxu0 %v240
    %v572 = vpop.f32.mrf.mxu0
    %v573 = vadd.f32 %v203, %v572
    %v574 = vpop.f32.mrf.mxu0
    %v575 = vadd.f32 %v203, %v574
    %576 = vmatmul.bf16.gmra.mxu0 %v241
    %v577 = vpop.f32.mrf.mxu0
    %v578 = vadd.f32 %v203, %v577
    %v579 = vpop.f32.mrf.mxu0
    %v580 = vadd.f32 %v203, %v579
    %581 = vmatmul.bf16.gmra.mxu0 %v242
    %v582 = vpop.f32.mrf.mxu0
    %v583 = vadd.f32 %v203, %v582
    %v584 = vpop.f32.mrf.mxu0
    %v585 = vadd.f32 %v203, %v584
    %586 = vmatmul.bf16.gmra.mxu0 %v243
    %v587 = vpop.f32.mrf.mxu0
    %v588 = vadd.f32 %v203, %v587
    %v589 = vpop.f32.mrf.mxu0
    %v590 = vadd.f32 %v203, %v589
    %591 = vmatmul.bf16.gmra.mxu0 %v244
    %v592 = vpop.f32.mrf.mxu0
    %v593 = vadd.f32 %v203, %v592
    %v594 = vpop.f32.mrf.mxu0
    %v595 = vadd.f32 %v203, %v594
    %596 = vmatmul.bf16.gmra.mxu0 %v245
    %v597 = vpop.f32.mrf.mxu0
    %v598 = vadd.f32 %v203, %v597
    %v599 = vpop.f32.mrf.mxu0
    %v600 = vadd.f32 %v203, %v599
    %601 = vmatmul.bf16.gmra.mxu0 %v246
    %v602 = vpop.f32.mrf.mxu0
    %v603 = vadd.f32 %v203, %v602
    %v604 = vpop.f32.mrf.mxu0
    %v605 = vadd.f32 %v203, %v604
    %606 = vmatmul.bf16.gmra.mxu0 %v247
    %v607 = vpop.f32.mrf.mxu0
    %v608 = vadd.f32 %v203, %v607
    %v609 = vpop.f32.mrf.mxu0
    %v610 = vadd.f32 %v203, %v609
    %611 = vdwg.mxu0
    %612 = vst [vmem:[#allocation4] sm:$0xff] %v426
    %613 = vst [vmem:[#allocation4 + $0x8] sm:$0xff] %v475
    %614 = vst [vmem:[#allocation4 + $0x10] sm:$0xff] %v524
    %615 = vst [vmem:[#allocation4 + $0x18] sm:$0xff] %v573
    %616 = vst [vmem:[#allocation4 + $0x20] sm:$0xff] %v428
    %617 = vst [vmem:[#allocation4 + $0x28] sm:$0xff] %v477
    %618 = vst [vmem:[#allocation4 + $0x30] sm:$0xff] %v526
    %619 = vst [vmem:[#allocation4 + $0x38] sm:$0xff] %v575
    %620 = vst [vmem:[#allocation4 + $0x40] sm:$0xff] %v431
    %621 = vst [vmem:[#allocation4 + $0x48] sm:$0xff] %v480
    %622 = vst [vmem:[#allocation4 + $0x50] sm:$0xff] %v529
    %623 = vst [vmem:[#allocation4 + $0x58] sm:$0xff] %v578
    %624 = vst [vmem:[#allocation4 + $0x60] sm:$0xff] %v433
    %625 = vst [vmem:[#allocation4 + $0x68] sm:$0xff] %v482
    %626 = vst [vmem:[#allocation4 + $0x70] sm:$0xff] %v531
    %627 = vst [vmem:[#allocation4 + $0x78] sm:$0xff] %v580
    %628 = vst [vmem:[#allocation4 + $0x80] sm:$0xff] %v436
    %629 = vst [vmem:[#allocation4 + $0x88] sm:$0xff] %v485
    %630 = vst [vmem:[#allocation4 + $0x90] sm:$0xff] %v534
    %631 = vst [vmem:[#allocation4 + $0x98] sm:$0xff] %v583
    %632 = vst [vmem:[#allocation4 + $0xa0] sm:$0xff] %v438
    %633 = vst [vmem:[#allocation4 + $0xa8] sm:$0xff] %v487
    %634 = vst [vmem:[#allocation4 + $0xb0] sm:$0xff] %v536
    %635 = vst [vmem:[#allocation4 + $0xb8] sm:$0xff] %v585
    %636 = vst [vmem:[#allocation4 + $0xc0] sm:$0xff] %v441
    %637 = vst [vmem:[#allocation4 + $0xc8] sm:$0xff] %v490
    %638 = vst [vmem:[#allocation4 + $0xd0] sm:$0xff] %v539
    %639 = vst [vmem:[#allocation4 + $0xd8] sm:$0xff] %v588
    %640 = vst [vmem:[#allocation4 + $0xe0] sm:$0xff] %v443
    %641 = vst [vmem:[#allocation4 + $0xe8] sm:$0xff] %v492
    %642 = vst [vmem:[#allocation4 + $0xf0] sm:$0xff] %v541
    %643 = vst [vmem:[#allocation4 + $0xf8] sm:$0xff] %v590
    %644 = vst [vmem:[#allocation4 + $0x100] sm:$0xff] %v446
    %645 = vst [vmem:[#allocation4 + $0x108] sm:$0xff] %v495
    %646 = vst [vmem:[#allocation4 + $0x110] sm:$0xff] %v544
    %647 = vst [vmem:[#allocation4 + $0x118] sm:$0xff] %v593
    %648 = vst [vmem:[#allocation4 + $0x120] sm:$0xff] %v448
    %649 = vst [vmem:[#allocation4 + $0x128] sm:$0xff] %v497
    %650 = vst [vmem:[#allocation4 + $0x130] sm:$0xff] %v546
    %651 = vst [vmem:[#allocation4 + $0x138] sm:$0xff] %v595
    %652 = vst [vmem:[#allocation4 + $0x140] sm:$0xff] %v451
    %653 = vst [vmem:[#allocation4 + $0x148] sm:$0xff] %v500
    %654 = vst [vmem:[#allocation4 + $0x150] sm:$0xff] %v549
    %655 = vst [vmem:[#allocation4 + $0x158] sm:$0xff] %v598
    %656 = vst [vmem:[#allocation4 + $0x160] sm:$0xff] %v453
    %657 = vst [vmem:[#allocation4 + $0x168] sm:$0xff] %v502
    %658 = vst [vmem:[#allocation4 + $0x170] sm:$0xff] %v551
    %659 = vst [vmem:[#allocation4 + $0x178] sm:$0xff] %v600
    %660 = vst [vmem:[#allocation4 + $0x180] sm:$0xff] %v456
    %661 = vst [vmem:[#allocation4 + $0x188] sm:$0xff] %v505
    %662 = vst [vmem:[#allocation4 + $0x190] sm:$0xff] %v554
    %663 = vst [vmem:[#allocation4 + $0x198] sm:$0xff] %v603
    %664 = vst [vmem:[#allocation4 + $0x1a0] sm:$0xff] %v458
    %665 = vst [vmem:[#allocation4 + $0x1a8] sm:$0xff] %v507
    %666 = vst [vmem:[#allocation4 + $0x1b0] sm:$0xff] %v556
    %667 = vst [vmem:[#allocation4 + $0x1b8] sm:$0xff] %v605
    %668 = vst [vmem:[#allocation4 + $0x1c0] sm:$0xff] %v461
    %669 = vst [vmem:[#allocation4 + $0x1c8] sm:$0xff] %v510
    %670 = vst [vmem:[#allocation4 + $0x1d0] sm:$0xff] %v559
    %671 = vst [vmem:[#allocation4 + $0x1d8] sm:$0xff] %v608
    %672 = vst [vmem:[#allocation4 + $0x1e0] sm:$0xff] %v463
    %673 = vst [vmem:[#allocation4 + $0x1e8] sm:$0xff] %v512
    %674 = vst [vmem:[#allocation4 + $0x1f0] sm:$0xff] %v561
    %675 = vst [vmem:[#allocation4 + $0x1f8] sm:$0xff] %v610
    %v676 = vld [vmem:[#allocation2] sm:$0xff]
    %v677 = vld [vmem:[#allocation2 + $0x8] sm:$0xff]
    %v678 = vld [vmem:[#allocation3] sm:$0xff]
    %v679 = vld [vmem:[#allocation3 + $0x8] sm:$0xff]
    %v680 = vld [vmem:[#allocation4] sm:$0xff]
    %v681 = vld [vmem:[#allocation4 + $0x8] sm:$0xff]
    %v682 = vld [vmem:[#allocation4 + $0x10] sm:$0xff]
    %v683 = vld [vmem:[#allocation4 + $0x18] sm:$0xff]
    %v684 = vld [vmem:[#allocation4 + $0x20] sm:$0xff]
    %v685 = vld [vmem:[#allocation4 + $0x28] sm:$0xff]
    %v686 = vld [vmem:[#allocation4 + $0x30] sm:$0xff]
    %v687 = vld [vmem:[#allocation4 + $0x38] sm:$0xff]
    %v688 = vpack.c.bf16 %v677, %v676
    %v721 = vunpack.c.l.b16 %v150
    %v722 = vunpack.c.h.b16 %v150
    %v723 = vunpack.c.l.b16 %v151
    %v724 = vunpack.c.h.b16 %v151
    %v725 = vunpack.c.l.b16 %v152
    %v726 = vunpack.c.h.b16 %v152
    %v727 = vunpack.c.l.b16 %v153
    %v728 = vunpack.c.h.b16 %v153
    %v729 = vunpack.c.l.b16 %v154
    %v730 = vunpack.c.h.b16 %v154
    %v731 = vunpack.c.l.b16 %v155
    %v732 = vunpack.c.h.b16 %v155
    %v733 = vunpack.c.l.b16 %v156
    %v734 = vunpack.c.h.b16 %v156
    %v735 = vunpack.c.l.b16 %v157
    %v736 = vunpack.c.h.b16 %v157
    %v737 = vunpack.c.l.b16 %v158
    %v738 = vunpack.c.h.b16 %v158
    %v739 = vunpack.c.l.b16 %v159
    %v740 = vunpack.c.h.b16 %v159
    %v741 = vunpack.c.l.b16 %v160
    %v742 = vunpack.c.h.b16 %v160
    %v743 = vunpack.c.l.b16 %v161
    %v744 = vunpack.c.h.b16 %v161
    %v745 = vunpack.c.l.b16 %v162
    %v746 = vunpack.c.h.b16 %v162
    %v747 = vunpack.c.l.b16 %v163
    %v748 = vunpack.c.h.b16 %v163
    %v749 = vunpack.c.l.b16 %v164
    %v750 = vunpack.c.h.b16 %v164
    %v751 = vunpack.c.l.b16 %v165
    %v752 = vunpack.c.h.b16 %v165
    %v753 = vunpack.c.l.b16 %v166
    %v754 = vunpack.c.h.b16 %v166
    %v755 = vunpack.c.l.b16 %v167
    %v756 = vunpack.c.h.b16 %v167
    %v757 = vunpack.c.l.b16 %v168
    %v758 = vunpack.c.h.b16 %v168
    %v759 = vunpack.c.l.b16 %v169
    %v760 = vunpack.c.h.b16 %v169
    %v761 = vunpack.c.l.b16 %v170
    %v762 = vunpack.c.h.b16 %v170
    %v763 = vunpack.c.l.b16 %v171
    %v764 = vunpack.c.h.b16 %v171
    %v765 = vunpack.c.l.b16 %v172
    %v766 = vunpack.c.h.b16 %v172
    %v767 = vunpack.c.l.b16 %v173
    %v768 = vunpack.c.h.b16 %v173
    %v769 = vunpack.c.l.b16 %v174
    %v770 = vunpack.c.h.b16 %v174
    %v771 = vunpack.c.l.b16 %v175
    %v772 = vunpack.c.h.b16 %v175
    %v773 = vunpack.c.l.b16 %v176
    %v774 = vunpack.c.h.b16 %v176
    %v775 = vunpack.c.l.b16 %v177
    %v776 = vunpack.c.h.b16 %v177
    %v777 = vunpack.c.l.b16 %v178
    %v778 = vunpack.c.h.b16 %v178
    %v779 = vunpack.c.l.b16 %v179
    %v780 = vunpack.c.h.b16 %v179
    %v781 = vunpack.c.l.b16 %v180
    %v782 = vunpack.c.h.b16 %v180
    %v783 = vunpack.c.l.b16 %v181
    %v784 = vunpack.c.h.b16 %v181
    %v785 = vpack.c.b16 %v725, %v721
    %v786 = vpack.c.b16 %v726, %v722
    %v787 = vpack.c.b16 %v727, %v723
    %v788 = vpack.c.b16 %v728, %v724
    %v789 = vpack.c.b16 %v733, %v729
    %v790 = vpack.c.b16 %v734, %v730
    %v791 = vpack.c.b16 %v735, %v731
    %v792 = vpack.c.b16 %v736, %v732
    %v793 = vpack.c.b16 %v741, %v737
    %v794 = vpack.c.b16 %v742, %v738
    %v795 = vpack.c.b16 %v743, %v739
    %v796 = vpack.c.b16 %v744, %v740
    %v797 = vpack.c.b16 %v749, %v745
    %v798 = vpack.c.b16 %v750, %v746
    %v799 = vpack.c.b16 %v751, %v747
    %v800 = vpack.c.b16 %v752, %v748
    %v801 = vpack.c.b16 %v757, %v753
    %v802 = vpack.c.b16 %v758, %v754
    %v803 = vpack.c.b16 %v759, %v755
    %v804 = vpack.c.b16 %v760, %v756
    %v805 = vpack.c.b16 %v765, %v761
    %v806 = vpack.c.b16 %v766, %v762
    %v807 = vpack.c.b16 %v767, %v763
    %v808 = vpack.c.b16 %v768, %v764
    %v809 = vpack.c.b16 %v773, %v769
    %v810 = vpack.c.b16 %v774, %v770
    %v811 = vpack.c.b16 %v775, %v771
    %v812 = vpack.c.b16 %v776, %v772
    %v813 = vpack.c.b16 %v781, %v777
    %v814 = vpack.c.b16 %v782, %v778
    %v815 = vpack.c.b16 %v783, %v779
    %v816 = vpack.c.b16 %v784, %v780
    %849 = vmatpush.bf16.msra.mxu0 %v813
    %850 = vmatpush.bf16.msra.mxu0 %v809
    %851 = vmatpush.bf16.msra.mxu0 %v805
    %852 = vmatpush.bf16.msra.mxu0 %v801
    %853 = vmatpush.bf16.msra.mxu0 %v797
    %854 = vmatpush.bf16.msra.mxu0 %v793
    %855 = vmatpush.bf16.msra.mxu0 %v789
    %856 = vmatpush.bf16.msra.mxu0 %v785
    %857 = vmatmul.bf16.gmra.mxu0 %v688
    %v858 = vpop.f32.mrf.mxu0
    %v859 = vadd.f32 0.0, %v858
    %v860 = vpop.f32.mrf.mxu0
    %v861 = vadd.f32 0.0, %v860
    %862 = vdwg.mxu0
    %863 = vmatpush.bf16.msra.mxu0 %v814
    %864 = vmatpush.bf16.msra.mxu0 %v810
    %865 = vmatpush.bf16.msra.mxu0 %v806
    %866 = vmatpush.bf16.msra.mxu0 %v802
    %867 = vmatpush.bf16.msra.mxu0 %v798
    %868 = vmatpush.bf16.msra.mxu0 %v794
    %869 = vmatpush.bf16.msra.mxu0 %v790
    %870 = vmatpush.bf16.msra.mxu0 %v786
    %871 = vmatmul.bf16.gmra.mxu0 %v688
    %v872 = vpop.f32.mrf.mxu0
    %v873 = vadd.f32 0.0, %v872
    %v874 = vpop.f32.mrf.mxu0
    %v875 = vadd.f32 0.0, %v874
    %876 = vdwg.mxu0
    %877 = vmatpush.bf16.msra.mxu0 %v815
    %878 = vmatpush.bf16.msra.mxu0 %v811
    %879 = vmatpush.bf16.msra.mxu0 %v807
    %880 = vmatpush.bf16.msra.mxu0 %v803
    %881 = vmatpush.bf16.msra.mxu0 %v799
    %882 = vmatpush.bf16.msra.mxu0 %v795
    %883 = vmatpush.bf16.msra.mxu0 %v791
    %884 = vmatpush.bf16.msra.mxu0 %v787
    %885 = vmatmul.bf16.gmra.mxu0 %v688
    %v886 = vpop.f32.mrf.mxu0
    %v887 = vadd.f32 0.0, %v886
    %v888 = vpop.f32.mrf.mxu0
    %v889 = vadd.f32 0.0, %v888
    %890 = vdwg.mxu0
    %891 = vmatpush.bf16.msra.mxu0 %v816
    %892 = vmatpush.bf16.msra.mxu0 %v812
    %893 = vmatpush.bf16.msra.mxu0 %v808
    %894 = vmatpush.bf16.msra.mxu0 %v804
    %895 = vmatpush.bf16.msra.mxu0 %v800
    %896 = vmatpush.bf16.msra.mxu0 %v796
    %897 = vmatpush.bf16.msra.mxu0 %v792
    %898 = vmatpush.bf16.msra.mxu0 %v788
    %899 = vmatmul.bf16.gmra.mxu0 %v688
    %v900 = vpop.f32.mrf.mxu0
    %v901 = vadd.f32 0.0, %v900
    %v902 = vpop.f32.mrf.mxu0
    %v903 = vadd.f32 0.0, %v902
    %904 = vdwg.mxu0
    %v905 = vadd.f32 %v680, %v859
    %v906 = vadd.f32 %v681, %v873
    %v907 = vadd.f32 %v682, %v887
    %v908 = vadd.f32 %v683, %v901
    %v909 = vadd.f32 %v684, %v861
    %v910 = vadd.f32 %v685, %v875
    %v911 = vadd.f32 %v686, %v889
    %v912 = vadd.f32 %v687, %v903
    %v913 = vxor.u32 %v905, 2147483648
    %v914 = vxor.u32 %v909, 2147483648
    %v915 = vmul.f32 %v913, 1.442695
    %v916 = vpow.pop %v915
    %v917 = vmul.f32 %v914, 1.442695
    %v918 = vpow.pop %v917
    %v919 = vadd.f32 %v916, 1.0
    %v920 = vadd.f32 %v918, 1.0
    %v921 = vrcp.pop %v919
    %v922 = vmul.f32 %v919, %v921
    %v923 = vsub.f32 1.0, %v922
    %v924 = vmul.f32 %v921, %v923
    %v925 = vadd.f32 %v921, %v924
    %vm926 = vweird.f32 %v919
    %vm927 = vweird.f32 %v921
    %vm928 = vmor %vm926, %vm927
    %v929 = vsel %vm928, %v921, %v925
    %v930 = vand.u32 2147483647, %v919
    %vm931 = vcmp.eq.f32.partialorder %v930, 8.507059e+37
    %v932 = vand.u32 %v919, 2147483648
    %v933 = vor.u32 1.1754944e-38, %v932
    %v934 = vsel %vm931, %v933, %v929
    %v935 = vmul.f32 1.0, %v934
    %v936 = vrcp.pop %v920
    %v937 = vmul.f32 %v920, %v936
    %v938 = vsub.f32 1.0, %v937
    %v939 = vmul.f32 %v936, %v938
    %v940 = vadd.f32 %v936, %v939
    %vm941 = vweird.f32 %v920
    %vm942 = vweird.f32 %v936
    %vm943 = vmor %vm941, %vm942
    %v944 = vsel %vm943, %v936, %v940
    %v945 = vand.u32 2147483647, %v920
    %vm946 = vcmp.eq.f32.partialorder %v945, 8.507059e+37
    %v947 = vand.u32 %v920, 2147483648
    %v948 = vor.u32 1.1754944e-38, %v947
    %v949 = vsel %vm946, %v948, %v944
    %v950 = vmul.f32 1.0, %v949
    %v951 = vxor.u32 %v906, 2147483648
    %v952 = vxor.u32 %v910, 2147483648
    %v953 = vmul.f32 %v951, 1.442695
    %v954 = vpow.pop %v953
    %v955 = vmul.f32 %v952, 1.442695
    %v956 = vpow.pop %v955
    %v957 = vadd.f32 %v954, 1.0
    %v958 = vadd.f32 %v956, 1.0
    %v959 = vrcp.pop %v957
    %v960 = vmul.f32 %v957, %v959
    %v961 = vsub.f32 1.0, %v960
    %v962 = vmul.f32 %v959, %v961
    %v963 = vadd.f32 %v959, %v962
    %vm964 = vweird.f32 %v957
    %vm965 = vweird.f32 %v959
    %vm966 = vmor %vm964, %vm965
    %v967 = vsel %vm966, %v959, %v963
    %v968 = vand.u32 2147483647, %v957
    %vm969 = vcmp.eq.f32.partialorder %v968, 8.507059e+37
    %v970 = vand.u32 %v957, 2147483648
    %v971 = vor.u32 1.1754944e-38, %v970
    %v972 = vsel %vm969, %v971, %v967
    %v973 = vmul.f32 1.0, %v972
    %v974 = vrcp.pop %v958
    %v975 = vmul.f32 %v958, %v974
    %v976 = vsub.f32 1.0, %v975
    %v977 = vmul.f32 %v974, %v976
    %v978 = vadd.f32 %v974, %v977
    %vm979 = vweird.f32 %v958
    %vm980 = vweird.f32 %v974
    %vm981 = vmor %vm979, %vm980
    %v982 = vsel %vm981, %v974, %v978
    %v983 = vand.u32 2147483647, %v958
    %vm984 = vcmp.eq.f32.partialorder %v983, 8.507059e+37
    %v985 = vand.u32 %v958, 2147483648
    %v986 = vor.u32 1.1754944e-38, %v985
    %v987 = vsel %vm984, %v986, %v982
    %v988 = vmul.f32 1.0, %v987
    %v989 = vtanh.pop %v907
    %v990 = vtanh.pop %v911
    %v991 = vxor.u32 %v908, 2147483648
    %v992 = vxor.u32 %v912, 2147483648
    %v993 = vmul.f32 %v991, 1.442695
    %v994 = vpow.pop %v993
    %v995 = vmul.f32 %v992, 1.442695
    %v996 = vpow.pop %v995
    %v997 = vadd.f32 %v994, 1.0
    %v998 = vadd.f32 %v996, 1.0
    %v999 = vrcp.pop %v997
    %v1000 = vmul.f32 %v997, %v999
    %v1001 = vsub.f32 1.0, %v1000
    %v1002 = vmul.f32 %v999, %v1001
    %v1003 = vadd.f32 %v999, %v1002
    %vm1004 = vweird.f32 %v997
    %vm1005 = vweird.f32 %v999
    %vm1006 = vmor %vm1004, %vm1005
    %v1007 = vsel %vm1006, %v999, %v1003
    %v1008 = vand.u32 2147483647, %v997
    %vm1009 = vcmp.eq.f32.partialorder %v1008, 8.507059e+37
    %v1010 = vand.u32 %v997, 2147483648
    %v1011 = vor.u32 1.1754944e-38, %v1010
    %v1012 = vsel %vm1009, %v1011, %v1007
    %v1013 = vmul.f32 1.0, %v1012
    %v1014 = vrcp.pop %v998
    %v1015 = vmul.f32 %v998, %v1014
    %v1016 = vsub.f32 1.0, %v1015
    %v1017 = vmul.f32 %v1014, %v1016
    %v1018 = vadd.f32 %v1014, %v1017
    %vm1019 = vweird.f32 %v998
    %vm1020 = vweird.f32 %v1014
    %vm1021 = vmor %vm1019, %vm1020
    %v1022 = vsel %vm1021, %v1014, %v1018
    %v1023 = vand.u32 2147483647, %v998
    %vm1024 = vcmp.eq.f32.partialorder %v1023, 8.507059e+37
    %v1025 = vand.u32 %v998, 2147483648
    %v1026 = vor.u32 1.1754944e-38, %v1025
    %v1027 = vsel %vm1024, %v1026, %v1022
    %v1028 = vmul.f32 1.0, %v1027
    %v1029 = vmul.f32 %v973, %v678
    %v1030 = vmul.f32 %v988, %v679
    %v1031 = vmul.f32 %v935, %v989
    %v1032 = vmul.f32 %v950, %v990
    %v1033 = vadd.f32 %v1029, %v1031
    %v1034 = vadd.f32 %v1030, %v1032
    %v1035 = vtanh.pop %v1033
    %v1036 = vtanh.pop %v1034
    %v1037 = vmul.f32 %v1013, %v1035
    %v1038 = vmul.f32 %v1028, %v1036
    %v1039 = vpack.c.bf16 %v1037, %v1037
    %v1040 = vpack.c.bf16 %v1038, %v1038
    %1041 = vst [vmem:[#allocation14] sm:$0xf] %v1039
    %1042 = vst [vmem:[#allocation14 + $0x4] sm:$0xf] %v1040
    %s1043 = smul.u32 0, 8
    %p1044 = scmp.lt.s32.totalorder %s1043, 8
    %s1045 = scalar_select %p1044, 1, 0
    %v1046 = vstv %s1045
    %vm1047 = vcmp.eq.s32.totalorder %v1046, 1
    %v1048 = vsel %vm1047, %v1037, %v676
    %v1049 = vsel %vm1047, %v1038, %v677
    %v1050 = vsel %vm1047, %v1033, %v678
    %v1051 = vsel %vm1047, %v1034, %v679
    %s1052 = scalar_lea.vmem [#allocation4], 64
    %v1053 = vld [vmem:[%s1052] sm:$0xff]
    %v1054 = vld [vmem:[%s1052 + $0x8] sm:$0xff]
    %v1055 = vld [vmem:[%s1052 + $0x10] sm:$0xff]
    %v1056 = vld [vmem:[%s1052 + $0x18] sm:$0xff]
    %v1057 = vld [vmem:[%s1052 + $0x20] sm:$0xff]
    %v1058 = vld [vmem:[%s1052 + $0x28] sm:$0xff]
    %v1059 = vld [vmem:[%s1052 + $0x30] sm:$0xff]
    %v1060 = vld [vmem:[%s1052 + $0x38] sm:$0xff]
    %v1061 = vpack.c.bf16 %v1049, %v1048
    %1062 = vmatpush.bf16.msra.mxu0 %v813
    %1063 = vmatpush.bf16.msra.mxu0 %v809
    %1064 = vmatpush.bf16.msra.mxu0 %v805
    %1065 = vmatpush.bf16.msra.mxu0 %v801
    %1066 = vmatpush.bf16.msra.mxu0 %v797
    %1067 = vmatpush.bf16.msra.mxu0 %v793
    %1068 = vmatpush.bf16.msra.mxu0 %v789
    %1069 = vmatpush.bf16.msra.mxu0 %v785
    %1070 = vmatmul.bf16.gmra.mxu0 %v1061
    %v1071 = vpop.f32.mrf.mxu0
    %v1072 = vadd.f32 0.0, %v1071
    %v1073 = vpop.f32.mrf.mxu0
    %v1074 = vadd.f32 0.0, %v1073
    %1075 = vdwg.mxu0
    %1076 = vmatpush.bf16.msra.mxu0 %v814
    %1077 = vmatpush.bf16.msra.mxu0 %v810
    %1078 = vmatpush.bf16.msra.mxu0 %v806
    %1079 = vmatpush.bf16.msra.mxu0 %v802
    %1080 = vmatpush.bf16.msra.mxu0 %v798
    %1081 = vmatpush.bf16.msra.mxu0 %v794
    %1082 = vmatpush.bf16.msra.mxu0 %v790
    %1083 = vmatpush.bf16.msra.mxu0 %v786
    %1084 = vmatmul.bf16.gmra.mxu0 %v1061
    %v1085 = vpop.f32.mrf.mxu0
    %v1086 = vadd.f32 0.0, %v1085
    %v1087 = vpop.f32.mrf.mxu0
    %v1088 = vadd.f32 0.0, %v1087
    %1089 = vdwg.mxu0
    %1090 = vmatpush.bf16.msra.mxu0 %v815
    %1091 = vmatpush.bf16.msra.mxu0 %v811
    %1092 = vmatpush.bf16.msra.mxu0 %v807
    %1093 = vmatpush.bf16.msra.mxu0 %v803
    %1094 = vmatpush.bf16.msra.mxu0 %v799
    %1095 = vmatpush.bf16.msra.mxu0 %v795
    %1096 = vmatpush.bf16.msra.mxu0 %v791
    %1097 = vmatpush.bf16.msra.mxu0 %v787
    %1098 = vmatmul.bf16.gmra.mxu0 %v1061
    %v1099 = vpop.f32.mrf.mxu0
    %v1100 = vadd.f32 0.0, %v1099
    %v1101 = vpop.f32.mrf.mxu0
    %v1102 = vadd.f32 0.0, %v1101
    %1103 = vdwg.mxu0
    %1104 = vmatpush.bf16.msra.mxu0 %v816
    %1105 = vmatpush.bf16.msra.mxu0 %v812
    %1106 = vmatpush.bf16.msra.mxu0 %v808
    %1107 = vmatpush.bf16.msra.mxu0 %v804
    %1108 = vmatpush.bf16.msra.mxu0 %v800
    %1109 = vmatpush.bf16.msra.mxu0 %v796
    %1110 = vmatpush.bf16.msra.mxu0 %v792
    %1111 = vmatpush.bf16.msra.mxu0 %v788
    %1112 = vmatmul.bf16.gmra.mxu0 %v1061
    %v1113 = vpop.f32.mrf.mxu0
    %v1114 = vadd.f32 0.0, %v1113
    %v1115 = vpop.f32.mrf.mxu0
    %v1116 = vadd.f32 0.0, %v1115
    %1117 = vdwg.mxu0
    %v1118 = vadd.f32 %v1053, %v1072
    %v1119 = vadd.f32 %v1054, %v1086
    %v1120 = vadd.f32 %v1055, %v1100
    %v1121 = vadd.f32 %v1056, %v1114
    %v1122 = vadd.f32 %v1057, %v1074
    %v1123 = vadd.f32 %v1058, %v1088
    %v1124 = vadd.f32 %v1059, %v1102
    %v1125 = vadd.f32 %v1060, %v1116
    %v1126 = vxor.u32 %v1118, 2147483648
    %v1127 = vxor.u32 %v1122, 2147483648
    %v1128 = vmul.f32 %v1126, 1.442695
    %v1129 = vpow.pop %v1128
    %v1130 = vmul.f32 %v1127, 1.442695
    %v1131 = vpow.pop %v1130
    %v1132 = vadd.f32 %v1129, 1.0
    %v1133 = vadd.f32 %v1131, 1.0
    %v1134 = vrcp.pop %v1132
    %v1135 = vmul.f32 %v1132, %v1134
    %v1136 = vsub.f32 1.0, %v1135
    %v1137 = vmul.f32 %v1134, %v1136
    %v1138 = vadd.f32 %v1134, %v1137
    %vm1139 = vweird.f32 %v1132
    %vm1140 = vweird.f32 %v1134
    %vm1141 = vmor %vm1139, %vm1140
    %v1142 = vsel %vm1141, %v1134, %v1138
    %v1143 = vand.u32 2147483647, %v1132
    %vm1144 = vcmp.eq.f32.partialorder %v1143, 8.507059e+37
    %v1145 = vand.u32 %v1132, 2147483648
    %v1146 = vor.u32 1.1754944e-38, %v1145
    %v1147 = vsel %vm1144, %v1146, %v1142
    %v1148 = vmul.f32 1.0, %v1147
    %v1149 = vrcp.pop %v1133
    %v1150 = vmul.f32 %v1133, %v1149
    %v1151 = vsub.f32 1.0, %v1150
    %v1152 = vmul.f32 %v1149, %v1151
    %v1153 = vadd.f32 %v1149, %v1152
    %vm1154 = vweird.f32 %v1133
    %vm1155 = vweird.f32 %v1149
    %vm1156 = vmor %vm1154, %vm1155
    %v1157 = vsel %vm1156, %v1149, %v1153
    %v1158 = vand.u32 2147483647, %v1133
    %vm1159 = vcmp.eq.f32.partialorder %v1158, 8.507059e+37
    %v1160 = vand.u32 %v1133, 2147483648
    %v1161 = vor.u32 1.1754944e-38, %v1160
    %v1162 = vsel %vm1159, %v1161, %v1157
    %v1163 = vmul.f32 1.0, %v1162
    %v1164 = vxor.u32 %v1119, 2147483648
    %v1165 = vxor.u32 %v1123, 2147483648
    %v1166 = vmul.f32 %v1164, 1.442695
    %v1167 = vpow.pop %v1166
    %v1168 = vmul.f32 %v1165, 1.442695
    %v1169 = vpow.pop %v1168
    %v1170 = vadd.f32 %v1167, 1.0
    %v1171 = vadd.f32 %v1169, 1.0
    %v1172 = vrcp.pop %v1170
    %v1173 = vmul.f32 %v1170, %v1172
    %v1174 = vsub.f32 1.0, %v1173
    %v1175 = vmul.f32 %v1172, %v1174
    %v1176 = vadd.f32 %v1172, %v1175
    %vm1177 = vweird.f32 %v1170
    %vm1178 = vweird.f32 %v1172
    %vm1179 = vmor %vm1177, %vm1178
    %v1180 = vsel %vm1179, %v1172, %v1176
    %v1181 = vand.u32 2147483647, %v1170
    %vm1182 = vcmp.eq.f32.partialorder %v1181, 8.507059e+37
    %v1183 = vand.u32 %v1170, 2147483648
    %v1184 = vor.u32 1.1754944e-38, %v1183
    %v1185 = vsel %vm1182, %v1184, %v1180
    %v1186 = vmul.f32 1.0, %v1185
    %v1187 = vrcp.pop %v1171
    %v1188 = vmul.f32 %v1171, %v1187
    %v1189 = vsub.f32 1.0, %v1188
    %v1190 = vmul.f32 %v1187, %v1189
    %v1191 = vadd.f32 %v1187, %v1190
    %vm1192 = vweird.f32 %v1171
    %vm1193 = vweird.f32 %v1187
    %vm1194 = vmor %vm1192, %vm1193
    %v1195 = vsel %vm1194, %v1187, %v1191
    %v1196 = vand.u32 2147483647, %v1171
    %vm1197 = vcmp.eq.f32.partialorder %v1196, 8.507059e+37
    %v1198 = vand.u32 %v1171, 2147483648
    %v1199 = vor.u32 1.1754944e-38, %v1198
    %v1200 = vsel %vm1197, %v1199, %v1195
    %v1201 = vmul.f32 1.0, %v1200
    %v1202 = vtanh.pop %v1120
    %v1203 = vtanh.pop %v1124
    %v1204 = vxor.u32 %v1121, 2147483648
    %v1205 = vxor.u32 %v1125, 2147483648
    %v1206 = vmul.f32 %v1204, 1.442695
    %v1207 = vpow.pop %v1206
    %v1208 = vmul.f32 %v1205, 1.442695
    %v1209 = vpow.pop %v1208
    %v1210 = vadd.f32 %v1207, 1.0
    %v1211 = vadd.f32 %v1209, 1.0
    %v1212 = vrcp.pop %v1210
    %v1213 = vmul.f32 %v1210, %v1212
    %v1214 = vsub.f32 1.0, %v1213
    %v1215 = vmul.f32 %v1212, %v1214
    %v1216 = vadd.f32 %v1212, %v1215
    %vm1217 = vweird.f32 %v1210
    %vm1218 = vweird.f32 %v1212
    %vm1219 = vmor %vm1217, %vm1218
    %v1220 = vsel %vm1219, %v1212, %v1216
    %v1221 = vand.u32 2147483647, %v1210
    %vm1222 = vcmp.eq.f32.partialorder %v1221, 8.507059e+37
    %v1223 = vand.u32 %v1210, 2147483648
    %v1224 = vor.u32 1.1754944e-38, %v1223
    %v1225 = vsel %vm1222, %v1224, %v1220
    %v1226 = vmul.f32 1.0, %v1225
    %v1227 = vrcp.pop %v1211
    %v1228 = vmul.f32 %v1211, %v1227
    %v1229 = vsub.f32 1.0, %v1228
    %v1230 = vmul.f32 %v1227, %v1229
    %v1231 = vadd.f32 %v1227, %v1230
    %vm1232 = vweird.f32 %v1211
    %vm1233 = vweird.f32 %v1227
    %vm1234 = vmor %vm1232, %vm1233
    %v1235 = vsel %vm1234, %v1227, %v1231
    %v1236 = vand.u32 2147483647, %v1211
    %vm1237 = vcmp.eq.f32.partialorder %v1236, 8.507059e+37
    %v1238 = vand.u32 %v1211, 2147483648
    %v1239 = vor.u32 1.1754944e-38, %v1238
    %v1240 = vsel %vm1237, %v1239, %v1235
    %v1241 = vmul.f32 1.0, %v1240
    %v1242 = vmul.f32 %v1186, %v1050
    %v1243 = vmul.f32 %v1201, %v1051
    %v1244 = vmul.f32 %v1148, %v1202
    %v1245 = vmul.f32 %v1163, %v1203
    %v1246 = vadd.f32 %v1242, %v1244
    %v1247 = vadd.f32 %v1243, %v1245
    %v1248 = vtanh.pop %v1246
    %v1249 = vtanh.pop %v1247
    %v1250 = vmul.f32 %v1226, %v1248
    %v1251 = vmul.f32 %v1241, %v1249
    %v1252 = vpack.c.bf16 %v1250, %v1250
    %v1253 = vpack.c.bf16 %v1251, %v1251
    %s1254 = scalar_lea.vmem [#allocation14], 8
    %1255 = vst [vmem:[%s1254] sm:$0xf] %v1252
    %1256 = vst [vmem:[%s1254 + $0x4] sm:$0xf] %v1253
    %s1257 = sadd.s32 %s1043, 1
    %p1258 = scmp.lt.s32.totalorder %s1257, 8
    %s1259 = scalar_select %p1258, 1, 0
    %v1260 = vstv %s1259
    %vm1261 = vcmp.eq.s32.totalorder %v1260, 1
    %v1262 = vsel %vm1261, %v1250, %v1048
    %v1263 = vsel %vm1261, %v1251, %v1049
    %v1264 = vsel %vm1261, %v1246, %v1050
    %v1265 = vsel %vm1261, %v1247, %v1051
    %s1266 = scalar_lea.vmem [#allocation4], 128
    %v1267 = vld [vmem:[%s1266] sm:$0xff]
    %v1268 = vld [vmem:[%s1266 + $0x8] sm:$0xff]
    %v1269 = vld [vmem:[%s1266 + $0x10] sm:$0xff]
    %v1270 = vld [vmem:[%s1266 + $0x18] sm:$0xff]
    %v1271 = vld [vmem:[%s1266 + $0x20] sm:$0xff]
    %v1272 = vld [vmem:[%s1266 + $0x28] sm:$0xff]
    %v1273 = vld [vmem:[%s1266 + $0x30] sm:$0xff]
    %v1274 = vld [vmem:[%s1266 + $0x38] sm:$0xff]
    %v1275 = vpack.c.bf16 %v1263, %v1262
    %1276 = vmatpush.bf16.msra.mxu0 %v813
    %1277 = vmatpush.bf16.msra.mxu0 %v809
    %1278 = vmatpush.bf16.msra.mxu0 %v805
    %1279 = vmatpush.bf16.msra.mxu0 %v801
    %1280 = vmatpush.bf16.msra.mxu0 %v797
    %1281 = vmatpush.bf16.msra.mxu0 %v793
    %1282 = vmatpush.bf16.msra.mxu0 %v789
    %1283 = vmatpush.bf16.msra.mxu0 %v785
    %1284 = vmatmul.bf16.gmra.mxu0 %v1275
    %v1285 = vpop.f32.mrf.mxu0
    %v1286 = vadd.f32 0.0, %v1285
    %v1287 = vpop.f32.mrf.mxu0
    %v1288 = vadd.f32 0.0, %v1287
    %1289 = vdwg.mxu0
    %1290 = vmatpush.bf16.msra.mxu0 %v814
    %1291 = vmatpush.bf16.msra.mxu0 %v810
    %1292 = vmatpush.bf16.msra.mxu0 %v806
    %1293 = vmatpush.bf16.msra.mxu0 %v802
    %1294 = vmatpush.bf16.msra.mxu0 %v798
    %1295 = vmatpush.bf16.msra.mxu0 %v794
    %1296 = vmatpush.bf16.msra.mxu0 %v790
    %1297 = vmatpush.bf16.msra.mxu0 %v786
    %1298 = vmatmul.bf16.gmra.mxu0 %v1275
    %v1299 = vpop.f32.mrf.mxu0
    %v1300 = vadd.f32 0.0, %v1299
    %v1301 = vpop.f32.mrf.mxu0
    %v1302 = vadd.f32 0.0, %v1301
    %1303 = vdwg.mxu0
    %1304 = vmatpush.bf16.msra.mxu0 %v815
    %1305 = vmatpush.bf16.msra.mxu0 %v811
    %1306 = vmatpush.bf16.msra.mxu0 %v807
    %1307 = vmatpush.bf16.msra.mxu0 %v803
    %1308 = vmatpush.bf16.msra.mxu0 %v799
    %1309 = vmatpush.bf16.msra.mxu0 %v795
    %1310 = vmatpush.bf16.msra.mxu0 %v791
    %1311 = vmatpush.bf16.msra.mxu0 %v787
    %1312 = vmatmul.bf16.gmra.mxu0 %v1275
    %v1313 = vpop.f32.mrf.mxu0
    %v1314 = vadd.f32 0.0, %v1313
    %v1315 = vpop.f32.mrf.mxu0
    %v1316 = vadd.f32 0.0, %v1315
    %1317 = vdwg.mxu0
    %1318 = vmatpush.bf16.msra.mxu0 %v816
    %1319 = vmatpush.bf16.msra.mxu0 %v812
    %1320 = vmatpush.bf16.msra.mxu0 %v808
    %1321 = vmatpush.bf16.msra.mxu0 %v804
    %1322 = vmatpush.bf16.msra.mxu0 %v800
    %1323 = vmatpush.bf16.msra.mxu0 %v796
    %1324 = vmatpush.bf16.msra.mxu0 %v792
    %1325 = vmatpush.bf16.msra.mxu0 %v788
    %1326 = vmatmul.bf16.gmra.mxu0 %v1275
    %v1327 = vpop.f32.mrf.mxu0
    %v1328 = vadd.f32 0.0, %v1327
    %v1329 = vpop.f32.mrf.mxu0
    %v1330 = vadd.f32 0.0, %v1329
    %1331 = vdwg.mxu0
    %v1332 = vadd.f32 %v1267, %v1286
    %v1333 = vadd.f32 %v1268, %v1300
    %v1334 = vadd.f32 %v1269, %v1314
    %v1335 = vadd.f32 %v1270, %v1328
    %v1336 = vadd.f32 %v1271, %v1288
    %v1337 = vadd.f32 %v1272, %v1302
    %v1338 = vadd.f32 %v1273, %v1316
    %v1339 = vadd.f32 %v1274, %v1330
    %v1340 = vxor.u32 %v1332, 2147483648
    %v1341 = vxor.u32 %v1336, 2147483648
    %v1342 = vmul.f32 %v1340, 1.442695
    %v1343 = vpow.pop %v1342
    %v1344 = vmul.f32 %v1341, 1.442695
    %v1345 = vpow.pop %v1344
    %v1346 = vadd.f32 %v1343, 1.0
    %v1347 = vadd.f32 %v1345, 1.0
    %v1348 = vrcp.pop %v1346
    %v1349 = vmul.f32 %v1346, %v1348
    %v1350 = vsub.f32 1.0, %v1349
    %v1351 = vmul.f32 %v1348, %v1350
    %v1352 = vadd.f32 %v1348, %v1351
    %vm1353 = vweird.f32 %v1346
    %vm1354 = vweird.f32 %v1348
    %vm1355 = vmor %vm1353, %vm1354
    %v1356 = vsel %vm1355, %v1348, %v1352
    %v1357 = vand.u32 2147483647, %v1346
    %vm1358 = vcmp.eq.f32.partialorder %v1357, 8.507059e+37
    %v1359 = vand.u32 %v1346, 2147483648
    %v1360 = vor.u32 1.1754944e-38, %v1359
    %v1361 = vsel %vm1358, %v1360, %v1356
    %v1362 = vmul.f32 1.0, %v1361
    %v1363 = vrcp.pop %v1347
    %v1364 = vmul.f32 %v1347, %v1363
    %v1365 = vsub.f32 1.0, %v1364
    %v1366 = vmul.f32 %v1363, %v1365
    %v1367 = vadd.f32 %v1363, %v1366
    %vm1368 = vweird.f32 %v1347
    %vm1369 = vweird.f32 %v1363
    %vm1370 = vmor %vm1368, %vm1369
    %v1371 = vsel %vm1370, %v1363, %v1367
    %v1372 = vand.u32 2147483647, %v1347
    %vm1373 = vcmp.eq.f32.partialorder %v1372, 8.507059e+37
    %v1374 = vand.u32 %v1347, 2147483648
    %v1375 = vor.u32 1.1754944e-38, %v1374
    %v1376 = vsel %vm1373, %v1375, %v1371
    %v1377 = vmul.f32 1.0, %v1376
    %v1378 = vxor.u32 %v1333, 2147483648
    %v1379 = vxor.u32 %v1337, 2147483648
    %v1380 = vmul.f32 %v1378, 1.442695
    %v1381 = vpow.pop %v1380
    %v1382 = vmul.f32 %v1379, 1.442695
    %v1383 = vpow.pop %v1382
    %v1384 = vadd.f32 %v1381, 1.0
    %v1385 = vadd.f32 %v1383, 1.0
    %v1386 = vrcp.pop %v1384
    %v1387 = vmul.f32 %v1384, %v1386
    %v1388 = vsub.f32 1.0, %v1387
    %v1389 = vmul.f32 %v1386, %v1388
    %v1390 = vadd.f32 %v1386, %v1389
    %vm1391 = vweird.f32 %v1384
    %vm1392 = vweird.f32 %v1386
    %vm1393 = vmor %vm1391, %vm1392
    %v1394 = vsel %vm1393, %v1386, %v1390
    %v1395 = vand.u32 2147483647, %v1384
    %vm1396 = vcmp.eq.f32.partialorder %v1395, 8.507059e+37
    %v1397 = vand.u32 %v1384, 2147483648
    %v1398 = vor.u32 1.1754944e-38, %v1397
    %v1399 = vsel %vm1396, %v1398, %v1394
    %v1400 = vmul.f32 1.0, %v1399
    %v1401 = vrcp.pop %v1385
    %v1402 = vmul.f32 %v1385, %v1401
    %v1403 = vsub.f32 1.0, %v1402
    %v1404 = vmul.f32 %v1401, %v1403
    %v1405 = vadd.f32 %v1401, %v1404
    %vm1406 = vweird.f32 %v1385
    %vm1407 = vweird.f32 %v1401
    %vm1408 = vmor %vm1406, %vm1407
    %v1409 = vsel %vm1408, %v1401, %v1405
    %v1410 = vand.u32 2147483647, %v1385
    %vm1411 = vcmp.eq.f32.partialorder %v1410, 8.507059e+37
    %v1412 = vand.u32 %v1385, 2147483648
    %v1413 = vor.u32 1.1754944e-38, %v1412
    %v1414 = vsel %vm1411, %v1413, %v1409
    %v1415 = vmul.f32 1.0, %v1414
    %v1416 = vtanh.pop %v1334
    %v1417 = vtanh.pop %v1338
    %v1418 = vxor.u32 %v1335, 2147483648
    %v1419 = vxor.u32 %v1339, 2147483648
    %v1420 = vmul.f32 %v1418, 1.442695
    %v1421 = vpow.pop %v1420
    %v1422 = vmul.f32 %v1419, 1.442695
    %v1423 = vpow.pop %v1422
    %v1424 = vadd.f32 %v1421, 1.0
    %v1425 = vadd.f32 %v1423, 1.0
    %v1426 = vrcp.pop %v1424
    %v1427 = vmul.f32 %v1424, %v1426
    %v1428 = vsub.f32 1.0, %v1427
    %v1429 = vmul.f32 %v1426, %v1428
    %v1430 = vadd.f32 %v1426, %v1429
    %vm1431 = vweird.f32 %v1424
    %vm1432 = vweird.f32 %v1426
    %vm1433 = vmor %vm1431, %vm1432
    %v1434 = vsel %vm1433, %v1426, %v1430
    %v1435 = vand.u32 2147483647, %v1424
    %vm1436 = vcmp.eq.f32.partialorder %v1435, 8.507059e+37
    %v1437 = vand.u32 %v1424, 2147483648
    %v1438 = vor.u32 1.1754944e-38, %v1437
    %v1439 = vsel %vm1436, %v1438, %v1434
    %v1440 = vmul.f32 1.0, %v1439
    %v1441 = vrcp.pop %v1425
    %v1442 = vmul.f32 %v1425, %v1441
    %v1443 = vsub.f32 1.0, %v1442
    %v1444 = vmul.f32 %v1441, %v1443
    %v1445 = vadd.f32 %v1441, %v1444
    %vm1446 = vweird.f32 %v1425
    %vm1447 = vweird.f32 %v1441
    %vm1448 = vmor %vm1446, %vm1447
    %v1449 = vsel %vm1448, %v1441, %v1445
    %v1450 = vand.u32 2147483647, %v1425
    %vm1451 = vcmp.eq.f32.partialorder %v1450, 8.507059e+37
    %v1452 = vand.u32 %v1425, 2147483648
    %v1453 = vor.u32 1.1754944e-38, %v1452
    %v1454 = vsel %vm1451, %v1453, %v1449
    %v1455 = vmul.f32 1.0, %v1454
    %v1456 = vmul.f32 %v1400, %v1264
    %v1457 = vmul.f32 %v1415, %v1265
    %v1458 = vmul.f32 %v1362, %v1416
    %v1459 = vmul.f32 %v1377, %v1417
    %v1460 = vadd.f32 %v1456, %v1458
    %v1461 = vadd.f32 %v1457, %v1459
    %v1462 = vtanh.pop %v1460
    %v1463 = vtanh.pop %v1461
    %v1464 = vmul.f32 %v1440, %v1462
    %v1465 = vmul.f32 %v1455, %v1463
    %v1466 = vpack.c.bf16 %v1464, %v1464
    %v1467 = vpack.c.bf16 %v1465, %v1465
    %s1468 = scalar_lea.vmem [#allocation14], 16
    %1469 = vst [vmem:[%s1468] sm:$0xf] %v1466
    %1470 = vst [vmem:[%s1468 + $0x4] sm:$0xf] %v1467
    %s1471 = sadd.s32 %s1043, 2
    %p1472 = scmp.lt.s32.totalorder %s1471, 8
    %s1473 = scalar_select %p1472, 1, 0
    %v1474 = vstv %s1473
    %vm1475 = vcmp.eq.s32.totalorder %v1474, 1
    %v1476 = vsel %vm1475, %v1464, %v1262
    %v1477 = vsel %vm1475, %v1465, %v1263
    %v1478 = vsel %vm1475, %v1460, %v1264
    %v1479 = vsel %vm1475, %v1461, %v1265
    %s1480 = scalar_lea.vmem [#allocation4], 192
    %v1481 = vld [vmem:[%s1480] sm:$0xff]
    %v1482 = vld [vmem:[%s1480 + $0x8] sm:$0xff]
    %v1483 = vld [vmem:[%s1480 + $0x10] sm:$0xff]
    %v1484 = vld [vmem:[%s1480 + $0x18] sm:$0xff]
    %v1485 = vld [vmem:[%s1480 + $0x20] sm:$0xff]
    %v1486 = vld [vmem:[%s1480 + $0x28] sm:$0xff]
    %v1487 = vld [vmem:[%s1480 + $0x30] sm:$0xff]
    %v1488 = vld [vmem:[%s1480 + $0x38] sm:$0xff]
    %v1489 = vpack.c.bf16 %v1477, %v1476
    %1490 = vmatpush.bf16.msra.mxu0 %v813
    %1491 = vmatpush.bf16.msra.mxu0 %v809
    %1492 = vmatpush.bf16.msra.mxu0 %v805
    %1493 = vmatpush.bf16.msra.mxu0 %v801
    %1494 = vmatpush.bf16.msra.mxu0 %v797
    %1495 = vmatpush.bf16.msra.mxu0 %v793
    %1496 = vmatpush.bf16.msra.mxu0 %v789
    %1497 = vmatpush.bf16.msra.mxu0 %v785
    %1498 = vmatmul.bf16.gmra.mxu0 %v1489
    %v1499 = vpop.f32.mrf.mxu0
    %v1500 = vadd.f32 0.0, %v1499
    %v1501 = vpop.f32.mrf.mxu0
    %v1502 = vadd.f32 0.0, %v1501
    %1503 = vdwg.mxu0
    %1504 = vmatpush.bf16.msra.mxu0 %v814
    %1505 = vmatpush.bf16.msra.mxu0 %v810
    %1506 = vmatpush.bf16.msra.mxu0 %v806
    %1507 = vmatpush.bf16.msra.mxu0 %v802
    %1508 = vmatpush.bf16.msra.mxu0 %v798
    %1509 = vmatpush.bf16.msra.mxu0 %v794
    %1510 = vmatpush.bf16.msra.mxu0 %v790
    %1511 = vmatpush.bf16.msra.mxu0 %v786
    %1512 = vmatmul.bf16.gmra.mxu0 %v1489
    %v1513 = vpop.f32.mrf.mxu0
    %v1514 = vadd.f32 0.0, %v1513
    %v1515 = vpop.f32.mrf.mxu0
    %v1516 = vadd.f32 0.0, %v1515
    %1517 = vdwg.mxu0
    %1518 = vmatpush.bf16.msra.mxu0 %v815
    %1519 = vmatpush.bf16.msra.mxu0 %v811
    %1520 = vmatpush.bf16.msra.mxu0 %v807
    %1521 = vmatpush.bf16.msra.mxu0 %v803
    %1522 = vmatpush.bf16.msra.mxu0 %v799
    %1523 = vmatpush.bf16.msra.mxu0 %v795
    %1524 = vmatpush.bf16.msra.mxu0 %v791
    %1525 = vmatpush.bf16.msra.mxu0 %v787
    %1526 = vmatmul.bf16.gmra.mxu0 %v1489
    %v1527 = vpop.f32.mrf.mxu0
    %v1528 = vadd.f32 0.0, %v1527
    %v1529 = vpop.f32.mrf.mxu0
    %v1530 = vadd.f32 0.0, %v1529
    %1531 = vdwg.mxu0
    %1532 = vmatpush.bf16.msra.mxu0 %v816
    %1533 = vmatpush.bf16.msra.mxu0 %v812
    %1534 = vmatpush.bf16.msra.mxu0 %v808
    %1535 = vmatpush.bf16.msra.mxu0 %v804
    %1536 = vmatpush.bf16.msra.mxu0 %v800
    %1537 = vmatpush.bf16.msra.mxu0 %v796
    %1538 = vmatpush.bf16.msra.mxu0 %v792
    %1539 = vmatpush.bf16.msra.mxu0 %v788
    %1540 = vmatmul.bf16.gmra.mxu0 %v1489
    %v1541 = vpop.f32.mrf.mxu0
    %v1542 = vadd.f32 0.0, %v1541
    %v1543 = vpop.f32.mrf.mxu0
    %v1544 = vadd.f32 0.0, %v1543
    %1545 = vdwg.mxu0
    %v1546 = vadd.f32 %v1481, %v1500
    %v1547 = vadd.f32 %v1482, %v1514
    %v1548 = vadd.f32 %v1483, %v1528
    %v1549 = vadd.f32 %v1484, %v1542
    %v1550 = vadd.f32 %v1485, %v1502
    %v1551 = vadd.f32 %v1486, %v1516
    %v1552 = vadd.f32 %v1487, %v1530
    %v1553 = vadd.f32 %v1488, %v1544
    %v1554 = vxor.u32 %v1546, 2147483648
    %v1555 = vxor.u32 %v1550, 2147483648
    %v1556 = vmul.f32 %v1554, 1.442695
    %v1557 = vpow.pop %v1556
    %v1558 = vmul.f32 %v1555, 1.442695
    %v1559 = vpow.pop %v1558
    %v1560 = vadd.f32 %v1557, 1.0
    %v1561 = vadd.f32 %v1559, 1.0
    %v1562 = vrcp.pop %v1560
    %v1563 = vmul.f32 %v1560, %v1562
    %v1564 = vsub.f32 1.0, %v1563
    %v1565 = vmul.f32 %v1562, %v1564
    %v1566 = vadd.f32 %v1562, %v1565
    %vm1567 = vweird.f32 %v1560
    %vm1568 = vweird.f32 %v1562
    %vm1569 = vmor %vm1567, %vm1568
    %v1570 = vsel %vm1569, %v1562, %v1566
    %v1571 = vand.u32 2147483647, %v1560
    %vm1572 = vcmp.eq.f32.partialorder %v1571, 8.507059e+37
    %v1573 = vand.u32 %v1560, 2147483648
    %v1574 = vor.u32 1.1754944e-38, %v1573
    %v1575 = vsel %vm1572, %v1574, %v1570
    %v1576 = vmul.f32 1.0, %v1575
    %v1577 = vrcp.pop %v1561
    %v1578 = vmul.f32 %v1561, %v1577
    %v1579 = vsub.f32 1.0, %v1578
    %v1580 = vmul.f32 %v1577, %v1579
    %v1581 = vadd.f32 %v1577, %v1580
    %vm1582 = vweird.f32 %v1561
    %vm1583 = vweird.f32 %v1577
    %vm1584 = vmor %vm1582, %vm1583
    %v1585 = vsel %vm1584, %v1577, %v1581
    %v1586 = vand.u32 2147483647, %v1561
    %vm1587 = vcmp.eq.f32.partialorder %v1586, 8.507059e+37
    %v1588 = vand.u32 %v1561, 2147483648
    %v1589 = vor.u32 1.1754944e-38, %v1588
    %v1590 = vsel %vm1587, %v1589, %v1585
    %v1591 = vmul.f32 1.0, %v1590
    %v1592 = vxor.u32 %v1547, 2147483648
    %v1593 = vxor.u32 %v1551, 2147483648
    %v1594 = vmul.f32 %v1592, 1.442695
    %v1595 = vpow.pop %v1594
    %v1596 = vmul.f32 %v1593, 1.442695
    %v1597 = vpow.pop %v1596
    %v1598 = vadd.f32 %v1595, 1.0
    %v1599 = vadd.f32 %v1597, 1.0
    %v1600 = vrcp.pop %v1598
    %v1601 = vmul.f32 %v1598, %v1600
    %v1602 = vsub.f32 1.0, %v1601
    %v1603 = vmul.f32 %v1600, %v1602
    %v1604 = vadd.f32 %v1600, %v1603
    %vm1605 = vweird.f32 %v1598
    %vm1606 = vweird.f32 %v1600
    %vm1607 = vmor %vm1605, %vm1606
    %v1608 = vsel %vm1607, %v1600, %v1604
    %v1609 = vand.u32 2147483647, %v1598
    %vm1610 = vcmp.eq.f32.partialorder %v1609, 8.507059e+37
    %v1611 = vand.u32 %v1598, 2147483648
    %v1612 = vor.u32 1.1754944e-38, %v1611
    %v1613 = vsel %vm1610, %v1612, %v1608
    %v1614 = vmul.f32 1.0, %v1613
    %v1615 = vrcp.pop %v1599
    %v1616 = vmul.f32 %v1599, %v1615
    %v1617 = vsub.f32 1.0, %v1616
    %v1618 = vmul.f32 %v1615, %v1617
    %v1619 = vadd.f32 %v1615, %v1618
    %vm1620 = vweird.f32 %v1599
    %vm1621 = vweird.f32 %v1615
    %vm1622 = vmor %vm1620, %vm1621
    %v1623 = vsel %vm1622, %v1615, %v1619
    %v1624 = vand.u32 2147483647, %v1599
    %vm1625 = vcmp.eq.f32.partialorder %v1624, 8.507059e+37
    %v1626 = vand.u32 %v1599, 2147483648
    %v1627 = vor.u32 1.1754944e-38, %v1626
    %v1628 = vsel %vm1625, %v1627, %v1623
    %v1629 = vmul.f32 1.0, %v1628
    %v1630 = vtanh.pop %v1548
    %v1631 = vtanh.pop %v1552
    %v1632 = vxor.u32 %v1549, 2147483648
    %v1633 = vxor.u32 %v1553, 2147483648
    %v1634 = vmul.f32 %v1632, 1.442695
    %v1635 = vpow.pop %v1634
    %v1636 = vmul.f32 %v1633, 1.442695
    %v1637 = vpow.pop %v1636
    %v1638 = vadd.f32 %v1635, 1.0
    %v1639 = vadd.f32 %v1637, 1.0
    %v1640 = vrcp.pop %v1638
    %v1641 = vmul.f32 %v1638, %v1640
    %v1642 = vsub.f32 1.0, %v1641
    %v1643 = vmul.f32 %v1640, %v1642
    %v1644 = vadd.f32 %v1640, %v1643
    %vm1645 = vweird.f32 %v1638
    %vm1646 = vweird.f32 %v1640
    %vm1647 = vmor %vm1645, %vm1646
    %v1648 = vsel %vm1647, %v1640, %v1644
    %v1649 = vand.u32 2147483647, %v1638
    %vm1650 = vcmp.eq.f32.partialorder %v1649, 8.507059e+37
    %v1651 = vand.u32 %v1638, 2147483648
    %v1652 = vor.u32 1.1754944e-38, %v1651
    %v1653 = vsel %vm1650, %v1652, %v1648
    %v1654 = vmul.f32 1.0, %v1653
    %v1655 = vrcp.pop %v1639
    %v1656 = vmul.f32 %v1639, %v1655
    %v1657 = vsub.f32 1.0, %v1656
    %v1658 = vmul.f32 %v1655, %v1657
    %v1659 = vadd.f32 %v1655, %v1658
    %vm1660 = vweird.f32 %v1639
    %vm1661 = vweird.f32 %v1655
    %vm1662 = vmor %vm1660, %vm1661
    %v1663 = vsel %vm1662, %v1655, %v1659
    %v1664 = vand.u32 2147483647, %v1639
    %vm1665 = vcmp.eq.f32.partialorder %v1664, 8.507059e+37
    %v1666 = vand.u32 %v1639, 2147483648
    %v1667 = vor.u32 1.1754944e-38, %v1666
    %v1668 = vsel %vm1665, %v1667, %v1663
    %v1669 = vmul.f32 1.0, %v1668
    %v1670 = vmul.f32 %v1614, %v1478
    %v1671 = vmul.f32 %v1629, %v1479
    %v1672 = vmul.f32 %v1576, %v1630
    %v1673 = vmul.f32 %v1591, %v1631
    %v1674 = vadd.f32 %v1670, %v1672
    %v1675 = vadd.f32 %v1671, %v1673
    %v1676 = vtanh.pop %v1674
    %v1677 = vtanh.pop %v1675
    %v1678 = vmul.f32 %v1654, %v1676
    %v1679 = vmul.f32 %v1669, %v1677
    %v1680 = vpack.c.bf16 %v1678, %v1678
    %v1681 = vpack.c.bf16 %v1679, %v1679
    %s1682 = scalar_lea.vmem [#allocation14], 24
    %1683 = vst [vmem:[%s1682] sm:$0xf] %v1680
    %1684 = vst [vmem:[%s1682 + $0x4] sm:$0xf] %v1681
    %s1685 = sadd.s32 %s1043, 3
    %p1686 = scmp.lt.s32.totalorder %s1685, 8
    %s1687 = scalar_select %p1686, 1, 0
    %v1688 = vstv %s1687
    %vm1689 = vcmp.eq.s32.totalorder %v1688, 1
    %v1690 = vsel %vm1689, %v1678, %v1476
    %v1691 = vsel %vm1689, %v1679, %v1477
    %v1692 = vsel %vm1689, %v1674, %v1478
    %v1693 = vsel %vm1689, %v1675, %v1479
    %s1694 = scalar_lea.vmem [#allocation4], 256
    %v1695 = vld [vmem:[%s1694] sm:$0xff]
    %v1696 = vld [vmem:[%s1694 + $0x8] sm:$0xff]
    %v1697 = vld [vmem:[%s1694 + $0x10] sm:$0xff]
    %v1698 = vld [vmem:[%s1694 + $0x18] sm:$0xff]
    %v1699 = vld [vmem:[%s1694 + $0x20] sm:$0xff]
    %v1700 = vld [vmem:[%s1694 + $0x28] sm:$0xff]
    %v1701 = vld [vmem:[%s1694 + $0x30] sm:$0xff]
    %v1702 = vld [vmem:[%s1694 + $0x38] sm:$0xff]
    %v1703 = vpack.c.bf16 %v1691, %v1690
    %1704 = vmatpush.bf16.msra.mxu0 %v813
    %1705 = vmatpush.bf16.msra.mxu0 %v809
    %1706 = vmatpush.bf16.msra.mxu0 %v805
    %1707 = vmatpush.bf16.msra.mxu0 %v801
    %1708 = vmatpush.bf16.msra.mxu0 %v797
    %1709 = vmatpush.bf16.msra.mxu0 %v793
    %1710 = vmatpush.bf16.msra.mxu0 %v789
    %1711 = vmatpush.bf16.msra.mxu0 %v785
    %1712 = vmatmul.bf16.gmra.mxu0 %v1703
    %v1713 = vpop.f32.mrf.mxu0
    %v1714 = vadd.f32 0.0, %v1713
    %v1715 = vpop.f32.mrf.mxu0
    %v1716 = vadd.f32 0.0, %v1715
    %1717 = vdwg.mxu0
    %1718 = vmatpush.bf16.msra.mxu0 %v814
    %1719 = vmatpush.bf16.msra.mxu0 %v810
    %1720 = vmatpush.bf16.msra.mxu0 %v806
    %1721 = vmatpush.bf16.msra.mxu0 %v802
    %1722 = vmatpush.bf16.msra.mxu0 %v798
    %1723 = vmatpush.bf16.msra.mxu0 %v794
    %1724 = vmatpush.bf16.msra.mxu0 %v790
    %1725 = vmatpush.bf16.msra.mxu0 %v786
    %1726 = vmatmul.bf16.gmra.mxu0 %v1703
    %v1727 = vpop.f32.mrf.mxu0
    %v1728 = vadd.f32 0.0, %v1727
    %v1729 = vpop.f32.mrf.mxu0
    %v1730 = vadd.f32 0.0, %v1729
    %1731 = vdwg.mxu0
    %1732 = vmatpush.bf16.msra.mxu0 %v815
    %1733 = vmatpush.bf16.msra.mxu0 %v811
    %1734 = vmatpush.bf16.msra.mxu0 %v807
    %1735 = vmatpush.bf16.msra.mxu0 %v803
    %1736 = vmatpush.bf16.msra.mxu0 %v799
    %1737 = vmatpush.bf16.msra.mxu0 %v795
    %1738 = vmatpush.bf16.msra.mxu0 %v791
    %1739 = vmatpush.bf16.msra.mxu0 %v787
    %1740 = vmatmul.bf16.gmra.mxu0 %v1703
    %v1741 = vpop.f32.mrf.mxu0
    %v1742 = vadd.f32 0.0, %v1741
    %v1743 = vpop.f32.mrf.mxu0
    %v1744 = vadd.f32 0.0, %v1743
    %1745 = vdwg.mxu0
    %1746 = vmatpush.bf16.msra.mxu0 %v816
    %1747 = vmatpush.bf16.msra.mxu0 %v812
    %1748 = vmatpush.bf16.msra.mxu0 %v808
    %1749 = vmatpush.bf16.msra.mxu0 %v804
    %1750 = vmatpush.bf16.msra.mxu0 %v800
    %1751 = vmatpush.bf16.msra.mxu0 %v796
    %1752 = vmatpush.bf16.msra.mxu0 %v792
    %1753 = vmatpush.bf16.msra.mxu0 %v788
    %1754 = vmatmul.bf16.gmra.mxu0 %v1703
    %v1755 = vpop.f32.mrf.mxu0
    %v1756 = vadd.f32 0.0, %v1755
    %v1757 = vpop.f32.mrf.mxu0
    %v1758 = vadd.f32 0.0, %v1757
    %1759 = vdwg.mxu0
    %v1760 = vadd.f32 %v1695, %v1714
    %v1761 = vadd.f32 %v1696, %v1728
    %v1762 = vadd.f32 %v1697, %v1742
    %v1763 = vadd.f32 %v1698, %v1756
    %v1764 = vadd.f32 %v1699, %v1716
    %v1765 = vadd.f32 %v1700, %v1730
    %v1766 = vadd.f32 %v1701, %v1744
    %v1767 = vadd.f32 %v1702, %v1758
    %v1768 = vxor.u32 %v1760, 2147483648
    %v1769 = vxor.u32 %v1764, 2147483648
    %v1770 = vmul.f32 %v1768, 1.442695
    %v1771 = vpow.pop %v1770
    %v1772 = vmul.f32 %v1769, 1.442695
    %v1773 = vpow.pop %v1772
    %v1774 = vadd.f32 %v1771, 1.0
    %v1775 = vadd.f32 %v1773, 1.0
    %v1776 = vrcp.pop %v1774
    %v1777 = vmul.f32 %v1774, %v1776
    %v1778 = vsub.f32 1.0, %v1777
    %v1779 = vmul.f32 %v1776, %v1778
    %v1780 = vadd.f32 %v1776, %v1779
    %vm1781 = vweird.f32 %v1774
    %vm1782 = vweird.f32 %v1776
    %vm1783 = vmor %vm1781, %vm1782
    %v1784 = vsel %vm1783, %v1776, %v1780
    %v1785 = vand.u32 2147483647, %v1774
    %vm1786 = vcmp.eq.f32.partialorder %v1785, 8.507059e+37
    %v1787 = vand.u32 %v1774, 2147483648
    %v1788 = vor.u32 1.1754944e-38, %v1787
    %v1789 = vsel %vm1786, %v1788, %v1784
    %v1790 = vmul.f32 1.0, %v1789
    %v1791 = vrcp.pop %v1775
    %v1792 = vmul.f32 %v1775, %v1791
    %v1793 = vsub.f32 1.0, %v1792
    %v1794 = vmul.f32 %v1791, %v1793
    %v1795 = vadd.f32 %v1791, %v1794
    %vm1796 = vweird.f32 %v1775
    %vm1797 = vweird.f32 %v1791
    %vm1798 = vmor %vm1796, %vm1797
    %v1799 = vsel %vm1798, %v1791, %v1795
    %v1800 = vand.u32 2147483647, %v1775
    %vm1801 = vcmp.eq.f32.partialorder %v1800, 8.507059e+37
    %v1802 = vand.u32 %v1775, 2147483648
    %v1803 = vor.u32 1.1754944e-38, %v1802
    %v1804 = vsel %vm1801, %v1803, %v1799
    %v1805 = vmul.f32 1.0, %v1804
    %v1806 = vxor.u32 %v1761, 2147483648
    %v1807 = vxor.u32 %v1765, 2147483648
    %v1808 = vmul.f32 %v1806, 1.442695
    %v1809 = vpow.pop %v1808
    %v1810 = vmul.f32 %v1807, 1.442695
    %v1811 = vpow.pop %v1810
    %v1812 = vadd.f32 %v1809, 1.0
    %v1813 = vadd.f32 %v1811, 1.0
    %v1814 = vrcp.pop %v1812
    %v1815 = vmul.f32 %v1812, %v1814
    %v1816 = vsub.f32 1.0, %v1815
    %v1817 = vmul.f32 %v1814, %v1816
    %v1818 = vadd.f32 %v1814, %v1817
    %vm1819 = vweird.f32 %v1812
    %vm1820 = vweird.f32 %v1814
    %vm1821 = vmor %vm1819, %vm1820
    %v1822 = vsel %vm1821, %v1814, %v1818
    %v1823 = vand.u32 2147483647, %v1812
    %vm1824 = vcmp.eq.f32.partialorder %v1823, 8.507059e+37
    %v1825 = vand.u32 %v1812, 2147483648
    %v1826 = vor.u32 1.1754944e-38, %v1825
    %v1827 = vsel %vm1824, %v1826, %v1822
    %v1828 = vmul.f32 1.0, %v1827
    %v1829 = vrcp.pop %v1813
    %v1830 = vmul.f32 %v1813, %v1829
    %v1831 = vsub.f32 1.0, %v1830
    %v1832 = vmul.f32 %v1829, %v1831
    %v1833 = vadd.f32 %v1829, %v1832
    %vm1834 = vweird.f32 %v1813
    %vm1835 = vweird.f32 %v1829
    %vm1836 = vmor %vm1834, %vm1835
    %v1837 = vsel %vm1836, %v1829, %v1833
    %v1838 = vand.u32 2147483647, %v1813
    %vm1839 = vcmp.eq.f32.partialorder %v1838, 8.507059e+37
    %v1840 = vand.u32 %v1813, 2147483648
    %v1841 = vor.u32 1.1754944e-38, %v1840
    %v1842 = vsel %vm1839, %v1841, %v1837
    %v1843 = vmul.f32 1.0, %v1842
    %v1844 = vtanh.pop %v1762
    %v1845 = vtanh.pop %v1766
    %v1846 = vxor.u32 %v1763, 2147483648
    %v1847 = vxor.u32 %v1767, 2147483648
    %v1848 = vmul.f32 %v1846, 1.442695
    %v1849 = vpow.pop %v1848
    %v1850 = vmul.f32 %v1847, 1.442695
    %v1851 = vpow.pop %v1850
    %v1852 = vadd.f32 %v1849, 1.0
    %v1853 = vadd.f32 %v1851, 1.0
    %v1854 = vrcp.pop %v1852
    %v1855 = vmul.f32 %v1852, %v1854
    %v1856 = vsub.f32 1.0, %v1855
    %v1857 = vmul.f32 %v1854, %v1856
    %v1858 = vadd.f32 %v1854, %v1857
    %vm1859 = vweird.f32 %v1852
    %vm1860 = vweird.f32 %v1854
    %vm1861 = vmor %vm1859, %vm1860
    %v1862 = vsel %vm1861, %v1854, %v1858
    %v1863 = vand.u32 2147483647, %v1852
    %vm1864 = vcmp.eq.f32.partialorder %v1863, 8.507059e+37
    %v1865 = vand.u32 %v1852, 2147483648
    %v1866 = vor.u32 1.1754944e-38, %v1865
    %v1867 = vsel %vm1864, %v1866, %v1862
    %v1868 = vmul.f32 1.0, %v1867
    %v1869 = vrcp.pop %v1853
    %v1870 = vmul.f32 %v1853, %v1869
    %v1871 = vsub.f32 1.0, %v1870
    %v1872 = vmul.f32 %v1869, %v1871
    %v1873 = vadd.f32 %v1869, %v1872
    %vm1874 = vweird.f32 %v1853
    %vm1875 = vweird.f32 %v1869
    %vm1876 = vmor %vm1874, %vm1875
    %v1877 = vsel %vm1876, %v1869, %v1873
    %v1878 = vand.u32 2147483647, %v1853
    %vm1879 = vcmp.eq.f32.partialorder %v1878, 8.507059e+37
    %v1880 = vand.u32 %v1853, 2147483648
    %v1881 = vor.u32 1.1754944e-38, %v1880
    %v1882 = vsel %vm1879, %v1881, %v1877
    %v1883 = vmul.f32 1.0, %v1882
    %v1884 = vmul.f32 %v1828, %v1692
    %v1885 = vmul.f32 %v1843, %v1693
    %v1886 = vmul.f32 %v1790, %v1844
    %v1887 = vmul.f32 %v1805, %v1845
    %v1888 = vadd.f32 %v1884, %v1886
    %v1889 = vadd.f32 %v1885, %v1887
    %v1890 = vtanh.pop %v1888
    %v1891 = vtanh.pop %v1889
    %v1892 = vmul.f32 %v1868, %v1890
    %v1893 = vmul.f32 %v1883, %v1891
    %v1894 = vpack.c.bf16 %v1892, %v1892
    %v1895 = vpack.c.bf16 %v1893, %v1893
    %s1896 = scalar_lea.vmem [#allocation14], 32
    %1897 = vst [vmem:[%s1896] sm:$0xf] %v1894
    %1898 = vst [vmem:[%s1896 + $0x4] sm:$0xf] %v1895
    %s1899 = sadd.s32 %s1043, 4
    %p1900 = scmp.lt.s32.totalorder %s1899, 8
    %s1901 = scalar_select %p1900, 1, 0
    %v1902 = vstv %s1901
    %vm1903 = vcmp.eq.s32.totalorder %v1902, 1
    %v1904 = vsel %vm1903, %v1892, %v1690
    %v1905 = vsel %vm1903, %v1893, %v1691
    %v1906 = vsel %vm1903, %v1888, %v1692
    %v1907 = vsel %vm1903, %v1889, %v1693
    %s1908 = scalar_lea.vmem [#allocation4], 320
    %v1909 = vld [vmem:[%s1908] sm:$0xff]
    %v1910 = vld [vmem:[%s1908 + $0x8] sm:$0xff]
    %v1911 = vld [vmem:[%s1908 + $0x10] sm:$0xff]
    %v1912 = vld [vmem:[%s1908 + $0x18] sm:$0xff]
    %v1913 = vld [vmem:[%s1908 + $0x20] sm:$0xff]
    %v1914 = vld [vmem:[%s1908 + $0x28] sm:$0xff]
    %v1915 = vld [vmem:[%s1908 + $0x30] sm:$0xff]
    %v1916 = vld [vmem:[%s1908 + $0x38] sm:$0xff]
    %v1917 = vpack.c.bf16 %v1905, %v1904
    %1918 = vmatpush.bf16.msra.mxu0 %v813
    %1919 = vmatpush.bf16.msra.mxu0 %v809
    %1920 = vmatpush.bf16.msra.mxu0 %v805
    %1921 = vmatpush.bf16.msra.mxu0 %v801
    %1922 = vmatpush.bf16.msra.mxu0 %v797
    %1923 = vmatpush.bf16.msra.mxu0 %v793
    %1924 = vmatpush.bf16.msra.mxu0 %v789
    %1925 = vmatpush.bf16.msra.mxu0 %v785
    %1926 = vmatmul.bf16.gmra.mxu0 %v1917
    %v1927 = vpop.f32.mrf.mxu0
    %v1928 = vadd.f32 0.0, %v1927
    %v1929 = vpop.f32.mrf.mxu0
    %v1930 = vadd.f32 0.0, %v1929
    %1931 = vdwg.mxu0
    %1932 = vmatpush.bf16.msra.mxu0 %v814
    %1933 = vmatpush.bf16.msra.mxu0 %v810
    %1934 = vmatpush.bf16.msra.mxu0 %v806
    %1935 = vmatpush.bf16.msra.mxu0 %v802
    %1936 = vmatpush.bf16.msra.mxu0 %v798
    %1937 = vmatpush.bf16.msra.mxu0 %v794
    %1938 = vmatpush.bf16.msra.mxu0 %v790
    %1939 = vmatpush.bf16.msra.mxu0 %v786
    %1940 = vmatmul.bf16.gmra.mxu0 %v1917
    %v1941 = vpop.f32.mrf.mxu0
    %v1942 = vadd.f32 0.0, %v1941
    %v1943 = vpop.f32.mrf.mxu0
    %v1944 = vadd.f32 0.0, %v1943
    %1945 = vdwg.mxu0
    %1946 = vmatpush.bf16.msra.mxu0 %v815
    %1947 = vmatpush.bf16.msra.mxu0 %v811
    %1948 = vmatpush.bf16.msra.mxu0 %v807
    %1949 = vmatpush.bf16.msra.mxu0 %v803
    %1950 = vmatpush.bf16.msra.mxu0 %v799
    %1951 = vmatpush.bf16.msra.mxu0 %v795
    %1952 = vmatpush.bf16.msra.mxu0 %v791
    %1953 = vmatpush.bf16.msra.mxu0 %v787
    %1954 = vmatmul.bf16.gmra.mxu0 %v1917
    %v1955 = vpop.f32.mrf.mxu0
    %v1956 = vadd.f32 0.0, %v1955
    %v1957 = vpop.f32.mrf.mxu0
    %v1958 = vadd.f32 0.0, %v1957
    %1959 = vdwg.mxu0
    %1960 = vmatpush.bf16.msra.mxu0 %v816
    %1961 = vmatpush.bf16.msra.mxu0 %v812
    %1962 = vmatpush.bf16.msra.mxu0 %v808
    %1963 = vmatpush.bf16.msra.mxu0 %v804
    %1964 = vmatpush.bf16.msra.mxu0 %v800
    %1965 = vmatpush.bf16.msra.mxu0 %v796
    %1966 = vmatpush.bf16.msra.mxu0 %v792
    %1967 = vmatpush.bf16.msra.mxu0 %v788
    %1968 = vmatmul.bf16.gmra.mxu0 %v1917
    %v1969 = vpop.f32.mrf.mxu0
    %v1970 = vadd.f32 0.0, %v1969
    %v1971 = vpop.f32.mrf.mxu0
    %v1972 = vadd.f32 0.0, %v1971
    %1973 = vdwg.mxu0
    %v1974 = vadd.f32 %v1909, %v1928
    %v1975 = vadd.f32 %v1910, %v1942
    %v1976 = vadd.f32 %v1911, %v1956
    %v1977 = vadd.f32 %v1912, %v1970
    %v1978 = vadd.f32 %v1913, %v1930
    %v1979 = vadd.f32 %v1914, %v1944
    %v1980 = vadd.f32 %v1915, %v1958
    %v1981 = vadd.f32 %v1916, %v1972
    %v1982 = vxor.u32 %v1974, 2147483648
    %v1983 = vxor.u32 %v1978, 2147483648
    %v1984 = vmul.f32 %v1982, 1.442695
    %v1985 = vpow.pop %v1984
    %v1986 = vmul.f32 %v1983, 1.442695
    %v1987 = vpow.pop %v1986
    %v1988 = vadd.f32 %v1985, 1.0
    %v1989 = vadd.f32 %v1987, 1.0
    %v1990 = vrcp.pop %v1988
    %v1991 = vmul.f32 %v1988, %v1990
    %v1992 = vsub.f32 1.0, %v1991
    %v1993 = vmul.f32 %v1990, %v1992
    %v1994 = vadd.f32 %v1990, %v1993
    %vm1995 = vweird.f32 %v1988
    %vm1996 = vweird.f32 %v1990
    %vm1997 = vmor %vm1995, %vm1996
    %v1998 = vsel %vm1997, %v1990, %v1994
    %v1999 = vand.u32 2147483647, %v1988
    %vm2000 = vcmp.eq.f32.partialorder %v1999, 8.507059e+37
    %v2001 = vand.u32 %v1988, 2147483648
    %v2002 = vor.u32 1.1754944e-38, %v2001
    %v2003 = vsel %vm2000, %v2002, %v1998
    %v2004 = vmul.f32 1.0, %v2003
    %v2005 = vrcp.pop %v1989
    %v2006 = vmul.f32 %v1989, %v2005
    %v2007 = vsub.f32 1.0, %v2006
    %v2008 = vmul.f32 %v2005, %v2007
    %v2009 = vadd.f32 %v2005, %v2008
    %vm2010 = vweird.f32 %v1989
    %vm2011 = vweird.f32 %v2005
    %vm2012 = vmor %vm2010, %vm2011
    %v2013 = vsel %vm2012, %v2005, %v2009
    %v2014 = vand.u32 2147483647, %v1989
    %vm2015 = vcmp.eq.f32.partialorder %v2014, 8.507059e+37
    %v2016 = vand.u32 %v1989, 2147483648
    %v2017 = vor.u32 1.1754944e-38, %v2016
    %v2018 = vsel %vm2015, %v2017, %v2013
    %v2019 = vmul.f32 1.0, %v2018
    %v2020 = vxor.u32 %v1975, 2147483648
    %v2021 = vxor.u32 %v1979, 2147483648
    %v2022 = vmul.f32 %v2020, 1.442695
    %v2023 = vpow.pop %v2022
    %v2024 = vmul.f32 %v2021, 1.442695
    %v2025 = vpow.pop %v2024
    %v2026 = vadd.f32 %v2023, 1.0
    %v2027 = vadd.f32 %v2025, 1.0
    %v2028 = vrcp.pop %v2026
    %v2029 = vmul.f32 %v2026, %v2028
    %v2030 = vsub.f32 1.0, %v2029
    %v2031 = vmul.f32 %v2028, %v2030
    %v2032 = vadd.f32 %v2028, %v2031
    %vm2033 = vweird.f32 %v2026
    %vm2034 = vweird.f32 %v2028
    %vm2035 = vmor %vm2033, %vm2034
    %v2036 = vsel %vm2035, %v2028, %v2032
    %v2037 = vand.u32 2147483647, %v2026
    %vm2038 = vcmp.eq.f32.partialorder %v2037, 8.507059e+37
    %v2039 = vand.u32 %v2026, 2147483648
    %v2040 = vor.u32 1.1754944e-38, %v2039
    %v2041 = vsel %vm2038, %v2040, %v2036
    %v2042 = vmul.f32 1.0, %v2041
    %v2043 = vrcp.pop %v2027
    %v2044 = vmul.f32 %v2027, %v2043
    %v2045 = vsub.f32 1.0, %v2044
    %v2046 = vmul.f32 %v2043, %v2045
    %v2047 = vadd.f32 %v2043, %v2046
    %vm2048 = vweird.f32 %v2027
    %vm2049 = vweird.f32 %v2043
    %vm2050 = vmor %vm2048, %vm2049
    %v2051 = vsel %vm2050, %v2043, %v2047
    %v2052 = vand.u32 2147483647, %v2027
    %vm2053 = vcmp.eq.f32.partialorder %v2052, 8.507059e+37
    %v2054 = vand.u32 %v2027, 2147483648
    %v2055 = vor.u32 1.1754944e-38, %v2054
    %v2056 = vsel %vm2053, %v2055, %v2051
    %v2057 = vmul.f32 1.0, %v2056
    %v2058 = vtanh.pop %v1976
    %v2059 = vtanh.pop %v1980
    %v2060 = vxor.u32 %v1977, 2147483648
    %v2061 = vxor.u32 %v1981, 2147483648
    %v2062 = vmul.f32 %v2060, 1.442695
    %v2063 = vpow.pop %v2062
    %v2064 = vmul.f32 %v2061, 1.442695
    %v2065 = vpow.pop %v2064
    %v2066 = vadd.f32 %v2063, 1.0
    %v2067 = vadd.f32 %v2065, 1.0
    %v2068 = vrcp.pop %v2066
    %v2069 = vmul.f32 %v2066, %v2068
    %v2070 = vsub.f32 1.0, %v2069
    %v2071 = vmul.f32 %v2068, %v2070
    %v2072 = vadd.f32 %v2068, %v2071
    %vm2073 = vweird.f32 %v2066
    %vm2074 = vweird.f32 %v2068
    %vm2075 = vmor %vm2073, %vm2074
    %v2076 = vsel %vm2075, %v2068, %v2072
    %v2077 = vand.u32 2147483647, %v2066
    %vm2078 = vcmp.eq.f32.partialorder %v2077, 8.507059e+37
    %v2079 = vand.u32 %v2066, 2147483648
    %v2080 = vor.u32 1.1754944e-38, %v2079
    %v2081 = vsel %vm2078, %v2080, %v2076
    %v2082 = vmul.f32 1.0, %v2081
    %v2083 = vrcp.pop %v2067
    %v2084 = vmul.f32 %v2067, %v2083
    %v2085 = vsub.f32 1.0, %v2084
    %v2086 = vmul.f32 %v2083, %v2085
    %v2087 = vadd.f32 %v2083, %v2086
    %vm2088 = vweird.f32 %v2067
    %vm2089 = vweird.f32 %v2083
    %vm2090 = vmor %vm2088, %vm2089
    %v2091 = vsel %vm2090, %v2083, %v2087
    %v2092 = vand.u32 2147483647, %v2067
    %vm2093 = vcmp.eq.f32.partialorder %v2092, 8.507059e+37
    %v2094 = vand.u32 %v2067, 2147483648
    %v2095 = vor.u32 1.1754944e-38, %v2094
    %v2096 = vsel %vm2093, %v2095, %v2091
    %v2097 = vmul.f32 1.0, %v2096
    %v2098 = vmul.f32 %v2042, %v1906
    %v2099 = vmul.f32 %v2057, %v1907
    %v2100 = vmul.f32 %v2004, %v2058
    %v2101 = vmul.f32 %v2019, %v2059
    %v2102 = vadd.f32 %v2098, %v2100
    %v2103 = vadd.f32 %v2099, %v2101
    %v2104 = vtanh.pop %v2102
    %v2105 = vtanh.pop %v2103
    %v2106 = vmul.f32 %v2082, %v2104
    %v2107 = vmul.f32 %v2097, %v2105
    %v2108 = vpack.c.bf16 %v2106, %v2106
    %v2109 = vpack.c.bf16 %v2107, %v2107
    %s2110 = scalar_lea.vmem [#allocation14], 40
    %2111 = vst [vmem:[%s2110] sm:$0xf] %v2108
    %2112 = vst [vmem:[%s2110 + $0x4] sm:$0xf] %v2109
    %s2113 = sadd.s32 %s1043, 5
    %p2114 = scmp.lt.s32.totalorder %s2113, 8
    %s2115 = scalar_select %p2114, 1, 0
    %v2116 = vstv %s2115
    %vm2117 = vcmp.eq.s32.totalorder %v2116, 1
    %v2118 = vsel %vm2117, %v2106, %v1904
    %v2119 = vsel %vm2117, %v2107, %v1905
    %v2120 = vsel %vm2117, %v2102, %v1906
    %v2121 = vsel %vm2117, %v2103, %v1907
    %s2122 = scalar_lea.vmem [#allocation4], 384
    %v2123 = vld [vmem:[%s2122] sm:$0xff]
    %v2124 = vld [vmem:[%s2122 + $0x8] sm:$0xff]
    %v2125 = vld [vmem:[%s2122 + $0x10] sm:$0xff]
    %v2126 = vld [vmem:[%s2122 + $0x18] sm:$0xff]
    %v2127 = vld [vmem:[%s2122 + $0x20] sm:$0xff]
    %v2128 = vld [vmem:[%s2122 + $0x28] sm:$0xff]
    %v2129 = vld [vmem:[%s2122 + $0x30] sm:$0xff]
    %v2130 = vld [vmem:[%s2122 + $0x38] sm:$0xff]
    %v2131 = vpack.c.bf16 %v2119, %v2118
    %2132 = vmatpush.bf16.msra.mxu0 %v813
    %2133 = vmatpush.bf16.msra.mxu0 %v809
    %2134 = vmatpush.bf16.msra.mxu0 %v805
    %2135 = vmatpush.bf16.msra.mxu0 %v801
    %2136 = vmatpush.bf16.msra.mxu0 %v797
    %2137 = vmatpush.bf16.msra.mxu0 %v793
    %2138 = vmatpush.bf16.msra.mxu0 %v789
    %2139 = vmatpush.bf16.msra.mxu0 %v785
    %2140 = vmatmul.bf16.gmra.mxu0 %v2131
    %v2141 = vpop.f32.mrf.mxu0
    %v2142 = vadd.f32 0.0, %v2141
    %v2143 = vpop.f32.mrf.mxu0
    %v2144 = vadd.f32 0.0, %v2143
    %2145 = vdwg.mxu0
    %2146 = vmatpush.bf16.msra.mxu0 %v814
    %2147 = vmatpush.bf16.msra.mxu0 %v810
    %2148 = vmatpush.bf16.msra.mxu0 %v806
    %2149 = vmatpush.bf16.msra.mxu0 %v802
    %2150 = vmatpush.bf16.msra.mxu0 %v798
    %2151 = vmatpush.bf16.msra.mxu0 %v794
    %2152 = vmatpush.bf16.msra.mxu0 %v790
    %2153 = vmatpush.bf16.msra.mxu0 %v786
    %2154 = vmatmul.bf16.gmra.mxu0 %v2131
    %v2155 = vpop.f32.mrf.mxu0
    %v2156 = vadd.f32 0.0, %v2155
    %v2157 = vpop.f32.mrf.mxu0
    %v2158 = vadd.f32 0.0, %v2157
    %2159 = vdwg.mxu0
    %2160 = vmatpush.bf16.msra.mxu0 %v815
    %2161 = vmatpush.bf16.msra.mxu0 %v811
    %2162 = vmatpush.bf16.msra.mxu0 %v807
    %2163 = vmatpush.bf16.msra.mxu0 %v803
    %2164 = vmatpush.bf16.msra.mxu0 %v799
    %2165 = vmatpush.bf16.msra.mxu0 %v795
    %2166 = vmatpush.bf16.msra.mxu0 %v791
    %2167 = vmatpush.bf16.msra.mxu0 %v787
    %2168 = vmatmul.bf16.gmra.mxu0 %v2131
    %v2169 = vpop.f32.mrf.mxu0
    %v2170 = vadd.f32 0.0, %v2169
    %v2171 = vpop.f32.mrf.mxu0
    %v2172 = vadd.f32 0.0, %v2171
    %2173 = vdwg.mxu0
    %2174 = vmatpush.bf16.msra.mxu0 %v816
    %2175 = vmatpush.bf16.msra.mxu0 %v812
    %2176 = vmatpush.bf16.msra.mxu0 %v808
    %2177 = vmatpush.bf16.msra.mxu0 %v804
    %2178 = vmatpush.bf16.msra.mxu0 %v800
    %2179 = vmatpush.bf16.msra.mxu0 %v796
    %2180 = vmatpush.bf16.msra.mxu0 %v792
    %2181 = vmatpush.bf16.msra.mxu0 %v788
    %2182 = vmatmul.bf16.gmra.mxu0 %v2131
    %v2183 = vpop.f32.mrf.mxu0
    %v2184 = vadd.f32 0.0, %v2183
    %v2185 = vpop.f32.mrf.mxu0
    %v2186 = vadd.f32 0.0, %v2185
    %2187 = vdwg.mxu0
    %v2188 = vadd.f32 %v2123, %v2142
    %v2189 = vadd.f32 %v2124, %v2156
    %v2190 = vadd.f32 %v2125, %v2170
    %v2191 = vadd.f32 %v2126, %v2184
    %v2192 = vadd.f32 %v2127, %v2144
    %v2193 = vadd.f32 %v2128, %v2158
    %v2194 = vadd.f32 %v2129, %v2172
    %v2195 = vadd.f32 %v2130, %v2186
    %v2196 = vxor.u32 %v2188, 2147483648
    %v2197 = vxor.u32 %v2192, 2147483648
    %v2198 = vmul.f32 %v2196, 1.442695
    %v2199 = vpow.pop %v2198
    %v2200 = vmul.f32 %v2197, 1.442695
    %v2201 = vpow.pop %v2200
    %v2202 = vadd.f32 %v2199, 1.0
    %v2203 = vadd.f32 %v2201, 1.0
    %v2204 = vrcp.pop %v2202
    %v2205 = vmul.f32 %v2202, %v2204
    %v2206 = vsub.f32 1.0, %v2205
    %v2207 = vmul.f32 %v2204, %v2206
    %v2208 = vadd.f32 %v2204, %v2207
    %vm2209 = vweird.f32 %v2202
    %vm2210 = vweird.f32 %v2204
    %vm2211 = vmor %vm2209, %vm2210
    %v2212 = vsel %vm2211, %v2204, %v2208
    %v2213 = vand.u32 2147483647, %v2202
    %vm2214 = vcmp.eq.f32.partialorder %v2213, 8.507059e+37
    %v2215 = vand.u32 %v2202, 2147483648
    %v2216 = vor.u32 1.1754944e-38, %v2215
    %v2217 = vsel %vm2214, %v2216, %v2212
    %v2218 = vmul.f32 1.0, %v2217
    %v2219 = vrcp.pop %v2203
    %v2220 = vmul.f32 %v2203, %v2219
    %v2221 = vsub.f32 1.0, %v2220
    %v2222 = vmul.f32 %v2219, %v2221
    %v2223 = vadd.f32 %v2219, %v2222
    %vm2224 = vweird.f32 %v2203
    %vm2225 = vweird.f32 %v2219
    %vm2226 = vmor %vm2224, %vm2225
    %v2227 = vsel %vm2226, %v2219, %v2223
    %v2228 = vand.u32 2147483647, %v2203
    %vm2229 = vcmp.eq.f32.partialorder %v2228, 8.507059e+37
    %v2230 = vand.u32 %v2203, 2147483648
    %v2231 = vor.u32 1.1754944e-38, %v2230
    %v2232 = vsel %vm2229, %v2231, %v2227
    %v2233 = vmul.f32 1.0, %v2232
    %v2234 = vxor.u32 %v2189, 2147483648
    %v2235 = vxor.u32 %v2193, 2147483648
    %v2236 = vmul.f32 %v2234, 1.442695
    %v2237 = vpow.pop %v2236
    %v2238 = vmul.f32 %v2235, 1.442695
    %v2239 = vpow.pop %v2238
    %v2240 = vadd.f32 %v2237, 1.0
    %v2241 = vadd.f32 %v2239, 1.0
    %v2242 = vrcp.pop %v2240
    %v2243 = vmul.f32 %v2240, %v2242
    %v2244 = vsub.f32 1.0, %v2243
    %v2245 = vmul.f32 %v2242, %v2244
    %v2246 = vadd.f32 %v2242, %v2245
    %vm2247 = vweird.f32 %v2240
    %vm2248 = vweird.f32 %v2242
    %vm2249 = vmor %vm2247, %vm2248
    %v2250 = vsel %vm2249, %v2242, %v2246
    %v2251 = vand.u32 2147483647, %v2240
    %vm2252 = vcmp.eq.f32.partialorder %v2251, 8.507059e+37
    %v2253 = vand.u32 %v2240, 2147483648
    %v2254 = vor.u32 1.1754944e-38, %v2253
    %v2255 = vsel %vm2252, %v2254, %v2250
    %v2256 = vmul.f32 1.0, %v2255
    %v2257 = vrcp.pop %v2241
    %v2258 = vmul.f32 %v2241, %v2257
    %v2259 = vsub.f32 1.0, %v2258
    %v2260 = vmul.f32 %v2257, %v2259
    %v2261 = vadd.f32 %v2257, %v2260
    %vm2262 = vweird.f32 %v2241
    %vm2263 = vweird.f32 %v2257
    %vm2264 = vmor %vm2262, %vm2263
    %v2265 = vsel %vm2264, %v2257, %v2261
    %v2266 = vand.u32 2147483647, %v2241
    %vm2267 = vcmp.eq.f32.partialorder %v2266, 8.507059e+37
    %v2268 = vand.u32 %v2241, 2147483648
    %v2269 = vor.u32 1.1754944e-38, %v2268
    %v2270 = vsel %vm2267, %v2269, %v2265
    %v2271 = vmul.f32 1.0, %v2270
    %v2272 = vtanh.pop %v2190
    %v2273 = vtanh.pop %v2194
    %v2274 = vxor.u32 %v2191, 2147483648
    %v2275 = vxor.u32 %v2195, 2147483648
    %v2276 = vmul.f32 %v2274, 1.442695
    %v2277 = vpow.pop %v2276
    %v2278 = vmul.f32 %v2275, 1.442695
    %v2279 = vpow.pop %v2278
    %v2280 = vadd.f32 %v2277, 1.0
    %v2281 = vadd.f32 %v2279, 1.0
    %v2282 = vrcp.pop %v2280
    %v2283 = vmul.f32 %v2280, %v2282
    %v2284 = vsub.f32 1.0, %v2283
    %v2285 = vmul.f32 %v2282, %v2284
    %v2286 = vadd.f32 %v2282, %v2285
    %vm2287 = vweird.f32 %v2280
    %vm2288 = vweird.f32 %v2282
    %vm2289 = vmor %vm2287, %vm2288
    %v2290 = vsel %vm2289, %v2282, %v2286
    %v2291 = vand.u32 2147483647, %v2280
    %vm2292 = vcmp.eq.f32.partialorder %v2291, 8.507059e+37
    %v2293 = vand.u32 %v2280, 2147483648
    %v2294 = vor.u32 1.1754944e-38, %v2293
    %v2295 = vsel %vm2292, %v2294, %v2290
    %v2296 = vmul.f32 1.0, %v2295
    %v2297 = vrcp.pop %v2281
    %v2298 = vmul.f32 %v2281, %v2297
    %v2299 = vsub.f32 1.0, %v2298
    %v2300 = vmul.f32 %v2297, %v2299
    %v2301 = vadd.f32 %v2297, %v2300
    %vm2302 = vweird.f32 %v2281
    %vm2303 = vweird.f32 %v2297
    %vm2304 = vmor %vm2302, %vm2303
    %v2305 = vsel %vm2304, %v2297, %v2301
    %v2306 = vand.u32 2147483647, %v2281
    %vm2307 = vcmp.eq.f32.partialorder %v2306, 8.507059e+37
    %v2308 = vand.u32 %v2281, 2147483648
    %v2309 = vor.u32 1.1754944e-38, %v2308
    %v2310 = vsel %vm2307, %v2309, %v2305
    %v2311 = vmul.f32 1.0, %v2310
    %v2312 = vmul.f32 %v2256, %v2120
    %v2313 = vmul.f32 %v2271, %v2121
    %v2314 = vmul.f32 %v2218, %v2272
    %v2315 = vmul.f32 %v2233, %v2273
    %v2316 = vadd.f32 %v2312, %v2314
    %v2317 = vadd.f32 %v2313, %v2315
    %v2318 = vtanh.pop %v2316
    %v2319 = vtanh.pop %v2317
    %v2320 = vmul.f32 %v2296, %v2318
    %v2321 = vmul.f32 %v2311, %v2319
    %v2322 = vpack.c.bf16 %v2320, %v2320
    %v2323 = vpack.c.bf16 %v2321, %v2321
    %s2324 = scalar_lea.vmem [#allocation14], 48
    %2325 = vst [vmem:[%s2324] sm:$0xf] %v2322
    %2326 = vst [vmem:[%s2324 + $0x4] sm:$0xf] %v2323
    %s2327 = sadd.s32 %s1043, 6
    %p2328 = scmp.lt.s32.totalorder %s2327, 8
    %s2329 = scalar_select %p2328, 1, 0
    %v2330 = vstv %s2329
    %vm2331 = vcmp.eq.s32.totalorder %v2330, 1
    %v2332 = vsel %vm2331, %v2320, %v2118
    %v2333 = vsel %vm2331, %v2321, %v2119
    %v2334 = vsel %vm2331, %v2316, %v2120
    %v2335 = vsel %vm2331, %v2317, %v2121
    %s2336 = scalar_lea.vmem [#allocation4], 448
    %v2337 = vld [vmem:[%s2336] sm:$0xff]
    %v2338 = vld [vmem:[%s2336 + $0x8] sm:$0xff]
    %v2339 = vld [vmem:[%s2336 + $0x10] sm:$0xff]
    %v2340 = vld [vmem:[%s2336 + $0x18] sm:$0xff]
    %v2341 = vld [vmem:[%s2336 + $0x20] sm:$0xff]
    %v2342 = vld [vmem:[%s2336 + $0x28] sm:$0xff]
    %v2343 = vld [vmem:[%s2336 + $0x30] sm:$0xff]
    %v2344 = vld [vmem:[%s2336 + $0x38] sm:$0xff]
    %v2345 = vpack.c.bf16 %v2333, %v2332
    %2346 = vmatpush.bf16.msra.mxu0 %v813
    %2347 = vmatpush.bf16.msra.mxu0 %v809
    %2348 = vmatpush.bf16.msra.mxu0 %v805
    %2349 = vmatpush.bf16.msra.mxu0 %v801
    %2350 = vmatpush.bf16.msra.mxu0 %v797
    %2351 = vmatpush.bf16.msra.mxu0 %v793
    %2352 = vmatpush.bf16.msra.mxu0 %v789
    %2353 = vmatpush.bf16.msra.mxu0 %v785
    %2354 = vmatmul.bf16.gmra.mxu0 %v2345
    %v2355 = vpop.f32.mrf.mxu0
    %v2356 = vadd.f32 0.0, %v2355
    %v2357 = vpop.f32.mrf.mxu0
    %v2358 = vadd.f32 0.0, %v2357
    %2359 = vdwg.mxu0
    %2360 = vmatpush.bf16.msra.mxu0 %v814
    %2361 = vmatpush.bf16.msra.mxu0 %v810
    %2362 = vmatpush.bf16.msra.mxu0 %v806
    %2363 = vmatpush.bf16.msra.mxu0 %v802
    %2364 = vmatpush.bf16.msra.mxu0 %v798
    %2365 = vmatpush.bf16.msra.mxu0 %v794
    %2366 = vmatpush.bf16.msra.mxu0 %v790
    %2367 = vmatpush.bf16.msra.mxu0 %v786
    %2368 = vmatmul.bf16.gmra.mxu0 %v2345
    %v2369 = vpop.f32.mrf.mxu0
    %v2370 = vadd.f32 0.0, %v2369
    %v2371 = vpop.f32.mrf.mxu0
    %v2372 = vadd.f32 0.0, %v2371
    %2373 = vdwg.mxu0
    %2374 = vmatpush.bf16.msra.mxu0 %v815
    %2375 = vmatpush.bf16.msra.mxu0 %v811
    %2376 = vmatpush.bf16.msra.mxu0 %v807
    %2377 = vmatpush.bf16.msra.mxu0 %v803
    %2378 = vmatpush.bf16.msra.mxu0 %v799
    %2379 = vmatpush.bf16.msra.mxu0 %v795
    %2380 = vmatpush.bf16.msra.mxu0 %v791
    %2381 = vmatpush.bf16.msra.mxu0 %v787
    %2382 = vmatmul.bf16.gmra.mxu0 %v2345
    %v2383 = vpop.f32.mrf.mxu0
    %v2384 = vadd.f32 0.0, %v2383
    %v2385 = vpop.f32.mrf.mxu0
    %v2386 = vadd.f32 0.0, %v2385
    %2387 = vdwg.mxu0
    %2388 = vmatpush.bf16.msra.mxu0 %v816
    %2389 = vmatpush.bf16.msra.mxu0 %v812
    %2390 = vmatpush.bf16.msra.mxu0 %v808
    %2391 = vmatpush.bf16.msra.mxu0 %v804
    %2392 = vmatpush.bf16.msra.mxu0 %v800
    %2393 = vmatpush.bf16.msra.mxu0 %v796
    %2394 = vmatpush.bf16.msra.mxu0 %v792
    %2395 = vmatpush.bf16.msra.mxu0 %v788
    %2396 = vmatmul.bf16.gmra.mxu0 %v2345
    %v2397 = vpop.f32.mrf.mxu0
    %v2398 = vadd.f32 0.0, %v2397
    %v2399 = vpop.f32.mrf.mxu0
    %v2400 = vadd.f32 0.0, %v2399
    %2401 = vdwg.mxu0
    %v2402 = vadd.f32 %v2337, %v2356
    %v2403 = vadd.f32 %v2338, %v2370
    %v2404 = vadd.f32 %v2339, %v2384
    %v2405 = vadd.f32 %v2340, %v2398
    %v2406 = vadd.f32 %v2341, %v2358
    %v2407 = vadd.f32 %v2342, %v2372
    %v2408 = vadd.f32 %v2343, %v2386
    %v2409 = vadd.f32 %v2344, %v2400
    %v2410 = vxor.u32 %v2402, 2147483648
    %v2411 = vxor.u32 %v2406, 2147483648
    %v2412 = vmul.f32 %v2410, 1.442695
    %v2413 = vpow.pop %v2412
    %v2414 = vmul.f32 %v2411, 1.442695
    %v2415 = vpow.pop %v2414
    %v2416 = vadd.f32 %v2413, 1.0
    %v2417 = vadd.f32 %v2415, 1.0
    %v2418 = vrcp.pop %v2416
    %v2419 = vmul.f32 %v2416, %v2418
    %v2420 = vsub.f32 1.0, %v2419
    %v2421 = vmul.f32 %v2418, %v2420
    %v2422 = vadd.f32 %v2418, %v2421
    %vm2423 = vweird.f32 %v2416
    %vm2424 = vweird.f32 %v2418
    %vm2425 = vmor %vm2423, %vm2424
    %v2426 = vsel %vm2425, %v2418, %v2422
    %v2427 = vand.u32 2147483647, %v2416
    %vm2428 = vcmp.eq.f32.partialorder %v2427, 8.507059e+37
    %v2429 = vand.u32 %v2416, 2147483648
    %v2430 = vor.u32 1.1754944e-38, %v2429
    %v2431 = vsel %vm2428, %v2430, %v2426
    %v2432 = vmul.f32 1.0, %v2431
    %v2433 = vrcp.pop %v2417
    %v2434 = vmul.f32 %v2417, %v2433
    %v2435 = vsub.f32 1.0, %v2434
    %v2436 = vmul.f32 %v2433, %v2435
    %v2437 = vadd.f32 %v2433, %v2436
    %vm2438 = vweird.f32 %v2417
    %vm2439 = vweird.f32 %v2433
    %vm2440 = vmor %vm2438, %vm2439
    %v2441 = vsel %vm2440, %v2433, %v2437
    %v2442 = vand.u32 2147483647, %v2417
    %vm2443 = vcmp.eq.f32.partialorder %v2442, 8.507059e+37
    %v2444 = vand.u32 %v2417, 2147483648
    %v2445 = vor.u32 1.1754944e-38, %v2444
    %v2446 = vsel %vm2443, %v2445, %v2441
    %v2447 = vmul.f32 1.0, %v2446
    %v2448 = vxor.u32 %v2403, 2147483648
    %v2449 = vxor.u32 %v2407, 2147483648
    %v2450 = vmul.f32 %v2448, 1.442695
    %v2451 = vpow.pop %v2450
    %v2452 = vmul.f32 %v2449, 1.442695
    %v2453 = vpow.pop %v2452
    %v2454 = vadd.f32 %v2451, 1.0
    %v2455 = vadd.f32 %v2453, 1.0
    %v2456 = vrcp.pop %v2454
    %v2457 = vmul.f32 %v2454, %v2456
    %v2458 = vsub.f32 1.0, %v2457
    %v2459 = vmul.f32 %v2456, %v2458
    %v2460 = vadd.f32 %v2456, %v2459
    %vm2461 = vweird.f32 %v2454
    %vm2462 = vweird.f32 %v2456
    %vm2463 = vmor %vm2461, %vm2462
    %v2464 = vsel %vm2463, %v2456, %v2460
    %v2465 = vand.u32 2147483647, %v2454
    %vm2466 = vcmp.eq.f32.partialorder %v2465, 8.507059e+37
    %v2467 = vand.u32 %v2454, 2147483648
    %v2468 = vor.u32 1.1754944e-38, %v2467
    %v2469 = vsel %vm2466, %v2468, %v2464
    %v2470 = vmul.f32 1.0, %v2469
    %v2471 = vrcp.pop %v2455
    %v2472 = vmul.f32 %v2455, %v2471
    %v2473 = vsub.f32 1.0, %v2472
    %v2474 = vmul.f32 %v2471, %v2473
    %v2475 = vadd.f32 %v2471, %v2474
    %vm2476 = vweird.f32 %v2455
    %vm2477 = vweird.f32 %v2471
    %vm2478 = vmor %vm2476, %vm2477
    %v2479 = vsel %vm2478, %v2471, %v2475
    %v2480 = vand.u32 2147483647, %v2455
    %vm2481 = vcmp.eq.f32.partialorder %v2480, 8.507059e+37
    %v2482 = vand.u32 %v2455, 2147483648
    %v2483 = vor.u32 1.1754944e-38, %v2482
    %v2484 = vsel %vm2481, %v2483, %v2479
    %v2485 = vmul.f32 1.0, %v2484
    %v2486 = vtanh.pop %v2404
    %v2487 = vtanh.pop %v2408
    %v2488 = vxor.u32 %v2405, 2147483648
    %v2489 = vxor.u32 %v2409, 2147483648
    %v2490 = vmul.f32 %v2488, 1.442695
    %v2491 = vpow.pop %v2490
    %v2492 = vmul.f32 %v2489, 1.442695
    %v2493 = vpow.pop %v2492
    %v2494 = vadd.f32 %v2491, 1.0
    %v2495 = vadd.f32 %v2493, 1.0
    %v2496 = vrcp.pop %v2494
    %v2497 = vmul.f32 %v2494, %v2496
    %v2498 = vsub.f32 1.0, %v2497
    %v2499 = vmul.f32 %v2496, %v2498
    %v2500 = vadd.f32 %v2496, %v2499
    %vm2501 = vweird.f32 %v2494
    %vm2502 = vweird.f32 %v2496
    %vm2503 = vmor %vm2501, %vm2502
    %v2504 = vsel %vm2503, %v2496, %v2500
    %v2505 = vand.u32 2147483647, %v2494
    %vm2506 = vcmp.eq.f32.partialorder %v2505, 8.507059e+37
    %v2507 = vand.u32 %v2494, 2147483648
    %v2508 = vor.u32 1.1754944e-38, %v2507
    %v2509 = vsel %vm2506, %v2508, %v2504
    %v2510 = vmul.f32 1.0, %v2509
    %v2511 = vrcp.pop %v2495
    %v2512 = vmul.f32 %v2495, %v2511
    %v2513 = vsub.f32 1.0, %v2512
    %v2514 = vmul.f32 %v2511, %v2513
    %v2515 = vadd.f32 %v2511, %v2514
    %vm2516 = vweird.f32 %v2495
    %vm2517 = vweird.f32 %v2511
    %vm2518 = vmor %vm2516, %vm2517
    %v2519 = vsel %vm2518, %v2511, %v2515
    %v2520 = vand.u32 2147483647, %v2495
    %vm2521 = vcmp.eq.f32.partialorder %v2520, 8.507059e+37
    %v2522 = vand.u32 %v2495, 2147483648
    %v2523 = vor.u32 1.1754944e-38, %v2522
    %v2524 = vsel %vm2521, %v2523, %v2519
    %v2525 = vmul.f32 1.0, %v2524
    %v2526 = vmul.f32 %v2470, %v2334
    %v2527 = vmul.f32 %v2485, %v2335
    %v2528 = vmul.f32 %v2432, %v2486
    %v2529 = vmul.f32 %v2447, %v2487
    %v2530 = vadd.f32 %v2526, %v2528
    %v2531 = vadd.f32 %v2527, %v2529
    %v2532 = vtanh.pop %v2530
    %v2533 = vtanh.pop %v2531
    %v2534 = vmul.f32 %v2510, %v2532
    %v2535 = vmul.f32 %v2525, %v2533
    %v2536 = vpack.c.bf16 %v2534, %v2534
    %v2537 = vpack.c.bf16 %v2535, %v2535
    %s2538 = scalar_lea.vmem [#allocation14], 56
    %2539 = vst [vmem:[%s2538] sm:$0xf] %v2536
    %2540 = vst [vmem:[%s2538 + $0x4] sm:$0xf] %v2537
    %s2541 = sadd.s32 %s1043, 7
    %p2542 = scmp.lt.s32.totalorder %s2541, 8
    %s2543 = scalar_select %p2542, 1, 0
    %v2544 = vstv %s2543
    %vm2545 = vcmp.eq.s32.totalorder %v2544, 1
    %v2546 = vsel %vm2545, %v2534, %v2332
    %v2547 = vsel %vm2545, %v2535, %v2333
    %v2548 = vsel %vm2545, %v2530, %v2334
    %v2549 = vsel %vm2545, %v2531, %v2335
    %2550 = vst [vmem:[#allocation2] sm:$0xff] %v2546
    %2551 = vst [vmem:[#allocation2 + $0x8] sm:$0xff] %v2547
    %2552 = vst [vmem:[#allocation3] sm:$0xff] %v2548
    %2553 = vst [vmem:[#allocation3 + $0x8] sm:$0xff] %v2549
    // Predicated region
    $region50: #{tpu_custom_call.1} parent=1 // pred_check
      %p2554 = pneg %p106
    $region51: #{tpu_custom_call.1} parent=1 // pred_check_branch
      %2556 = sbr.rel (%p2554) target = $region53
    $region52: #{tpu_custom_call.1} parent=1 // pred_region
      %2557 = vst [vmem:[#allocation15] sm:$0xff] %v2546
      %2558 = vst [vmem:[#allocation15 + $0x8] sm:$0xff] %v2547
      %2559 = vst [vmem:[#allocation17] sm:$0xff] %v2548
      %2560 = vst [vmem:[#allocation17 + $0x8] sm:$0xff] %v2549
    $region53: #{tpu_custom_call.1} parent=1 // pred_fallthru
      _
    // Predicated region
    $region54: #{tpu_custom_call.1} parent=1 // pred_check
      _
    $region55: #{tpu_custom_call.1} parent=1 // pred_check_branch
      %2562 = sbr.rel (0) target = $region57
    $region56: #{tpu_custom_call.1} parent=1 // pred_region
      %2564 = vsyncadd [#allocation7], 0
      %s2565 = sshll.u32 [#allocation14], 4
      %s2566 = int_to_ptr.vmem [resolvable:$true] %s2565
      %s2567 = sshll.u32 %s6, 4
      %s2568 = int_to_ptr.hbm [resolvable:$true] %s2567
      %2573 = dma.vmem_to_hbm [thread:$0]  %s2566, 1024, %s2568, [#allocation7], 64, 64, 4
    $region57: #{tpu_custom_call.1} parent=1 // pred_fallthru
      _
    // Predicated region
    $region58: #{tpu_custom_call.1} parent=1 // pred_check
      _
    $region59: #{tpu_custom_call.1} parent=1 // pred_check_branch
      %2575 = sbr.rel (0) target = $region61
    $region60: #{tpu_custom_call.1} parent=1 // pred_region
      %2577 = vsyncadd [#allocation16], 0
      %s2578 = sshll.u32 [#allocation15], 4
      %s2579 = int_to_ptr.vmem [resolvable:$true] %s2578
      %s2580 = sshll.u32 %s7, 4
      %s2581 = int_to_ptr.hbm [resolvable:$true] %s2580
      %2586 = dma.vmem_to_hbm [thread:$0]  %s2579, 256, %s2581, [#allocation16], 128, 128, 8
    $region61: #{tpu_custom_call.1} parent=1 // pred_fallthru
      _
    // Predicated region
    $region62: #{tpu_custom_call.1} parent=1 // pred_check
      _
    $region63: #{tpu_custom_call.1} parent=1 // pred_check_branch
      %2588 = sbr.rel (0) target = $region65
    $region64: #{tpu_custom_call.1} parent=1 // pred_region
      %2590 = vsyncadd [#allocation16], 0
      %s2591 = sshll.u32 [#allocation17], 4
      %s2592 = int_to_ptr.vmem [resolvable:$true] %s2591
      %s2593 = sshll.u32 %s8, 4
      %s2594 = int_to_ptr.hbm [resolvable:$true] %s2593
      %2599 = dma.vmem_to_hbm [thread:$0]  %s2592, 256, %s2594, [#allocation16], 128, 128, 8
    $region65: #{tpu_custom_call.1} parent=1 // pred_fallthru
      _
    // Predicated region
    $region66: #{tpu_custom_call.1} parent=1 // pred_check
      _
    $region67: #{tpu_custom_call.1} parent=1 // pred_check_branch
      %2601 = sbr.rel (0) target = $region69
    $region68: #{tpu_custom_call.1} parent=1 // pred_region
      %2603 = dma.done [#allocation7], 1024
    $region69: #{tpu_custom_call.1} parent=1 // pred_fallthru
      _
    // Predicated region
    $region70: #{tpu_custom_call.1} parent=1 // pred_check
      _
    $region71: #{tpu_custom_call.1} parent=1 // pred_check_branch
      %2605 = sbr.rel (0) target = $region73
    $region72: #{tpu_custom_call.1} parent=1 // pred_region
      %2607 = dma.done [#allocation16], 256
    $region73: #{tpu_custom_call.1} parent=1 // pred_fallthru
      _
    // Predicated region
    $region74: #{tpu_custom_call.1} parent=1 // pred_check
      _
    $region75: #{tpu_custom_call.1} parent=1 // pred_check_branch
      %2609 = sbr.rel (0) target = $region77
    $region76: #{tpu_custom_call.1} parent=1 // pred_region
      %2611 = dma.done [#allocation16], 256
    $region77: #{tpu_custom_call.1} parent=1 // pred_fallthru
      _
    %2612 = vsyncpa [#allocation6], 1
    %2613 = vsyncpa [#allocation9], 1
    %2614 = vsyncpa [#allocation12], 1
    %2615 = vsyncpa [#allocation7], 1
    %2616 = vsyncpa [#allocation16], 1

// kernel: tpu_custom_call.1
$region0: #{tpu_custom_call.1}
  #allocation0 [shape = 'u32[]', space=smem, size = 0x4, offset = 0x4, fixed_abs, tag = 'smem constant byte address 0x4 - core index']
  #allocation1 [shape = 'u32[72,128]{1,0:T(1,128)}', space=vmem, size = 0x9000, scoped, tag = 'internal scratch']
  #allocation2 [shape = 'f32[16,128]{1,0:T(8,128)}', space=vmem, size = 0x2000, scoped, tag = 'scratch operand']
  #allocation3 [shape = 'f32[16,128]{1,0:T(8,128)}', space=vmem, size = 0x2000, scoped, tag = 'scratch operand']
  #allocation4 [shape = 'f32[8,16,512]{2,1,0:T(8,128)}', space=vmem, size = 0x40000, scoped, tag = 'scratch operand']
  %s0 = inlined_call_operand.hbm [shape: bf16[8,16,128], index: 0, kind: input, shape index: {}]
  %s1 = inlined_call_operand.hbm [shape: f32[16,128], index: 1, kind: input, shape index: {}]
  %s2 = inlined_call_operand.hbm [shape: f32[16,128], index: 2, kind: input, shape index: {}]
  %s3 = inlined_call_operand.hbm [shape: bf16[128,512], index: 3, kind: input, shape index: {}]
  %s4 = inlined_call_operand.hbm [shape: bf16[128,512], index: 4, kind: input, shape index: {}]
  %s5 = inlined_call_operand.vmem [shape: f32[1,512], index: 5, kind: input, shape index: {}]
  %s6 = inlined_call_operand.hbm [shape: bf16[8,16,128], index: 6, kind: output, shape index: {0}]
  %s7 = inlined_call_operand.hbm [shape: f32[16,128], index: 7, kind: output, shape index: {1}]
  %s8 = inlined_call_operand.hbm [shape: f32[16,128], index: 8, kind: output, shape index: {2}]
  %9 = xla_tuple %s6, %s7, %s8
  %s10 = sld [smem:[#allocation0]]
  $region78: #{tpu_custom_call.1} parent=0
    _
  %s12 = ssub.s32 1, %s10
  %s13 = scalar_select 0, %s12, %s10
  $region1: #{tpu_custom_call.1} parent=0
    #allocation5 [shape = 'u8[32768]{0}', space=vmem, size = 0x8000, scoped, tag = 'input window, operand 0, single buffered']
    #allocation6 [shape = 's32[1]{0}', space=sflag, size = 0x4, scoped, tag = 'scoped memory for tpu_custom_call.1']
    #allocation7 [shape = 's32[1]{0}', space=sflag, size = 0x4, scoped, tag = 'scoped memory for tpu_custom_call.1']
    #allocation8 [shape = 'u8[8192]{0}', space=vmem, size = 0x2000, scoped, tag = 'input window, operand 1, single buffered']
    #allocation9 [shape = 's32[1]{0}', space=sflag, size = 0x4, scoped, tag = 'scoped memory for tpu_custom_call.1']
    #allocation10 [shape = 'u8[8192]{0}', space=vmem, size = 0x2000, scoped, tag = 'input window, operand 2, single buffered']
    #allocation11 [shape = 'u8[131072]{0}', space=vmem, size = 0x20000, scoped, tag = 'input window, operand 3, single buffered']
    #allocation12 [shape = 's32[1]{0}', space=sflag, size = 0x4, scoped, tag = 'scoped memory for tpu_custom_call.1']
    #allocation13 [shape = 'u8[131072]{0}', space=vmem, size = 0x20000, scoped, tag = 'input window, operand 4, single buffered']
    #allocation14 [shape = 'u8[32768]{0}', space=vmem, size = 0x8000, scoped, tag = 'output window, operand 0, single buffered']
    #allocation15 [shape = 'u8[8192]{0}', space=vmem, size = 0x2000, scoped, tag = 'output window, operand 1, single buffered']
    #allocation16 [shape = 's32[1]{0}', space=sflag, size = 0x4, scoped, tag = 'scoped memory for tpu_custom_call.1']
    #allocation17 [shape = 'u8[8192]{0}', space=vmem, size = 0x2000, scoped, tag = 'output window, operand 2, single buffered']
    %14 = vsyncpa [#allocation6], 0
    %15 = vsyncpa [#allocation9], 0
    %16 = vsyncpa [#allocation12], 0
    %17 = vsyncpa [#allocation7], 0
    %18 = vsyncpa [#allocation16], 0
    // Predicated region
    $region2: #{tpu_custom_call.1} parent=1 // pred_check
      _
    $region3: #{tpu_custom_call.1} parent=1 // pred_check_branch
      %20 = sbr.rel (0) target = $region5
    $region4: #{tpu_custom_call.1} parent=1 // pred_region
      %22 = vsyncadd [#allocation6], 0
      %s23 = sshll.u32 %s0, 4
      %s24 = int_to_ptr.hbm [resolvable:$true] %s23
      %s25 = sshll.u32 [#allocation5], 4
      %s26 = int_to_ptr.vmem [resolvable:$true] %s25
      %31 = dma.hbm_to_vmem [thread:$0]  %s24, 1024, %s26, [#allocation6], 64, 64, 4
    $region5: #{tpu_custom_call.1} parent=1 // pred_fallthru
      _
    // Predicated region
    $region6: #{tpu_custom_call.1} parent=1 // pred_check
      _
    $region7: #{tpu_custom_call.1} parent=1 // pred_check_branch
      %33 = sbr.rel (0) target = $region9
    $region8: #{tpu_custom_call.1} parent=1 // pred_region
      %35 = vsyncadd [#allocation9], 0
      %s36 = sshll.u32 %s1, 4
      %s37 = int_to_ptr.hbm [resolvable:$true] %s36
      %s38 = sshll.u32 [#allocation8], 4
      %s39 = int_to_ptr.vmem [resolvable:$true] %s38
      %44 = dma.hbm_to_vmem [thread:$0]  %s37, 256, %s39, [#allocation9], 128, 128, 8
    $region9: #{tpu_custom_call.1} parent=1 // pred_fallthru
      _
    // Predicated region
    $region10: #{tpu_custom_call.1} parent=1 // pred_check
      _
    $region11: #{tpu_custom_call.1} parent=1 // pred_check_branch
      %46 = sbr.rel (0) target = $region13
    $region12: #{tpu_custom_call.1} parent=1 // pred_region
      %48 = vsyncadd [#allocation9], 0
      %s49 = sshll.u32 %s2, 4
      %s50 = int_to_ptr.hbm [resolvable:$true] %s49
      %s51 = sshll.u32 [#allocation10], 4
      %s52 = int_to_ptr.vmem [resolvable:$true] %s51
      %57 = dma.hbm_to_vmem [thread:$0]  %s50, 256, %s52, [#allocation9], 128, 128, 8
    $region13: #{tpu_custom_call.1} parent=1 // pred_fallthru
      _
    // Predicated region
    $region14: #{tpu_custom_call.1} parent=1 // pred_check
      _
    $region15: #{tpu_custom_call.1} parent=1 // pred_check_branch
      %59 = sbr.rel (0) target = $region17
    $region16: #{tpu_custom_call.1} parent=1 // pred_region
      %61 = vsyncadd [#allocation12], 0
      %s62 = sshll.u32 %s3, 4
      %s63 = int_to_ptr.hbm [resolvable:$true] %s62
      %s64 = sshll.u32 [#allocation11], 4
      %s65 = int_to_ptr.vmem [resolvable:$true] %s64
      %70 = dma.hbm_to_vmem [thread:$0]  %s63, 4096, %s65, [#allocation12], 256, 256, 16
    $region17: #{tpu_custom_call.1} parent=1 // pred_fallthru
      _
    // Predicated region
    $region18: #{tpu_custom_call.1} parent=1 // pred_check
      _
    $region19: #{tpu_custom_call.1} parent=1 // pred_check_branch
      %72 = sbr.rel (0) target = $region21
    $region20: #{tpu_custom_call.1} parent=1 // pred_region
      %74 = vsyncadd [#allocation12], 0
      %s75 = sshll.u32 %s4, 4
      %s76 = int_to_ptr.hbm [resolvable:$true] %s75
      %s77 = sshll.u32 [#allocation13], 4
      %s78 = int_to_ptr.vmem [resolvable:$true] %s77
      %83 = dma.hbm_to_vmem [thread:$0]  %s76, 4096, %s78, [#allocation12], 256, 256, 16
    $region21: #{tpu_custom_call.1} parent=1 // pred_fallthru
      _
    // Predicated region
    $region22: #{tpu_custom_call.1} parent=1 // pred_check
      _
    $region23: #{tpu_custom_call.1} parent=1 // pred_check_branch
      %85 = sbr.rel (0) target = $region25
    $region24: #{tpu_custom_call.1} parent=1 // pred_region
      _
    $region25: #{tpu_custom_call.1} parent=1 // pred_fallthru
      _
    // Predicated region
    $region26: #{tpu_custom_call.1} parent=1 // pred_check
      _
    $region27: #{tpu_custom_call.1} parent=1 // pred_check_branch
      %87 = sbr.rel (0) target = $region29
    $region28: #{tpu_custom_call.1} parent=1 // pred_region
      %89 = dma.done [#allocation6], 1024
    $region29: #{tpu_custom_call.1} parent=1 // pred_fallthru
      _
    // Predicated region
    $region30: #{tpu_custom_call.1} parent=1 // pred_check
      _
    $region31: #{tpu_custom_call.1} parent=1 // pred_check_branch
      %91 = sbr.rel (0) target = $region33
    $region32: #{tpu_custom_call.1} parent=1 // pred_region
      %93 = dma.done [#allocation9], 256
    $region33: #{tpu_custom_call.1} parent=1 // pred_fallthru
      _
    // Predicated region
    $region34: #{tpu_custom_call.1} parent=1 // pred_check
      _
    $region35: #{tpu_custom_call.1} parent=1 // pred_check_branch
      %95 = sbr.rel (0) target = $region37
    $region36: #{tpu_custom_call.1} parent=1 // pred_region
      %97 = dma.done [#allocation9], 256
    $region37: #{tpu_custom_call.1} parent=1 // pred_fallthru
      _
    // Predicated region
    $region38: #{tpu_custom_call.1} parent=1 // pred_check
      _
    $region39: #{tpu_custom_call.1} parent=1 // pred_check_branch
      %99 = sbr.rel (0) target = $region41
    $region40: #{tpu_custom_call.1} parent=1 // pred_region
      %101 = dma.done [#allocation12], 4096
    $region41: #{tpu_custom_call.1} parent=1 // pred_fallthru
      _
    // Predicated region
    $region42: #{tpu_custom_call.1} parent=1 // pred_check
      _
    $region43: #{tpu_custom_call.1} parent=1 // pred_check_branch
      %103 = sbr.rel (0) target = $region45
    $region44: #{tpu_custom_call.1} parent=1 // pred_region
      %105 = dma.done [#allocation12], 4096
    $region45: #{tpu_custom_call.1} parent=1 // pred_fallthru
      _
    %p106 = scmp.eq.s32.totalorder 0, 0
    // Predicated region
    $region46: #{tpu_custom_call.1} parent=1 // pred_check
      %p107 = pneg %p106
    $region47: #{tpu_custom_call.1} parent=1 // pred_check_branch
      %109 = sbr.rel (%p107) target = $region49
    $region48: #{tpu_custom_call.1} parent=1 // pred_region
      %v110 = vld [vmem:[#allocation8] sm:$0xff]
      %v111 = vld [vmem:[#allocation8 + $0x8] sm:$0xff]
      %112 = vst [vmem:[#allocation2] sm:$0xff] %v110
      %113 = vst [vmem:[#allocation2 + $0x8] sm:$0xff] %v111
      %v114 = vld [vmem:[#allocation10] sm:$0xff]
      %v115 = vld [vmem:[#allocation10 + $0x8] sm:$0xff]
      %116 = vst [vmem:[#allocation3] sm:$0xff] %v114
      %117 = vst [vmem:[#allocation3 + $0x8] sm:$0xff] %v115
    $region49: #{tpu_custom_call.1} parent=1 // pred_fallthru
      _
    %v118 = vld [vmem:[#allocation11] sm:$0xff]
    %v119 = vld [vmem:[#allocation11 + $0x8] sm:$0xff]
    %v120 = vld [vmem:[#allocation11 + $0x10] sm:$0xff]
    %v121 = vld [vmem:[#allocation11 + $0x18] sm:$0xff]
    %v122 = vld [vmem:[#allocation11 + $0x20] sm:$0xff]
    %v123 = vld [vmem:[#allocation11 + $0x28] sm:$0xff]
    %v124 = vld [vmem:[#allocation11 + $0x30] sm:$0xff]
    %v125 = vld [vmem:[#allocation11 + $0x38] sm:$0xff]
    %v126 = vld [vmem:[#allocation11 + $0x40] sm:$0xff]
    %v127 = vld [vmem:[#allocation11 + $0x48] sm:$0xff]
    %v128 = vld [vmem:[#allocation11 + $0x50] sm:$0xff]
    %v129 = vld [vmem:[#allocation11 + $0x58] sm:$0xff]
    %v130 = vld [vmem:[#allocation11 + $0x60] sm:$0xff]
    %v131 = vld [vmem:[#allocation11 + $0x68] sm:$0xff]
    %v132 = vld [vmem:[#allocation11 + $0x70] sm:$0xff]
    %v133 = vld [vmem:[#allocation11 + $0x78] sm:$0xff]
    %v134 = vld [vmem:[#allocation11 + $0x80] sm:$0xff]
    %v135 = vld [vmem:[#allocation11 + $0x88] sm:$0xff]
    %v136 = vld [vmem:[#allocation11 + $0x90] sm:$0xff]
    %v137 = vld [vmem:[#allocation11 + $0x98] sm:$0xff]
    %v138 = vld [vmem:[#allocation11 + $0xa0] sm:$0xff]
    %v139 = vld [vmem:[#allocation11 + $0xa8] sm:$0xff]
    %v140 = vld [vmem:[#allocation11 + $0xb0] sm:$0xff]
    %v141 = vld [vmem:[#allocation11 + $0xb8] sm:$0xff]
    %v142 = vld [vmem:[#allocation11 + $0xc0] sm:$0xff]
    %v143 = vld [vmem:[#allocation11 + $0xc8] sm:$0xff]
    %v144 = vld [vmem:[#allocation11 + $0xd0] sm:$0xff]
    %v145 = vld [vmem:[#allocation11 + $0xd8] sm:$0xff]
    %v146 = vld [vmem:[#allocation11 + $0xe0] sm:$0xff]
    %v147 = vld [vmem:[#allocation11 + $0xe8] sm:$0xff]
    %v148 = vld [vmem:[#allocation11 + $0xf0] sm:$0xff]
    %v149 = vld [vmem:[#allocation11 + $0xf8] sm:$0xff]
    %v150 = vld [vmem:[#allocation13] sm:$0xff]
    %v151 = vld [vmem:[#allocation13 + $0x8] sm:$0xff]
    %v152 = vld [vmem:[#allocation13 + $0x10] sm:$0xff]
    %v153 = vld [vmem:[#allocation13 + $0x18] sm:$0xff]
    %v154 = vld [vmem:[#allocation13 + $0x20] sm:$0xff]
    %v155 = vld [vmem:[#allocation13 + $0x28] sm:$0xff]
    %v156 = vld [vmem:[#allocation13 + $0x30] sm:$0xff]
    %v157 = vld [vmem:[#allocation13 + $0x38] sm:$0xff]
    %v158 = vld [vmem:[#allocation13 + $0x40] sm:$0xff]
    %v159 = vld [vmem:[#allocation13 + $0x48] sm:$0xff]
    %v160 = vld [vmem:[#allocation13 + $0x50] sm:$0xff]
    %v161 = vld [vmem:[#allocation13 + $0x58] sm:$0xff]
    %v162 = vld [vmem:[#allocation13 + $0x60] sm:$0xff]
    %v163 = vld [vmem:[#allocation13 + $0x68] sm:$0xff]
    %v164 = vld [vmem:[#allocation13 + $0x70] sm:$0xff]
    %v165 = vld [vmem:[#allocation13 + $0x78] sm:$0xff]
    %v166 = vld [vmem:[#allocation13 + $0x80] sm:$0xff]
    %v167 = vld [vmem:[#allocation13 + $0x88] sm:$0xff]
    %v168 = vld [vmem:[#allocation13 + $0x90] sm:$0xff]
    %v169 = vld [vmem:[#allocation13 + $0x98] sm:$0xff]
    %v170 = vld [vmem:[#allocation13 + $0xa0] sm:$0xff]
    %v171 = vld [vmem:[#allocation13 + $0xa8] sm:$0xff]
    %v172 = vld [vmem:[#allocation13 + $0xb0] sm:$0xff]
    %v173 = vld [vmem:[#allocation13 + $0xb8] sm:$0xff]
    %v174 = vld [vmem:[#allocation13 + $0xc0] sm:$0xff]
    %v175 = vld [vmem:[#allocation13 + $0xc8] sm:$0xff]
    %v176 = vld [vmem:[#allocation13 + $0xd0] sm:$0xff]
    %v177 = vld [vmem:[#allocation13 + $0xd8] sm:$0xff]
    %v178 = vld [vmem:[#allocation13 + $0xe0] sm:$0xff]
    %v179 = vld [vmem:[#allocation13 + $0xe8] sm:$0xff]
    %v180 = vld [vmem:[#allocation13 + $0xf0] sm:$0xff]
    %v181 = vld [vmem:[#allocation13 + $0xf8] sm:$0xff]
    %v182 = vld [vmem:[%s5] sm:$0xf]
    %v183 = vld [vmem:[#allocation5] sm:$0xf]
    %v184 = vld [vmem:[#allocation5 + $0x4] sm:$0xf]
    %v185 = vld [vmem:[#allocation5 + $0x8] sm:$0xf]
    %v186 = vld [vmem:[#allocation5 + $0xc] sm:$0xf]
    %v187 = vld [vmem:[#allocation5 + $0x10] sm:$0xf]
    %v188 = vld [vmem:[#allocation5 + $0x14] sm:$0xf]
    %v189 = vld [vmem:[#allocation5 + $0x18] sm:$0xf]
    %v190 = vld [vmem:[#allocation5 + $0x1c] sm:$0xf]
    %v191 = vld [vmem:[#allocation5 + $0x20] sm:$0xf]
    %v192 = vld [vmem:[#allocation5 + $0x24] sm:$0xf]
    %v193 = vld [vmem:[#allocation5 + $0x28] sm:$0xf]
    %v194 = vld [vmem:[#allocation5 + $0x2c] sm:$0xf]
    %v195 = vld [vmem:[#allocation5 + $0x30] sm:$0xf]
    %v196 = vld [vmem:[#allocation5 + $0x34] sm:$0xf]
    %v197 = vld [vmem:[#allocation5 + $0x38] sm:$0xf]
    %v198 = vld [vmem:[#allocation5 + $0x3c] sm:$0xf]
    %v200 = vperm.slane %v182, 0
    %v201 = vperm.slane %v182, 1
    %v202 = vperm.slane %v182, 2
    %v203 = vperm.slane %v182, 3
    %v224 = vunpack.c.l.b16 %v183
    %v225 = vunpack.c.l.b16 %v184
    %v226 = vunpack.c.l.b16 %v185
    %v227 = vunpack.c.l.b16 %v186
    %v228 = vunpack.c.l.b16 %v187
    %v229 = vunpack.c.l.b16 %v188
    %v230 = vunpack.c.l.b16 %v189
    %v231 = vunpack.c.l.b16 %v190
    %v232 = vunpack.c.l.b16 %v191
    %v233 = vunpack.c.l.b16 %v192
    %v234 = vunpack.c.l.b16 %v193
    %v235 = vunpack.c.l.b16 %v194
    %v236 = vunpack.c.l.b16 %v195
    %v237 = vunpack.c.l.b16 %v196
    %v238 = vunpack.c.l.b16 %v197
    %v239 = vunpack.c.l.b16 %v198
    %v240 = vpack.c.b16 %v225, %v224
    %v241 = vpack.c.b16 %v227, %v226
    %v242 = vpack.c.b16 %v229, %v228
    %v243 = vpack.c.b16 %v231, %v230
    %v244 = vpack.c.b16 %v233, %v232
    %v245 = vpack.c.b16 %v235, %v234
    %v246 = vpack.c.b16 %v237, %v236
    %v247 = vpack.c.b16 %v239, %v238
    %v288 = vunpack.c.l.b16 %v118
    %v289 = vunpack.c.h.b16 %v118
    %v290 = vunpack.c.l.b16 %v119
    %v291 = vunpack.c.h.b16 %v119
    %v292 = vunpack.c.l.b16 %v120
    %v293 = vunpack.c.h.b16 %v120
    %v294 = vunpack.c.l.b16 %v121
    %v295 = vunpack.c.h.b16 %v121
    %v296 = vunpack.c.l.b16 %v122
    %v297 = vunpack.c.h.b16 %v122
    %v298 = vunpack.c.l.b16 %v123
    %v299 = vunpack.c.h.b16 %v123
    %v300 = vunpack.c.l.b16 %v124
    %v301 = vunpack.c.h.b16 %v124
    %v302 = vunpack.c.l.b16 %v125
    %v303 = vunpack.c.h.b16 %v125
    %v304 = vunpack.c.l.b16 %v126
    %v305 = vunpack.c.h.b16 %v126
    %v306 = vunpack.c.l.b16 %v127
    %v307 = vunpack.c.h.b16 %v127
    %v308 = vunpack.c.l.b16 %v128
    %v309 = vunpack.c.h.b16 %v128
    %v310 = vunpack.c.l.b16 %v129
    %v311 = vunpack.c.h.b16 %v129
    %v312 = vunpack.c.l.b16 %v130
    %v313 = vunpack.c.h.b16 %v130
    %v314 = vunpack.c.l.b16 %v131
    %v315 = vunpack.c.h.b16 %v131
    %v316 = vunpack.c.l.b16 %v132
    %v317 = vunpack.c.h.b16 %v132
    %v318 = vunpack.c.l.b16 %v133
    %v319 = vunpack.c.h.b16 %v133
    %v320 = vunpack.c.l.b16 %v134
    %v321 = vunpack.c.h.b16 %v134
    %v322 = vunpack.c.l.b16 %v135
    %v323 = vunpack.c.h.b16 %v135
    %v324 = vunpack.c.l.b16 %v136
    %v325 = vunpack.c.h.b16 %v136
    %v326 = vunpack.c.l.b16 %v137
    %v327 = vunpack.c.h.b16 %v137
    %v328 = vunpack.c.l.b16 %v138
    %v329 = vunpack.c.h.b16 %v138
    %v330 = vunpack.c.l.b16 %v139
    %v331 = vunpack.c.h.b16 %v139
    %v332 = vunpack.c.l.b16 %v140
    %v333 = vunpack.c.h.b16 %v140
    %v334 = vunpack.c.l.b16 %v141
    %v335 = vunpack.c.h.b16 %v141
    %v336 = vunpack.c.l.b16 %v142
    %v337 = vunpack.c.h.b16 %v142
    %v338 = vunpack.c.l.b16 %v143
    %v339 = vunpack.c.h.b16 %v143
    %v340 = vunpack.c.l.b16 %v144
    %v341 = vunpack.c.h.b16 %v144
    %v342 = vunpack.c.l.b16 %v145
    %v343 = vunpack.c.h.b16 %v145
    %v344 = vunpack.c.l.b16 %v146
    %v345 = vunpack.c.h.b16 %v146
    %v346 = vunpack.c.l.b16 %v147
    %v347 = vunpack.c.h.b16 %v147
    %v348 = vunpack.c.l.b16 %v148
    %v349 = vunpack.c.h.b16 %v148
    %v350 = vunpack.c.l.b16 %v149
    %v351 = vunpack.c.h.b16 %v149
    %v352 = vpack.c.b16 %v292, %v288
    %v353 = vpack.c.b16 %v293, %v289
    %v354 = vpack.c.b16 %v294, %v290
    %v355 = vpack.c.b16 %v295, %v291
    %v356 = vpack.c.b16 %v300, %v296
    %v357 = vpack.c.b16 %v301, %v297
    %v358 = vpack.c.b16 %v302, %v298
    %v359 = vpack.c.b16 %v303, %v299
    %v360 = vpack.c.b16 %v308, %v304
    %v361 = vpack.c.b16 %v309, %v305
    %v362 = vpack.c.b16 %v310, %v306
    %v363 = vpack.c.b16 %v311, %v307
    %v364 = vpack.c.b16 %v316, %v312
    %v365 = vpack.c.b16 %v317, %v313
    %v366 = vpack.c.b16 %v318, %v314
    %v367 = vpack.c.b16 %v319, %v315
    %v368 = vpack.c.b16 %v324, %v320
    %v369 = vpack.c.b16 %v325, %v321
    %v370 = vpack.c.b16 %v326, %v322
    %v371 = vpack.c.b16 %v327, %v323
    %v372 = vpack.c.b16 %v332, %v328
    %v373 = vpack.c.b16 %v333, %v329
    %v374 = vpack.c.b16 %v334, %v330
    %v375 = vpack.c.b16 %v335, %v331
    %v376 = vpack.c.b16 %v340, %v336
    %v377 = vpack.c.b16 %v341, %v337
    %v378 = vpack.c.b16 %v342, %v338
    %v379 = vpack.c.b16 %v343, %v339
    %v380 = vpack.c.b16 %v348, %v344
    %v381 = vpack.c.b16 %v349, %v345
    %v382 = vpack.c.b16 %v350, %v346
    %v383 = vpack.c.b16 %v351, %v347
    %416 = vmatpush.bf16.msra.mxu0 %v380
    %417 = vmatpush.bf16.msra.mxu0 %v376
    %418 = vmatpush.bf16.msra.mxu0 %v372
    %419 = vmatpush.bf16.msra.mxu0 %v368
    %420 = vmatpush.bf16.msra.mxu0 %v364
    %421 = vmatpush.bf16.msra.mxu0 %v360
    %422 = vmatpush.bf16.msra.mxu0 %v356
    %423 = vmatpush.bf16.msra.mxu0 %v352
    %424 = vmatmul.bf16.gmra.mxu0 %v240
    %v425 = vpop.f32.mrf.mxu0
    %v426 = vadd.f32 %v200, %v425
    %v427 = vpop.f32.mrf.mxu0
    %v428 = vadd.f32 %v200, %v427
    %429 = vmatmul.bf16.gmra.mxu0 %v241
    %v430 = vpop.f32.mrf.mxu0
    %v431 = vadd.f32 %v200, %v430
    %v432 = vpop.f32.mrf.mxu0
    %v433 = vadd.f32 %v200, %v432
    %434 = vmatmul.bf16.gmra.mxu0 %v242
    %v435 = vpop.f32.mrf.mxu0
    %v436 = vadd.f32 %v200, %v435
    %v437 = vpop.f32.mrf.mxu0
    %v438 = vadd.f32 %v200, %v437
    %439 = vmatmul.bf16.gmra.mxu0 %v243
    %v440 = vpop.f32.mrf.mxu0
    %v441 = vadd.f32 %v200, %v440
    %v442 = vpop.f32.mrf.mxu0
    %v443 = vadd.f32 %v200, %v442
    %444 = vmatmul.bf16.gmra.mxu0 %v244
    %v445 = vpop.f32.mrf.mxu0
    %v446 = vadd.f32 %v200, %v445
    %v447 = vpop.f32.mrf.mxu0
    %v448 = vadd.f32 %v200, %v447
    %449 = vmatmul.bf16.gmra.mxu0 %v245
    %v450 = vpop.f32.mrf.mxu0
    %v451 = vadd.f32 %v200, %v450
    %v452 = vpop.f32.mrf.mxu0
    %v453 = vadd.f32 %v200, %v452
    %454 = vmatmul.bf16.gmra.mxu0 %v246
    %v455 = vpop.f32.mrf.mxu0
    %v456 = vadd.f32 %v200, %v455
    %v457 = vpop.f32.mrf.mxu0
    %v458 = vadd.f32 %v200, %v457
    %459 = vmatmul.bf16.gmra.mxu0 %v247
    %v460 = vpop.f32.mrf.mxu0
    %v461 = vadd.f32 %v200, %v460
    %v462 = vpop.f32.mrf.mxu0
    %v463 = vadd.f32 %v200, %v462
    %464 = vdwg.mxu0
    %465 = vmatpush.bf16.msra.mxu0 %v381
    %466 = vmatpush.bf16.msra.mxu0 %v377
    %467 = vmatpush.bf16.msra.mxu0 %v373
    %468 = vmatpush.bf16.msra.mxu0 %v369
    %469 = vmatpush.bf16.msra.mxu0 %v365
    %470 = vmatpush.bf16.msra.mxu0 %v361
    %471 = vmatpush.bf16.msra.mxu0 %v357
    %472 = vmatpush.bf16.msra.mxu0 %v353
    %473 = vmatmul.bf16.gmra.mxu0 %v240
    %v474 = vpop.f32.mrf.mxu0
    %v475 = vadd.f32 %v201, %v474
    %v476 = vpop.f32.mrf.mxu0
    %v477 = vadd.f32 %v201, %v476
    %478 = vmatmul.bf16.gmra.mxu0 %v241
    %v479 = vpop.f32.mrf.mxu0
    %v480 = vadd.f32 %v201, %v479
    %v481 = vpop.f32.mrf.mxu0
    %v482 = vadd.f32 %v201, %v481
    %483 = vmatmul.bf16.gmra.mxu0 %v242
    %v484 = vpop.f32.mrf.mxu0
    %v485 = vadd.f32 %v201, %v484
    %v486 = vpop.f32.mrf.mxu0
    %v487 = vadd.f32 %v201, %v486
    %488 = vmatmul.bf16.gmra.mxu0 %v243
    %v489 = vpop.f32.mrf.mxu0
    %v490 = vadd.f32 %v201, %v489
    %v491 = vpop.f32.mrf.mxu0
    %v492 = vadd.f32 %v201, %v491
    %493 = vmatmul.bf16.gmra.mxu0 %v244
    %v494 = vpop.f32.mrf.mxu0
    %v495 = vadd.f32 %v201, %v494
    %v496 = vpop.f32.mrf.mxu0
    %v497 = vadd.f32 %v201, %v496
    %498 = vmatmul.bf16.gmra.mxu0 %v245
    %v499 = vpop.f32.mrf.mxu0
    %v500 = vadd.f32 %v201, %v499
    %v501 = vpop.f32.mrf.mxu0
    %v502 = vadd.f32 %v201, %v501
    %503 = vmatmul.bf16.gmra.mxu0 %v246
    %v504 = vpop.f32.mrf.mxu0
    %v505 = vadd.f32 %v201, %v504
    %v506 = vpop.f32.mrf.mxu0
    %v507 = vadd.f32 %v201, %v506
    %508 = vmatmul.bf16.gmra.mxu0 %v247
    %v509 = vpop.f32.mrf.mxu0
    %v510 = vadd.f32 %v201, %v509
    %v511 = vpop.f32.mrf.mxu0
    %v512 = vadd.f32 %v201, %v511
    %513 = vdwg.mxu0
    %514 = vmatpush.bf16.msra.mxu0 %v382
    %515 = vmatpush.bf16.msra.mxu0 %v378
    %516 = vmatpush.bf16.msra.mxu0 %v374
    %517 = vmatpush.bf16.msra.mxu0 %v370
    %518 = vmatpush.bf16.msra.mxu0 %v366
    %519 = vmatpush.bf16.msra.mxu0 %v362
    %520 = vmatpush.bf16.msra.mxu0 %v358
    %521 = vmatpush.bf16.msra.mxu0 %v354
    %522 = vmatmul.bf16.gmra.mxu0 %v240
    %v523 = vpop.f32.mrf.mxu0
    %v524 = vadd.f32 %v202, %v523
    %v525 = vpop.f32.mrf.mxu0
    %v526 = vadd.f32 %v202, %v525
    %527 = vmatmul.bf16.gmra.mxu0 %v241
    %v528 = vpop.f32.mrf.mxu0
    %v529 = vadd.f32 %v202, %v528
    %v530 = vpop.f32.mrf.mxu0
    %v531 = vadd.f32 %v202, %v530
    %532 = vmatmul.bf16.gmra.mxu0 %v242
    %v533 = vpop.f32.mrf.mxu0
    %v534 = vadd.f32 %v202, %v533
    %v535 = vpop.f32.mrf.mxu0
    %v536 = vadd.f32 %v202, %v535
    %537 = vmatmul.bf16.gmra.mxu0 %v243
    %v538 = vpop.f32.mrf.mxu0
    %v539 = vadd.f32 %v202, %v538
    %v540 = vpop.f32.mrf.mxu0
    %v541 = vadd.f32 %v202, %v540
    %542 = vmatmul.bf16.gmra.mxu0 %v244
    %v543 = vpop.f32.mrf.mxu0
    %v544 = vadd.f32 %v202, %v543
    %v545 = vpop.f32.mrf.mxu0
    %v546 = vadd.f32 %v202, %v545
    %547 = vmatmul.bf16.gmra.mxu0 %v245
    %v548 = vpop.f32.mrf.mxu0
    %v549 = vadd.f32 %v202, %v548
    %v550 = vpop.f32.mrf.mxu0
    %v551 = vadd.f32 %v202, %v550
    %552 = vmatmul.bf16.gmra.mxu0 %v246
    %v553 = vpop.f32.mrf.mxu0
    %v554 = vadd.f32 %v202, %v553
    %v555 = vpop.f32.mrf.mxu0
    %v556 = vadd.f32 %v202, %v555
    %557 = vmatmul.bf16.gmra.mxu0 %v247
    %v558 = vpop.f32.mrf.mxu0
    %v559 = vadd.f32 %v202, %v558
    %v560 = vpop.f32.mrf.mxu0
    %v561 = vadd.f32 %v202, %v560
    %562 = vdwg.mxu0
    %563 = vmatpush.bf16.msra.mxu0 %v383
    %564 = vmatpush.bf16.msra.mxu0 %v379
    %565 = vmatpush.bf16.msra.mxu0 %v375
    %566 = vmatpush.bf16.msra.mxu0 %v371
    %567 = vmatpush.bf16.msra.mxu0 %v367
    %568 = vmatpush.bf16.msra.mxu0 %v363
    %569 = vmatpush.bf16.msra.mxu0 %v359
    %570 = vmatpush.bf16.msra.mxu0 %v355
    %571 = vmatmul.bf16.gmra.mxu0 %v240
    %v572 = vpop.f32.mrf.mxu0
    %v573 = vadd.f32 %v203, %v572
    %v574 = vpop.f32.mrf.mxu0
    %v575 = vadd.f32 %v203, %v574
    %576 = vmatmul.bf16.gmra.mxu0 %v241
    %v577 = vpop.f32.mrf.mxu0
    %v578 = vadd.f32 %v203, %v577
    %v579 = vpop.f32.mrf.mxu0
    %v580 = vadd.f32 %v203, %v579
    %581 = vmatmul.bf16.gmra.mxu0 %v242
    %v582 = vpop.f32.mrf.mxu0
    %v583 = vadd.f32 %v203, %v582
    %v584 = vpop.f32.mrf.mxu0
    %v585 = vadd.f32 %v203, %v584
    %586 = vmatmul.bf16.gmra.mxu0 %v243
    %v587 = vpop.f32.mrf.mxu0
    %v588 = vadd.f32 %v203, %v587
    %v589 = vpop.f32.mrf.mxu0
    %v590 = vadd.f32 %v203, %v589
    %591 = vmatmul.bf16.gmra.mxu0 %v244
    %v592 = vpop.f32.mrf.mxu0
    %v593 = vadd.f32 %v203, %v592
    %v594 = vpop.f32.mrf.mxu0
    %v595 = vadd.f32 %v203, %v594
    %596 = vmatmul.bf16.gmra.mxu0 %v245
    %v597 = vpop.f32.mrf.mxu0
    %v598 = vadd.f32 %v203, %v597
    %v599 = vpop.f32.mrf.mxu0
    %v600 = vadd.f32 %v203, %v599
    %601 = vmatmul.bf16.gmra.mxu0 %v246
    %v602 = vpop.f32.mrf.mxu0
    %v603 = vadd.f32 %v203, %v602
    %v604 = vpop.f32.mrf.mxu0
    %v605 = vadd.f32 %v203, %v604
    %606 = vmatmul.bf16.gmra.mxu0 %v247
    %v607 = vpop.f32.mrf.mxu0
    %v608 = vadd.f32 %v203, %v607
    %v609 = vpop.f32.mrf.mxu0
    %v610 = vadd.f32 %v203, %v609
    %611 = vdwg.mxu0
    %612 = vst [vmem:[#allocation4] sm:$0xff] %v426
    %613 = vst [vmem:[#allocation4 + $0x8] sm:$0xff] %v475
    %614 = vst [vmem:[#allocation4 + $0x10] sm:$0xff] %v524
    %615 = vst [vmem:[#allocation4 + $0x18] sm:$0xff] %v573
    %616 = vst [vmem:[#allocation4 + $0x20] sm:$0xff] %v428
    %617 = vst [vmem:[#allocation4 + $0x28] sm:$0xff] %v477
    %618 = vst [vmem:[#allocation4 + $0x30] sm:$0xff] %v526
    %619 = vst [vmem:[#allocation4 + $0x38] sm:$0xff] %v575
    %620 = vst [vmem:[#allocation4 + $0x40] sm:$0xff] %v431
    %621 = vst [vmem:[#allocation4 + $0x48] sm:$0xff] %v480
    %622 = vst [vmem:[#allocation4 + $0x50] sm:$0xff] %v529
    %623 = vst [vmem:[#allocation4 + $0x58] sm:$0xff] %v578
    %624 = vst [vmem:[#allocation4 + $0x60] sm:$0xff] %v433
    %625 = vst [vmem:[#allocation4 + $0x68] sm:$0xff] %v482
    %626 = vst [vmem:[#allocation4 + $0x70] sm:$0xff] %v531
    %627 = vst [vmem:[#allocation4 + $0x78] sm:$0xff] %v580
    %628 = vst [vmem:[#allocation4 + $0x80] sm:$0xff] %v436
    %629 = vst [vmem:[#allocation4 + $0x88] sm:$0xff] %v485
    %630 = vst [vmem:[#allocation4 + $0x90] sm:$0xff] %v534
    %631 = vst [vmem:[#allocation4 + $0x98] sm:$0xff] %v583
    %632 = vst [vmem:[#allocation4 + $0xa0] sm:$0xff] %v438
    %633 = vst [vmem:[#allocation4 + $0xa8] sm:$0xff] %v487
    %634 = vst [vmem:[#allocation4 + $0xb0] sm:$0xff] %v536
    %635 = vst [vmem:[#allocation4 + $0xb8] sm:$0xff] %v585
    %636 = vst [vmem:[#allocation4 + $0xc0] sm:$0xff] %v441
    %637 = vst [vmem:[#allocation4 + $0xc8] sm:$0xff] %v490
    %638 = vst [vmem:[#allocation4 + $0xd0] sm:$0xff] %v539
    %639 = vst [vmem:[#allocation4 + $0xd8] sm:$0xff] %v588
    %640 = vst [vmem:[#allocation4 + $0xe0] sm:$0xff] %v443
    %641 = vst [vmem:[#allocation4 + $0xe8] sm:$0xff] %v492
    %642 = vst [vmem:[#allocation4 + $0xf0] sm:$0xff] %v541
    %643 = vst [vmem:[#allocation4 + $0xf8] sm:$0xff] %v590
    %644 = vst [vmem:[#allocation4 + $0x100] sm:$0xff] %v446
    %645 = vst [vmem:[#allocation4 + $0x108] sm:$0xff] %v495
    %646 = vst [vmem:[#allocation4 + $0x110] sm:$0xff] %v544
    %647 = vst [vmem:[#allocation4 + $0x118] sm:$0xff] %v593
    %648 = vst [vmem:[#allocation4 + $0x120] sm:$0xff] %v448
    %649 = vst [vmem:[#allocation4 + $0x128] sm:$0xff] %v497
    %650 = vst [vmem:[#allocation4 + $0x130] sm:$0xff] %v546
    %651 = vst [vmem:[#allocation4 + $0x138] sm:$0xff] %v595
    %652 = vst [vmem:[#allocation4 + $0x140] sm:$0xff] %v451
    %653 = vst [vmem:[#allocation4 + $0x148] sm:$0xff] %v500
    %654 = vst [vmem:[#allocation4 + $0x150] sm:$0xff] %v549
    %655 = vst [vmem:[#allocation4 + $0x158] sm:$0xff] %v598
    %656 = vst [vmem:[#allocation4 + $0x160] sm:$0xff] %v453
    %657 = vst [vmem:[#allocation4 + $0x168] sm:$0xff] %v502
    %658 = vst [vmem:[#allocation4 + $0x170] sm:$0xff] %v551
    %659 = vst [vmem:[#allocation4 + $0x178] sm:$0xff] %v600
    %660 = vst [vmem:[#allocation4 + $0x180] sm:$0xff] %v456
    %661 = vst [vmem:[#allocation4 + $0x188] sm:$0xff] %v505
    %662 = vst [vmem:[#allocation4 + $0x190] sm:$0xff] %v554
    %663 = vst [vmem:[#allocation4 + $0x198] sm:$0xff] %v603
    %664 = vst [vmem:[#allocation4 + $0x1a0] sm:$0xff] %v458
    %665 = vst [vmem:[#allocation4 + $0x1a8] sm:$0xff] %v507
    %666 = vst [vmem:[#allocation4 + $0x1b0] sm:$0xff] %v556
    %667 = vst [vmem:[#allocation4 + $0x1b8] sm:$0xff] %v605
    %668 = vst [vmem:[#allocation4 + $0x1c0] sm:$0xff] %v461
    %669 = vst [vmem:[#allocation4 + $0x1c8] sm:$0xff] %v510
    %670 = vst [vmem:[#allocation4 + $0x1d0] sm:$0xff] %v559
    %671 = vst [vmem:[#allocation4 + $0x1d8] sm:$0xff] %v608
    %672 = vst [vmem:[#allocation4 + $0x1e0] sm:$0xff] %v463
    %673 = vst [vmem:[#allocation4 + $0x1e8] sm:$0xff] %v512
    %674 = vst [vmem:[#allocation4 + $0x1f0] sm:$0xff] %v561
    %675 = vst [vmem:[#allocation4 + $0x1f8] sm:$0xff] %v610
    %v676 = vld [vmem:[#allocation2] sm:$0xff]
    %v677 = vld [vmem:[#allocation2 + $0x8] sm:$0xff]
    %v678 = vld [vmem:[#allocation3] sm:$0xff]
    %v679 = vld [vmem:[#allocation3 + $0x8] sm:$0xff]
    %v680 = vld [vmem:[#allocation4] sm:$0xff]
    %v681 = vld [vmem:[#allocation4 + $0x8] sm:$0xff]
    %v682 = vld [vmem:[#allocation4 + $0x10] sm:$0xff]
    %v683 = vld [vmem:[#allocation4 + $0x18] sm:$0xff]
    %v684 = vld [vmem:[#allocation4 + $0x20] sm:$0xff]
    %v685 = vld [vmem:[#allocation4 + $0x28] sm:$0xff]
    %v686 = vld [vmem:[#allocation4 + $0x30] sm:$0xff]
    %v687 = vld [vmem:[#allocation4 + $0x38] sm:$0xff]
    %v688 = vpack.c.bf16 %v677, %v676
    %v721 = vunpack.c.l.b16 %v150
    %v722 = vunpack.c.h.b16 %v150
    %v723 = vunpack.c.l.b16 %v151
    %v724 = vunpack.c.h.b16 %v151
    %v725 = vunpack.c.l.b16 %v152
    %v726 = vunpack.c.h.b16 %v152
    %v727 = vunpack.c.l.b16 %v153
    %v728 = vunpack.c.h.b16 %v153
    %v729 = vunpack.c.l.b16 %v154
    %v730 = vunpack.c.h.b16 %v154
    %v731 = vunpack.c.l.b16 %v155
    %v732 = vunpack.c.h.b16 %v155
    %v733 = vunpack.c.l.b16 %v156
    %v734 = vunpack.c.h.b16 %v156
    %v735 = vunpack.c.l.b16 %v157
    %v736 = vunpack.c.h.b16 %v157
    %v737 = vunpack.c.l.b16 %v158
    %v738 = vunpack.c.h.b16 %v158
    %v739 = vunpack.c.l.b16 %v159
    %v740 = vunpack.c.h.b16 %v159
    %v741 = vunpack.c.l.b16 %v160
    %v742 = vunpack.c.h.b16 %v160
    %v743 = vunpack.c.l.b16 %v161
    %v744 = vunpack.c.h.b16 %v161
    %v745 = vunpack.c.l.b16 %v162
    %v746 = vunpack.c.h.b16 %v162
    %v747 = vunpack.c.l.b16 %v163
    %v748 = vunpack.c.h.b16 %v163
    %v749 = vunpack.c.l.b16 %v164
    %v750 = vunpack.c.h.b16 %v164
    %v751 = vunpack.c.l.b16 %v165
    %v752 = vunpack.c.h.b16 %v165
    %v753 = vunpack.c.l.b16 %v166
    %v754 = vunpack.c.h.b16 %v166
    %v755 = vunpack.c.l.b16 %v167
    %v756 = vunpack.c.h.b16 %v167
    %v757 = vunpack.c.l.b16 %v168
    %v758 = vunpack.c.h.b16 %v168
    %v759 = vunpack.c.l.b16 %v169
    %v760 = vunpack.c.h.b16 %v169
    %v761 = vunpack.c.l.b16 %v170
    %v762 = vunpack.c.h.b16 %v170
    %v763 = vunpack.c.l.b16 %v171
    %v764 = vunpack.c.h.b16 %v171
    %v765 = vunpack.c.l.b16 %v172
    %v766 = vunpack.c.h.b16 %v172
    %v767 = vunpack.c.l.b16 %v173
    %v768 = vunpack.c.h.b16 %v173
    %v769 = vunpack.c.l.b16 %v174
    %v770 = vunpack.c.h.b16 %v174
    %v771 = vunpack.c.l.b16 %v175
    %v772 = vunpack.c.h.b16 %v175
    %v773 = vunpack.c.l.b16 %v176
    %v774 = vunpack.c.h.b16 %v176
    %v775 = vunpack.c.l.b16 %v177
    %v776 = vunpack.c.h.b16 %v177
    %v777 = vunpack.c.l.b16 %v178
    %v778 = vunpack.c.h.b16 %v178
    %v779 = vunpack.c.l.b16 %v179
    %v780 = vunpack.c.h.b16 %v179
    %v781 = vunpack.c.l.b16 %v180
    %v782 = vunpack.c.h.b16 %v180
    %v783 = vunpack.c.l.b16 %v181
    %v784 = vunpack.c.h.b16 %v181
    %v785 = vpack.c.b16 %v725, %v721
    %v786 = vpack.c.b16 %v726, %v722
    %v787 = vpack.c.b16 %v727, %v723
    %v788 = vpack.c.b16 %v728, %v724
    %v789 = vpack.c.b16 %v733, %v729
    %v790 = vpack.c.b16 %v734, %v730
    %v791 = vpack.c.b16 %v735, %v731
    %v792 = vpack.c.b16 %v736, %v732
    %v793 = vpack.c.b16 %v741, %v737
    %v794 = vpack.c.b16 %v742, %v738
    %v795 = vpack.c.b16 %v743, %v739
    %v796 = vpack.c.b16 %v744, %v740
    %v797 = vpack.c.b16 %v749, %v745
    %v798 = vpack.c.b16 %v750, %v746
    %v799 = vpack.c.b16 %v751, %v747
    %v800 = vpack.c.b16 %v752, %v748
    %v801 = vpack.c.b16 %v757, %v753
    %v802 = vpack.c.b16 %v758, %v754
    %v803 = vpack.c.b16 %v759, %v755
    %v804 = vpack.c.b16 %v760, %v756
    %v805 = vpack.c.b16 %v765, %v761
    %v806 = vpack.c.b16 %v766, %v762
    %v807 = vpack.c.b16 %v767, %v763
    %v808 = vpack.c.b16 %v768, %v764
    %v809 = vpack.c.b16 %v773, %v769
    %v810 = vpack.c.b16 %v774, %v770
    %v811 = vpack.c.b16 %v775, %v771
    %v812 = vpack.c.b16 %v776, %v772
    %v813 = vpack.c.b16 %v781, %v777
    %v814 = vpack.c.b16 %v782, %v778
    %v815 = vpack.c.b16 %v783, %v779
    %v816 = vpack.c.b16 %v784, %v780
    %849 = vmatpush.bf16.msra.mxu0 %v813
    %850 = vmatpush.bf16.msra.mxu0 %v809
    %851 = vmatpush.bf16.msra.mxu0 %v805
    %852 = vmatpush.bf16.msra.mxu0 %v801
    %853 = vmatpush.bf16.msra.mxu0 %v797
    %854 = vmatpush.bf16.msra.mxu0 %v793
    %855 = vmatpush.bf16.msra.mxu0 %v789
    %856 = vmatpush.bf16.msra.mxu0 %v785
    %857 = vmatmul.bf16.gmra.mxu0 %v688
    %v858 = vpop.f32.mrf.mxu0
    %v859 = vadd.f32 0.0, %v858
    %v860 = vpop.f32.mrf.mxu0
    %v861 = vadd.f32 0.0, %v860
    %862 = vdwg.mxu0
    %863 = vmatpush.bf16.msra.mxu0 %v814
    %864 = vmatpush.bf16.msra.mxu0 %v810
    %865 = vmatpush.bf16.msra.mxu0 %v806
    %866 = vmatpush.bf16.msra.mxu0 %v802
    %867 = vmatpush.bf16.msra.mxu0 %v798
    %868 = vmatpush.bf16.msra.mxu0 %v794
    %869 = vmatpush.bf16.msra.mxu0 %v790
    %870 = vmatpush.bf16.msra.mxu0 %v786
    %871 = vmatmul.bf16.gmra.mxu0 %v688
    %v872 = vpop.f32.mrf.mxu0
    %v873 = vadd.f32 0.0, %v872
    %v874 = vpop.f32.mrf.mxu0
    %v875 = vadd.f32 0.0, %v874
    %876 = vdwg.mxu0
    %877 = vmatpush.bf16.msra.mxu0 %v815
    %878 = vmatpush.bf16.msra.mxu0 %v811
    %879 = vmatpush.bf16.msra.mxu0 %v807
    %880 = vmatpush.bf16.msra.mxu0 %v803
    %881 = vmatpush.bf16.msra.mxu0 %v799
    %882 = vmatpush.bf16.msra.mxu0 %v795
    %883 = vmatpush.bf16.msra.mxu0 %v791
    %884 = vmatpush.bf16.msra.mxu0 %v787
    %885 = vmatmul.bf16.gmra.mxu0 %v688
    %v886 = vpop.f32.mrf.mxu0
    %v887 = vadd.f32 0.0, %v886
    %v888 = vpop.f32.mrf.mxu0
    %v889 = vadd.f32 0.0, %v888
    %890 = vdwg.mxu0
    %891 = vmatpush.bf16.msra.mxu0 %v816
    %892 = vmatpush.bf16.msra.mxu0 %v812
    %893 = vmatpush.bf16.msra.mxu0 %v808
    %894 = vmatpush.bf16.msra.mxu0 %v804
    %895 = vmatpush.bf16.msra.mxu0 %v800
    %896 = vmatpush.bf16.msra.mxu0 %v796
    %897 = vmatpush.bf16.msra.mxu0 %v792
    %898 = vmatpush.bf16.msra.mxu0 %v788
    %899 = vmatmul.bf16.gmra.mxu0 %v688
    %v900 = vpop.f32.mrf.mxu0
    %v901 = vadd.f32 0.0, %v900
    %v902 = vpop.f32.mrf.mxu0
    %v903 = vadd.f32 0.0, %v902
    %904 = vdwg.mxu0
    %v905 = vadd.f32 %v680, %v859
    %v906 = vadd.f32 %v681, %v873
    %v907 = vadd.f32 %v682, %v887
    %v908 = vadd.f32 %v683, %v901
    %v909 = vadd.f32 %v684, %v861
    %v910 = vadd.f32 %v685, %v875
    %v911 = vadd.f32 %v686, %v889
    %v912 = vadd.f32 %v687, %v903
    %v913 = vxor.u32 %v905, 2147483648
    %v914 = vxor.u32 %v909, 2147483648
    %v915 = vmul.f32 %v913, 1.442695
    %v916 = vpow.pop %v915
    %v917 = vmul.f32 %v914, 1.442695
    %v918 = vpow.pop %v917
    %v919 = vadd.f32 %v916, 1.0
    %v920 = vadd.f32 %v918, 1.0
    %v921 = vrcp.pop %v919
    %v922 = vmul.f32 %v919, %v921
    %v923 = vsub.f32 1.0, %v922
    %v924 = vmul.f32 %v921, %v923
    %v925 = vadd.f32 %v921, %v924
    %vm926 = vweird.f32 %v919
    %vm927 = vweird.f32 %v921
    %vm928 = vmor %vm926, %vm927
    %v929 = vsel %vm928, %v921, %v925
    %v930 = vand.u32 2147483647, %v919
    %vm931 = vcmp.eq.f32.partialorder %v930, 8.507059e+37
    %v932 = vand.u32 %v919, 2147483648
    %v933 = vor.u32 1.1754944e-38, %v932
    %v934 = vsel %vm931, %v933, %v929
    %v935 = vmul.f32 1.0, %v934
    %v936 = vrcp.pop %v920
    %v937 = vmul.f32 %v920, %v936
    %v938 = vsub.f32 1.0, %v937
    %v939 = vmul.f32 %v936, %v938
    %v940 = vadd.f32 %v936, %v939
    %vm941 = vweird.f32 %v920
    %vm942 = vweird.f32 %v936
    %vm943 = vmor %vm941, %vm942
    %v944 = vsel %vm943, %v936, %v940
    %v945 = vand.u32 2147483647, %v920
    %vm946 = vcmp.eq.f32.partialorder %v945, 8.507059e+37
    %v947 = vand.u32 %v920, 2147483648
    %v948 = vor.u32 1.1754944e-38, %v947
    %v949 = vsel %vm946, %v948, %v944
    %v950 = vmul.f32 1.0, %v949
    %v951 = vxor.u32 %v906, 2147483648
    %v952 = vxor.u32 %v910, 2147483648
    %v953 = vmul.f32 %v951, 1.442695
    %v954 = vpow.pop %v953
    %v955 = vmul.f32 %v952, 1.442695
    %v956 = vpow.pop %v955
    %v957 = vadd.f32 %v954, 1.0
    %v958 = vadd.f32 %v956, 1.0
    %v959 = vrcp.pop %v957
    %v960 = vmul.f32 %v957, %v959
    %v961 = vsub.f32 1.0, %v960
    %v962 = vmul.f32 %v959, %v961
    %v963 = vadd.f32 %v959, %v962
    %vm964 = vweird.f32 %v957
    %vm965 = vweird.f32 %v959
    %vm966 = vmor %vm964, %vm965
    %v967 = vsel %vm966, %v959, %v963
    %v968 = vand.u32 2147483647, %v957
    %vm969 = vcmp.eq.f32.partialorder %v968, 8.507059e+37
    %v970 = vand.u32 %v957, 2147483648
    %v971 = vor.u32 1.1754944e-38, %v970
    %v972 = vsel %vm969, %v971, %v967
    %v973 = vmul.f32 1.0, %v972
    %v974 = vrcp.pop %v958
    %v975 = vmul.f32 %v958, %v974
    %v976 = vsub.f32 1.0, %v975
    %v977 = vmul.f32 %v974, %v976
    %v978 = vadd.f32 %v974, %v977
    %vm979 = vweird.f32 %v958
    %vm980 = vweird.f32 %v974
    %vm981 = vmor %vm979, %vm980
    %v982 = vsel %vm981, %v974, %v978
    %v983 = vand.u32 2147483647, %v958
    %vm984 = vcmp.eq.f32.partialorder %v983, 8.507059e+37
    %v985 = vand.u32 %v958, 2147483648
    %v986 = vor.u32 1.1754944e-38, %v985
    %v987 = vsel %vm984, %v986, %v982
    %v988 = vmul.f32 1.0, %v987
    %v989 = vtanh.pop %v907
    %v990 = vtanh.pop %v911
    %v991 = vxor.u32 %v908, 2147483648
    %v992 = vxor.u32 %v912, 2147483648
    %v993 = vmul.f32 %v991, 1.442695
    %v994 = vpow.pop %v993
    %v995 = vmul.f32 %v992, 1.442695
    %v996 = vpow.pop %v995
    %v997 = vadd.f32 %v994, 1.0
    %v998 = vadd.f32 %v996, 1.0
    %v999 = vrcp.pop %v997
    %v1000 = vmul.f32 %v997, %v999
    %v1001 = vsub.f32 1.0, %v1000
    %v1002 = vmul.f32 %v999, %v1001
    %v1003 = vadd.f32 %v999, %v1002
    %vm1004 = vweird.f32 %v997
    %vm1005 = vweird.f32 %v999
    %vm1006 = vmor %vm1004, %vm1005
    %v1007 = vsel %vm1006, %v999, %v1003
    %v1008 = vand.u32 2147483647, %v997
    %vm1009 = vcmp.eq.f32.partialorder %v1008, 8.507059e+37
    %v1010 = vand.u32 %v997, 2147483648
    %v1011 = vor.u32 1.1754944e-38, %v1010
    %v1012 = vsel %vm1009, %v1011, %v1007
    %v1013 = vmul.f32 1.0, %v1012
    %v1014 = vrcp.pop %v998
    %v1015 = vmul.f32 %v998, %v1014
    %v1016 = vsub.f32 1.0, %v1015
    %v1017 = vmul.f32 %v1014, %v1016
    %v1018 = vadd.f32 %v1014, %v1017
    %vm1019 = vweird.f32 %v998
    %vm1020 = vweird.f32 %v1014
    %vm1021 = vmor %vm1019, %vm1020
    %v1022 = vsel %vm1021, %v1014, %v1018
    %v1023 = vand.u32 2147483647, %v998
    %vm1024 = vcmp.eq.f32.partialorder %v1023, 8.507059e+37
    %v1025 = vand.u32 %v998, 2147483648
    %v1026 = vor.u32 1.1754944e-38, %v1025
    %v1027 = vsel %vm1024, %v1026, %v1022
    %v1028 = vmul.f32 1.0, %v1027
    %v1029 = vmul.f32 %v973, %v678
    %v1030 = vmul.f32 %v988, %v679
    %v1031 = vmul.f32 %v935, %v989
    %v1032 = vmul.f32 %v950, %v990
    %v1033 = vadd.f32 %v1029, %v1031
    %v1034 = vadd.f32 %v1030, %v1032
    %v1035 = vtanh.pop %v1033
    %v1036 = vtanh.pop %v1034
    %v1037 = vmul.f32 %v1013, %v1035
    %v1038 = vmul.f32 %v1028, %v1036
    %v1039 = vpack.c.bf16 %v1037, %v1037
    %v1040 = vpack.c.bf16 %v1038, %v1038
    %1041 = vst [vmem:[#allocation14] sm:$0xf] %v1039
    %1042 = vst [vmem:[#allocation14 + $0x4] sm:$0xf] %v1040
    %s1043 = smul.u32 0, 8
    %p1044 = scmp.lt.s32.totalorder %s1043, 8
    %s1045 = scalar_select %p1044, 1, 0
    %v1046 = vstv %s1045
    %vm1047 = vcmp.eq.s32.totalorder %v1046, 1
    %v1048 = vsel %vm1047, %v1037, %v676
    %v1049 = vsel %vm1047, %v1038, %v677
    %v1050 = vsel %vm1047, %v1033, %v678
    %v1051 = vsel %vm1047, %v1034, %v679
    %s1052 = scalar_lea.vmem [#allocation4], 64
    %v1053 = vld [vmem:[%s1052] sm:$0xff]
    %v1054 = vld [vmem:[%s1052 + $0x8] sm:$0xff]
    %v1055 = vld [vmem:[%s1052 + $0x10] sm:$0xff]
    %v1056 = vld [vmem:[%s1052 + $0x18] sm:$0xff]
    %v1057 = vld [vmem:[%s1052 + $0x20] sm:$0xff]
    %v1058 = vld [vmem:[%s1052 + $0x28] sm:$0xff]
    %v1059 = vld [vmem:[%s1052 + $0x30] sm:$0xff]
    %v1060 = vld [vmem:[%s1052 + $0x38] sm:$0xff]
    %v1061 = vpack.c.bf16 %v1049, %v1048
    %1062 = vmatpush.bf16.msra.mxu0 %v813
    %1063 = vmatpush.bf16.msra.mxu0 %v809
    %1064 = vmatpush.bf16.msra.mxu0 %v805
    %1065 = vmatpush.bf16.msra.mxu0 %v801
    %1066 = vmatpush.bf16.msra.mxu0 %v797
    %1067 = vmatpush.bf16.msra.mxu0 %v793
    %1068 = vmatpush.bf16.msra.mxu0 %v789
    %1069 = vmatpush.bf16.msra.mxu0 %v785
    %1070 = vmatmul.bf16.gmra.mxu0 %v1061
    %v1071 = vpop.f32.mrf.mxu0
    %v1072 = vadd.f32 0.0, %v1071
    %v1073 = vpop.f32.mrf.mxu0
    %v1074 = vadd.f32 0.0, %v1073
    %1075 = vdwg.mxu0
    %1076 = vmatpush.bf16.msra.mxu0 %v814
    %1077 = vmatpush.bf16.msra.mxu0 %v810
    %1078 = vmatpush.bf16.msra.mxu0 %v806
    %1079 = vmatpush.bf16.msra.mxu0 %v802
    %1080 = vmatpush.bf16.msra.mxu0 %v798
    %1081 = vmatpush.bf16.msra.mxu0 %v794
    %1082 = vmatpush.bf16.msra.mxu0 %v790
    %1083 = vmatpush.bf16.msra.mxu0 %v786
    %1084 = vmatmul.bf16.gmra.mxu0 %v1061
    %v1085 = vpop.f32.mrf.mxu0
    %v1086 = vadd.f32 0.0, %v1085
    %v1087 = vpop.f32.mrf.mxu0
    %v1088 = vadd.f32 0.0, %v1087
    %1089 = vdwg.mxu0
    %1090 = vmatpush.bf16.msra.mxu0 %v815
    %1091 = vmatpush.bf16.msra.mxu0 %v811
    %1092 = vmatpush.bf16.msra.mxu0 %v807
    %1093 = vmatpush.bf16.msra.mxu0 %v803
    %1094 = vmatpush.bf16.msra.mxu0 %v799
    %1095 = vmatpush.bf16.msra.mxu0 %v795
    %1096 = vmatpush.bf16.msra.mxu0 %v791
    %1097 = vmatpush.bf16.msra.mxu0 %v787
    %1098 = vmatmul.bf16.gmra.mxu0 %v1061
    %v1099 = vpop.f32.mrf.mxu0
    %v1100 = vadd.f32 0.0, %v1099
    %v1101 = vpop.f32.mrf.mxu0
    %v1102 = vadd.f32 0.0, %v1101
    %1103 = vdwg.mxu0
    %1104 = vmatpush.bf16.msra.mxu0 %v816
    %1105 = vmatpush.bf16.msra.mxu0 %v812
    %1106 = vmatpush.bf16.msra.mxu0 %v808
    %1107 = vmatpush.bf16.msra.mxu0 %v804
    %1108 = vmatpush.bf16.msra.mxu0 %v800
    %1109 = vmatpush.bf16.msra.mxu0 %v796
    %1110 = vmatpush.bf16.msra.mxu0 %v792
    %1111 = vmatpush.bf16.msra.mxu0 %v788
    %1112 = vmatmul.bf16.gmra.mxu0 %v1061
    %v1113 = vpop.f32.mrf.mxu0
    %v1114 = vadd.f32 0.0, %v1113
    %v1115 = vpop.f32.mrf.mxu0
    %v1116 = vadd.f32 0.0, %v1115
    %1117 = vdwg.mxu0
    %v1118 = vadd.f32 %v1053, %v1072
    %v1119 = vadd.f32 %v1054, %v1086
    %v1120 = vadd.f32 %v1055, %v1100
    %v1121 = vadd.f32 %v1056, %v1114
    %v1122 = vadd.f32 %v1057, %v1074
    %v1123 = vadd.f32 %v1058, %v1088
    %v1124 = vadd.f32 %v1059, %v1102
    %v1125 = vadd.f32 %v1060, %v1116
    %v1126 = vxor.u32 %v1118, 2147483648
    %v1127 = vxor.u32 %v1122, 2147483648
    %v1128 = vmul.f32 %v1126, 1.442695
    %v1129 = vpow.pop %v1128
    %v1130 = vmul.f32 %v1127, 1.442695
    %v1131 = vpow.pop %v1130
    %v1132 = vadd.f32 %v1129, 1.0
    %v1133 = vadd.f32 %v1131, 1.0
    %v1134 = vrcp.pop %v1132
    %v1135 = vmul.f32 %v1132, %v1134
    %v1136 = vsub.f32 1.0, %v1135
    %v1137 = vmul.f32 %v1134, %v1136
    %v1138 = vadd.f32 %v1134, %v1137
    %vm1139 = vweird.f32 %v1132
    %vm1140 = vweird.f32 %v1134
    %vm1141 = vmor %vm1139, %vm1140
    %v1142 = vsel %vm1141, %v1134, %v1138
    %v1143 = vand.u32 2147483647, %v1132
    %vm1144 = vcmp.eq.f32.partialorder %v1143, 8.507059e+37
    %v1145 = vand.u32 %v1132, 2147483648
    %v1146 = vor.u32 1.1754944e-38, %v1145
    %v1147 = vsel %vm1144, %v1146, %v1142
    %v1148 = vmul.f32 1.0, %v1147
    %v1149 = vrcp.pop %v1133
    %v1150 = vmul.f32 %v1133, %v1149
    %v1151 = vsub.f32 1.0, %v1150
    %v1152 = vmul.f32 %v1149, %v1151
    %v1153 = vadd.f32 %v1149, %v1152
    %vm1154 = vweird.f32 %v1133
    %vm1155 = vweird.f32 %v1149
    %vm1156 = vmor %vm1154, %vm1155
    %v1157 = vsel %vm1156, %v1149, %v1153
    %v1158 = vand.u32 2147483647, %v1133
    %vm1159 = vcmp.eq.f32.partialorder %v1158, 8.507059e+37
    %v1160 = vand.u32 %v1133, 2147483648
    %v1161 = vor.u32 1.1754944e-38, %v1160
    %v1162 = vsel %vm1159, %v1161, %v1157
    %v1163 = vmul.f32 1.0, %v1162
    %v1164 = vxor.u32 %v1119, 2147483648
    %v1165 = vxor.u32 %v1123, 2147483648
    %v1166 = vmul.f32 %v1164, 1.442695
    %v1167 = vpow.pop %v1166
    %v1168 = vmul.f32 %v1165, 1.442695
    %v1169 = vpow.pop %v1168
    %v1170 = vadd.f32 %v1167, 1.0
    %v1171 = vadd.f32 %v1169, 1.0
    %v1172 = vrcp.pop %v1170
    %v1173 = vmul.f32 %v1170, %v1172
    %v1174 = vsub.f32 1.0, %v1173
    %v1175 = vmul.f32 %v1172, %v1174
    %v1176 = vadd.f32 %v1172, %v1175
    %vm1177 = vweird.f32 %v1170
    %vm1178 = vweird.f32 %v1172
    %vm1179 = vmor %vm1177, %vm1178
    %v1180 = vsel %vm1179, %v1172, %v1176
    %v1181 = vand.u32 2147483647, %v1170
    %vm1182 = vcmp.eq.f32.partialorder %v1181, 8.507059e+37
    %v1183 = vand.u32 %v1170, 2147483648
    %v1184 = vor.u32 1.1754944e-38, %v1183
    %v1185 = vsel %vm1182, %v1184, %v1180
    %v1186 = vmul.f32 1.0, %v1185
    %v1187 = vrcp.pop %v1171
    %v1188 = vmul.f32 %v1171, %v1187
    %v1189 = vsub.f32 1.0, %v1188
    %v1190 = vmul.f32 %v1187, %v1189
    %v1191 = vadd.f32 %v1187, %v1190
    %vm1192 = vweird.f32 %v1171
    %vm1193 = vweird.f32 %v1187
    %vm1194 = vmor %vm1192, %vm1193
    %v1195 = vsel %vm1194, %v1187, %v1191
    %v1196 = vand.u32 2147483647, %v1171
    %vm1197 = vcmp.eq.f32.partialorder %v1196, 8.507059e+37
    %v1198 = vand.u32 %v1171, 2147483648
    %v1199 = vor.u32 1.1754944e-38, %v1198
    %v1200 = vsel %vm1197, %v1199, %v1195
    %v1201 = vmul.f32 1.0, %v1200
    %v1202 = vtanh.pop %v1120
    %v1203 = vtanh.pop %v1124
    %v1204 = vxor.u32 %v1121, 2147483648
    %v1205 = vxor.u32 %v1125, 2147483648
    %v1206 = vmul.f32 %v1204, 1.442695
    %v1207 = vpow.pop %v1206
    %v1208 = vmul.f32 %v1205, 1.442695
    %v1209 = vpow.pop %v1208
    %v1210 = vadd.f32 %v1207, 1.0
    %v1211 = vadd.f32 %v1209, 1.0
    %v1212 = vrcp.pop %v1210
    %v1213 = vmul.f32 %v1210, %v1212
    %v1214 = vsub.f32 1.0, %v1213
    %v1215 = vmul.f32 %v1212, %v1214
    %v1216 = vadd.f32 %v1212, %v1215
    %vm1217 = vweird.f32 %v1210
    %vm1218 = vweird.f32 %v1212
    %vm1219 = vmor %vm1217, %vm1218
    %v1220 = vsel %vm1219, %v1212, %v1216
    %v1221 = vand.u32 2147483647, %v1210
    %vm1222 = vcmp.eq.f32.partialorder %v1221, 8.507059e+37
    %v1223 = vand.u32 %v1210, 2147483648
    %v1224 = vor.u32 1.1754944e-38, %v1223
    %v1225 = vsel %vm1222, %v1224, %v1220
    %v1226 = vmul.f32 1.0, %v1225
    %v1227 = vrcp.pop %v1211
    %v1228 = vmul.f32 %v1211, %v1227
    %v1229 = vsub.f32 1.0, %v1228
    %v1230 = vmul.f32 %v1227, %v1229
    %v1231 = vadd.f32 %v1227, %v1230
    %vm1232 = vweird.f32 %v1211
    %vm1233 = vweird.f32 %v1227
    %vm1234 = vmor %vm1232, %vm1233
    %v1235 = vsel %vm1234, %v1227, %v1231
    %v1236 = vand.u32 2147483647, %v1211
    %vm1237 = vcmp.eq.f32.partialorder %v1236, 8.507059e+37
    %v1238 = vand.u32 %v1211, 2147483648
    %v1239 = vor.u32 1.1754944e-38, %v1238
    %v1240 = vsel %vm1237, %v1239, %v1235
    %v1241 = vmul.f32 1.0, %v1240
    %v1242 = vmul.f32 %v1186, %v1050
    %v1243 = vmul.f32 %v1201, %v1051
    %v1244 = vmul.f32 %v1148, %v1202
    %v1245 = vmul.f32 %v1163, %v1203
    %v1246 = vadd.f32 %v1242, %v1244
    %v1247 = vadd.f32 %v1243, %v1245
    %v1248 = vtanh.pop %v1246
    %v1249 = vtanh.pop %v1247
    %v1250 = vmul.f32 %v1226, %v1248
    %v1251 = vmul.f32 %v1241, %v1249
    %v1252 = vpack.c.bf16 %v1250, %v1250
    %v1253 = vpack.c.bf16 %v1251, %v1251
    %s1254 = scalar_lea.vmem [#allocation14], 8
    %1255 = vst [vmem:[%s1254] sm:$0xf] %v1252
    %1256 = vst [vmem:[%s1254 + $0x4] sm:$0xf] %v1253
    %s1257 = sadd.s32 %s1043, 1
    %p1258 = scmp.lt.s32.totalorder %s1257, 8
    %s1259 = scalar_select %p1258, 1, 0
    %v1260 = vstv %s1259
    %vm1261 = vcmp.eq.s32.totalorder %v1260, 1
    %v1262 = vsel %vm1261, %v1250, %v1048
    %v1263 = vsel %vm1261, %v1251, %v1049
    %v1264 = vsel %vm1261, %v1246, %v1050
    %v1265 = vsel %vm1261, %v1247, %v1051
    %s1266 = scalar_lea.vmem [#allocation4], 128
    %v1267 = vld [vmem:[%s1266] sm:$0xff]
    %v1268 = vld [vmem:[%s1266 + $0x8] sm:$0xff]
    %v1269 = vld [vmem:[%s1266 + $0x10] sm:$0xff]
    %v1270 = vld [vmem:[%s1266 + $0x18] sm:$0xff]
    %v1271 = vld [vmem:[%s1266 + $0x20] sm:$0xff]
    %v1272 = vld [vmem:[%s1266 + $0x28] sm:$0xff]
    %v1273 = vld [vmem:[%s1266 + $0x30] sm:$0xff]
    %v1274 = vld [vmem:[%s1266 + $0x38] sm:$0xff]
    %v1275 = vpack.c.bf16 %v1263, %v1262
    %1276 = vmatpush.bf16.msra.mxu0 %v813
    %1277 = vmatpush.bf16.msra.mxu0 %v809
    %1278 = vmatpush.bf16.msra.mxu0 %v805
    %1279 = vmatpush.bf16.msra.mxu0 %v801
    %1280 = vmatpush.bf16.msra.mxu0 %v797
    %1281 = vmatpush.bf16.msra.mxu0 %v793
    %1282 = vmatpush.bf16.msra.mxu0 %v789
    %1283 = vmatpush.bf16.msra.mxu0 %v785
    %1284 = vmatmul.bf16.gmra.mxu0 %v1275
    %v1285 = vpop.f32.mrf.mxu0
    %v1286 = vadd.f32 0.0, %v1285
    %v1287 = vpop.f32.mrf.mxu0
    %v1288 = vadd.f32 0.0, %v1287
    %1289 = vdwg.mxu0
    %1290 = vmatpush.bf16.msra.mxu0 %v814
    %1291 = vmatpush.bf16.msra.mxu0 %v810
    %1292 = vmatpush.bf16.msra.mxu0 %v806
    %1293 = vmatpush.bf16.msra.mxu0 %v802
    %1294 = vmatpush.bf16.msra.mxu0 %v798
    %1295 = vmatpush.bf16.msra.mxu0 %v794
    %1296 = vmatpush.bf16.msra.mxu0 %v790
    %1297 = vmatpush.bf16.msra.mxu0 %v786
    %1298 = vmatmul.bf16.gmra.mxu0 %v1275
    %v1299 = vpop.f32.mrf.mxu0
    %v1300 = vadd.f32 0.0, %v1299
    %v1301 = vpop.f32.mrf.mxu0
    %v1302 = vadd.f32 0.0, %v1301
    %1303 = vdwg.mxu0
    %1304 = vmatpush.bf16.msra.mxu0 %v815
    %1305 = vmatpush.bf16.msra.mxu0 %v811
    %1306 = vmatpush.bf16.msra.mxu0 %v807
    %1307 = vmatpush.bf16.msra.mxu0 %v803
    %1308 = vmatpush.bf16.msra.mxu0 %v799
    %1309 = vmatpush.bf16.msra.mxu0 %v795
    %1310 = vmatpush.bf16.msra.mxu0 %v791
    %1311 = vmatpush.bf16.msra.mxu0 %v787
    %1312 = vmatmul.bf16.gmra.mxu0 %v1275
    %v1313 = vpop.f32.mrf.mxu0
    %v1314 = vadd.f32 0.0, %v1313
    %v1315 = vpop.f32.mrf.mxu0
    %v1316 = vadd.f32 0.0, %v1315
    %1317 = vdwg.mxu0
    %1318 = vmatpush.bf16.msra.mxu0 %v816
    %1319 = vmatpush.bf16.msra.mxu0 %v812
    %1320 = vmatpush.bf16.msra.mxu0 %v808
    %1321 = vmatpush.bf16.msra.mxu0 %v804
    %1322 = vmatpush.bf16.msra.mxu0 %v800
    %1323 = vmatpush.bf16.msra.mxu0 %v796
    %1324 = vmatpush.bf16.msra.mxu0 %v792
    %1325 = vmatpush.bf16.msra.mxu0 %v788
    %1326 = vmatmul.bf16.gmra.mxu0 %v1275
    %v1327 = vpop.f32.mrf.mxu0
    %v1328 = vadd.f32 0.0, %v1327
    %v1329 = vpop.f32.mrf.mxu0
    %v1330 = vadd.f32 0.0, %v1329
    %1331 = vdwg.mxu0
    %v1332 = vadd.f32 %v1267, %v1286
    %v1333 = vadd.f32 %v1268, %v1300
    %v1334 = vadd.f32 %v1269, %v1314
    %v1335 = vadd.f32 %v1270, %v1328
    %v1336 = vadd.f32 %v1271, %v1288
    %v1337 = vadd.f32 %v1272, %v1302
    %v1338 = vadd.f32 %v1273, %v1316
    %v1339 = vadd.f32 %v1274, %v1330
    %v1340 = vxor.u32 %v1332, 2147483648
    %v1341 = vxor.u32 %v1336, 2147483648
    %v1342 = vmul.f32 %v1340, 1.442695
    %v1343 = vpow.pop %v1342
    %v1344 = vmul.f32 %v1341, 1.442695
    %v1345 = vpow.pop %v1344
    %v1346 = vadd.f32 %v1343, 1.0
    %v1347 = vadd.f32 %v1345, 1.0
    %v1348 = vrcp.pop %v1346
    %v1349 = vmul.f32 %v1346, %v1348
    %v1350 = vsub.f32 1.0, %v1349
    %v1351 = vmul.f32 %v1348, %v1350
    %v1352 = vadd.f32 %v1348, %v1351
    %vm1353 = vweird.f32 %v1346
    %vm1354 = vweird.f32 %v1348
    %vm1355 = vmor %vm1353, %vm1354
    %v1356 = vsel %vm1355, %v1348, %v1352
    %v1357 = vand.u32 2147483647, %v1346
    %vm1358 = vcmp.eq.f32.partialorder %v1357, 8.507059e+37
    %v1359 = vand.u32 %v1346, 2147483648
    %v1360 = vor.u32 1.1754944e-38, %v1359
    %v1361 = vsel %vm1358, %v1360, %v1356
    %v1362 = vmul.f32 1.0, %v1361
    %v1363 = vrcp.pop %v1347
    %v1364 = vmul.f32 %v1347, %v1363
    %v1365 = vsub.f32 1.0, %v1364
    %v1366 = vmul.f32 %v1363, %v1365
    %v1367 = vadd.f32 %v1363, %v1366
    %vm1368 = vweird.f32 %v1347
    %vm1369 = vweird.f32 %v1363
    %vm1370 = vmor %vm1368, %vm1369
    %v1371 = vsel %vm1370, %v1363, %v1367
    %v1372 = vand.u32 2147483647, %v1347
    %vm1373 = vcmp.eq.f32.partialorder %v1372, 8.507059e+37
    %v1374 = vand.u32 %v1347, 2147483648
    %v1375 = vor.u32 1.1754944e-38, %v1374
    %v1376 = vsel %vm1373, %v1375, %v1371
    %v1377 = vmul.f32 1.0, %v1376
    %v1378 = vxor.u32 %v1333, 2147483648
    %v1379 = vxor.u32 %v1337, 2147483648
    %v1380 = vmul.f32 %v1378, 1.442695
    %v1381 = vpow.pop %v1380
    %v1382 = vmul.f32 %v1379, 1.442695
    %v1383 = vpow.pop %v1382
    %v1384 = vadd.f32 %v1381, 1.0
    %v1385 = vadd.f32 %v1383, 1.0
    %v1386 = vrcp.pop %v1384
    %v1387 = vmul.f32 %v1384, %v1386
    %v1388 = vsub.f32 1.0, %v1387
    %v1389 = vmul.f32 %v1386, %v1388
    %v1390 = vadd.f32 %v1386, %v1389
    %vm1391 = vweird.f32 %v1384
    %vm1392 = vweird.f32 %v1386
    %vm1393 = vmor %vm1391, %vm1392
    %v1394 = vsel %vm1393, %v1386, %v1390
    %v1395 = vand.u32 2147483647, %v1384
    %vm1396 = vcmp.eq.f32.partialorder %v1395, 8.507059e+37
    %v1397 = vand.u32 %v1384, 2147483648
    %v1398 = vor.u32 1.1754944e-38, %v1397
    %v1399 = vsel %vm1396, %v1398, %v1394
    %v1400 = vmul.f32 1.0, %v1399
    %v1401 = vrcp.pop %v1385
    %v1402 = vmul.f32 %v1385, %v1401
    %v1403 = vsub.f32 1.0, %v1402
    %v1404 = vmul.f32 %v1401, %v1403
    %v1405 = vadd.f32 %v1401, %v1404
    %vm1406 = vweird.f32 %v1385
    %vm1407 = vweird.f32 %v1401
    %vm1408 = vmor %vm1406, %vm1407
    %v1409 = vsel %vm1408, %v1401, %v1405
    %v1410 = vand.u32 2147483647, %v1385
    %vm1411 = vcmp.eq.f32.partialorder %v1410, 8.507059e+37
    %v1412 = vand.u32 %v1385, 2147483648
    %v1413 = vor.u32 1.1754944e-38, %v1412
    %v1414 = vsel %vm1411, %v1413, %v1409
    %v1415 = vmul.f32 1.0, %v1414
    %v1416 = vtanh.pop %v1334
    %v1417 = vtanh.pop %v1338
    %v1418 = vxor.u32 %v1335, 2147483648
    %v1419 = vxor.u32 %v1339, 2147483648
    %v1420 = vmul.f32 %v1418, 1.442695
    %v1421 = vpow.pop %v1420
    %v1422 = vmul.f32 %v1419, 1.442695
    %v1423 = vpow.pop %v1422
    %v1424 = vadd.f32 %v1421, 1.0
    %v1425 = vadd.f32 %v1423, 1.0
    %v1426 = vrcp.pop %v1424
    %v1427 = vmul.f32 %v1424, %v1426
    %v1428 = vsub.f32 1.0, %v1427
    %v1429 = vmul.f32 %v1426, %v1428
    %v1430 = vadd.f32 %v1426, %v1429
    %vm1431 = vweird.f32 %v1424
    %vm1432 = vweird.f32 %v1426
    %vm1433 = vmor %vm1431, %vm1432
    %v1434 = vsel %vm1433, %v1426, %v1430
    %v1435 = vand.u32 2147483647, %v1424
    %vm1436 = vcmp.eq.f32.partialorder %v1435, 8.507059e+37
    %v1437 = vand.u32 %v1424, 2147483648
    %v1438 = vor.u32 1.1754944e-38, %v1437
    %v1439 = vsel %vm1436, %v1438, %v1434
    %v1440 = vmul.f32 1.0, %v1439
    %v1441 = vrcp.pop %v1425
    %v1442 = vmul.f32 %v1425, %v1441
    %v1443 = vsub.f32 1.0, %v1442
    %v1444 = vmul.f32 %v1441, %v1443
    %v1445 = vadd.f32 %v1441, %v1444
    %vm1446 = vweird.f32 %v1425
    %vm1447 = vweird.f32 %v1441
    %vm1448 = vmor %vm1446, %vm1447
    %v1449 = vsel %vm1448, %v1441, %v1445
    %v1450 = vand.u32 2147483647, %v1425
    %vm1451 = vcmp.eq.f32.partialorder %v1450, 8.507059e+37
    %v1452 = vand.u32 %v1425, 2147483648
    %v1453 = vor.u32 1.1754944e-38, %v1452
    %v1454 = vsel %vm1451, %v1453, %v1449
    %v1455 = vmul.f32 1.0, %v1454
    %v1456 = vmul.f32 %v1400, %v1264
    %v1457 = vmul.f32 %v1415, %v1265
    %v1458 = vmul.f32 %v1362, %v1416
    %v1459 = vmul.f32 %v1377, %v1417
    %v1460 = vadd.f32 %v1456, %v1458
    %v1461 = vadd.f32 %v1457, %v1459
    %v1462 = vtanh.pop %v1460
    %v1463 = vtanh.pop %v1461
    %v1464 = vmul.f32 %v1440, %v1462
    %v1465 = vmul.f32 %v1455, %v1463
    %v1466 = vpack.c.bf16 %v1464, %v1464
    %v1467 = vpack.c.bf16 %v1465, %v1465
    %s1468 = scalar_lea.vmem [#allocation14], 16
    %1469 = vst [vmem:[%s1468] sm:$0xf] %v1466
    %1470 = vst [vmem:[%s1468 + $0x4] sm:$0xf] %v1467
    %s1471 = sadd.s32 %s1043, 2
    %p1472 = scmp.lt.s32.totalorder %s1471, 8
    %s1473 = scalar_select %p1472, 1, 0
    %v1474 = vstv %s1473
    %vm1475 = vcmp.eq.s32.totalorder %v1474, 1
    %v1476 = vsel %vm1475, %v1464, %v1262
    %v1477 = vsel %vm1475, %v1465, %v1263
    %v1478 = vsel %vm1475, %v1460, %v1264
    %v1479 = vsel %vm1475, %v1461, %v1265
    %s1480 = scalar_lea.vmem [#allocation4], 192
    %v1481 = vld [vmem:[%s1480] sm:$0xff]
    %v1482 = vld [vmem:[%s1480 + $0x8] sm:$0xff]
    %v1483 = vld [vmem:[%s1480 + $0x10] sm:$0xff]
    %v1484 = vld [vmem:[%s1480 + $0x18] sm:$0xff]
    %v1485 = vld [vmem:[%s1480 + $0x20] sm:$0xff]
    %v1486 = vld [vmem:[%s1480 + $0x28] sm:$0xff]
    %v1487 = vld [vmem:[%s1480 + $0x30] sm:$0xff]
    %v1488 = vld [vmem:[%s1480 + $0x38] sm:$0xff]
    %v1489 = vpack.c.bf16 %v1477, %v1476
    %1490 = vmatpush.bf16.msra.mxu0 %v813
    %1491 = vmatpush.bf16.msra.mxu0 %v809
    %1492 = vmatpush.bf16.msra.mxu0 %v805
    %1493 = vmatpush.bf16.msra.mxu0 %v801
    %1494 = vmatpush.bf16.msra.mxu0 %v797
    %1495 = vmatpush.bf16.msra.mxu0 %v793
    %1496 = vmatpush.bf16.msra.mxu0 %v789
    %1497 = vmatpush.bf16.msra.mxu0 %v785
    %1498 = vmatmul.bf16.gmra.mxu0 %v1489
    %v1499 = vpop.f32.mrf.mxu0
    %v1500 = vadd.f32 0.0, %v1499
    %v1501 = vpop.f32.mrf.mxu0
    %v1502 = vadd.f32 0.0, %v1501
    %1503 = vdwg.mxu0
    %1504 = vmatpush.bf16.msra.mxu0 %v814
    %1505 = vmatpush.bf16.msra.mxu0 %v810
    %1506 = vmatpush.bf16.msra.mxu0 %v806
    %1507 = vmatpush.bf16.msra.mxu0 %v802
    %1508 = vmatpush.bf16.msra.mxu0 %v798
    %1509 = vmatpush.bf16.msra.mxu0 %v794
    %1510 = vmatpush.bf16.msra.mxu0 %v790
    %1511 = vmatpush.bf16.msra.mxu0 %v786
    %1512 = vmatmul.bf16.gmra.mxu0 %v1489
    %v1513 = vpop.f32.mrf.mxu0
    %v1514 = vadd.f32 0.0, %v1513
    %v1515 = vpop.f32.mrf.mxu0
    %v1516 = vadd.f32 0.0, %v1515
    %1517 = vdwg.mxu0
    %1518 = vmatpush.bf16.msra.mxu0 %v815
    %1519 = vmatpush.bf16.msra.mxu0 %v811
    %1520 = vmatpush.bf16.msra.mxu0 %v807
    %1521 = vmatpush.bf16.msra.mxu0 %v803
    %1522 = vmatpush.bf16.msra.mxu0 %v799
    %1523 = vmatpush.bf16.msra.mxu0 %v795
    %1524 = vmatpush.bf16.msra.mxu0 %v791
    %1525 = vmatpush.bf16.msra.mxu0 %v787
    %1526 = vmatmul.bf16.gmra.mxu0 %v1489
    %v1527 = vpop.f32.mrf.mxu0
    %v1528 = vadd.f32 0.0, %v1527
    %v1529 = vpop.f32.mrf.mxu0
    %v1530 = vadd.f32 0.0, %v1529
    %1531 = vdwg.mxu0
    %1532 = vmatpush.bf16.msra.mxu0 %v816
    %1533 = vmatpush.bf16.msra.mxu0 %v812
    %1534 = vmatpush.bf16.msra.mxu0 %v808
    %1535 = vmatpush.bf16.msra.mxu0 %v804
    %1536 = vmatpush.bf16.msra.mxu0 %v800
    %1537 = vmatpush.bf16.msra.mxu0 %v796
    %1538 = vmatpush.bf16.msra.mxu0 %v792
    %1539 = vmatpush.bf16.msra.mxu0 %v788
    %1540 = vmatmul.bf16.gmra.mxu0 %v1489
    %v1541 = vpop.f32.mrf.mxu0
    %v1542 = vadd.f32 0.0, %v1541
    %v1543 = vpop.f32.mrf.mxu0
    %v1544 = vadd.f32 0.0, %v1543
    %1545 = vdwg.mxu0
    %v1546 = vadd.f32 %v1481, %v1500
    %v1547 = vadd.f32 %v1482, %v1514
    %v1548 = vadd.f32 %v1483, %v1528
    %v1549 = vadd.f32 %v1484, %v1542
    %v1550 = vadd.f32 %v1485, %v1502
    %v1551 = vadd.f32 %v1486, %v1516
    %v1552 = vadd.f32 %v1487, %v1530
    %v1553 = vadd.f32 %v1488, %v1544
    %v1554 = vxor.u32 %v1546, 2147483648
    %v1555 = vxor.u32 %v1550, 2147483648
    %v1556 = vmul.f32 %v1554, 1.442695
    %v1557 = vpow.pop %v1556
    %v1558 = vmul.f32 %v1555, 1.442695
    %v1559 = vpow.pop %v1558
    %v1560 = vadd.f32 %v1557, 1.0
    %v1561 = vadd.f32 %v1559, 1.0
    %v1562 = vrcp.pop %v1560
    %v1563 = vmul.f32 %v1560, %v1562
    %v1564 = vsub.f32 1.0, %v1563
    %v1565 = vmul.f32 %v1562, %v1564
    %v1566 = vadd.f32 %v1562, %v1565
    %vm1567 = vweird.f32 %v1560
    %vm1568 = vweird.f32 %v1562
    %vm1569 = vmor %vm1567, %vm1568
    %v1570 = vsel %vm1569, %v1562, %v1566
    %v1571 = vand.u32 2147483647, %v1560
    %vm1572 = vcmp.eq.f32.partialorder %v1571, 8.507059e+37
    %v1573 = vand.u32 %v1560, 2147483648
    %v1574 = vor.u32 1.1754944e-38, %v1573
    %v1575 = vsel %vm1572, %v1574, %v1570
    %v1576 = vmul.f32 1.0, %v1575
    %v1577 = vrcp.pop %v1561
    %v1578 = vmul.f32 %v1561, %v1577
    %v1579 = vsub.f32 1.0, %v1578
    %v1580 = vmul.f32 %v1577, %v1579
    %v1581 = vadd.f32 %v1577, %v1580
    %vm1582 = vweird.f32 %v1561
    %vm1583 = vweird.f32 %v1577
    %vm1584 = vmor %vm1582, %vm1583
    %v1585 = vsel %vm1584, %v1577, %v1581
    %v1586 = vand.u32 2147483647, %v1561
    %vm1587 = vcmp.eq.f32.partialorder %v1586, 8.507059e+37
    %v1588 = vand.u32 %v1561, 2147483648
    %v1589 = vor.u32 1.1754944e-38, %v1588
    %v1590 = vsel %vm1587, %v1589, %v1585
    %v1591 = vmul.f32 1.0, %v1590
    %v1592 = vxor.u32 %v1547, 2147483648
    %v1593 = vxor.u32 %v1551, 2147483648
    %v1594 = vmul.f32 %v1592, 1.442695
    %v1595 = vpow.pop %v1594
    %v1596 = vmul.f32 %v1593, 1.442695
    %v1597 = vpow.pop %v1596
    %v1598 = vadd.f32 %v1595, 1.0
    %v1599 = vadd.f32 %v1597, 1.0
    %v1600 = vrcp.pop %v1598
    %v1601 = vmul.f32 %v1598, %v1600
    %v1602 = vsub.f32 1.0, %v1601
    %v1603 = vmul.f32 %v1600, %v1602
    %v1604 = vadd.f32 %v1600, %v1603
    %vm1605 = vweird.f32 %v1598
    %vm1606 = vweird.f32 %v1600
    %vm1607 = vmor %vm1605, %vm1606
    %v1608 = vsel %vm1607, %v1600, %v1604
    %v1609 = vand.u32 2147483647, %v1598
    %vm1610 = vcmp.eq.f32.partialorder %v1609, 8.507059e+37
    %v1611 = vand.u32 %v1598, 2147483648
    %v1612 = vor.u32 1.1754944e-38, %v1611
    %v1613 = vsel %vm1610, %v1612, %v1608
    %v1614 = vmul.f32 1.0, %v1613
    %v1615 = vrcp.pop %v1599
    %v1616 = vmul.f32 %v1599, %v1615
    %v1617 = vsub.f32 1.0, %v1616
    %v1618 = vmul.f32 %v1615, %v1617
    %v1619 = vadd.f32 %v1615, %v1618
    %vm1620 = vweird.f32 %v1599
    %vm1621 = vweird.f32 %v1615
    %vm1622 = vmor %vm1620, %vm1621
    %v1623 = vsel %vm1622, %v1615, %v1619
    %v1624 = vand.u32 2147483647, %v1599
    %vm1625 = vcmp.eq.f32.partialorder %v1624, 8.507059e+37
    %v1626 = vand.u32 %v1599, 2147483648
    %v1627 = vor.u32 1.1754944e-38, %v1626
    %v1628 = vsel %vm1625, %v1627, %v1623
    %v1629 = vmul.f32 1.0, %v1628
    %v1630 = vtanh.pop %v1548
    %v1631 = vtanh.pop %v1552
    %v1632 = vxor.u32 %v1549, 2147483648
    %v1633 = vxor.u32 %v1553, 2147483648
    %v1634 = vmul.f32 %v1632, 1.442695
    %v1635 = vpow.pop %v1634
    %v1636 = vmul.f32 %v1633, 1.442695
    %v1637 = vpow.pop %v1636
    %v1638 = vadd.f32 %v1635, 1.0
    %v1639 = vadd.f32 %v1637, 1.0
    %v1640 = vrcp.pop %v1638
    %v1641 = vmul.f32 %v1638, %v1640
    %v1642 = vsub.f32 1.0, %v1641
    %v1643 = vmul.f32 %v1640, %v1642
    %v1644 = vadd.f32 %v1640, %v1643
    %vm1645 = vweird.f32 %v1638
    %vm1646 = vweird.f32 %v1640
    %vm1647 = vmor %vm1645, %vm1646
    %v1648 = vsel %vm1647, %v1640, %v1644
    %v1649 = vand.u32 2147483647, %v1638
    %vm1650 = vcmp.eq.f32.partialorder %v1649, 8.507059e+37
    %v1651 = vand.u32 %v1638, 2147483648
    %v1652 = vor.u32 1.1754944e-38, %v1651
    %v1653 = vsel %vm1650, %v1652, %v1648
    %v1654 = vmul.f32 1.0, %v1653
    %v1655 = vrcp.pop %v1639
    %v1656 = vmul.f32 %v1639, %v1655
    %v1657 = vsub.f32 1.0, %v1656
    %v1658 = vmul.f32 %v1655, %v1657
    %v1659 = vadd.f32 %v1655, %v1658
    %vm1660 = vweird.f32 %v1639
    %vm1661 = vweird.f32 %v1655
    %vm1662 = vmor %vm1660, %vm1661
    %v1663 = vsel %vm1662, %v1655, %v1659
    %v1664 = vand.u32 2147483647, %v1639
    %vm1665 = vcmp.eq.f32.partialorder %v1664, 8.507059e+37
    %v1666 = vand.u32 %v1639, 2147483648
    %v1667 = vor.u32 1.1754944e-38, %v1666
    %v1668 = vsel %vm1665, %v1667, %v1663
    %v1669 = vmul.f32 1.0, %v1668
    %v1670 = vmul.f32 %v1614, %v1478
    %v1671 = vmul.f32 %v1629, %v1479
    %v1672 = vmul.f32 %v1576, %v1630
    %v1673 = vmul.f32 %v1591, %v1631
    %v1674 = vadd.f32 %v1670, %v1672
    %v1675 = vadd.f32 %v1671, %v1673
    %v1676 = vtanh.pop %v1674
    %v1677 = vtanh.pop %v1675
    %v1678 = vmul.f32 %v1654, %v1676
    %v1679 = vmul.f32 %v1669, %v1677
    %v1680 = vpack.c.bf16 %v1678, %v1678
    %v1681 = vpack.c.bf16 %v1679, %v1679
    %s1682 = scalar_lea.vmem [#allocation14], 24
    %1683 = vst [vmem:[%s1682] sm:$0xf] %v1680
    %1684 = vst [vmem:[%s1682 + $0x4] sm:$0xf] %v1681
    %s1685 = sadd.s32 %s1043, 3
    %p1686 = scmp.lt.s32.totalorder %s1685, 8
    %s1687 = scalar_select %p1686, 1, 0
    %v1688 = vstv %s1687
    %vm1689 = vcmp.eq.s32.totalorder %v1688, 1
    %v1690 = vsel %vm1689, %v1678, %v1476
    %v1691 = vsel %vm1689, %v1679, %v1477
    %v1692 = vsel %vm1689, %v1674, %v1478
    %v1693 = vsel %vm1689, %v1675, %v1479
    %s1694 = scalar_lea.vmem [#allocation4], 256
    %v1695 = vld [vmem:[%s1694] sm:$0xff]
    %v1696 = vld [vmem:[%s1694 + $0x8] sm:$0xff]
    %v1697 = vld [vmem:[%s1694 + $0x10] sm:$0xff]
    %v1698 = vld [vmem:[%s1694 + $0x18] sm:$0xff]
    %v1699 = vld [vmem:[%s1694 + $0x20] sm:$0xff]
    %v1700 = vld [vmem:[%s1694 + $0x28] sm:$0xff]
    %v1701 = vld [vmem:[%s1694 + $0x30] sm:$0xff]
    %v1702 = vld [vmem:[%s1694 + $0x38] sm:$0xff]
    %v1703 = vpack.c.bf16 %v1691, %v1690
    %1704 = vmatpush.bf16.msra.mxu0 %v813
    %1705 = vmatpush.bf16.msra.mxu0 %v809
    %1706 = vmatpush.bf16.msra.mxu0 %v805
    %1707 = vmatpush.bf16.msra.mxu0 %v801
    %1708 = vmatpush.bf16.msra.mxu0 %v797
    %1709 = vmatpush.bf16.msra.mxu0 %v793
    %1710 = vmatpush.bf16.msra.mxu0 %v789
    %1711 = vmatpush.bf16.msra.mxu0 %v785
    %1712 = vmatmul.bf16.gmra.mxu0 %v1703
    %v1713 = vpop.f32.mrf.mxu0
    %v1714 = vadd.f32 0.0, %v1713
    %v1715 = vpop.f32.mrf.mxu0
    %v1716 = vadd.f32 0.0, %v1715
    %1717 = vdwg.mxu0
    %1718 = vmatpush.bf16.msra.mxu0 %v814
    %1719 = vmatpush.bf16.msra.mxu0 %v810
    %1720 = vmatpush.bf16.msra.mxu0 %v806
    %1721 = vmatpush.bf16.msra.mxu0 %v802
    %1722 = vmatpush.bf16.msra.mxu0 %v798
    %1723 = vmatpush.bf16.msra.mxu0 %v794
    %1724 = vmatpush.bf16.msra.mxu0 %v790
    %1725 = vmatpush.bf16.msra.mxu0 %v786
    %1726 = vmatmul.bf16.gmra.mxu0 %v1703
    %v1727 = vpop.f32.mrf.mxu0
    %v1728 = vadd.f32 0.0, %v1727
    %v1729 = vpop.f32.mrf.mxu0
    %v1730 = vadd.f32 0.0, %v1729
    %1731 = vdwg.mxu0
    %1732 = vmatpush.bf16.msra.mxu0 %v815
    %1733 = vmatpush.bf16.msra.mxu0 %v811
    %1734 = vmatpush.bf16.msra.mxu0 %v807
    %1735 = vmatpush.bf16.msra.mxu0 %v803
    %1736 = vmatpush.bf16.msra.mxu0 %v799
    %1737 = vmatpush.bf16.msra.mxu0 %v795
    %1738 = vmatpush.bf16.msra.mxu0 %v791
    %1739 = vmatpush.bf16.msra.mxu0 %v787
    %1740 = vmatmul.bf16.gmra.mxu0 %v1703
    %v1741 = vpop.f32.mrf.mxu0
    %v1742 = vadd.f32 0.0, %v1741
    %v1743 = vpop.f32.mrf.mxu0
    %v1744 = vadd.f32 0.0, %v1743
    %1745 = vdwg.mxu0
    %1746 = vmatpush.bf16.msra.mxu0 %v816
    %1747 = vmatpush.bf16.msra.mxu0 %v812
    %1748 = vmatpush.bf16.msra.mxu0 %v808
    %1749 = vmatpush.bf16.msra.mxu0 %v804
    %1750 = vmatpush.bf16.msra.mxu0 %v800
    %1751 = vmatpush.bf16.msra.mxu0 %v796
    %1752 = vmatpush.bf16.msra.mxu0 %v792
    %1753 = vmatpush.bf16.msra.mxu0 %v788
    %1754 = vmatmul.bf16.gmra.mxu0 %v1703
    %v1755 = vpop.f32.mrf.mxu0
    %v1756 = vadd.f32 0.0, %v1755
    %v1757 = vpop.f32.mrf.mxu0
    %v1758 = vadd.f32 0.0, %v1757
    %1759 = vdwg.mxu0
    %v1760 = vadd.f32 %v1695, %v1714
    %v1761 = vadd.f32 %v1696, %v1728
    %v1762 = vadd.f32 %v1697, %v1742
    %v1763 = vadd.f32 %v1698, %v1756
    %v1764 = vadd.f32 %v1699, %v1716
    %v1765 = vadd.f32 %v1700, %v1730
    %v1766 = vadd.f32 %v1701, %v1744
    %v1767 = vadd.f32 %v1702, %v1758
    %v1768 = vxor.u32 %v1760, 2147483648
    %v1769 = vxor.u32 %v1764, 2147483648
    %v1770 = vmul.f32 %v1768, 1.442695
    %v1771 = vpow.pop %v1770
    %v1772 = vmul.f32 %v1769, 1.442695
    %v1773 = vpow.pop %v1772
    %v1774 = vadd.f32 %v1771, 1.0
    %v1775 = vadd.f32 %v1773, 1.0
    %v1776 = vrcp.pop %v1774
    %v1777 = vmul.f32 %v1774, %v1776
    %v1778 = vsub.f32 1.0, %v1777
    %v1779 = vmul.f32 %v1776, %v1778
    %v1780 = vadd.f32 %v1776, %v1779
    %vm1781 = vweird.f32 %v1774
    %vm1782 = vweird.f32 %v1776
    %vm1783 = vmor %vm1781, %vm1782
    %v1784 = vsel %vm1783, %v1776, %v1780
    %v1785 = vand.u32 2147483647, %v1774
    %vm1786 = vcmp.eq.f32.partialorder %v1785, 8.507059e+37
    %v1787 = vand.u32 %v1774, 2147483648
    %v1788 = vor.u32 1.1754944e-38, %v1787
    %v1789 = vsel %vm1786, %v1788, %v1784
    %v1790 = vmul.f32 1.0, %v1789
    %v1791 = vrcp.pop %v1775
    %v1792 = vmul.f32 %v1775, %v1791
    %v1793 = vsub.f32 1.0, %v1792
    %v1794 = vmul.f32 %v1791, %v1793
    %v1795 = vadd.f32 %v1791, %v1794
    %vm1796 = vweird.f32 %v1775
    %vm1797 = vweird.f32 %v1791
    %vm1798 = vmor %vm1796, %vm1797
    %v1799 = vsel %vm1798, %v1791, %v1795
    %v1800 = vand.u32 2147483647, %v1775
    %vm1801 = vcmp.eq.f32.partialorder %v1800, 8.507059e+37
    %v1802 = vand.u32 %v1775, 2147483648
    %v1803 = vor.u32 1.1754944e-38, %v1802
    %v1804 = vsel %vm1801, %v1803, %v1799
    %v1805 = vmul.f32 1.0, %v1804
    %v1806 = vxor.u32 %v1761, 2147483648
    %v1807 = vxor.u32 %v1765, 2147483648
    %v1808 = vmul.f32 %v1806, 1.442695
    %v1809 = vpow.pop %v1808
    %v1810 = vmul.f32 %v1807, 1.442695
    %v1811 = vpow.pop %v1810
    %v1812 = vadd.f32 %v1809, 1.0
    %v1813 = vadd.f32 %v1811, 1.0
    %v1814 = vrcp.pop %v1812
    %v1815 = vmul.f32 %v1812, %v1814
    %v1816 = vsub.f32 1.0, %v1815
    %v1817 = vmul.f32 %v1814, %v1816
    %v1818 = vadd.f32 %v1814, %v1817
    %vm1819 = vweird.f32 %v1812
    %vm1820 = vweird.f32 %v1814
    %vm1821 = vmor %vm1819, %vm1820
    %v1822 = vsel %vm1821, %v1814, %v1818
    %v1823 = vand.u32 2147483647, %v1812
    %vm1824 = vcmp.eq.f32.partialorder %v1823, 8.507059e+37
    %v1825 = vand.u32 %v1812, 2147483648
    %v1826 = vor.u32 1.1754944e-38, %v1825
    %v1827 = vsel %vm1824, %v1826, %v1822
    %v1828 = vmul.f32 1.0, %v1827
    %v1829 = vrcp.pop %v1813
    %v1830 = vmul.f32 %v1813, %v1829
    %v1831 = vsub.f32 1.0, %v1830
    %v1832 = vmul.f32 %v1829, %v1831
    %v1833 = vadd.f32 %v1829, %v1832
    %vm1834 = vweird.f32 %v1813
    %vm1835 = vweird.f32 %v1829
    %vm1836 = vmor %vm1834, %vm1835
    %v1837 = vsel %vm1836, %v1829, %v1833
    %v1838 = vand.u32 2147483647, %v1813
    %vm1839 = vcmp.eq.f32.partialorder %v1838, 8.507059e+37
    %v1840 = vand.u32 %v1813, 2147483648
    %v1841 = vor.u32 1.1754944e-38, %v1840
    %v1842 = vsel %vm1839, %v1841, %v1837
    %v1843 = vmul.f32 1.0, %v1842
    %v1844 = vtanh.pop %v1762
    %v1845 = vtanh.pop %v1766
    %v1846 = vxor.u32 %v1763, 2147483648
    %v1847 = vxor.u32 %v1767, 2147483648
    %v1848 = vmul.f32 %v1846, 1.442695
    %v1849 = vpow.pop %v1848
    %v1850 = vmul.f32 %v1847, 1.442695
    %v1851 = vpow.pop %v1850
    %v1852 = vadd.f32 %v1849, 1.0
    %v1853 = vadd.f32 %v1851, 1.0
    %v1854 = vrcp.pop %v1852
    %v1855 = vmul.f32 %v1852, %v1854
    %v1856 = vsub.f32 1.0, %v1855
    %v1857 = vmul.f32 %v1854, %v1856
    %v1858 = vadd.f32 %v1854, %v1857
    %vm1859 = vweird.f32 %v1852
    %vm1860 = vweird.f32 %v1854
    %vm1861 = vmor %vm1859, %vm1860
    %v1862 = vsel %vm1861, %v1854, %v1858
    %v1863 = vand.u32 2147483647, %v1852
    %vm1864 = vcmp.eq.f32.partialorder %v1863, 8.507059e+37
    %v1865 = vand.u32 %v1852, 2147483648
    %v1866 = vor.u32 1.1754944e-38, %v1865
    %v1867 = vsel %vm1864, %v1866, %v1862
    %v1868 = vmul.f32 1.0, %v1867
    %v1869 = vrcp.pop %v1853
    %v1870 = vmul.f32 %v1853, %v1869
    %v1871 = vsub.f32 1.0, %v1870
    %v1872 = vmul.f32 %v1869, %v1871
    %v1873 = vadd.f32 %v1869, %v1872
    %vm1874 = vweird.f32 %v1853
    %vm1875 = vweird.f32 %v1869
    %vm1876 = vmor %vm1874, %vm1875
    %v1877 = vsel %vm1876, %v1869, %v1873
    %v1878 = vand.u32 2147483647, %v1853
    %vm1879 = vcmp.eq.f32.partialorder %v1878, 8.507059e+37
    %v1880 = vand.u32 %v1853, 2147483648
    %v1881 = vor.u32 1.1754944e-38, %v1880
    %v1882 = vsel %vm1879, %v1881, %v1877
    %v1883 = vmul.f32 1.0, %v1882
    %v1884 = vmul.f32 %v1828, %v1692
    %v1885 = vmul.f32 %v1843, %v1693
    %v1886 = vmul.f32 %v1790, %v1844
    %v1887 = vmul.f32 %v1805, %v1845
    %v1888 = vadd.f32 %v1884, %v1886
    %v1889 = vadd.f32 %v1885, %v1887
    %v1890 = vtanh.pop %v1888
    %v1891 = vtanh.pop %v1889
    %v1892 = vmul.f32 %v1868, %v1890
    %v1893 = vmul.f32 %v1883, %v1891
    %v1894 = vpack.c.bf16 %v1892, %v1892
    %v1895 = vpack.c.bf16 %v1893, %v1893
    %s1896 = scalar_lea.vmem [#allocation14], 32
    %1897 = vst [vmem:[%s1896] sm:$0xf] %v1894
    %1898 = vst [vmem:[%s1896 + $0x4] sm:$0xf] %v1895
    %s1899 = sadd.s32 %s1043, 4
    %p1900 = scmp.lt.s32.totalorder %s1899, 8
    %s1901 = scalar_select %p1900, 1, 0
    %v1902 = vstv %s1901
    %vm1903 = vcmp.eq.s32.totalorder %v1902, 1
    %v1904 = vsel %vm1903, %v1892, %v1690
    %v1905 = vsel %vm1903, %v1893, %v1691
    %v1906 = vsel %vm1903, %v1888, %v1692
    %v1907 = vsel %vm1903, %v1889, %v1693
    %s1908 = scalar_lea.vmem [#allocation4], 320
    %v1909 = vld [vmem:[%s1908] sm:$0xff]
    %v1910 = vld [vmem:[%s1908 + $0x8] sm:$0xff]
    %v1911 = vld [vmem:[%s1908 + $0x10] sm:$0xff]
    %v1912 = vld [vmem:[%s1908 + $0x18] sm:$0xff]
    %v1913 = vld [vmem:[%s1908 + $0x20] sm:$0xff]
    %v1914 = vld [vmem:[%s1908 + $0x28] sm:$0xff]
    %v1915 = vld [vmem:[%s1908 + $0x30] sm:$0xff]
    %v1916 = vld [vmem:[%s1908 + $0x38] sm:$0xff]
    %v1917 = vpack.c.bf16 %v1905, %v1904
    %1918 = vmatpush.bf16.msra.mxu0 %v813
    %1919 = vmatpush.bf16.msra.mxu0 %v809
    %1920 = vmatpush.bf16.msra.mxu0 %v805
    %1921 = vmatpush.bf16.msra.mxu0 %v801
    %1922 = vmatpush.bf16.msra.mxu0 %v797
    %1923 = vmatpush.bf16.msra.mxu0 %v793
    %1924 = vmatpush.bf16.msra.mxu0 %v789
    %1925 = vmatpush.bf16.msra.mxu0 %v785
    %1926 = vmatmul.bf16.gmra.mxu0 %v1917
    %v1927 = vpop.f32.mrf.mxu0
    %v1928 = vadd.f32 0.0, %v1927
    %v1929 = vpop.f32.mrf.mxu0
    %v1930 = vadd.f32 0.0, %v1929
    %1931 = vdwg.mxu0
    %1932 = vmatpush.bf16.msra.mxu0 %v814
    %1933 = vmatpush.bf16.msra.mxu0 %v810
    %1934 = vmatpush.bf16.msra.mxu0 %v806
    %1935 = vmatpush.bf16.msra.mxu0 %v802
    %1936 = vmatpush.bf16.msra.mxu0 %v798
    %1937 = vmatpush.bf16.msra.mxu0 %v794
    %1938 = vmatpush.bf16.msra.mxu0 %v790
    %1939 = vmatpush.bf16.msra.mxu0 %v786
    %1940 = vmatmul.bf16.gmra.mxu0 %v1917
    %v1941 = vpop.f32.mrf.mxu0
    %v1942 = vadd.f32 0.0, %v1941
    %v1943 = vpop.f32.mrf.mxu0
    %v1944 = vadd.f32 0.0, %v1943
    %1945 = vdwg.mxu0
    %1946 = vmatpush.bf16.msra.mxu0 %v815
    %1947 = vmatpush.bf16.msra.mxu0 %v811
    %1948 = vmatpush.bf16.msra.mxu0 %v807
    %1949 = vmatpush.bf16.msra.mxu0 %v803
    %1950 = vmatpush.bf16.msra.mxu0 %v799
    %1951 = vmatpush.bf16.msra.mxu0 %v795
    %1952 = vmatpush.bf16.msra.mxu0 %v791
    %1953 = vmatpush.bf16.msra.mxu0 %v787
    %1954 = vmatmul.bf16.gmra.mxu0 %v1917
    %v1955 = vpop.f32.mrf.mxu0
    %v1956 = vadd.f32 0.0, %v1955
    %v1957 = vpop.f32.mrf.mxu0
    %v1958 = vadd.f32 0.0, %v1957
    %1959 = vdwg.mxu0
    %1960 = vmatpush.bf16.msra.mxu0 %v816
    %1961 = vmatpush.bf16.msra.mxu0 %v812
    %1962 = vmatpush.bf16.msra.mxu0 %v808
    %1963 = vmatpush.bf16.msra.mxu0 %v804
    %1964 = vmatpush.bf16.msra.mxu0 %v800
    %1965 = vmatpush.bf16.msra.mxu0 %v796
    %1966 = vmatpush.bf16.msra.mxu0 %v792
    %1967 = vmatpush.bf16.msra.mxu0 %v788
    %1968 = vmatmul.bf16.gmra.mxu0 %v1917
    %v1969 = vpop.f32.mrf.mxu0
    %v1970 = vadd.f32 0.0, %v1969
    %v1971 = vpop.f32.mrf.mxu0
    %v1972 = vadd.f32 0.0, %v1971
    %1973 = vdwg.mxu0
    %v1974 = vadd.f32 %v1909, %v1928
    %v1975 = vadd.f32 %v1910, %v1942
    %v1976 = vadd.f32 %v1911, %v1956
    %v1977 = vadd.f32 %v1912, %v1970
    %v1978 = vadd.f32 %v1913, %v1930
    %v1979 = vadd.f32 %v1914, %v1944
    %v1980 = vadd.f32 %v1915, %v1958
    %v1981 = vadd.f32 %v1916, %v1972
    %v1982 = vxor.u32 %v1974, 2147483648
    %v1983 = vxor.u32 %v1978, 2147483648
    %v1984 = vmul.f32 %v1982, 1.442695
    %v1985 = vpow.pop %v1984
    %v1986 = vmul.f32 %v1983, 1.442695
    %v1987 = vpow.pop %v1986
    %v1988 = vadd.f32 %v1985, 1.0
    %v1989 = vadd.f32 %v1987, 1.0
    %v1990 = vrcp.pop %v1988
    %v1991 = vmul.f32 %v1988, %v1990
    %v1992 = vsub.f32 1.0, %v1991
    %v1993 = vmul.f32 %v1990, %v1992
    %v1994 = vadd.f32 %v1990, %v1993
    %vm1995 = vweird.f32 %v1988
    %vm1996 = vweird.f32 %v1990
    %vm1997 = vmor %vm1995, %vm1996
    %v1998 = vsel %vm1997, %v1990, %v1994
    %v1999 = vand.u32 2147483647, %v1988
    %vm2000 = vcmp.eq.f32.partialorder %v1999, 8.507059e+37
    %v2001 = vand.u32 %v1988, 2147483648
    %v2002 = vor.u32 1.1754944e-38, %v2001
    %v2003 = vsel %vm2000, %v2002, %v1998
    %v2004 = vmul.f32 1.0, %v2003
    %v2005 = vrcp.pop %v1989
    %v2006 = vmul.f32 %v1989, %v2005
    %v2007 = vsub.f32 1.0, %v2006
    %v2008 = vmul.f32 %v2005, %v2007
    %v2009 = vadd.f32 %v2005, %v2008
    %vm2010 = vweird.f32 %v1989
    %vm2011 = vweird.f32 %v2005
    %vm2012 = vmor %vm2010, %vm2011
    %v2013 = vsel %vm2012, %v2005, %v2009
    %v2014 = vand.u32 2147483647, %v1989
    %vm2015 = vcmp.eq.f32.partialorder %v2014, 8.507059e+37
    %v2016 = vand.u32 %v1989, 2147483648
    %v2017 = vor.u32 1.1754944e-38, %v2016
    %v2018 = vsel %vm2015, %v2017, %v2013
    %v2019 = vmul.f32 1.0, %v2018
    %v2020 = vxor.u32 %v1975, 2147483648
    %v2021 = vxor.u32 %v1979, 2147483648
    %v2022 = vmul.f32 %v2020, 1.442695
    %v2023 = vpow.pop %v2022
    %v2024 = vmul.f32 %v2021, 1.442695
    %v2025 = vpow.pop %v2024
    %v2026 = vadd.f32 %v2023, 1.0
    %v2027 = vadd.f32 %v2025, 1.0
    %v2028 = vrcp.pop %v2026
    %v2029 = vmul.f32 %v2026, %v2028
    %v2030 = vsub.f32 1.0, %v2029
    %v2031 = vmul.f32 %v2028, %v2030
    %v2032 = vadd.f32 %v2028, %v2031
    %vm2033 = vweird.f32 %v2026
    %vm2034 = vweird.f32 %v2028
    %vm2035 = vmor %vm2033, %vm2034
    %v2036 = vsel %vm2035, %v2028, %v2032
    %v2037 = vand.u32 2147483647, %v2026
    %vm2038 = vcmp.eq.f32.partialorder %v2037, 8.507059e+37
    %v2039 = vand.u32 %v2026, 2147483648
    %v2040 = vor.u32 1.1754944e-38, %v2039
    %v2041 = vsel %vm2038, %v2040, %v2036
    %v2042 = vmul.f32 1.0, %v2041
    %v2043 = vrcp.pop %v2027
    %v2044 = vmul.f32 %v2027, %v2043
    %v2045 = vsub.f32 1.0, %v2044
    %v2046 = vmul.f32 %v2043, %v2045
    %v2047 = vadd.f32 %v2043, %v2046
    %vm2048 = vweird.f32 %v2027
    %vm2049 = vweird.f32 %v2043
    %vm2050 = vmor %vm2048, %vm2049
    %v2051 = vsel %vm2050, %v2043, %v2047
    %v2052 = vand.u32 2147483647, %v2027
    %vm2053 = vcmp.eq.f32.partialorder %v2052, 8.507059e+37
    %v2054 = vand.u32 %v2027, 2147483648
    %v2055 = vor.u32 1.1754944e-38, %v2054
    %v2056 = vsel %vm2053, %v2055, %v2051
    %v2057 = vmul.f32 1.0, %v2056
    %v2058 = vtanh.pop %v1976
    %v2059 = vtanh.pop %v1980
    %v2060 = vxor.u32 %v1977, 2147483648
    %v2061 = vxor.u32 %v1981, 2147483648
    %v2062 = vmul.f32 %v2060, 1.442695
    %v2063 = vpow.pop %v2062
    %v2064 = vmul.f32 %v2061, 1.442695
    %v2065 = vpow.pop %v2064
    %v2066 = vadd.f32 %v2063, 1.0
    %v2067 = vadd.f32 %v2065, 1.0
    %v2068 = vrcp.pop %v2066
    %v2069 = vmul.f32 %v2066, %v2068
    %v2070 = vsub.f32 1.0, %v2069
    %v2071 = vmul.f32 %v2068, %v2070
    %v2072 = vadd.f32 %v2068, %v2071
    %vm2073 = vweird.f32 %v2066
    %vm2074 = vweird.f32 %v2068
    %vm2075 = vmor %vm2073, %vm2074
    %v2076 = vsel %vm2075, %v2068, %v2072
    %v2077 = vand.u32 2147483647, %v2066
    %vm2078 = vcmp.eq.f32.partialorder %v2077, 8.507059e+37
    %v2079 = vand.u32 %v2066, 2147483648
    %v2080 = vor.u32 1.1754944e-38, %v2079
    %v2081 = vsel %vm2078, %v2080, %v2076
    %v2082 = vmul.f32 1.0, %v2081
    %v2083 = vrcp.pop %v2067
    %v2084 = vmul.f32 %v2067, %v2083
    %v2085 = vsub.f32 1.0, %v2084
    %v2086 = vmul.f32 %v2083, %v2085
    %v2087 = vadd.f32 %v2083, %v2086
    %vm2088 = vweird.f32 %v2067
    %vm2089 = vweird.f32 %v2083
    %vm2090 = vmor %vm2088, %vm2089
    %v2091 = vsel %vm2090, %v2083, %v2087
    %v2092 = vand.u32 2147483647, %v2067
    %vm2093 = vcmp.eq.f32.partialorder %v2092, 8.507059e+37
    %v2094 = vand.u32 %v2067, 2147483648
    %v2095 = vor.u32 1.1754944e-38, %v2094
    %v2096 = vsel %vm2093, %v2095, %v2091
    %v2097 = vmul.f32 1.0, %v2096
    %v2098 = vmul.f32 %v2042, %v1906
    %v2099 = vmul.f32 %v2057, %v1907
    %v2100 = vmul.f32 %v2004, %v2058
    %v2101 = vmul.f32 %v2019, %v2059
    %v2102 = vadd.f32 %v2098, %v2100
    %v2103 = vadd.f32 %v2099, %v2101
    %v2104 = vtanh.pop %v2102
    %v2105 = vtanh.pop %v2103
    %v2106 = vmul.f32 %v2082, %v2104
    %v2107 = vmul.f32 %v2097, %v2105
    %v2108 = vpack.c.bf16 %v2106, %v2106
    %v2109 = vpack.c.bf16 %v2107, %v2107
    %s2110 = scalar_lea.vmem [#allocation14], 40
    %2111 = vst [vmem:[%s2110] sm:$0xf] %v2108
    %2112 = vst [vmem:[%s2110 + $0x4] sm:$0xf] %v2109
    %s2113 = sadd.s32 %s1043, 5
    %p2114 = scmp.lt.s32.totalorder %s2113, 8
    %s2115 = scalar_select %p2114, 1, 0
    %v2116 = vstv %s2115
    %vm2117 = vcmp.eq.s32.totalorder %v2116, 1
    %v2118 = vsel %vm2117, %v2106, %v1904
    %v2119 = vsel %vm2117, %v2107, %v1905
    %v2120 = vsel %vm2117, %v2102, %v1906
    %v2121 = vsel %vm2117, %v2103, %v1907
    %s2122 = scalar_lea.vmem [#allocation4], 384
    %v2123 = vld [vmem:[%s2122] sm:$0xff]
    %v2124 = vld [vmem:[%s2122 + $0x8] sm:$0xff]
    %v2125 = vld [vmem:[%s2122 + $0x10] sm:$0xff]
    %v2126 = vld [vmem:[%s2122 + $0x18] sm:$0xff]
    %v2127 = vld [vmem:[%s2122 + $0x20] sm:$0xff]
    %v2128 = vld [vmem:[%s2122 + $0x28] sm:$0xff]
    %v2129 = vld [vmem:[%s2122 + $0x30] sm:$0xff]
    %v2130 = vld [vmem:[%s2122 + $0x38] sm:$0xff]
    %v2131 = vpack.c.bf16 %v2119, %v2118
    %2132 = vmatpush.bf16.msra.mxu0 %v813
    %2133 = vmatpush.bf16.msra.mxu0 %v809
    %2134 = vmatpush.bf16.msra.mxu0 %v805
    %2135 = vmatpush.bf16.msra.mxu0 %v801
    %2136 = vmatpush.bf16.msra.mxu0 %v797
    %2137 = vmatpush.bf16.msra.mxu0 %v793
    %2138 = vmatpush.bf16.msra.mxu0 %v789
    %2139 = vmatpush.bf16.msra.mxu0 %v785
    %2140 = vmatmul.bf16.gmra.mxu0 %v2131
    %v2141 = vpop.f32.mrf.mxu0
    %v2142 = vadd.f32 0.0, %v2141
    %v2143 = vpop.f32.mrf.mxu0
    %v2144 = vadd.f32 0.0, %v2143
    %2145 = vdwg.mxu0
    %2146 = vmatpush.bf16.msra.mxu0 %v814
    %2147 = vmatpush.bf16.msra.mxu0 %v810
    %2148 = vmatpush.bf16.msra.mxu0 %v806
    %2149 = vmatpush.bf16.msra.mxu0 %v802
    %2150 = vmatpush.bf16.msra.mxu0 %v798
    %2151 = vmatpush.bf16.msra.mxu0 %v794
    %2152 = vmatpush.bf16.msra.mxu0 %v790
    %2153 = vmatpush.bf16.msra.mxu0 %v786
    %2154 = vmatmul.bf16.gmra.mxu0 %v2131
    %v2155 = vpop.f32.mrf.mxu0
    %v2156 = vadd.f32 0.0, %v2155
    %v2157 = vpop.f32.mrf.mxu0
    %v2158 = vadd.f32 0.0, %v2157
    %2159 = vdwg.mxu0
    %2160 = vmatpush.bf16.msra.mxu0 %v815
    %2161 = vmatpush.bf16.msra.mxu0 %v811
    %2162 = vmatpush.bf16.msra.mxu0 %v807
    %2163 = vmatpush.bf16.msra.mxu0 %v803
    %2164 = vmatpush.bf16.msra.mxu0 %v799
    %2165 = vmatpush.bf16.msra.mxu0 %v795
    %2166 = vmatpush.bf16.msra.mxu0 %v791
    %2167 = vmatpush.bf16.msra.mxu0 %v787
    %2168 = vmatmul.bf16.gmra.mxu0 %v2131
    %v2169 = vpop.f32.mrf.mxu0
    %v2170 = vadd.f32 0.0, %v2169
    %v2171 = vpop.f32.mrf.mxu0
    %v2172 = vadd.f32 0.0, %v2171
    %2173 = vdwg.mxu0
    %2174 = vmatpush.bf16.msra.mxu0 %v816
    %2175 = vmatpush.bf16.msra.mxu0 %v812
    %2176 = vmatpush.bf16.msra.mxu0 %v808
    %2177 = vmatpush.bf16.msra.mxu0 %v804
    %2178 = vmatpush.bf16.msra.mxu0 %v800
    %2179 = vmatpush.bf16.msra.mxu0 %v796
    %2180 = vmatpush.bf16.msra.mxu0 %v792
    %2181 = vmatpush.bf16.msra.mxu0 %v788
    %2182 = vmatmul.bf16.gmra.mxu0 %v2131
    %v2183 = vpop.f32.mrf.mxu0
    %v2184 = vadd.f32 0.0, %v2183
    %v2185 = vpop.f32.mrf.mxu0
    %v2186 = vadd.f32 0.0, %v2185
    %2187 = vdwg.mxu0
    %v2188 = vadd.f32 %v2123, %v2142
    %v2189 = vadd.f32 %v2124, %v2156
    %v2190 = vadd.f32 %v2125, %v2170
    %v2191 = vadd.f32 %v2126, %v2184
    %v2192 = vadd.f32 %v2127, %v2144
    %v2193 = vadd.f32 %v2128, %v2158
    %v2194 = vadd.f32 %v2129, %v2172
    %v2195 = vadd.f32 %v2130, %v2186
    %v2196 = vxor.u32 %v2188, 2147483648
    %v2197 = vxor.u32 %v2192, 2147483648
    %v2198 = vmul.f32 %v2196, 1.442695
    %v2199 = vpow.pop %v2198
    %v2200 = vmul.f32 %v2197, 1.442695
    %v2201 = vpow.pop %v2200
    %v2202 = vadd.f32 %v2199, 1.0
    %v2203 = vadd.f32 %v2201, 1.0
    %v2204 = vrcp.pop %v2202
    %v2205 = vmul.f32 %v2202, %v2204
    %v2206 = vsub.f32 1.0, %v2205
    %v2207 = vmul.f32 %v2204, %v2206
    %v2208 = vadd.f32 %v2204, %v2207
    %vm2209 = vweird.f32 %v2202
    %vm2210 = vweird.f32 %v2204
    %vm2211 = vmor %vm2209, %vm2210
    %v2212 = vsel %vm2211, %v2204, %v2208
    %v2213 = vand.u32 2147483647, %v2202
    %vm2214 = vcmp.eq.f32.partialorder %v2213, 8.507059e+37
    %v2215 = vand.u32 %v2202, 2147483648
    %v2216 = vor.u32 1.1754944e-38, %v2215
    %v2217 = vsel %vm2214, %v2216, %v2212
    %v2218 = vmul.f32 1.0, %v2217
    %v2219 = vrcp.pop %v2203
    %v2220 = vmul.f32 %v2203, %v2219
    %v2221 = vsub.f32 1.0, %v2220
    %v2222 = vmul.f32 %v2219, %v2221
    %v2223 = vadd.f32 %v2219, %v2222
    %vm2224 = vweird.f32 %v2203
    %vm2225 = vweird.f32 %v2219
    %vm2226 = vmor %vm2224, %vm2225
    %v2227 = vsel %vm2226, %v2219, %v2223
    %v2228 = vand.u32 2147483647, %v2203
    %vm2229 = vcmp.eq.f32.partialorder %v2228, 8.507059e+37
    %v2230 = vand.u32 %v2203, 2147483648
    %v2231 = vor.u32 1.1754944e-38, %v2230
    %v2232 = vsel %vm2229, %v2231, %v2227
    %v2233 = vmul.f32 1.0, %v2232
    %v2234 = vxor.u32 %v2189, 2147483648
    %v2235 = vxor.u32 %v2193, 2147483648
    %v2236 = vmul.f32 %v2234, 1.442695
    %v2237 = vpow.pop %v2236
    %v2238 = vmul.f32 %v2235, 1.442695
    %v2239 = vpow.pop %v2238
    %v2240 = vadd.f32 %v2237, 1.0
    %v2241 = vadd.f32 %v2239, 1.0
    %v2242 = vrcp.pop %v2240
    %v2243 = vmul.f32 %v2240, %v2242
    %v2244 = vsub.f32 1.0, %v2243
    %v2245 = vmul.f32 %v2242, %v2244
    %v2246 = vadd.f32 %v2242, %v2245
    %vm2247 = vweird.f32 %v2240
    %vm2248 = vweird.f32 %v2242
    %vm2249 = vmor %vm2247, %vm2248
    %v2250 = vsel %vm2249, %v2242, %v2246
    %v2251 = vand.u32 2147483647, %v2240
    %vm2252 = vcmp.eq.f32.partialorder %v2251, 8.507059e+37
    %v2253 = vand.u32 %v2240, 2147483648
    %v2254 = vor.u32 1.1754944e-38, %v2253
    %v2255 = vsel %vm2252, %v2254, %v2250
    %v2256 = vmul.f32 1.0, %v2255
    %v2257 = vrcp.pop %v2241
    %v2258 = vmul.f32 %v2241, %v2257
    %v2259 = vsub.f32 1.0, %v2258
    %v2260 = vmul.f32 %v2257, %v2259
    %v2261 = vadd.f32 %v2257, %v2260
    %vm2262 = vweird.f32 %v2241
    %vm2263 = vweird.f32 %v2257
    %vm2264 = vmor %vm2262, %vm2263
    %v2265 = vsel %vm2264, %v2257, %v2261
    %v2266 = vand.u32 2147483647, %v2241
    %vm2267 = vcmp.eq.f32.partialorder %v2266, 8.507059e+37
    %v2268 = vand.u32 %v2241, 2147483648
    %v2269 = vor.u32 1.1754944e-38, %v2268
    %v2270 = vsel %vm2267, %v2269, %v2265
    %v2271 = vmul.f32 1.0, %v2270
    %v2272 = vtanh.pop %v2190
    %v2273 = vtanh.pop %v2194
    %v2274 = vxor.u32 %v2191, 2147483648
    %v2275 = vxor.u32 %v2195, 2147483648
    %v2276 = vmul.f32 %v2274, 1.442695
    %v2277 = vpow.pop %v2276
    %v2278 = vmul.f32 %v2275, 1.442695
    %v2279 = vpow.pop %v2278
    %v2280 = vadd.f32 %v2277, 1.0
    %v2281 = vadd.f32 %v2279, 1.0
    %v2282 = vrcp.pop %v2280
    %v2283 = vmul.f32 %v2280, %v2282
    %v2284 = vsub.f32 1.0, %v2283
    %v2285 = vmul.f32 %v2282, %v2284
    %v2286 = vadd.f32 %v2282, %v2285
    %vm2287 = vweird.f32 %v2280
    %vm2288 = vweird.f32 %v2282
    %vm2289 = vmor %vm2287, %vm2288
    %v2290 = vsel %vm2289, %v2282, %v2286
    %v2291 = vand.u32 2147483647, %v2280
    %vm2292 = vcmp.eq.f32.partialorder %v2291, 8.507059e+37
    %v2293 = vand.u32 %v2280, 2147483648
    %v2294 = vor.u32 1.1754944e-38, %v2293
    %v2295 = vsel %vm2292, %v2294, %v2290
    %v2296 = vmul.f32 1.0, %v2295
    %v2297 = vrcp.pop %v2281
    %v2298 = vmul.f32 %v2281, %v2297
    %v2299 = vsub.f32 1.0, %v2298
    %v2300 = vmul.f32 %v2297, %v2299
    %v2301 = vadd.f32 %v2297, %v2300
    %vm2302 = vweird.f32 %v2281
    %vm2303 = vweird.f32 %v2297
    %vm2304 = vmor %vm2302, %vm2303
    %v2305 = vsel %vm2304, %v2297, %v2301
    %v2306 = vand.u32 2147483647, %v2281
    %vm2307 = vcmp.eq.f32.partialorder %v2306, 8.507059e+37
    %v2308 = vand.u32 %v2281, 2147483648
    %v2309 = vor.u32 1.1754944e-38, %v2308
    %v2310 = vsel %vm2307, %v2309, %v2305
    %v2311 = vmul.f32 1.0, %v2310
    %v2312 = vmul.f32 %v2256, %v2120
    %v2313 = vmul.f32 %v2271, %v2121
    %v2314 = vmul.f32 %v2218, %v2272
    %v2315 = vmul.f32 %v2233, %v2273
    %v2316 = vadd.f32 %v2312, %v2314
    %v2317 = vadd.f32 %v2313, %v2315
    %v2318 = vtanh.pop %v2316
    %v2319 = vtanh.pop %v2317
    %v2320 = vmul.f32 %v2296, %v2318
    %v2321 = vmul.f32 %v2311, %v2319
    %v2322 = vpack.c.bf16 %v2320, %v2320
    %v2323 = vpack.c.bf16 %v2321, %v2321
    %s2324 = scalar_lea.vmem [#allocation14], 48
    %2325 = vst [vmem:[%s2324] sm:$0xf] %v2322
    %2326 = vst [vmem:[%s2324 + $0x4] sm:$0xf] %v2323
    %s2327 = sadd.s32 %s1043, 6
    %p2328 = scmp.lt.s32.totalorder %s2327, 8
    %s2329 = scalar_select %p2328, 1, 0
    %v2330 = vstv %s2329
    %vm2331 = vcmp.eq.s32.totalorder %v2330, 1
    %v2332 = vsel %vm2331, %v2320, %v2118
    %v2333 = vsel %vm2331, %v2321, %v2119
    %v2334 = vsel %vm2331, %v2316, %v2120
    %v2335 = vsel %vm2331, %v2317, %v2121
    %s2336 = scalar_lea.vmem [#allocation4], 448
    %v2337 = vld [vmem:[%s2336] sm:$0xff]
    %v2338 = vld [vmem:[%s2336 + $0x8] sm:$0xff]
    %v2339 = vld [vmem:[%s2336 + $0x10] sm:$0xff]
    %v2340 = vld [vmem:[%s2336 + $0x18] sm:$0xff]
    %v2341 = vld [vmem:[%s2336 + $0x20] sm:$0xff]
    %v2342 = vld [vmem:[%s2336 + $0x28] sm:$0xff]
    %v2343 = vld [vmem:[%s2336 + $0x30] sm:$0xff]
    %v2344 = vld [vmem:[%s2336 + $0x38] sm:$0xff]
    %v2345 = vpack.c.bf16 %v2333, %v2332
    %2346 = vmatpush.bf16.msra.mxu0 %v813
    %2347 = vmatpush.bf16.msra.mxu0 %v809
    %2348 = vmatpush.bf16.msra.mxu0 %v805
    %2349 = vmatpush.bf16.msra.mxu0 %v801
    %2350 = vmatpush.bf16.msra.mxu0 %v797
    %2351 = vmatpush.bf16.msra.mxu0 %v793
    %2352 = vmatpush.bf16.msra.mxu0 %v789
    %2353 = vmatpush.bf16.msra.mxu0 %v785
    %2354 = vmatmul.bf16.gmra.mxu0 %v2345
    %v2355 = vpop.f32.mrf.mxu0
    %v2356 = vadd.f32 0.0, %v2355
    %v2357 = vpop.f32.mrf.mxu0
    %v2358 = vadd.f32 0.0, %v2357
    %2359 = vdwg.mxu0
    %2360 = vmatpush.bf16.msra.mxu0 %v814
    %2361 = vmatpush.bf16.msra.mxu0 %v810
    %2362 = vmatpush.bf16.msra.mxu0 %v806
    %2363 = vmatpush.bf16.msra.mxu0 %v802
    %2364 = vmatpush.bf16.msra.mxu0 %v798
    %2365 = vmatpush.bf16.msra.mxu0 %v794
    %2366 = vmatpush.bf16.msra.mxu0 %v790
    %2367 = vmatpush.bf16.msra.mxu0 %v786
    %2368 = vmatmul.bf16.gmra.mxu0 %v2345
    %v2369 = vpop.f32.mrf.mxu0
    %v2370 = vadd.f32 0.0, %v2369
    %v2371 = vpop.f32.mrf.mxu0
    %v2372 = vadd.f32 0.0, %v2371
    %2373 = vdwg.mxu0
    %2374 = vmatpush.bf16.msra.mxu0 %v815
    %2375 = vmatpush.bf16.msra.mxu0 %v811
    %2376 = vmatpush.bf16.msra.mxu0 %v807
    %2377 = vmatpush.bf16.msra.mxu0 %v803
    %2378 = vmatpush.bf16.msra.mxu0 %v799
    %2379 = vmatpush.bf16.msra.mxu0 %v795
    %2380 = vmatpush.bf16.msra.mxu0 %v791
    %2381 = vmatpush.bf16.msra.mxu0 %v787
    %2382 = vmatmul.bf16.gmra.mxu0 %v2345
    %v2383 = vpop.f32.mrf.mxu0
    %v2384 = vadd.f32 0.0, %v2383
    %v2385 = vpop.f32.mrf.mxu0
    %v2386 = vadd.f32 0.0, %v2385
    %2387 = vdwg.mxu0
    %2388 = vmatpush.bf16.msra.mxu0 %v816
    %2389 = vmatpush.bf16.msra.mxu0 %v812
    %2390 = vmatpush.bf16.msra.mxu0 %v808
    %2391 = vmatpush.bf16.msra.mxu0 %v804
    %2392 = vmatpush.bf16.msra.mxu0 %v800
    %2393 = vmatpush.bf16.msra.mxu0 %v796
    %2394 = vmatpush.bf16.msra.mxu0 %v792
    %2395 = vmatpush.bf16.msra.mxu0 %v788
    %2396 = vmatmul.bf16.gmra.mxu0 %v2345
    %v2397 = vpop.f32.mrf.mxu0
    %v2398 = vadd.f32 0.0, %v2397
    %v2399 = vpop.f32.mrf.mxu0
    %v2400 = vadd.f32 0.0, %v2399
    %2401 = vdwg.mxu0
    %v2402 = vadd.f32 %v2337, %v2356
    %v2403 = vadd.f32 %v2338, %v2370
    %v2404 = vadd.f32 %v2339, %v2384
    %v2405 = vadd.f32 %v2340, %v2398
    %v2406 = vadd.f32 %v2341, %v2358
    %v2407 = vadd.f32 %v2342, %v2372
    %v2408 = vadd.f32 %v2343, %v2386
    %v2409 = vadd.f32 %v2344, %v2400
    %v2410 = vxor.u32 %v2402, 2147483648
    %v2411 = vxor.u32 %v2406, 2147483648
    %v2412 = vmul.f32 %v2410, 1.442695
    %v2413 = vpow.pop %v2412
    %v2414 = vmul.f32 %v2411, 1.442695
    %v2415 = vpow.pop %v2414
    %v2416 = vadd.f32 %v2413, 1.0
    %v2417 = vadd.f32 %v2415, 1.0
    %v2418 = vrcp.pop %v2416
    %v2419 = vmul.f32 %v2416, %v2418
    %v2420 = vsub.f32 1.0, %v2419
    %v2421 = vmul.f32 %v2418, %v2420
    %v2422 = vadd.f32 %v2418, %v2421
    %vm2423 = vweird.f32 %v2416
    %vm2424 = vweird.f32 %v2418
    %vm2425 = vmor %vm2423, %vm2424
    %v2426 = vsel %vm2425, %v2418, %v2422
    %v2427 = vand.u32 2147483647, %v2416
    %vm2428 = vcmp.eq.f32.partialorder %v2427, 8.507059e+37
    %v2429 = vand.u32 %v2416, 2147483648
    %v2430 = vor.u32 1.1754944e-38, %v2429
    %v2431 = vsel %vm2428, %v2430, %v2426
    %v2432 = vmul.f32 1.0, %v2431
    %v2433 = vrcp.pop %v2417
    %v2434 = vmul.f32 %v2417, %v2433
    %v2435 = vsub.f32 1.0, %v2434
    %v2436 = vmul.f32 %v2433, %v2435
    %v2437 = vadd.f32 %v2433, %v2436
    %vm2438 = vweird.f32 %v2417
    %vm2439 = vweird.f32 %v2433
    %vm2440 = vmor %vm2438, %vm2439
    %v2441 = vsel %vm2440, %v2433, %v2437
    %v2442 = vand.u32 2147483647, %v2417
    %vm2443 = vcmp.eq.f32.partialorder %v2442, 8.507059e+37
    %v2444 = vand.u32 %v2417, 2147483648
    %v2445 = vor.u32 1.1754944e-38, %v2444
    %v2446 = vsel %vm2443, %v2445, %v2441
    %v2447 = vmul.f32 1.0, %v2446
    %v2448 = vxor.u32 %v2403, 2147483648
    %v2449 = vxor.u32 %v2407, 2147483648
    %v2450 = vmul.f32 %v2448, 1.442695
    %v2451 = vpow.pop %v2450
    %v2452 = vmul.f32 %v2449, 1.442695
    %v2453 = vpow.pop %v2452
    %v2454 = vadd.f32 %v2451, 1.0
    %v2455 = vadd.f32 %v2453, 1.0
    %v2456 = vrcp.pop %v2454
    %v2457 = vmul.f32 %v2454, %v2456
    %v2458 = vsub.f32 1.0, %v2457
    %v2459 = vmul.f32 %v2456, %v2458
    %v2460 = vadd.f32 %v2456, %v2459
    %vm2461 = vweird.f32 %v2454
    %vm2462 = vweird.f32 %v2456
    %vm2463 = vmor %vm2461, %vm2462
    %v2464 = vsel %vm2463, %v2456, %v2460
    %v2465 = vand.u32 2147483647, %v2454
    %vm2466 = vcmp.eq.f32.partialorder %v2465, 8.507059e+37
    %v2467 = vand.u32 %v2454, 2147483648
    %v2468 = vor.u32 1.1754944e-38, %v2467
    %v2469 = vsel %vm2466, %v2468, %v2464
    %v2470 = vmul.f32 1.0, %v2469
    %v2471 = vrcp.pop %v2455
    %v2472 = vmul.f32 %v2455, %v2471
    %v2473 = vsub.f32 1.0, %v2472
    %v2474 = vmul.f32 %v2471, %v2473
    %v2475 = vadd.f32 %v2471, %v2474
    %vm2476 = vweird.f32 %v2455
    %vm2477 = vweird.f32 %v2471
    %vm2478 = vmor %vm2476, %vm2477
    %v2479 = vsel %vm2478, %v2471, %v2475
    %v2480 = vand.u32 2147483647, %v2455
    %vm2481 = vcmp.eq.f32.partialorder %v2480, 8.507059e+37
    %v2482 = vand.u32 %v2455, 2147483648
    %v2483 = vor.u32 1.1754944e-38, %v2482
    %v2484 = vsel %vm2481, %v2483, %v2479
    %v2485 = vmul.f32 1.0, %v2484
    %v2486 = vtanh.pop %v2404
    %v2487 = vtanh.pop %v2408
    %v2488 = vxor.u32 %v2405, 2147483648
    %v2489 = vxor.u32 %v2409, 2147483648
    %v2490 = vmul.f32 %v2488, 1.442695
    %v2491 = vpow.pop %v2490
    %v2492 = vmul.f32 %v2489, 1.442695
    %v2493 = vpow.pop %v2492
    %v2494 = vadd.f32 %v2491, 1.0
    %v2495 = vadd.f32 %v2493, 1.0
    %v2496 = vrcp.pop %v2494
    %v2497 = vmul.f32 %v2494, %v2496
    %v2498 = vsub.f32 1.0, %v2497
    %v2499 = vmul.f32 %v2496, %v2498
    %v2500 = vadd.f32 %v2496, %v2499
    %vm2501 = vweird.f32 %v2494
    %vm2502 = vweird.f32 %v2496
    %vm2503 = vmor %vm2501, %vm2502
    %v2504 = vsel %vm2503, %v2496, %v2500
    %v2505 = vand.u32 2147483647, %v2494
    %vm2506 = vcmp.eq.f32.partialorder %v2505, 8.507059e+37
    %v2507 = vand.u32 %v2494, 2147483648
    %v2508 = vor.u32 1.1754944e-38, %v2507
    %v2509 = vsel %vm2506, %v2508, %v2504
    %v2510 = vmul.f32 1.0, %v2509
    %v2511 = vrcp.pop %v2495
    %v2512 = vmul.f32 %v2495, %v2511
    %v2513 = vsub.f32 1.0, %v2512
    %v2514 = vmul.f32 %v2511, %v2513
    %v2515 = vadd.f32 %v2511, %v2514
    %vm2516 = vweird.f32 %v2495
    %vm2517 = vweird.f32 %v2511
    %vm2518 = vmor %vm2516, %vm2517
    %v2519 = vsel %vm2518, %v2511, %v2515
    %v2520 = vand.u32 2147483647, %v2495
    %vm2521 = vcmp.eq.f32.partialorder %v2520, 8.507059e+37
    %v2522 = vand.u32 %v2495, 2147483648
    %v2523 = vor.u32 1.1754944e-38, %v2522
    %v2524 = vsel %vm2521, %v2523, %v2519
    %v2525 = vmul.f32 1.0, %v2524
    %v2526 = vmul.f32 %v2470, %v2334
    %v2527 = vmul.f32 %v2485, %v2335
    %v2528 = vmul.f32 %v2432, %v2486
    %v2529 = vmul.f32 %v2447, %v2487
    %v2530 = vadd.f32 %v2526, %v2528
    %v2531 = vadd.f32 %v2527, %v2529
    %v2532 = vtanh.pop %v2530
    %v2533 = vtanh.pop %v2531
    %v2534 = vmul.f32 %v2510, %v2532
    %v2535 = vmul.f32 %v2525, %v2533
    %v2536 = vpack.c.bf16 %v2534, %v2534
    %v2537 = vpack.c.bf16 %v2535, %v2535
    %s2538 = scalar_lea.vmem [#allocation14], 56
    %2539 = vst [vmem:[%s2538] sm:$0xf] %v2536
    %2540 = vst [vmem:[%s2538 + $0x4] sm:$0xf] %v2537
    %s2541 = sadd.s32 %s1043, 7
    %p2542 = scmp.lt.s32.totalorder %s2541, 8
    %s2543 = scalar_select %p2542, 1, 0
    %v2544 = vstv %s2543
    %vm2545 = vcmp.eq.s32.totalorder %v2544, 1
    %v2546 = vsel %vm2545, %v2534, %v2332
    %v2547 = vsel %vm2545, %v2535, %v2333
    %v2548 = vsel %vm2545, %v2530, %v2334
    %v2549 = vsel %vm2545, %v2531, %v2335
    %2550 = vst [vmem:[#allocation2] sm:$0xff] %v2546
    %2551 = vst [vmem:[#allocation2 + $0x8] sm:$0xff] %v2547
    %2552 = vst [vmem:[#allocation3] sm:$0xff] %v2548
    %2553 = vst [vmem:[#allocation3 + $0x8] sm:$0xff] %v2549
    // Predicated region
    $region50: #{tpu_custom_call.1} parent=1 // pred_check
      %p2554 = pneg %p106
    $region51: #{tpu_custom_call.1} parent=1 // pred_check_branch
      %2556 = sbr.rel (%p2554) target = $region53
    $region52: #{tpu_custom_call.1} parent=1 // pred_region
      %2557 = vst [vmem:[#allocation15] sm:$0xff] %v2546
      %2558 = vst [vmem:[#allocation15 + $0x8] sm:$0xff] %v2547
      %2559 = vst [vmem:[#allocation17] sm:$0xff] %v2548
      %2560 = vst [vmem:[#allocation17 + $0x8] sm:$0xff] %v2549
    $region53: #{tpu_custom_call.1} parent=1 // pred_fallthru
      _
    // Predicated region
    $region54: #{tpu_custom_call.1} parent=1 // pred_check
      _
    $region55: #{tpu_custom_call.1} parent=1 // pred_check_branch
      %2562 = sbr.rel (0) target = $region57
    $region56: #{tpu_custom_call.1} parent=1 // pred_region
      %2564 = vsyncadd [#allocation7], 0
      %s2565 = sshll.u32 [#allocation14], 4
      %s2566 = int_to_ptr.vmem [resolvable:$true] %s2565
      %s2567 = sshll.u32 %s6, 4
      %s2568 = int_to_ptr.hbm [resolvable:$true] %s2567
      %2573 = dma.vmem_to_hbm [thread:$0]  %s2566, 1024, %s2568, [#allocation7], 64, 64, 4
    $region57: #{tpu_custom_call.1} parent=1 // pred_fallthru
      _
    // Predicated region
    $region58: #{tpu_custom_call.1} parent=1 // pred_check
      _
    $region59: #{tpu_custom_call.1} parent=1 // pred_check_branch
      %2575 = sbr.rel (0) target = $region61
    $region60: #{tpu_custom_call.1} parent=1 // pred_region
      %2577 = vsyncadd [#allocation16], 0
      %s2578 = sshll.u32 [#allocation15], 4
      %s2579 = int_to_ptr.vmem [resolvable:$true] %s2578
      %s2580 = sshll.u32 %s7, 4
      %s2581 = int_to_ptr.hbm [resolvable:$true] %s2580
      %2586 = dma.vmem_to_hbm [thread:$0]  %s2579, 256, %s2581, [#allocation16], 128, 128, 8
    $region61: #{tpu_custom_call.1} parent=1 // pred_fallthru
      _
    // Predicated region
    $region62: #{tpu_custom_call.1} parent=1 // pred_check
      _
    $region63: #{tpu_custom_call.1} parent=1 // pred_check_branch
      %2588 = sbr.rel (0) target = $region65
    $region64: #{tpu_custom_call.1} parent=1 // pred_region
      %2590 = vsyncadd [#allocation16], 0
      %s2591 = sshll.u32 [#allocation17], 4
      %s2592 = int_to_ptr.vmem [resolvable:$true] %s2591
      %s2593 = sshll.u32 %s8, 4
      %s2594 = int_to_ptr.hbm [resolvable:$true] %s2593
      %2599 = dma.vmem_to_hbm [thread:$0]  %s2592, 256, %s2594, [#allocation16], 128, 128, 8
    $region65: #{tpu_custom_call.1} parent=1 // pred_fallthru
      _
    // Predicated region
    $region66: #{tpu_custom_call.1} parent=1 // pred_check
      _
    $region67: #{tpu_custom_call.1} parent=1 // pred_check_branch
      %2601 = sbr.rel (0) target = $region69
    $region68: #{tpu_custom_call.1} parent=1 // pred_region
      %2603 = dma.done [#allocation7], 1024
    $region69: #{tpu_custom_call.1} parent=1 // pred_fallthru
      _
    // Predicated region
    $region70: #{tpu_custom_call.1} parent=1 // pred_check
      _
    $region71: #{tpu_custom_call.1} parent=1 // pred_check_branch
      %2605 = sbr.rel (0) target = $region73
    $region72: #{tpu_custom_call.1} parent=1 // pred_region
      %2607 = dma.done [#allocation16], 256
    $region73: #{tpu_custom_call.1} parent=1 // pred_fallthru
      _
    // Predicated region
    $region74: #{tpu_custom_call.1} parent=1 // pred_check
      _
    $region75: #{tpu_custom_call.1} parent=1 // pred_check_branch
      %2609 = sbr.rel (0) target = $region77
    $region76: #{tpu_custom_call.1} parent=1 // pred_region
      %2611 = dma.done [#allocation16], 256
    $region77: #{tpu_custom_call.1} parent=1 // pred_fallthru
      _
    %2612 = vsyncpa [#allocation6], 1
    %2613 = vsyncpa [#allocation9], 1
    %2614 = vsyncpa [#allocation12], 1
    %2615 = vsyncpa [#allocation7], 1
    %2616 = vsyncpa [#allocation16], 1

</llo_original>
